<compile_context>
chip_gen: v5e
topology: v5e:2x2
jax: 0.10.0
libtpu: 0.0.40
codegen_flags: <defaults>
</compile_context>

<pallas_src>
import numpy as np
import jax
import jax.numpy as jnp
from jax.experimental import pallas as pl
from jax.experimental.pallas import tpu as pltpu

EPS = 1e-5  # BatchNorm2d default eps


def _round_up(a, b):
    return ((a + b - 1) // b) * b


# ----------------------------------------------------------------------------
# Bilinear x2 upsample (align_corners=True) folded into a single matrix that
# also produces the zero-padded plane the 3x3 conv needs.
# ----------------------------------------------------------------------------
def _interp_matrix(n_in, n_out):
    src = np.arange(n_out, dtype=np.float64) * (n_in - 1) / (n_out - 1)
    i0 = np.clip(np.floor(src).astype(np.int64), 0, n_in - 1)
    i1 = np.minimum(i0 + 1, n_in - 1)
    frac = (src - i0).astype(np.float32)
    m = np.zeros((n_out, n_in), np.float32)
    m[np.arange(n_out), i0] += 1.0 - frac
    m[np.arange(n_out), i1] += frac
    return m


def _upsample_pad_matrix(H, W, Hp, Wtot):
    """(Hp*Wtot, H*W): upsampled image lands in rows 1..2H, cols 8..8+2W-1.

    Row 0 / row 2H+1 and columns outside [8, 8+2W) are the conv zero padding
    (the 8-column left pad keeps every scratch store sublane-aligned).
    """
    Hf, Wf = 2 * H, 2 * W
    mh = _interp_matrix(H, Hf)
    mw = _interp_matrix(W, Wf)
    u = np.zeros((Hp, Wtot, H, W), np.float32)
    u[1:Hf + 1, 8:8 + Wf] = np.einsum('ih,jw->ijhw', mh, mw)
    return jnp.asarray(u.reshape(Hp * Wtot, H * W))


# ----------------------------------------------------------------------------
# Fused UpBlock kernel: upsample -> (conv3x3+BN+ReLU) x2 [-> conv1x1 head]
# ----------------------------------------------------------------------------
def _make_upblock_kernel(N, H, W, Cin, C1, C2, head):
    Hf, Wf = 2 * H, 2 * W
    Hp = Hf + 2                       # one zero-pad row top & bottom
    Wtot = 8 + _round_up(Wf + 8, 8)   # 8 zero cols left, >=1 zero col right
    M = N * Hf * Wf

    def conv3x3(rows3, w_ref, cout):
        # rows3[ky]: (Hf*Wtot, cin) bf16 contiguous row block of padded plane.
        acc = jnp.zeros((Hf, Wf, cout), jnp.float32)
        for ky in range(3):
            for kx in range(3):
                part = jnp.dot(rows3[ky], w_ref[3 * ky + kx],
                               preferred_element_type=jnp.float32)
                part = part.reshape(Hf, Wtot, cout)
                # output(h, w) needs plane(h+ky, w+kx+7)
                acc = acc + part[:, 7 + kx:7 + kx + Wf, :]
        return acc

    def bn_scale_shift(acc_list, g_ref, b_ref, c):
        # Single traversal: per-channel sum and sum-of-squares over (N, Hf, Wf).
        s = jnp.zeros((1, c), jnp.float32)
        ss = jnp.zeros((1, c), jnp.float32)
        for a in acc_list:
            a2 = a.reshape(Hf * Wf, c)
            s = s + jnp.sum(a2, axis=0, keepdims=True)
            ss = ss + jnp.sum(a2 * a2, axis=0, keepdims=True)
        mean = s / M
        var = ss / M - mean * mean          # biased variance (training mode)
        scale = g_ref[...] * jax.lax.rsqrt(var + EPS)
        shift = b_ref[...] - mean * scale
        return scale.reshape(1, 1, c), shift.reshape(1, 1, c)

    def kernel(*refs):
        if head:
            (x_ref, u_ref, w1_ref, g1_ref, b1_ref, w2_ref, g2_ref, b2_ref,
             wo_ref, bo_ref, o_ref, pad_ref) = refs
        else:
            (x_ref, u_ref, w1_ref, g1_ref, b1_ref, w2_ref, g2_ref, b2_ref,
             o_ref, pad_ref) = refs

        # Scratch: zero-padded conv2 input plane (borders stay zero).
        pad_ref[...] = jnp.zeros((N, Hp, Wtot, C1), jnp.float32)

        # ---- upsample (one MXU matmul per image) + conv1 (pre-BN) ----------
        acc1 = []
        for n in range(N):
            xu = jnp.dot(u_ref[...], x_ref[n],
                         preferred_element_type=jnp.float32)   # (Hp*Wtot, Cin)
            xu = xu.reshape(Hp, Wtot, Cin)
            rows3 = [xu[ky:ky + Hf].reshape(Hf * Wtot, Cin).astype(jnp.bfloat16)
                     for ky in range(3)]
            acc1.append(conv3x3(rows3, w1_ref, C1))

        # No conv bias: a per-channel constant cancels exactly under
        # training-mode BatchNorm (mean subtraction removes it).
        sc1, sh1 = bn_scale_shift(acc1, g1_ref, b1_ref, C1)
        for n in range(N):
            y1 = jnp.maximum(acc1[n] * sc1 + sh1, 0.0)          # (Hf, Wf, C1)
            pad_ref[n, 1:Hf + 1, 8:8 + Wf, :] = y1              # aligned store

        # ---- conv2 (pre-BN) -------------------------------------------------
        acc2 = []
        for n in range(N):
            rows3 = [pad_ref[n, ky:ky + Hf, :, :]
                     .reshape(Hf * Wtot, C1).astype(jnp.bfloat16)
                     for ky in range(3)]
            acc2.append(conv3x3(rows3, w2_ref, C2))

        sc2, sh2 = bn_scale_shift(acc2, g2_ref, b2_ref, C2)
        for n in range(N):
            y2 = jnp.maximum(acc2[n] * sc2 + sh2, 0.0).reshape(Hf * Wf, C2)
            if head:  # fused final 1x1 conv (bias kept: no BN after it)
                y2 = jnp.dot(y2, wo_ref[...],
                             preferred_element_type=jnp.float32) + bo_ref[...]
            o_ref[n] = y2

    return kernel, Hp, Wtot


def up_block(x, hw, blk, head=None):
    """x: (N, H*W, Cin) f32.  Returns (N, (2H)*(2W), Cout) f32."""
    N, HW, Cin = x.shape
    H, W = hw
    assert HW == H * W
    w1, g1, b1 = blk['conv1']
    w2, g2, b2 = blk['conv2']
    C1, C2 = w1.shape[-1], w2.shape[-1]
    Cout = C2 if head is None else head[0].shape[-1]
    Hf, Wf = 2 * H, 2 * W

    kernel, Hp, Wtot = _make_upblock_kernel(N, H, W, Cin, C1, C2,
                                            head is not None)
    u = _upsample_pad_matrix(H, W, Hp, Wtot)

    inputs = [x, u, w1, g1, b1, w2, g2, b2]
    in_specs = [
        pl.BlockSpec((N, HW, Cin), lambda i: (0, 0, 0)),
        pl.BlockSpec((Hp * Wtot, HW), lambda i: (0, 0)),
        pl.BlockSpec((9, Cin, C1), lambda i: (0, 0, 0)),
        pl.BlockSpec((1, C1), lambda i: (0, 0)),
        pl.BlockSpec((1, C1), lambda i: (0, 0)),
        pl.BlockSpec((9, C1, C2), lambda i: (0, 0, 0)),
        pl.BlockSpec((1, C2), lambda i: (0, 0)),
        pl.BlockSpec((1, C2), lambda i: (0, 0)),
    ]
    if head is not None:
        wo, bo = head
        inputs += [wo, bo]
        in_specs += [pl.BlockSpec((C2, Cout), lambda i: (0, 0)),
                     pl.BlockSpec((1, Cout), lambda i: (0, 0))]

    return pl.pallas_call(
        kernel,
        out_shape=jax.ShapeDtypeStruct((N, Hf * Wf, Cout), jnp.float32),
        grid=(1,),
        in_specs=in_specs,
        out_specs=pl.BlockSpec((N, Hf * Wf, Cout), lambda i: (0, 0, 0)),
        scratch_shapes=[pltpu.VMEM((N, Hp, Wtot, C1), jnp.float32)],
        compiler_params=pltpu.CompilerParams(
            dimension_semantics=("arbitrary",),
            # Fits v7x's 64 MiB physical VMEM (actual use is only a few MiB).
            vmem_limit_bytes=48 * 2**20),
    )(*inputs)


# ----------------------------------------------------------------------------
# Parameter construction (deterministic, synthetic)
# ----------------------------------------------------------------------------
def _make_conv_bn(kconv, kbn, cin, cout):
    w = jax.random.normal(kconv, (3, 3, cin, cout), jnp.float32) / np.sqrt(9.0 * cin)
    # Conv bias omitted on purpose: it cancels exactly under training-mode BN.
    k1, k2 = jax.random.split(kbn)
    gamma = 1.0 + 0.1 * jax.random.normal(k1, (1, cout), jnp.float32)
    beta = 0.1 * jax.random.normal(k2, (1, cout), jnp.float32)
    # Conv weights stored in bf16 (MXU operands); BN affine params stay f32.
    return (w.reshape(9, cin, cout).astype(jnp.bfloat16), gamma, beta)


def make_stress_decoder_params(key, out_channel):
    params = {}
    chans = [(256, 256), (256, 128), (128, 64), (64, 32)]
    for idx, (cin, cout) in enumerate(chans, start=1):
        key, k1, k2, k3, k4 = jax.random.split(key, 5)
        params[f'up{idx}'] = dict(conv1=_make_conv_bn(k1, k2, cin, cout),
                                  conv2=_make_conv_bn(k3, k4, cout, cout))
    key, kw, kb = jax.random.split(key, 3)
    wo = jax.random.normal(kw, (32, out_channel), jnp.float32) / np.sqrt(32.0)
    bo = 0.01 * jax.random.normal(kb, (1, out_channel), jnp.float32)
    params['outlayer'] = (wo, bo)
    return params


# ----------------------------------------------------------------------------
# StressDecoder forward (NCHW in / NCHW out, like PyTorch)
# ----------------------------------------------------------------------------
def stress_decoder(x_nchw, params):
    N, C, H, W = x_nchw.shape
    x = jnp.transpose(x_nchw, (0, 2, 3, 1)).reshape(N, H * W, C)
    x = up_block(x, (H, W), params['up1'])
    x = up_block(x, (2 * H, 2 * W), params['up2'])
    x = up_block(x, (4 * H, 4 * W), params['up3'])
    x = up_block(x, (8 * H, 8 * W), params['up4'], head=params['outlayer'])
    Hf, Wf, Cout = 16 * H, 16 * W, x.shape[-1]
    x = x.reshape(N, Hf, Wf, Cout)
    return jnp.transpose(x, (0, 3, 1, 2))


# TODO(synk): BatchNorm reproduces PyTorch *training-mode* forward (batch
# statistics); running-stat updates / eval-mode stats are not modeled.


if __name__ == "__main__":
    key = jax.random.PRNGKey(0)
    kx, kp = jax.random.split(key)

    out_channel = 4
    # StressDecoder expects 256 input channels; 2x2 spatial -> 32x32 output.
    x = jax.random.normal(kx, (2, 256, 2, 2), jnp.float32)  # NCHW

    params = make_stress_decoder_params(kp, out_channel)

    y = stress_decoder(x, params)
    y = jax.block_until_ready(y)
    assert y.shape == (2, out_channel, 32, 32), y.shape
    assert bool(jnp.all(jnp.isfinite(y)))
    print("KERNEL_OK")
</pallas_src>

<mosaic_0001>
module attributes {stable_mosaic.version = 11 : i64} {
  func.func @kernel(%arg0: i32, %arg1: memref<2x4x256xf32, #tpu.memory_space<vmem>>, %arg2: memref<144x4xf32, #tpu.memory_space<vmem>>, %arg3: memref<9x256x256xbf16, #tpu.memory_space<vmem>>, %arg4: memref<1x256xf32, #tpu.memory_space<vmem>>, %arg5: memref<1x256xf32, #tpu.memory_space<vmem>>, %arg6: memref<9x256x256xbf16, #tpu.memory_space<vmem>>, %arg7: memref<1x256xf32, #tpu.memory_space<vmem>>, %arg8: memref<1x256xf32, #tpu.memory_space<vmem>>, %arg9: memref<2x16x256xf32, #tpu.memory_space<vmem>>, %arg10: memref<2x6x24x256xf32, #tpu.memory_space<vmem>>) attributes {dimension_semantics = [#tpu.dimension_semantics<arbitrary>], iteration_bounds = array<i64: 1>, scalar_prefetch = 0 : i64, scratch_operands = 1 : i64, tpu.core_type = #tpu.core_type<tc>, window_params = [{pipeline_mode = #tpu.pipeline_mode<synchronous>, transform_indices = @transform_0, window_bounds = array<i64: 2, 4, 256>}, {pipeline_mode = #tpu.pipeline_mode<synchronous>, transform_indices = @transform_1, window_bounds = array<i64: 144, 4>}, {pipeline_mode = #tpu.pipeline_mode<synchronous>, transform_indices = @transform_2, window_bounds = array<i64: 9, 256, 256>}, {pipeline_mode = #tpu.pipeline_mode<synchronous>, transform_indices = @transform_3, window_bounds = array<i64: 1, 256>}, {pipeline_mode = #tpu.pipeline_mode<synchronous>, transform_indices = @transform_4, window_bounds = array<i64: 1, 256>}, {pipeline_mode = #tpu.pipeline_mode<synchronous>, transform_indices = @transform_5, window_bounds = array<i64: 9, 256, 256>}, {pipeline_mode = #tpu.pipeline_mode<synchronous>, transform_indices = @transform_6, window_bounds = array<i64: 1, 256>}, {pipeline_mode = #tpu.pipeline_mode<synchronous>, transform_indices = @transform_7, window_bounds = array<i64: 1, 256>}, {pipeline_mode = #tpu.pipeline_mode<synchronous>, transform_indices = @transform_8, window_bounds = array<i64: 2, 16, 256>}]} {
    %cst = arith.constant 0.000000e+00 : f32
    %0 = vector.broadcast %cst : f32 to vector<2x6x24x256xf32>
    %c0 = arith.constant 0 : index
    %c0_0 = arith.constant 0 : index
    %c0_1 = arith.constant 0 : index
    %c0_2 = arith.constant 0 : index
    %1 = vector.load %arg10[%c0, %c0_0, %c0_1, %c0_2] : memref<2x6x24x256xf32, #tpu.memory_space<vmem>>, vector<2x6x24x256xf32>
    tpu.vector_store %arg10[%c0, %c0_0, %c0_1, %c0_2], %0 {strides = array<i32>} : memref<2x6x24x256xf32, #tpu.memory_space<vmem>>, vector<2x6x24x256xf32>,
    %c0_3 = arith.constant 0 : index
    %c0_4 = arith.constant 0 : index
    %2 = vector.load %arg2[%c0_3, %c0_4] : memref<144x4xf32, #tpu.memory_space<vmem>>, vector<144x4xf32>
    %c0_5 = arith.constant 0 : index
    %c0_6 = arith.constant 0 : index
    %c0_7 = arith.constant 0 : index
    %3 = vector.load %arg1[%c0_5, %c0_6, %c0_7] : memref<2x4x256xf32, #tpu.memory_space<vmem>>, vector<1x4x256xf32>
    %4 = vector.shape_cast %3 : vector<1x4x256xf32> to vector<4x256xf32>
    %cst_8 = arith.constant dense<0.000000e+00> : vector<144x256xf32>
    %5 = tpu.matmul %2, %4, %cst_8 {dimension_numbers = #tpu.dot_dimension_numbers<[1], [0], [0], [1], [0, 0, 1, 1], [], []>} : vector<144x4xf32>, vector<4x256xf32>, vector<144x256xf32> -> vector<144x256xf32>
    %6 = vector.shape_cast %5 : vector<144x256xf32> to vector<6x24x256xf32>
    %7 = vector.extract_strided_slice %6 {offsets = [0, 0, 0], sizes = [4, 24, 256], strides = [1, 1, 1]} : vector<6x24x256xf32> to vector<4x24x256xf32>
    %8 = vector.shape_cast %7 : vector<4x24x256xf32> to vector<96x256xf32>
    %9 = arith.truncf %8 : vector<96x256xf32> to vector<96x256xbf16>
    %10 = vector.extract_strided_slice %6 {offsets = [1, 0, 0], sizes = [4, 24, 256], strides = [1, 1, 1]} : vector<6x24x256xf32> to vector<4x24x256xf32>
    %11 = vector.shape_cast %10 : vector<4x24x256xf32> to vector<96x256xf32>
    %12 = arith.truncf %11 : vector<96x256xf32> to vector<96x256xbf16>
    %13 = vector.extract_strided_slice %6 {offsets = [2, 0, 0], sizes = [4, 24, 256], strides = [1, 1, 1]} : vector<6x24x256xf32> to vector<4x24x256xf32>
    %14 = vector.shape_cast %13 : vector<4x24x256xf32> to vector<96x256xf32>
    %15 = arith.truncf %14 : vector<96x256xf32> to vector<96x256xbf16>
    %cst_9 = arith.constant 0.000000e+00 : f32
    %16 = vector.broadcast %cst_9 : f32 to vector<4x4x256xf32>
    %c0_10 = arith.constant 0 : index
    %c0_11 = arith.constant 0 : index
    %c0_12 = arith.constant 0 : index
    %17 = vector.load %arg3[%c0_10, %c0_11, %c0_12] : memref<9x256x256xbf16, #tpu.memory_space<vmem>>, vector<1x256x256xbf16>
    %18 = vector.shape_cast %17 : vector<1x256x256xbf16> to vector<256x256xbf16>
    %cst_13 = arith.constant dense<0.000000e+00> : vector<96x256xf32>
    %19 = tpu.matmul %9, %18, %cst_13 {dimension_numbers = #tpu.dot_dimension_numbers<[1], [0], [0], [1], [0, 0, 1, 1], [], []>} : vector<96x256xbf16>, vector<256x256xbf16>, vector<96x256xf32> -> vector<96x256xf32>
    %20 = vector.shape_cast %19 : vector<96x256xf32> to vector<4x24x256xf32>
    %21 = vector.extract_strided_slice %20 {offsets = [0, 7, 0], sizes = [4, 4, 256], strides = [1, 1, 1]} : vector<4x24x256xf32> to vector<4x4x256xf32>
    %22 = arith.addf %16, %21 : vector<4x4x256xf32>
    %c1 = arith.constant 1 : index
    %c0_14 = arith.constant 0 : index
    %c0_15 = arith.constant 0 : index
    %23 = vector.load %arg3[%c1, %c0_14, %c0_15] : memref<9x256x256xbf16, #tpu.memory_space<vmem>>, vector<1x256x256xbf16>
    %24 = vector.shape_cast %23 : vector<1x256x256xbf16> to vector<256x256xbf16>
    %cst_16 = arith.constant dense<0.000000e+00> : vector<96x256xf32>
    %25 = tpu.matmul %9, %24, %cst_16 {dimension_numbers = #tpu.dot_dimension_numbers<[1], [0], [0], [1], [0, 0, 1, 1], [], []>} : vector<96x256xbf16>, vector<256x256xbf16>, vector<96x256xf32> -> vector<96x256xf32>
    %26 = vector.shape_cast %25 : vector<96x256xf32> to vector<4x24x256xf32>
    %27 = vector.extract_strided_slice %26 {offsets = [0, 8, 0], sizes = [4, 4, 256], strides = [1, 1, 1]} : vector<4x24x256xf32> to vector<4x4x256xf32>
    %28 = arith.addf %22, %27 : vector<4x4x256xf32>
    %c2 = arith.constant 2 : index
    %c0_17 = arith.constant 0 : index
    %c0_18 = arith.constant 0 : index
    %29 = vector.load %arg3[%c2, %c0_17, %c0_18] : memref<9x256x256xbf16, #tpu.memory_space<vmem>>, vector<1x256x256xbf16>
    %30 = vector.shape_cast %29 : vector<1x256x256xbf16> to vector<256x256xbf16>
    %cst_19 = arith.constant dense<0.000000e+00> : vector<96x256xf32>
    %31 = tpu.matmul %9, %30, %cst_19 {dimension_numbers = #tpu.dot_dimension_numbers<[1], [0], [0], [1], [0, 0, 1, 1], [], []>} : vector<96x256xbf16>, vector<256x256xbf16>, vector<96x256xf32> -> vector<96x256xf32>
    %32 = vector.shape_cast %31 : vector<96x256xf32> to vector<4x24x256xf32>
    %33 = vector.extract_strided_slice %32 {offsets = [0, 9, 0], sizes = [4, 4, 256], strides = [1, 1, 1]} : vector<4x24x256xf32> to vector<4x4x256xf32>
    %34 = arith.addf %28, %33 : vector<4x4x256xf32>
    %c3 = arith.constant 3 : index
    %c0_20 = arith.constant 0 : index
    %c0_21 = arith.constant 0 : index
    %35 = vector.load %arg3[%c3, %c0_20, %c0_21] : memref<9x256x256xbf16, #tpu.memory_space<vmem>>, vector<1x256x256xbf16>
    %36 = vector.shape_cast %35 : vector<1x256x256xbf16> to vector<256x256xbf16>
    %cst_22 = arith.constant dense<0.000000e+00> : vector<96x256xf32>
    %37 = tpu.matmul %12, %36, %cst_22 {dimension_numbers = #tpu.dot_dimension_numbers<[1], [0], [0], [1], [0, 0, 1, 1], [], []>} : vector<96x256xbf16>, vector<256x256xbf16>, vector<96x256xf32> -> vector<96x256xf32>
    %38 = vector.shape_cast %37 : vector<96x256xf32> to vector<4x24x256xf32>
    %39 = vector.extract_strided_slice %38 {offsets = [0, 7, 0], sizes = [4, 4, 256], strides = [1, 1, 1]} : vector<4x24x256xf32> to vector<4x4x256xf32>
    %40 = arith.addf %34, %39 : vector<4x4x256xf32>
    %c4 = arith.constant 4 : index
    %c0_23 = arith.constant 0 : index
    %c0_24 = arith.constant 0 : index
    %41 = vector.load %arg3[%c4, %c0_23, %c0_24] : memref<9x256x256xbf16, #tpu.memory_space<vmem>>, vector<1x256x256xbf16>
    %42 = vector.shape_cast %41 : vector<1x256x256xbf16> to vector<256x256xbf16>
    %cst_25 = arith.constant dense<0.000000e+00> : vector<96x256xf32>
    %43 = tpu.matmul %12, %42, %cst_25 {dimension_numbers = #tpu.dot_dimension_numbers<[1], [0], [0], [1], [0, 0, 1, 1], [], []>} : vector<96x256xbf16>, vector<256x256xbf16>, vector<96x256xf32> -> vector<96x256xf32>
    %44 = vector.shape_cast %43 : vector<96x256xf32> to vector<4x24x256xf32>
    %45 = vector.extract_strided_slice %44 {offsets = [0, 8, 0], sizes = [4, 4, 256], strides = [1, 1, 1]} : vector<4x24x256xf32> to vector<4x4x256xf32>
    %46 = arith.addf %40, %45 : vector<4x4x256xf32>
    %c5 = arith.constant 5 : index
    %c0_26 = arith.constant 0 : index
    %c0_27 = arith.constant 0 : index
    %47 = vector.load %arg3[%c5, %c0_26, %c0_27] : memref<9x256x256xbf16, #tpu.memory_space<vmem>>, vector<1x256x256xbf16>
    %48 = vector.shape_cast %47 : vector<1x256x256xbf16> to vector<256x256xbf16>
    %cst_28 = arith.constant dense<0.000000e+00> : vector<96x256xf32>
    %49 = tpu.matmul %12, %48, %cst_28 {dimension_numbers = #tpu.dot_dimension_numbers<[1], [0], [0], [1], [0, 0, 1, 1], [], []>} : vector<96x256xbf16>, vector<256x256xbf16>, vector<96x256xf32> -> vector<96x256xf32>
    %50 = vector.shape_cast %49 : vector<96x256xf32> to vector<4x24x256xf32>
    %51 = vector.extract_strided_slice %50 {offsets = [0, 9, 0], sizes = [4, 4, 256], strides = [1, 1, 1]} : vector<4x24x256xf32> to vector<4x4x256xf32>
    %52 = arith.addf %46, %51 : vector<4x4x256xf32>
    %c6 = arith.constant 6 : index
    %c0_29 = arith.constant 0 : index
    %c0_30 = arith.constant 0 : index
    %53 = vector.load %arg3[%c6, %c0_29, %c0_30] : memref<9x256x256xbf16, #tpu.memory_space<vmem>>, vector<1x256x256xbf16>
    %54 = vector.shape_cast %53 : vector<1x256x256xbf16> to vector<256x256xbf16>
    %cst_31 = arith.constant dense<0.000000e+00> : vector<96x256xf32>
    %55 = tpu.matmul %15, %54, %cst_31 {dimension_numbers = #tpu.dot_dimension_numbers<[1], [0], [0], [1], [0, 0, 1, 1], [], []>} : vector<96x256xbf16>, vector<256x256xbf16>, vector<96x256xf32> -> vector<96x256xf32>
    %56 = vector.shape_cast %55 : vector<96x256xf32> to vector<4x24x256xf32>
    %57 = vector.extract_strided_slice %56 {offsets = [0, 7, 0], sizes = [4, 4, 256], strides = [1, 1, 1]} : vector<4x24x256xf32> to vector<4x4x256xf32>
    %58 = arith.addf %52, %57 : vector<4x4x256xf32>
    %c7 = arith.constant 7 : index
    %c0_32 = arith.constant 0 : index
    %c0_33 = arith.constant 0 : index
    %59 = vector.load %arg3[%c7, %c0_32, %c0_33] : memref<9x256x256xbf16, #tpu.memory_space<vmem>>, vector<1x256x256xbf16>
    %60 = vector.shape_cast %59 : vector<1x256x256xbf16> to vector<256x256xbf16>
    %cst_34 = arith.constant dense<0.000000e+00> : vector<96x256xf32>
    %61 = tpu.matmul %15, %60, %cst_34 {dimension_numbers = #tpu.dot_dimension_numbers<[1], [0], [0], [1], [0, 0, 1, 1], [], []>} : vector<96x256xbf16>, vector<256x256xbf16>, vector<96x256xf32> -> vector<96x256xf32>
    %62 = vector.shape_cast %61 : vector<96x256xf32> to vector<4x24x256xf32>
    %63 = vector.extract_strided_slice %62 {offsets = [0, 8, 0], sizes = [4, 4, 256], strides = [1, 1, 1]} : vector<4x24x256xf32> to vector<4x4x256xf32>
    %64 = arith.addf %58, %63 : vector<4x4x256xf32>
    %c8 = arith.constant 8 : index
    %c0_35 = arith.constant 0 : index
    %c0_36 = arith.constant 0 : index
    %65 = vector.load %arg3[%c8, %c0_35, %c0_36] : memref<9x256x256xbf16, #tpu.memory_space<vmem>>, vector<1x256x256xbf16>
    %66 = vector.shape_cast %65 : vector<1x256x256xbf16> to vector<256x256xbf16>
    %cst_37 = arith.constant dense<0.000000e+00> : vector<96x256xf32>
    %67 = tpu.matmul %15, %66, %cst_37 {dimension_numbers = #tpu.dot_dimension_numbers<[1], [0], [0], [1], [0, 0, 1, 1], [], []>} : vector<96x256xbf16>, vector<256x256xbf16>, vector<96x256xf32> -> vector<96x256xf32>
    %68 = vector.shape_cast %67 : vector<96x256xf32> to vector<4x24x256xf32>
    %69 = vector.extract_strided_slice %68 {offsets = [0, 9, 0], sizes = [4, 4, 256], strides = [1, 1, 1]} : vector<4x24x256xf32> to vector<4x4x256xf32>
    %70 = arith.addf %64, %69 : vector<4x4x256xf32>
    %c0_38 = arith.constant 0 : index
    %c0_39 = arith.constant 0 : index
    %71 = vector.load %arg2[%c0_38, %c0_39] : memref<144x4xf32, #tpu.memory_space<vmem>>, vector<144x4xf32>
    %c1_40 = arith.constant 1 : index
    %c0_41 = arith.constant 0 : index
    %c0_42 = arith.constant 0 : index
    %72 = vector.load %arg1[%c1_40, %c0_41, %c0_42] : memref<2x4x256xf32, #tpu.memory_space<vmem>>, vector<1x4x256xf32>
    %73 = vector.shape_cast %72 : vector<1x4x256xf32> to vector<4x256xf32>
    %cst_43 = arith.constant dense<0.000000e+00> : vector<144x256xf32>
    %74 = tpu.matmul %71, %73, %cst_43 {dimension_numbers = #tpu.dot_dimension_numbers<[1], [0], [0], [1], [0, 0, 1, 1], [], []>} : vector<144x4xf32>, vector<4x256xf32>, vector<144x256xf32> -> vector<144x256xf32>
    %75 = vector.shape_cast %74 : vector<144x256xf32> to vector<6x24x256xf32>
    %76 = vector.extract_strided_slice %75 {offsets = [0, 0, 0], sizes = [4, 24, 256], strides = [1, 1, 1]} : vector<6x24x256xf32> to vector<4x24x256xf32>
    %77 = vector.shape_cast %76 : vector<4x24x256xf32> to vector<96x256xf32>
    %78 = arith.truncf %77 : vector<96x256xf32> to vector<96x256xbf16>
    %79 = vector.extract_strided_slice %75 {offsets = [1, 0, 0], sizes = [4, 24, 256], strides = [1, 1, 1]} : vector<6x24x256xf32> to vector<4x24x256xf32>
    %80 = vector.shape_cast %79 : vector<4x24x256xf32> to vector<96x256xf32>
    %81 = arith.truncf %80 : vector<96x256xf32> to vector<96x256xbf16>
    %82 = vector.extract_strided_slice %75 {offsets = [2, 0, 0], sizes = [4, 24, 256], strides = [1, 1, 1]} : vector<6x24x256xf32> to vector<4x24x256xf32>
    %83 = vector.shape_cast %82 : vector<4x24x256xf32> to vector<96x256xf32>
    %84 = arith.truncf %83 : vector<96x256xf32> to vector<96x256xbf16>
    %cst_44 = arith.constant 0.000000e+00 : f32
    %85 = vector.broadcast %cst_44 : f32 to vector<4x4x256xf32>
    %c0_45 = arith.constant 0 : index
    %c0_46 = arith.constant 0 : index
    %c0_47 = arith.constant 0 : index
    %86 = vector.load %arg3[%c0_45, %c0_46, %c0_47] : memref<9x256x256xbf16, #tpu.memory_space<vmem>>, vector<1x256x256xbf16>
    %87 = vector.shape_cast %86 : vector<1x256x256xbf16> to vector<256x256xbf16>
    %cst_48 = arith.constant dense<0.000000e+00> : vector<96x256xf32>
    %88 = tpu.matmul %78, %87, %cst_48 {dimension_numbers = #tpu.dot_dimension_numbers<[1], [0], [0], [1], [0, 0, 1, 1], [], []>} : vector<96x256xbf16>, vector<256x256xbf16>, vector<96x256xf32> -> vector<96x256xf32>
    %89 = vector.shape_cast %88 : vector<96x256xf32> to vector<4x24x256xf32>
    %90 = vector.extract_strided_slice %89 {offsets = [0, 7, 0], sizes = [4, 4, 256], strides = [1, 1, 1]} : vector<4x24x256xf32> to vector<4x4x256xf32>
    %91 = arith.addf %85, %90 : vector<4x4x256xf32>
    %c1_49 = arith.constant 1 : index
    %c0_50 = arith.constant 0 : index
    %c0_51 = arith.constant 0 : index
    %92 = vector.load %arg3[%c1_49, %c0_50, %c0_51] : memref<9x256x256xbf16, #tpu.memory_space<vmem>>, vector<1x256x256xbf16>
    %93 = vector.shape_cast %92 : vector<1x256x256xbf16> to vector<256x256xbf16>
    %cst_52 = arith.constant dense<0.000000e+00> : vector<96x256xf32>
    %94 = tpu.matmul %78, %93, %cst_52 {dimension_numbers = #tpu.dot_dimension_numbers<[1], [0], [0], [1], [0, 0, 1, 1], [], []>} : vector<96x256xbf16>, vector<256x256xbf16>, vector<96x256xf32> -> vector<96x256xf32>
    %95 = vector.shape_cast %94 : vector<96x256xf32> to vector<4x24x256xf32>
    %96 = vector.extract_strided_slice %95 {offsets = [0, 8, 0], sizes = [4, 4, 256], strides = [1, 1, 1]} : vector<4x24x256xf32> to vector<4x4x256xf32>
    %97 = arith.addf %91, %96 : vector<4x4x256xf32>
    %c2_53 = arith.constant 2 : index
    %c0_54 = arith.constant 0 : index
    %c0_55 = arith.constant 0 : index
    %98 = vector.load %arg3[%c2_53, %c0_54, %c0_55] : memref<9x256x256xbf16, #tpu.memory_space<vmem>>, vector<1x256x256xbf16>
    %99 = vector.shape_cast %98 : vector<1x256x256xbf16> to vector<256x256xbf16>
    %cst_56 = arith.constant dense<0.000000e+00> : vector<96x256xf32>
    %100 = tpu.matmul %78, %99, %cst_56 {dimension_numbers = #tpu.dot_dimension_numbers<[1], [0], [0], [1], [0, 0, 1, 1], [], []>} : vector<96x256xbf16>, vector<256x256xbf16>, vector<96x256xf32> -> vector<96x256xf32>
    %101 = vector.shape_cast %100 : vector<96x256xf32> to vector<4x24x256xf32>
    %102 = vector.extract_strided_slice %101 {offsets = [0, 9, 0], sizes = [4, 4, 256], strides = [1, 1, 1]} : vector<4x24x256xf32> to vector<4x4x256xf32>
    %103 = arith.addf %97, %102 : vector<4x4x256xf32>
    %c3_57 = arith.constant 3 : index
    %c0_58 = arith.constant 0 : index
    %c0_59 = arith.constant 0 : index
    %104 = vector.load %arg3[%c3_57, %c0_58, %c0_59] : memref<9x256x256xbf16, #tpu.memory_space<vmem>>, vector<1x256x256xbf16>
    %105 = vector.shape_cast %104 : vector<1x256x256xbf16> to vector<256x256xbf16>
    %cst_60 = arith.constant dense<0.000000e+00> : vector<96x256xf32>
    %106 = tpu.matmul %81, %105, %cst_60 {dimension_numbers = #tpu.dot_dimension_numbers<[1], [0], [0], [1], [0, 0, 1, 1], [], []>} : vector<96x256xbf16>, vector<256x256xbf16>, vector<96x256xf32> -> vector<96x256xf32>
    %107 = vector.shape_cast %106 : vector<96x256xf32> to vector<4x24x256xf32>
    %108 = vector.extract_strided_slice %107 {offsets = [0, 7, 0], sizes = [4, 4, 256], strides = [1, 1, 1]} : vector<4x24x256xf32> to vector<4x4x256xf32>
    %109 = arith.addf %103, %108 : vector<4x4x256xf32>
    %c4_61 = arith.constant 4 : index
    %c0_62 = arith.constant 0 : index
    %c0_63 = arith.constant 0 : index
    %110 = vector.load %arg3[%c4_61, %c0_62, %c0_63] : memref<9x256x256xbf16, #tpu.memory_space<vmem>>, vector<1x256x256xbf16>
    %111 = vector.shape_cast %110 : vector<1x256x256xbf16> to vector<256x256xbf16>
    %cst_64 = arith.constant dense<0.000000e+00> : vector<96x256xf32>
    %112 = tpu.matmul %81, %111, %cst_64 {dimension_numbers = #tpu.dot_dimension_numbers<[1], [0], [0], [1], [0, 0, 1, 1], [], []>} : vector<96x256xbf16>, vector<256x256xbf16>, vector<96x256xf32> -> vector<96x256xf32>
    %113 = vector.shape_cast %112 : vector<96x256xf32> to vector<4x24x256xf32>
    %114 = vector.extract_strided_slice %113 {offsets = [0, 8, 0], sizes = [4, 4, 256], strides = [1, 1, 1]} : vector<4x24x256xf32> to vector<4x4x256xf32>
    %115 = arith.addf %109, %114 : vector<4x4x256xf32>
    %c5_65 = arith.constant 5 : index
    %c0_66 = arith.constant 0 : index
    %c0_67 = arith.constant 0 : index
    %116 = vector.load %arg3[%c5_65, %c0_66, %c0_67] : memref<9x256x256xbf16, #tpu.memory_space<vmem>>, vector<1x256x256xbf16>
    %117 = vector.shape_cast %116 : vector<1x256x256xbf16> to vector<256x256xbf16>
    %cst_68 = arith.constant dense<0.000000e+00> : vector<96x256xf32>
    %118 = tpu.matmul %81, %117, %cst_68 {dimension_numbers = #tpu.dot_dimension_numbers<[1], [0], [0], [1], [0, 0, 1, 1], [], []>} : vector<96x256xbf16>, vector<256x256xbf16>, vector<96x256xf32> -> vector<96x256xf32>
    %119 = vector.shape_cast %118 : vector<96x256xf32> to vector<4x24x256xf32>
    %120 = vector.extract_strided_slice %119 {offsets = [0, 9, 0], sizes = [4, 4, 256], strides = [1, 1, 1]} : vector<4x24x256xf32> to vector<4x4x256xf32>
    %121 = arith.addf %115, %120 : vector<4x4x256xf32>
    %c6_69 = arith.constant 6 : index
    %c0_70 = arith.constant 0 : index
    %c0_71 = arith.constant 0 : index
    %122 = vector.load %arg3[%c6_69, %c0_70, %c0_71] : memref<9x256x256xbf16, #tpu.memory_space<vmem>>, vector<1x256x256xbf16>
    %123 = vector.shape_cast %122 : vector<1x256x256xbf16> to vector<256x256xbf16>
    %cst_72 = arith.constant dense<0.000000e+00> : vector<96x256xf32>
    %124 = tpu.matmul %84, %123, %cst_72 {dimension_numbers = #tpu.dot_dimension_numbers<[1], [0], [0], [1], [0, 0, 1, 1], [], []>} : vector<96x256xbf16>, vector<256x256xbf16>, vector<96x256xf32> -> vector<96x256xf32>
    %125 = vector.shape_cast %124 : vector<96x256xf32> to vector<4x24x256xf32>
    %126 = vector.extract_strided_slice %125 {offsets = [0, 7, 0], sizes = [4, 4, 256], strides = [1, 1, 1]} : vector<4x24x256xf32> to vector<4x4x256xf32>
    %127 = arith.addf %121, %126 : vector<4x4x256xf32>
    %c7_73 = arith.constant 7 : index
    %c0_74 = arith.constant 0 : index
    %c0_75 = arith.constant 0 : index
    %128 = vector.load %arg3[%c7_73, %c0_74, %c0_75] : memref<9x256x256xbf16, #tpu.memory_space<vmem>>, vector<1x256x256xbf16>
    %129 = vector.shape_cast %128 : vector<1x256x256xbf16> to vector<256x256xbf16>
    %cst_76 = arith.constant dense<0.000000e+00> : vector<96x256xf32>
    %130 = tpu.matmul %84, %129, %cst_76 {dimension_numbers = #tpu.dot_dimension_numbers<[1], [0], [0], [1], [0, 0, 1, 1], [], []>} : vector<96x256xbf16>, vector<256x256xbf16>, vector<96x256xf32> -> vector<96x256xf32>
    %131 = vector.shape_cast %130 : vector<96x256xf32> to vector<4x24x256xf32>
    %132 = vector.extract_strided_slice %131 {offsets = [0, 8, 0], sizes = [4, 4, 256], strides = [1, 1, 1]} : vector<4x24x256xf32> to vector<4x4x256xf32>
    %133 = arith.addf %127, %132 : vector<4x4x256xf32>
    %c8_77 = arith.constant 8 : index
    %c0_78 = arith.constant 0 : index
    %c0_79 = arith.constant 0 : index
    %134 = vector.load %arg3[%c8_77, %c0_78, %c0_79] : memref<9x256x256xbf16, #tpu.memory_space<vmem>>, vector<1x256x256xbf16>
    %135 = vector.shape_cast %134 : vector<1x256x256xbf16> to vector<256x256xbf16>
    %cst_80 = arith.constant dense<0.000000e+00> : vector<96x256xf32>
    %136 = tpu.matmul %84, %135, %cst_80 {dimension_numbers = #tpu.dot_dimension_numbers<[1], [0], [0], [1], [0, 0, 1, 1], [], []>} : vector<96x256xbf16>, vector<256x256xbf16>, vector<96x256xf32> -> vector<96x256xf32>
    %137 = vector.shape_cast %136 : vector<96x256xf32> to vector<4x24x256xf32>
    %138 = vector.extract_strided_slice %137 {offsets = [0, 9, 0], sizes = [4, 4, 256], strides = [1, 1, 1]} : vector<4x24x256xf32> to vector<4x4x256xf32>
    %139 = arith.addf %133, %138 : vector<4x4x256xf32>
    %cst_81 = arith.constant 0.000000e+00 : f32
    %140 = vector.broadcast %cst_81 : f32 to vector<1x256xf32>
    %cst_82 = arith.constant 0.000000e+00 : f32
    %141 = vector.broadcast %cst_82 : f32 to vector<1x256xf32>
    %142 = vector.shape_cast %70 : vector<4x4x256xf32> to vector<16x256xf32>
    %cst_83 = arith.constant dense<0.000000e+00> : vector<256xf32>
    %143 = vector.multi_reduction <add>, %142, %cst_83 [0] : vector<16x256xf32> to vector<256xf32>
    %144 = vector.shape_cast %143 : vector<256xf32> to vector<1x256xf32>
    %145 = arith.addf %140, %144 : vector<1x256xf32>
    %146 = arith.mulf %142, %142 : vector<16x256xf32>
    %cst_84 = arith.constant dense<0.000000e+00> : vector<256xf32>
    %147 = vector.multi_reduction <add>, %146, %cst_84 [0] : vector<16x256xf32> to vector<256xf32>
    %148 = vector.shape_cast %147 : vector<256xf32> to vector<1x256xf32>
    %149 = arith.addf %141, %148 : vector<1x256xf32>
    %150 = vector.shape_cast %139 : vector<4x4x256xf32> to vector<16x256xf32>
    %cst_85 = arith.constant dense<0.000000e+00> : vector<256xf32>
    %151 = vector.multi_reduction <add>, %150, %cst_85 [0] : vector<16x256xf32> to vector<256xf32>
    %152 = vector.shape_cast %151 : vector<256xf32> to vector<1x256xf32>
    %153 = arith.addf %145, %152 : vector<1x256xf32>
    %154 = arith.mulf %150, %150 : vector<16x256xf32>
    %cst_86 = arith.constant dense<0.000000e+00> : vector<256xf32>
    %155 = vector.multi_reduction <add>, %154, %cst_86 [0] : vector<16x256xf32> to vector<256xf32>
    %156 = vector.shape_cast %155 : vector<256xf32> to vector<1x256xf32>
    %157 = arith.addf %149, %156 : vector<1x256xf32>
    %cst_87 = arith.constant 3.200000e+01 : f32
    %158 = vector.broadcast %cst_87 : f32 to vector<1x256xf32>
    %159 = arith.divf %153, %158 : vector<1x256xf32>
    %cst_88 = arith.constant 3.200000e+01 : f32
    %160 = vector.broadcast %cst_88 : f32 to vector<1x256xf32>
    %161 = arith.divf %157, %160 : vector<1x256xf32>
    %162 = arith.mulf %159, %159 : vector<1x256xf32>
    %163 = arith.subf %161, %162 : vector<1x256xf32>
    %c0_89 = arith.constant 0 : index
    %c0_90 = arith.constant 0 : index
    %164 = vector.load %arg4[%c0_89, %c0_90] : memref<1x256xf32, #tpu.memory_space<vmem>>, vector<1x256xf32>
    %cst_91 = arith.constant 9.99999974E-6 : f32
    %165 = vector.broadcast %cst_91 : f32 to vector<1x256xf32>
    %166 = arith.addf %163, %165 : vector<1x256xf32>
    %167 = math.rsqrt %166 : vector<1x256xf32>
    %168 = arith.mulf %164, %167 : vector<1x256xf32>
    %c0_92 = arith.constant 0 : index
    %c0_93 = arith.constant 0 : index
    %169 = vector.load %arg5[%c0_92, %c0_93] : memref<1x256xf32, #tpu.memory_space<vmem>>, vector<1x256xf32>
    %170 = arith.mulf %159, %168 : vector<1x256xf32>
    %171 = arith.subf %169, %170 : vector<1x256xf32>
    %172 = vector.shape_cast %168 : vector<1x256xf32> to vector<1x1x256xf32>
    %173 = vector.shape_cast %171 : vector<1x256xf32> to vector<1x1x256xf32>
    %174 = vector.broadcast %172 : vector<1x1x256xf32> to vector<4x4x256xf32>
    %175 = arith.mulf %70, %174 : vector<4x4x256xf32>
    %176 = vector.broadcast %173 : vector<1x1x256xf32> to vector<4x4x256xf32>
    %177 = arith.addf %175, %176 : vector<4x4x256xf32>
    %cst_94 = arith.constant 0.000000e+00 : f32
    %178 = vector.broadcast %cst_94 : f32 to vector<4x4x256xf32>
    %179 = arith.maximumf %177, %178 : vector<4x4x256xf32>
    %c0_95 = arith.constant 0 : index
    %c1_96 = arith.constant 1 : index
    %c8_97 = arith.constant 8 : index
    %c0_98 = arith.constant 0 : index
    %180 = vector.load %arg10[%c0_95, %c1_96, %c8_97, %c0_98] : memref<2x6x24x256xf32, #tpu.memory_space<vmem>>, vector<1x4x4x256xf32>
    %181 = vector.shape_cast %180 : vector<1x4x4x256xf32> to vector<4x4x256xf32>
    %182 = vector.shape_cast %179 : vector<4x4x256xf32> to vector<1x4x4x256xf32>
    tpu.vector_store %arg10[%c0_95, %c1_96, %c8_97, %c0_98], %182 {strides = array<i32>} : memref<2x6x24x256xf32, #tpu.memory_space<vmem>>, vector<1x4x4x256xf32>,
    %183 = vector.broadcast %172 : vector<1x1x256xf32> to vector<4x4x256xf32>
    %184 = arith.mulf %139, %183 : vector<4x4x256xf32>
    %185 = vector.broadcast %173 : vector<1x1x256xf32> to vector<4x4x256xf32>
    %186 = arith.addf %184, %185 : vector<4x4x256xf32>
    %cst_99 = arith.constant 0.000000e+00 : f32
    %187 = vector.broadcast %cst_99 : f32 to vector<4x4x256xf32>
    %188 = arith.maximumf %186, %187 : vector<4x4x256xf32>
    %c1_100 = arith.constant 1 : index
    %c1_101 = arith.constant 1 : index
    %c8_102 = arith.constant 8 : index
    %c0_103 = arith.constant 0 : index
    %189 = vector.load %arg10[%c1_100, %c1_101, %c8_102, %c0_103] : memref<2x6x24x256xf32, #tpu.memory_space<vmem>>, vector<1x4x4x256xf32>
    %190 = vector.shape_cast %189 : vector<1x4x4x256xf32> to vector<4x4x256xf32>
    %191 = vector.shape_cast %188 : vector<4x4x256xf32> to vector<1x4x4x256xf32>
    tpu.vector_store %arg10[%c1_100, %c1_101, %c8_102, %c0_103], %191 {strides = array<i32>} : memref<2x6x24x256xf32, #tpu.memory_space<vmem>>, vector<1x4x4x256xf32>,
    %c0_104 = arith.constant 0 : index
    %c0_105 = arith.constant 0 : index
    %c0_106 = arith.constant 0 : index
    %c0_107 = arith.constant 0 : index
    %192 = vector.load %arg10[%c0_104, %c0_105, %c0_106, %c0_107] : memref<2x6x24x256xf32, #tpu.memory_space<vmem>>, vector<1x4x24x256xf32>
    %193 = vector.shape_cast %192 : vector<1x4x24x256xf32> to vector<4x24x256xf32>
    %194 = vector.shape_cast %193 : vector<4x24x256xf32> to vector<96x256xf32>
    %195 = arith.truncf %194 : vector<96x256xf32> to vector<96x256xbf16>
    %c0_108 = arith.constant 0 : index
    %c1_109 = arith.constant 1 : index
    %c0_110 = arith.constant 0 : index
    %c0_111 = arith.constant 0 : index
    %196 = vector.load %arg10[%c0_108, %c1_109, %c0_110, %c0_111] : memref<2x6x24x256xf32, #tpu.memory_space<vmem>>, vector<1x4x24x256xf32>
    %197 = vector.shape_cast %196 : vector<1x4x24x256xf32> to vector<4x24x256xf32>
    %198 = vector.shape_cast %197 : vector<4x24x256xf32> to vector<96x256xf32>
    %199 = arith.truncf %198 : vector<96x256xf32> to vector<96x256xbf16>
    %c0_112 = arith.constant 0 : index
    %c2_113 = arith.constant 2 : index
    %c0_114 = arith.constant 0 : index
    %c0_115 = arith.constant 0 : index
    %200 = vector.load %arg10[%c0_112, %c2_113, %c0_114, %c0_115] : memref<2x6x24x256xf32, #tpu.memory_space<vmem>>, vector<1x4x24x256xf32>
    %201 = vector.shape_cast %200 : vector<1x4x24x256xf32> to vector<4x24x256xf32>
    %202 = vector.shape_cast %201 : vector<4x24x256xf32> to vector<96x256xf32>
    %203 = arith.truncf %202 : vector<96x256xf32> to vector<96x256xbf16>
    %cst_116 = arith.constant 0.000000e+00 : f32
    %204 = vector.broadcast %cst_116 : f32 to vector<4x4x256xf32>
    %c0_117 = arith.constant 0 : index
    %c0_118 = arith.constant 0 : index
    %c0_119 = arith.constant 0 : index
    %205 = vector.load %arg6[%c0_117, %c0_118, %c0_119] : memref<9x256x256xbf16, #tpu.memory_space<vmem>>, vector<1x256x256xbf16>
    %206 = vector.shape_cast %205 : vector<1x256x256xbf16> to vector<256x256xbf16>
    %cst_120 = arith.constant dense<0.000000e+00> : vector<96x256xf32>
    %207 = tpu.matmul %195, %206, %cst_120 {dimension_numbers = #tpu.dot_dimension_numbers<[1], [0], [0], [1], [0, 0, 1, 1], [], []>} : vector<96x256xbf16>, vector<256x256xbf16>, vector<96x256xf32> -> vector<96x256xf32>
    %208 = vector.shape_cast %207 : vector<96x256xf32> to vector<4x24x256xf32>
    %209 = vector.extract_strided_slice %208 {offsets = [0, 7, 0], sizes = [4, 4, 256], strides = [1, 1, 1]} : vector<4x24x256xf32> to vector<4x4x256xf32>
    %210 = arith.addf %204, %209 : vector<4x4x256xf32>
    %c1_121 = arith.constant 1 : index
    %c0_122 = arith.constant 0 : index
    %c0_123 = arith.constant 0 : index
    %211 = vector.load %arg6[%c1_121, %c0_122, %c0_123] : memref<9x256x256xbf16, #tpu.memory_space<vmem>>, vector<1x256x256xbf16>
    %212 = vector.shape_cast %211 : vector<1x256x256xbf16> to vector<256x256xbf16>
    %cst_124 = arith.constant dense<0.000000e+00> : vector<96x256xf32>
    %213 = tpu.matmul %195, %212, %cst_124 {dimension_numbers = #tpu.dot_dimension_numbers<[1], [0], [0], [1], [0, 0, 1, 1], [], []>} : vector<96x256xbf16>, vector<256x256xbf16>, vector<96x256xf32> -> vector<96x256xf32>
    %214 = vector.shape_cast %213 : vector<96x256xf32> to vector<4x24x256xf32>
    %215 = vector.extract_strided_slice %214 {offsets = [0, 8, 0], sizes = [4, 4, 256], strides = [1, 1, 1]} : vector<4x24x256xf32> to vector<4x4x256xf32>
    %216 = arith.addf %210, %215 : vector<4x4x256xf32>
    %c2_125 = arith.constant 2 : index
    %c0_126 = arith.constant 0 : index
    %c0_127 = arith.constant 0 : index
    %217 = vector.load %arg6[%c2_125, %c0_126, %c0_127] : memref<9x256x256xbf16, #tpu.memory_space<vmem>>, vector<1x256x256xbf16>
    %218 = vector.shape_cast %217 : vector<1x256x256xbf16> to vector<256x256xbf16>
    %cst_128 = arith.constant dense<0.000000e+00> : vector<96x256xf32>
    %219 = tpu.matmul %195, %218, %cst_128 {dimension_numbers = #tpu.dot_dimension_numbers<[1], [0], [0], [1], [0, 0, 1, 1], [], []>} : vector<96x256xbf16>, vector<256x256xbf16>, vector<96x256xf32> -> vector<96x256xf32>
    %220 = vector.shape_cast %219 : vector<96x256xf32> to vector<4x24x256xf32>
    %221 = vector.extract_strided_slice %220 {offsets = [0, 9, 0], sizes = [4, 4, 256], strides = [1, 1, 1]} : vector<4x24x256xf32> to vector<4x4x256xf32>
    %222 = arith.addf %216, %221 : vector<4x4x256xf32>
    %c3_129 = arith.constant 3 : index
    %c0_130 = arith.constant 0 : index
    %c0_131 = arith.constant 0 : index
    %223 = vector.load %arg6[%c3_129, %c0_130, %c0_131] : memref<9x256x256xbf16, #tpu.memory_space<vmem>>, vector<1x256x256xbf16>
    %224 = vector.shape_cast %223 : vector<1x256x256xbf16> to vector<256x256xbf16>
    %cst_132 = arith.constant dense<0.000000e+00> : vector<96x256xf32>
    %225 = tpu.matmul %199, %224, %cst_132 {dimension_numbers = #tpu.dot_dimension_numbers<[1], [0], [0], [1], [0, 0, 1, 1], [], []>} : vector<96x256xbf16>, vector<256x256xbf16>, vector<96x256xf32> -> vector<96x256xf32>
    %226 = vector.shape_cast %225 : vector<96x256xf32> to vector<4x24x256xf32>
    %227 = vector.extract_strided_slice %226 {offsets = [0, 7, 0], sizes = [4, 4, 256], strides = [1, 1, 1]} : vector<4x24x256xf32> to vector<4x4x256xf32>
    %228 = arith.addf %222, %227 : vector<4x4x256xf32>
    %c4_133 = arith.constant 4 : index
    %c0_134 = arith.constant 0 : index
    %c0_135 = arith.constant 0 : index
    %229 = vector.load %arg6[%c4_133, %c0_134, %c0_135] : memref<9x256x256xbf16, #tpu.memory_space<vmem>>, vector<1x256x256xbf16>
    %230 = vector.shape_cast %229 : vector<1x256x256xbf16> to vector<256x256xbf16>
    %cst_136 = arith.constant dense<0.000000e+00> : vector<96x256xf32>
    %231 = tpu.matmul %199, %230, %cst_136 {dimension_numbers = #tpu.dot_dimension_numbers<[1], [0], [0], [1], [0, 0, 1, 1], [], []>} : vector<96x256xbf16>, vector<256x256xbf16>, vector<96x256xf32> -> vector<96x256xf32>
    %232 = vector.shape_cast %231 : vector<96x256xf32> to vector<4x24x256xf32>
    %233 = vector.extract_strided_slice %232 {offsets = [0, 8, 0], sizes = [4, 4, 256], strides = [1, 1, 1]} : vector<4x24x256xf32> to vector<4x4x256xf32>
    %234 = arith.addf %228, %233 : vector<4x4x256xf32>
    %c5_137 = arith.constant 5 : index
    %c0_138 = arith.constant 0 : index
    %c0_139 = arith.constant 0 : index
    %235 = vector.load %arg6[%c5_137, %c0_138, %c0_139] : memref<9x256x256xbf16, #tpu.memory_space<vmem>>, vector<1x256x256xbf16>
    %236 = vector.shape_cast %235 : vector<1x256x256xbf16> to vector<256x256xbf16>
    %cst_140 = arith.constant dense<0.000000e+00> : vector<96x256xf32>
    %237 = tpu.matmul %199, %236, %cst_140 {dimension_numbers = #tpu.dot_dimension_numbers<[1], [0], [0], [1], [0, 0, 1, 1], [], []>} : vector<96x256xbf16>, vector<256x256xbf16>, vector<96x256xf32> -> vector<96x256xf32>
    %238 = vector.shape_cast %237 : vector<96x256xf32> to vector<4x24x256xf32>
    %239 = vector.extract_strided_slice %238 {offsets = [0, 9, 0], sizes = [4, 4, 256], strides = [1, 1, 1]} : vector<4x24x256xf32> to vector<4x4x256xf32>
    %240 = arith.addf %234, %239 : vector<4x4x256xf32>
    %c6_141 = arith.constant 6 : index
    %c0_142 = arith.constant 0 : index
    %c0_143 = arith.constant 0 : index
    %241 = vector.load %arg6[%c6_141, %c0_142, %c0_143] : memref<9x256x256xbf16, #tpu.memory_space<vmem>>, vector<1x256x256xbf16>
    %242 = vector.shape_cast %241 : vector<1x256x256xbf16> to vector<256x256xbf16>
    %cst_144 = arith.constant dense<0.000000e+00> : vector<96x256xf32>
    %243 = tpu.matmul %203, %242, %cst_144 {dimension_numbers = #tpu.dot_dimension_numbers<[1], [0], [0], [1], [0, 0, 1, 1], [], []>} : vector<96x256xbf16>, vector<256x256xbf16>, vector<96x256xf32> -> vector<96x256xf32>
    %244 = vector.shape_cast %243 : vector<96x256xf32> to vector<4x24x256xf32>
    %245 = vector.extract_strided_slice %244 {offsets = [0, 7, 0], sizes = [4, 4, 256], strides = [1, 1, 1]} : vector<4x24x256xf32> to vector<4x4x256xf32>
    %246 = arith.addf %240, %245 : vector<4x4x256xf32>
    %c7_145 = arith.constant 7 : index
    %c0_146 = arith.constant 0 : index
    %c0_147 = arith.constant 0 : index
    %247 = vector.load %arg6[%c7_145, %c0_146, %c0_147] : memref<9x256x256xbf16, #tpu.memory_space<vmem>>, vector<1x256x256xbf16>
    %248 = vector.shape_cast %247 : vector<1x256x256xbf16> to vector<256x256xbf16>
    %cst_148 = arith.constant dense<0.000000e+00> : vector<96x256xf32>
    %249 = tpu.matmul %203, %248, %cst_148 {dimension_numbers = #tpu.dot_dimension_numbers<[1], [0], [0], [1], [0, 0, 1, 1], [], []>} : vector<96x256xbf16>, vector<256x256xbf16>, vector<96x256xf32> -> vector<96x256xf32>
    %250 = vector.shape_cast %249 : vector<96x256xf32> to vector<4x24x256xf32>
    %251 = vector.extract_strided_slice %250 {offsets = [0, 8, 0], sizes = [4, 4, 256], strides = [1, 1, 1]} : vector<4x24x256xf32> to vector<4x4x256xf32>
    %252 = arith.addf %246, %251 : vector<4x4x256xf32>
    %c8_149 = arith.constant 8 : index
    %c0_150 = arith.constant 0 : index
    %c0_151 = arith.constant 0 : index
    %253 = vector.load %arg6[%c8_149, %c0_150, %c0_151] : memref<9x256x256xbf16, #tpu.memory_space<vmem>>, vector<1x256x256xbf16>
    %254 = vector.shape_cast %253 : vector<1x256x256xbf16> to vector<256x256xbf16>
    %cst_152 = arith.constant dense<0.000000e+00> : vector<96x256xf32>
    %255 = tpu.matmul %203, %254, %cst_152 {dimension_numbers = #tpu.dot_dimension_numbers<[1], [0], [0], [1], [0, 0, 1, 1], [], []>} : vector<96x256xbf16>, vector<256x256xbf16>, vector<96x256xf32> -> vector<96x256xf32>
    %256 = vector.shape_cast %255 : vector<96x256xf32> to vector<4x24x256xf32>
    %257 = vector.extract_strided_slice %256 {offsets = [0, 9, 0], sizes = [4, 4, 256], strides = [1, 1, 1]} : vector<4x24x256xf32> to vector<4x4x256xf32>
    %258 = arith.addf %252, %257 : vector<4x4x256xf32>
    %c1_153 = arith.constant 1 : index
    %c0_154 = arith.constant 0 : index
    %c0_155 = arith.constant 0 : index
    %c0_156 = arith.constant 0 : index
    %259 = vector.load %arg10[%c1_153, %c0_154, %c0_155, %c0_156] : memref<2x6x24x256xf32, #tpu.memory_space<vmem>>, vector<1x4x24x256xf32>
    %260 = vector.shape_cast %259 : vector<1x4x24x256xf32> to vector<4x24x256xf32>
    %261 = vector.shape_cast %260 : vector<4x24x256xf32> to vector<96x256xf32>
    %262 = arith.truncf %261 : vector<96x256xf32> to vector<96x256xbf16>
    %c1_157 = arith.constant 1 : index
    %c1_158 = arith.constant 1 : index
    %c0_159 = arith.constant 0 : index
    %c0_160 = arith.constant 0 : index
    %263 = vector.load %arg10[%c1_157, %c1_158, %c0_159, %c0_160] : memref<2x6x24x256xf32, #tpu.memory_space<vmem>>, vector<1x4x24x256xf32>
    %264 = vector.shape_cast %263 : vector<1x4x24x256xf32> to vector<4x24x256xf32>
    %265 = vector.shape_cast %264 : vector<4x24x256xf32> to vector<96x256xf32>
    %266 = arith.truncf %265 : vector<96x256xf32> to vector<96x256xbf16>
    %c1_161 = arith.constant 1 : index
    %c2_162 = arith.constant 2 : index
    %c0_163 = arith.constant 0 : index
    %c0_164 = arith.constant 0 : index
    %267 = vector.load %arg10[%c1_161, %c2_162, %c0_163, %c0_164] : memref<2x6x24x256xf32, #tpu.memory_space<vmem>>, vector<1x4x24x256xf32>
    %268 = vector.shape_cast %267 : vector<1x4x24x256xf32> to vector<4x24x256xf32>
    %269 = vector.shape_cast %268 : vector<4x24x256xf32> to vector<96x256xf32>
    %270 = arith.truncf %269 : vector<96x256xf32> to vector<96x256xbf16>
    %cst_165 = arith.constant 0.000000e+00 : f32
    %271 = vector.broadcast %cst_165 : f32 to vector<4x4x256xf32>
    %c0_166 = arith.constant 0 : index
    %c0_167 = arith.constant 0 : index
    %c0_168 = arith.constant 0 : index
    %272 = vector.load %arg6[%c0_166, %c0_167, %c0_168] : memref<9x256x256xbf16, #tpu.memory_space<vmem>>, vector<1x256x256xbf16>
    %273 = vector.shape_cast %272 : vector<1x256x256xbf16> to vector<256x256xbf16>
    %cst_169 = arith.constant dense<0.000000e+00> : vector<96x256xf32>
    %274 = tpu.matmul %262, %273, %cst_169 {dimension_numbers = #tpu.dot_dimension_numbers<[1], [0], [0], [1], [0, 0, 1, 1], [], []>} : vector<96x256xbf16>, vector<256x256xbf16>, vector<96x256xf32> -> vector<96x256xf32>
    %275 = vector.shape_cast %274 : vector<96x256xf32> to vector<4x24x256xf32>
    %276 = vector.extract_strided_slice %275 {offsets = [0, 7, 0], sizes = [4, 4, 256], strides = [1, 1, 1]} : vector<4x24x256xf32> to vector<4x4x256xf32>
    %277 = arith.addf %271, %276 : vector<4x4x256xf32>
    %c1_170 = arith.constant 1 : index
    %c0_171 = arith.constant 0 : index
    %c0_172 = arith.constant 0 : index
    %278 = vector.load %arg6[%c1_170, %c0_171, %c0_172] : memref<9x256x256xbf16, #tpu.memory_space<vmem>>, vector<1x256x256xbf16>
    %279 = vector.shape_cast %278 : vector<1x256x256xbf16> to vector<256x256xbf16>
    %cst_173 = arith.constant dense<0.000000e+00> : vector<96x256xf32>
    %280 = tpu.matmul %262, %279, %cst_173 {dimension_numbers = #tpu.dot_dimension_numbers<[1], [0], [0], [1], [0, 0, 1, 1], [], []>} : vector<96x256xbf16>, vector<256x256xbf16>, vector<96x256xf32> -> vector<96x256xf32>
    %281 = vector.shape_cast %280 : vector<96x256xf32> to vector<4x24x256xf32>
    %282 = vector.extract_strided_slice %281 {offsets = [0, 8, 0], sizes = [4, 4, 256], strides = [1, 1, 1]} : vector<4x24x256xf32> to vector<4x4x256xf32>
    %283 = arith.addf %277, %282 : vector<4x4x256xf32>
    %c2_174 = arith.constant 2 : index
    %c0_175 = arith.constant 0 : index
    %c0_176 = arith.constant 0 : index
    %284 = vector.load %arg6[%c2_174, %c0_175, %c0_176] : memref<9x256x256xbf16, #tpu.memory_space<vmem>>, vector<1x256x256xbf16>
    %285 = vector.shape_cast %284 : vector<1x256x256xbf16> to vector<256x256xbf16>
    %cst_177 = arith.constant dense<0.000000e+00> : vector<96x256xf32>
    %286 = tpu.matmul %262, %285, %cst_177 {dimension_numbers = #tpu.dot_dimension_numbers<[1], [0], [0], [1], [0, 0, 1, 1], [], []>} : vector<96x256xbf16>, vector<256x256xbf16>, vector<96x256xf32> -> vector<96x256xf32>
    %287 = vector.shape_cast %286 : vector<96x256xf32> to vector<4x24x256xf32>
    %288 = vector.extract_strided_slice %287 {offsets = [0, 9, 0], sizes = [4, 4, 256], strides = [1, 1, 1]} : vector<4x24x256xf32> to vector<4x4x256xf32>
    %289 = arith.addf %283, %288 : vector<4x4x256xf32>
    %c3_178 = arith.constant 3 : index
    %c0_179 = arith.constant 0 : index
    %c0_180 = arith.constant 0 : index
    %290 = vector.load %arg6[%c3_178, %c0_179, %c0_180] : memref<9x256x256xbf16, #tpu.memory_space<vmem>>, vector<1x256x256xbf16>
    %291 = vector.shape_cast %290 : vector<1x256x256xbf16> to vector<256x256xbf16>
    %cst_181 = arith.constant dense<0.000000e+00> : vector<96x256xf32>
    %292 = tpu.matmul %266, %291, %cst_181 {dimension_numbers = #tpu.dot_dimension_numbers<[1], [0], [0], [1], [0, 0, 1, 1], [], []>} : vector<96x256xbf16>, vector<256x256xbf16>, vector<96x256xf32> -> vector<96x256xf32>
    %293 = vector.shape_cast %292 : vector<96x256xf32> to vector<4x24x256xf32>
    %294 = vector.extract_strided_slice %293 {offsets = [0, 7, 0], sizes = [4, 4, 256], strides = [1, 1, 1]} : vector<4x24x256xf32> to vector<4x4x256xf32>
    %295 = arith.addf %289, %294 : vector<4x4x256xf32>
    %c4_182 = arith.constant 4 : index
    %c0_183 = arith.constant 0 : index
    %c0_184 = arith.constant 0 : index
    %296 = vector.load %arg6[%c4_182, %c0_183, %c0_184] : memref<9x256x256xbf16, #tpu.memory_space<vmem>>, vector<1x256x256xbf16>
    %297 = vector.shape_cast %296 : vector<1x256x256xbf16> to vector<256x256xbf16>
    %cst_185 = arith.constant dense<0.000000e+00> : vector<96x256xf32>
    %298 = tpu.matmul %266, %297, %cst_185 {dimension_numbers = #tpu.dot_dimension_numbers<[1], [0], [0], [1], [0, 0, 1, 1], [], []>} : vector<96x256xbf16>, vector<256x256xbf16>, vector<96x256xf32> -> vector<96x256xf32>
    %299 = vector.shape_cast %298 : vector<96x256xf32> to vector<4x24x256xf32>
    %300 = vector.extract_strided_slice %299 {offsets = [0, 8, 0], sizes = [4, 4, 256], strides = [1, 1, 1]} : vector<4x24x256xf32> to vector<4x4x256xf32>
    %301 = arith.addf %295, %300 : vector<4x4x256xf32>
    %c5_186 = arith.constant 5 : index
    %c0_187 = arith.constant 0 : index
    %c0_188 = arith.constant 0 : index
    %302 = vector.load %arg6[%c5_186, %c0_187, %c0_188] : memref<9x256x256xbf16, #tpu.memory_space<vmem>>, vector<1x256x256xbf16>
    %303 = vector.shape_cast %302 : vector<1x256x256xbf16> to vector<256x256xbf16>
    %cst_189 = arith.constant dense<0.000000e+00> : vector<96x256xf32>
    %304 = tpu.matmul %266, %303, %cst_189 {dimension_numbers = #tpu.dot_dimension_numbers<[1], [0], [0], [1], [0, 0, 1, 1], [], []>} : vector<96x256xbf16>, vector<256x256xbf16>, vector<96x256xf32> -> vector<96x256xf32>
    %305 = vector.shape_cast %304 : vector<96x256xf32> to vector<4x24x256xf32>
    %306 = vector.extract_strided_slice %305 {offsets = [0, 9, 0], sizes = [4, 4, 256], strides = [1, 1, 1]} : vector<4x24x256xf32> to vector<4x4x256xf32>
    %307 = arith.addf %301, %306 : vector<4x4x256xf32>
    %c6_190 = arith.constant 6 : index
    %c0_191 = arith.constant 0 : index
    %c0_192 = arith.constant 0 : index
    %308 = vector.load %arg6[%c6_190, %c0_191, %c0_192] : memref<9x256x256xbf16, #tpu.memory_space<vmem>>, vector<1x256x256xbf16>
    %309 = vector.shape_cast %308 : vector<1x256x256xbf16> to vector<256x256xbf16>
    %cst_193 = arith.constant dense<0.000000e+00> : vector<96x256xf32>
    %310 = tpu.matmul %270, %309, %cst_193 {dimension_numbers = #tpu.dot_dimension_numbers<[1], [0], [0], [1], [0, 0, 1, 1], [], []>} : vector<96x256xbf16>, vector<256x256xbf16>, vector<96x256xf32> -> vector<96x256xf32>
    %311 = vector.shape_cast %310 : vector<96x256xf32> to vector<4x24x256xf32>
    %312 = vector.extract_strided_slice %311 {offsets = [0, 7, 0], sizes = [4, 4, 256], strides = [1, 1, 1]} : vector<4x24x256xf32> to vector<4x4x256xf32>
    %313 = arith.addf %307, %312 : vector<4x4x256xf32>
    %c7_194 = arith.constant 7 : index
    %c0_195 = arith.constant 0 : index
    %c0_196 = arith.constant 0 : index
    %314 = vector.load %arg6[%c7_194, %c0_195, %c0_196] : memref<9x256x256xbf16, #tpu.memory_space<vmem>>, vector<1x256x256xbf16>
    %315 = vector.shape_cast %314 : vector<1x256x256xbf16> to vector<256x256xbf16>
    %cst_197 = arith.constant dense<0.000000e+00> : vector<96x256xf32>
    %316 = tpu.matmul %270, %315, %cst_197 {dimension_numbers = #tpu.dot_dimension_numbers<[1], [0], [0], [1], [0, 0, 1, 1], [], []>} : vector<96x256xbf16>, vector<256x256xbf16>, vector<96x256xf32> -> vector<96x256xf32>
    %317 = vector.shape_cast %316 : vector<96x256xf32> to vector<4x24x256xf32>
    %318 = vector.extract_strided_slice %317 {offsets = [0, 8, 0], sizes = [4, 4, 256], strides = [1, 1, 1]} : vector<4x24x256xf32> to vector<4x4x256xf32>
    %319 = arith.addf %313, %318 : vector<4x4x256xf32>
    %c8_198 = arith.constant 8 : index
    %c0_199 = arith.constant 0 : index
    %c0_200 = arith.constant 0 : index
    %320 = vector.load %arg6[%c8_198, %c0_199, %c0_200] : memref<9x256x256xbf16, #tpu.memory_space<vmem>>, vector<1x256x256xbf16>
    %321 = vector.shape_cast %320 : vector<1x256x256xbf16> to vector<256x256xbf16>
    %cst_201 = arith.constant dense<0.000000e+00> : vector<96x256xf32>
    %322 = tpu.matmul %270, %321, %cst_201 {dimension_numbers = #tpu.dot_dimension_numbers<[1], [0], [0], [1], [0, 0, 1, 1], [], []>} : vector<96x256xbf16>, vector<256x256xbf16>, vector<96x256xf32> -> vector<96x256xf32>
    %323 = vector.shape_cast %322 : vector<96x256xf32> to vector<4x24x256xf32>
    %324 = vector.extract_strided_slice %323 {offsets = [0, 9, 0], sizes = [4, 4, 256], strides = [1, 1, 1]} : vector<4x24x256xf32> to vector<4x4x256xf32>
    %325 = arith.addf %319, %324 : vector<4x4x256xf32>
    %cst_202 = arith.constant 0.000000e+00 : f32
    %326 = vector.broadcast %cst_202 : f32 to vector<1x256xf32>
    %cst_203 = arith.constant 0.000000e+00 : f32
    %327 = vector.broadcast %cst_203 : f32 to vector<1x256xf32>
    %328 = vector.shape_cast %258 : vector<4x4x256xf32> to vector<16x256xf32>
    %cst_204 = arith.constant dense<0.000000e+00> : vector<256xf32>
    %329 = vector.multi_reduction <add>, %328, %cst_204 [0] : vector<16x256xf32> to vector<256xf32>
    %330 = vector.shape_cast %329 : vector<256xf32> to vector<1x256xf32>
    %331 = arith.addf %326, %330 : vector<1x256xf32>
    %332 = arith.mulf %328, %328 : vector<16x256xf32>
    %cst_205 = arith.constant dense<0.000000e+00> : vector<256xf32>
    %333 = vector.multi_reduction <add>, %332, %cst_205 [0] : vector<16x256xf32> to vector<256xf32>
    %334 = vector.shape_cast %333 : vector<256xf32> to vector<1x256xf32>
    %335 = arith.addf %327, %334 : vector<1x256xf32>
    %336 = vector.shape_cast %325 : vector<4x4x256xf32> to vector<16x256xf32>
    %cst_206 = arith.constant dense<0.000000e+00> : vector<256xf32>
    %337 = vector.multi_reduction <add>, %336, %cst_206 [0] : vector<16x256xf32> to vector<256xf32>
    %338 = vector.shape_cast %337 : vector<256xf32> to vector<1x256xf32>
    %339 = arith.addf %331, %338 : vector<1x256xf32>
    %340 = arith.mulf %336, %336 : vector<16x256xf32>
    %cst_207 = arith.constant dense<0.000000e+00> : vector<256xf32>
    %341 = vector.multi_reduction <add>, %340, %cst_207 [0] : vector<16x256xf32> to vector<256xf32>
    %342 = vector.shape_cast %341 : vector<256xf32> to vector<1x256xf32>
    %343 = arith.addf %335, %342 : vector<1x256xf32>
    %cst_208 = arith.constant 3.200000e+01 : f32
    %344 = vector.broadcast %cst_208 : f32 to vector<1x256xf32>
    %345 = arith.divf %339, %344 : vector<1x256xf32>
    %cst_209 = arith.constant 3.200000e+01 : f32
    %346 = vector.broadcast %cst_209 : f32 to vector<1x256xf32>
    %347 = arith.divf %343, %346 : vector<1x256xf32>
    %348 = arith.mulf %345, %345 : vector<1x256xf32>
    %349 = arith.subf %347, %348 : vector<1x256xf32>
    %c0_210 = arith.constant 0 : index
    %c0_211 = arith.constant 0 : index
    %350 = vector.load %arg7[%c0_210, %c0_211] : memref<1x256xf32, #tpu.memory_space<vmem>>, vector<1x256xf32>
    %cst_212 = arith.constant 9.99999974E-6 : f32
    %351 = vector.broadcast %cst_212 : f32 to vector<1x256xf32>
    %352 = arith.addf %349, %351 : vector<1x256xf32>
    %353 = math.rsqrt %352 : vector<1x256xf32>
    %354 = arith.mulf %350, %353 : vector<1x256xf32>
    %c0_213 = arith.constant 0 : index
    %c0_214 = arith.constant 0 : index
    %355 = vector.load %arg8[%c0_213, %c0_214] : memref<1x256xf32, #tpu.memory_space<vmem>>, vector<1x256xf32>
    %356 = arith.mulf %345, %354 : vector<1x256xf32>
    %357 = arith.subf %355, %356 : vector<1x256xf32>
    %358 = vector.shape_cast %354 : vector<1x256xf32> to vector<1x1x256xf32>
    %359 = vector.shape_cast %357 : vector<1x256xf32> to vector<1x1x256xf32>
    %360 = vector.broadcast %358 : vector<1x1x256xf32> to vector<4x4x256xf32>
    %361 = arith.mulf %258, %360 : vector<4x4x256xf32>
    %362 = vector.broadcast %359 : vector<1x1x256xf32> to vector<4x4x256xf32>
    %363 = arith.addf %361, %362 : vector<4x4x256xf32>
    %cst_215 = arith.constant 0.000000e+00 : f32
    %364 = vector.broadcast %cst_215 : f32 to vector<4x4x256xf32>
    %365 = arith.maximumf %363, %364 : vector<4x4x256xf32>
    %366 = vector.shape_cast %365 : vector<4x4x256xf32> to vector<16x256xf32>
    %c0_216 = arith.constant 0 : index
    %c0_217 = arith.constant 0 : index
    %c0_218 = arith.constant 0 : index
    %367 = vector.load %arg9[%c0_216, %c0_217, %c0_218] : memref<2x16x256xf32, #tpu.memory_space<vmem>>, vector<1x16x256xf32>
    %368 = vector.shape_cast %367 : vector<1x16x256xf32> to vector<16x256xf32>
    %369 = vector.shape_cast %366 : vector<16x256xf32> to vector<1x16x256xf32>
    tpu.vector_store %arg9[%c0_216, %c0_217, %c0_218], %369 {strides = array<i32>} : memref<2x16x256xf32, #tpu.memory_space<vmem>>, vector<1x16x256xf32>,
    %370 = vector.broadcast %358 : vector<1x1x256xf32> to vector<4x4x256xf32>
    %371 = arith.mulf %325, %370 : vector<4x4x256xf32>
    %372 = vector.broadcast %359 : vector<1x1x256xf32> to vector<4x4x256xf32>
    %373 = arith.addf %371, %372 : vector<4x4x256xf32>
    %cst_219 = arith.constant 0.000000e+00 : f32
    %374 = vector.broadcast %cst_219 : f32 to vector<4x4x256xf32>
    %375 = arith.maximumf %373, %374 : vector<4x4x256xf32>
    %376 = vector.shape_cast %375 : vector<4x4x256xf32> to vector<16x256xf32>
    %c1_220 = arith.constant 1 : index
    %c0_221 = arith.constant 0 : index
    %c0_222 = arith.constant 0 : index
    %377 = vector.load %arg9[%c1_220, %c0_221, %c0_222] : memref<2x16x256xf32, #tpu.memory_space<vmem>>, vector<1x16x256xf32>
    %378 = vector.shape_cast %377 : vector<1x16x256xf32> to vector<16x256xf32>
    %379 = vector.shape_cast %376 : vector<16x256xf32> to vector<1x16x256xf32>
    tpu.vector_store %arg9[%c1_220, %c0_221, %c0_222], %379 {strides = array<i32>} : memref<2x16x256xf32, #tpu.memory_space<vmem>>, vector<1x16x256xf32>,
    return
  }
  func.func @transform_0(%arg0: i32) -> (i32, i32, i32) {
    %c0_i32 = arith.constant 0 : i32
    %c0_i32_0 = arith.constant 0 : i32
    %c0_i32_1 = arith.constant 0 : i32
    %c0_i32_2 = arith.constant 0 : i32
    return %c0_i32, %c0_i32_0, %c0_i32_1 : i32, i32, i32
  }
  func.func @transform_1(%arg0: i32) -> (i32, i32) {
    %c0_i32 = arith.constant 0 : i32
    %c0_i32_0 = arith.constant 0 : i32
    %c0_i32_1 = arith.constant 0 : i32
    return %c0_i32, %c0_i32_0 : i32, i32
  }
  func.func @transform_2(%arg0: i32) -> (i32, i32, i32) {
    %c0_i32 = arith.constant 0 : i32
    %c0_i32_0 = arith.constant 0 : i32
    %c0_i32_1 = arith.constant 0 : i32
    %c0_i32_2 = arith.constant 0 : i32
    return %c0_i32, %c0_i32_0, %c0_i32_1 : i32, i32, i32
  }
  func.func @transform_3(%arg0: i32) -> (i32, i32) {
    %c0_i32 = arith.constant 0 : i32
    %c0_i32_0 = arith.constant 0 : i32
    %c0_i32_1 = arith.constant 0 : i32
    return %c0_i32, %c0_i32_0 : i32, i32
  }
  func.func @transform_4(%arg0: i32) -> (i32, i32) {
    %c0_i32 = arith.constant 0 : i32
    %c0_i32_0 = arith.constant 0 : i32
    %c0_i32_1 = arith.constant 0 : i32
    return %c0_i32, %c0_i32_0 : i32, i32
  }
  func.func @transform_5(%arg0: i32) -> (i32, i32, i32) {
    %c0_i32 = arith.constant 0 : i32
    %c0_i32_0 = arith.constant 0 : i32
    %c0_i32_1 = arith.constant 0 : i32
    %c0_i32_2 = arith.constant 0 : i32
    return %c0_i32, %c0_i32_0, %c0_i32_1 : i32, i32, i32
  }
  func.func @transform_6(%arg0: i32) -> (i32, i32) {
    %c0_i32 = arith.constant 0 : i32
    %c0_i32_0 = arith.constant 0 : i32
    %c0_i32_1 = arith.constant 0 : i32
    return %c0_i32, %c0_i32_0 : i32, i32
  }
  func.func @transform_7(%arg0: i32) -> (i32, i32) {
    %c0_i32 = arith.constant 0 : i32
    %c0_i32_0 = arith.constant 0 : i32
    %c0_i32_1 = arith.constant 0 : i32
    return %c0_i32, %c0_i32_0 : i32, i32
  }
  func.func @transform_8(%arg0: i32) -> (i32, i32, i32) {
    %c0_i32 = arith.constant 0 : i32
    %c0_i32_0 = arith.constant 0 : i32
    %c0_i32_1 = arith.constant 0 : i32
    %c0_i32_2 = arith.constant 0 : i32
    return %c0_i32, %c0_i32_0, %c0_i32_1 : i32, i32, i32
  }
}

</mosaic_0001>

<llo_original>
// kernel: tpu_custom_call.1
$region0: #{tpu_custom_call.1}
  #allocation0 [shape = 'u32[]', space=smem, size = 0x4, offset = 0x4, fixed_abs, tag = 'smem constant byte address 0x4 - core index']
  #allocation1 [shape = 'u32[72,128]{1,0:T(1,128)}', space=vmem, size = 0x9000, scoped, tag = 'internal scratch']
  #allocation2 [shape = 'f32[2,6,24,256]{3,2,1,0:T(8,128)}', space=vmem, size = 0x48000, scoped, tag = 'scratch operand']
  %s0 = inlined_call_operand.hbm [shape: f32[2,4,256], index: 0, kind: input, shape index: {}]
  %s1 = inlined_call_operand.vmem [shape: f32[144,4], index: 1, kind: input, shape index: {}]
  %s2 = inlined_call_operand.hbm [shape: bf16[9,256,256], index: 2, kind: input, shape index: {}]
  %s3 = inlined_call_operand.hbm [shape: f32[1,256], index: 3, kind: input, shape index: {}]
  %s4 = inlined_call_operand.hbm [shape: f32[1,256], index: 4, kind: input, shape index: {}]
  %s5 = inlined_call_operand.hbm [shape: bf16[9,256,256], index: 5, kind: input, shape index: {}]
  %s6 = inlined_call_operand.hbm [shape: f32[1,256], index: 6, kind: input, shape index: {}]
  %s7 = inlined_call_operand.hbm [shape: f32[1,256], index: 7, kind: input, shape index: {}]
  %s8 = inlined_call_operand.hbm [shape: f32[2,16,256], index: 8, kind: output, shape index: {}]
  %s9 = sld [smem:[#allocation0]]
  $region70: #{tpu_custom_call.1} parent=0
    _
  %s11 = ssub.s32 1, %s9
  %s12 = scalar_select 0, %s11, %s9
  $region1: #{tpu_custom_call.1} parent=0
    #allocation3 [shape = 'u8[8192]{0}', space=vmem, size = 0x2000, scoped, tag = 'input window, operand 0, single buffered']
    #allocation4 [shape = 's32[1]{0}', space=sflag, size = 0x4, scoped, tag = 'scoped memory for tpu_custom_call.1']
    #allocation5 [shape = 's32[1]{0}', space=sflag, size = 0x4, scoped, tag = 'scoped memory for tpu_custom_call.1']
    #allocation6 [shape = 'u8[1179648]{0}', space=vmem, size = 0x120000, scoped, tag = 'input window, operand 2, single buffered']
    #allocation7 [shape = 's32[1]{0}', space=sflag, size = 0x4, scoped, tag = 'scoped memory for tpu_custom_call.1']
    #allocation8 [shape = 'u8[1024]{0}', space=vmem, size = 0x400, scoped, tag = 'input window, operand 3, single buffered']
    #allocation9 [shape = 'u8[1024]{0}', space=vmem, size = 0x400, scoped, tag = 'input window, operand 4, single buffered']
    #allocation10 [shape = 's32[1]{0}', space=sflag, size = 0x4, scoped, tag = 'scoped memory for tpu_custom_call.1']
    #allocation11 [shape = 'u8[1179648]{0}', space=vmem, size = 0x120000, scoped, tag = 'input window, operand 5, single buffered']
    #allocation12 [shape = 'u8[1024]{0}', space=vmem, size = 0x400, scoped, tag = 'input window, operand 6, single buffered']
    #allocation13 [shape = 's32[1]{0}', space=sflag, size = 0x4, scoped, tag = 'scoped memory for tpu_custom_call.1']
    #allocation14 [shape = 'u8[1024]{0}', space=vmem, size = 0x400, scoped, tag = 'input window, operand 7, single buffered']
    #allocation15 [shape = 'u8[32768]{0}', space=vmem, size = 0x8000, scoped, tag = 'output window, operand 0, single buffered']
    %13 = vsyncpa [#allocation4], 0
    %14 = vsyncpa [#allocation7], 0
    %15 = vsyncpa [#allocation10], 0
    %16 = vsyncpa [#allocation13], 0
    %17 = vsyncpa [#allocation5], 0
    // Predicated region
    $region2: #{tpu_custom_call.1} parent=1 // pred_check
      _
    $region3: #{tpu_custom_call.1} parent=1 // pred_check_branch
      %19 = sbr.rel (0) target = $region5
    $region4: #{tpu_custom_call.1} parent=1 // pred_region
      %21 = vsyncadd [#allocation4], 0
      %s22 = sshll.u32 %s0, 4
      %s23 = int_to_ptr.hbm [resolvable:$true] %s22
      %s24 = sshll.u32 [#allocation3], 4
      %s25 = int_to_ptr.vmem [resolvable:$true] %s24
      %30 = dma.hbm_to_vmem [thread:$0]  %s23, 256, %s25, [#allocation4], 128, 128, 8
    $region5: #{tpu_custom_call.1} parent=1 // pred_fallthru
      _
    // Predicated region
    $region6: #{tpu_custom_call.1} parent=1 // pred_check
      _
    $region7: #{tpu_custom_call.1} parent=1 // pred_check_branch
      %32 = sbr.rel (0) target = $region9
    $region8: #{tpu_custom_call.1} parent=1 // pred_region
      _
    $region9: #{tpu_custom_call.1} parent=1 // pred_fallthru
      _
    // Predicated region
    $region10: #{tpu_custom_call.1} parent=1 // pred_check
      _
    $region11: #{tpu_custom_call.1} parent=1 // pred_check_branch
      %34 = sbr.rel (0) target = $region13
    $region12: #{tpu_custom_call.1} parent=1 // pred_region
      %36 = vsyncadd [#allocation7], 0
      %s37 = sshll.u32 %s2, 4
      %s38 = int_to_ptr.hbm [resolvable:$true] %s37
      %s39 = sshll.u32 [#allocation6], 4
      %s40 = int_to_ptr.vmem [resolvable:$true] %s39
      %45 = dma.hbm_to_vmem [thread:$0]  %s38, 36864, %s40, [#allocation7], 128, 128, 8
    $region13: #{tpu_custom_call.1} parent=1 // pred_fallthru
      _
    // Predicated region
    $region14: #{tpu_custom_call.1} parent=1 // pred_check
      _
    $region15: #{tpu_custom_call.1} parent=1 // pred_check_branch
      %47 = sbr.rel (0) target = $region17
    $region16: #{tpu_custom_call.1} parent=1 // pred_region
      %49 = vsyncadd [#allocation7], 0
      %s51 = sshll.u32 %s3, 4
      %s52 = int_to_ptr.hbm [resolvable:$true] %s51
      %s53 = sshll.u32 [#allocation8], 4
      %s54 = int_to_ptr.vmem [resolvable:$true] %s53
      %56 = dma.hbm_to_vmem [thread:$0]  %s52, 32, %s54, [#allocation7]
    $region17: #{tpu_custom_call.1} parent=1 // pred_fallthru
      _
    // Predicated region
    $region18: #{tpu_custom_call.1} parent=1 // pred_check
      _
    $region19: #{tpu_custom_call.1} parent=1 // pred_check_branch
      %58 = sbr.rel (0) target = $region21
    $region20: #{tpu_custom_call.1} parent=1 // pred_region
      %60 = vsyncadd [#allocation10], 0
      %s62 = sshll.u32 %s4, 4
      %s63 = int_to_ptr.hbm [resolvable:$true] %s62
      %s64 = sshll.u32 [#allocation9], 4
      %s65 = int_to_ptr.vmem [resolvable:$true] %s64
      %67 = dma.hbm_to_vmem [thread:$0]  %s63, 32, %s65, [#allocation10]
    $region21: #{tpu_custom_call.1} parent=1 // pred_fallthru
      _
    // Predicated region
    $region22: #{tpu_custom_call.1} parent=1 // pred_check
      _
    $region23: #{tpu_custom_call.1} parent=1 // pred_check_branch
      %69 = sbr.rel (0) target = $region25
    $region24: #{tpu_custom_call.1} parent=1 // pred_region
      %71 = vsyncadd [#allocation10], 0
      %s72 = sshll.u32 %s5, 4
      %s73 = int_to_ptr.hbm [resolvable:$true] %s72
      %s74 = sshll.u32 [#allocation11], 4
      %s75 = int_to_ptr.vmem [resolvable:$true] %s74
      %80 = dma.hbm_to_vmem [thread:$0]  %s73, 36864, %s75, [#allocation10], 128, 128, 8
    $region25: #{tpu_custom_call.1} parent=1 // pred_fallthru
      _
    // Predicated region
    $region26: #{tpu_custom_call.1} parent=1 // pred_check
      _
    $region27: #{tpu_custom_call.1} parent=1 // pred_check_branch
      %82 = sbr.rel (0) target = $region29
    $region28: #{tpu_custom_call.1} parent=1 // pred_region
      %84 = vsyncadd [#allocation13], 0
      %s86 = sshll.u32 %s6, 4
      %s87 = int_to_ptr.hbm [resolvable:$true] %s86
      %s88 = sshll.u32 [#allocation12], 4
      %s89 = int_to_ptr.vmem [resolvable:$true] %s88
      %91 = dma.hbm_to_vmem [thread:$0]  %s87, 32, %s89, [#allocation13]
    $region29: #{tpu_custom_call.1} parent=1 // pred_fallthru
      _
    // Predicated region
    $region30: #{tpu_custom_call.1} parent=1 // pred_check
      _
    $region31: #{tpu_custom_call.1} parent=1 // pred_check_branch
      %93 = sbr.rel (0) target = $region33
    $region32: #{tpu_custom_call.1} parent=1 // pred_region
      %95 = vsyncadd [#allocation13], 0
      %s97 = sshll.u32 %s7, 4
      %s98 = int_to_ptr.hbm [resolvable:$true] %s97
      %s99 = sshll.u32 [#allocation14], 4
      %s100 = int_to_ptr.vmem [resolvable:$true] %s99
      %102 = dma.hbm_to_vmem [thread:$0]  %s98, 32, %s100, [#allocation13]
    $region33: #{tpu_custom_call.1} parent=1 // pred_fallthru
      _
    // Predicated region
    $region34: #{tpu_custom_call.1} parent=1 // pred_check
      _
    $region35: #{tpu_custom_call.1} parent=1 // pred_check_branch
      %104 = sbr.rel (0) target = $region37
    $region36: #{tpu_custom_call.1} parent=1 // pred_region
      %106 = dma.done [#allocation4], 256
    $region37: #{tpu_custom_call.1} parent=1 // pred_fallthru
      _
    // Predicated region
    $region38: #{tpu_custom_call.1} parent=1 // pred_check
      _
    $region39: #{tpu_custom_call.1} parent=1 // pred_check_branch
      %108 = sbr.rel (0) target = $region41
    $region40: #{tpu_custom_call.1} parent=1 // pred_region
      %110 = dma.done [#allocation7], 36864
    $region41: #{tpu_custom_call.1} parent=1 // pred_fallthru
      _
    // Predicated region
    $region42: #{tpu_custom_call.1} parent=1 // pred_check
      _
    $region43: #{tpu_custom_call.1} parent=1 // pred_check_branch
      %112 = sbr.rel (0) target = $region45
    $region44: #{tpu_custom_call.1} parent=1 // pred_region
      %114 = dma.done [#allocation7], 32
    $region45: #{tpu_custom_call.1} parent=1 // pred_fallthru
      _
    // Predicated region
    $region46: #{tpu_custom_call.1} parent=1 // pred_check
      _
    $region47: #{tpu_custom_call.1} parent=1 // pred_check_branch
      %116 = sbr.rel (0) target = $region49
    $region48: #{tpu_custom_call.1} parent=1 // pred_region
      %118 = dma.done [#allocation10], 32
    $region49: #{tpu_custom_call.1} parent=1 // pred_fallthru
      _
    // Predicated region
    $region50: #{tpu_custom_call.1} parent=1 // pred_check
      _
    $region51: #{tpu_custom_call.1} parent=1 // pred_check_branch
      %120 = sbr.rel (0) target = $region53
    $region52: #{tpu_custom_call.1} parent=1 // pred_region
      %122 = dma.done [#allocation10], 36864
    $region53: #{tpu_custom_call.1} parent=1 // pred_fallthru
      _
    // Predicated region
    $region54: #{tpu_custom_call.1} parent=1 // pred_check
      _
    $region55: #{tpu_custom_call.1} parent=1 // pred_check_branch
      %124 = sbr.rel (0) target = $region57
    $region56: #{tpu_custom_call.1} parent=1 // pred_region
      %126 = dma.done [#allocation13], 32
    $region57: #{tpu_custom_call.1} parent=1 // pred_fallthru
      _
    // Predicated region
    $region58: #{tpu_custom_call.1} parent=1 // pred_check
      _
    $region59: #{tpu_custom_call.1} parent=1 // pred_check_branch
      %128 = sbr.rel (0) target = $region61
    $region60: #{tpu_custom_call.1} parent=1 // pred_region
      %130 = dma.done [#allocation13], 32
    $region61: #{tpu_custom_call.1} parent=1 // pred_fallthru
      _
    %131 = vst [vmem:[#allocation2] sm:$0xff] 0.0
    %132 = vst [vmem:[#allocation2 + $0x8] sm:$0xff] 0.0
    %133 = vst [vmem:[#allocation2 + $0x10] sm:$0xff] 0.0
    %134 = vst [vmem:[#allocation2 + $0x18] sm:$0xff] 0.0
    %135 = vst [vmem:[#allocation2 + $0x20] sm:$0xff] 0.0
    %136 = vst [vmem:[#allocation2 + $0x28] sm:$0xff] 0.0
    %137 = vst [vmem:[#allocation2 + $0x30] sm:$0xff] 0.0
    %138 = vst [vmem:[#allocation2 + $0x38] sm:$0xff] 0.0
    %139 = vst [vmem:[#allocation2 + $0x40] sm:$0xff] 0.0
    %140 = vst [vmem:[#allocation2 + $0x48] sm:$0xff] 0.0
    %141 = vst [vmem:[#allocation2 + $0x50] sm:$0xff] 0.0
    %142 = vst [vmem:[#allocation2 + $0x58] sm:$0xff] 0.0
    %143 = vst [vmem:[#allocation2 + $0x60] sm:$0xff] 0.0
    %144 = vst [vmem:[#allocation2 + $0x68] sm:$0xff] 0.0
    %145 = vst [vmem:[#allocation2 + $0x70] sm:$0xff] 0.0
    %146 = vst [vmem:[#allocation2 + $0x78] sm:$0xff] 0.0
    %147 = vst [vmem:[#allocation2 + $0x80] sm:$0xff] 0.0
    %148 = vst [vmem:[#allocation2 + $0x88] sm:$0xff] 0.0
    %149 = vst [vmem:[#allocation2 + $0x90] sm:$0xff] 0.0
    %150 = vst [vmem:[#allocation2 + $0x98] sm:$0xff] 0.0
    %151 = vst [vmem:[#allocation2 + $0xa0] sm:$0xff] 0.0
    %152 = vst [vmem:[#allocation2 + $0xa8] sm:$0xff] 0.0
    %153 = vst [vmem:[#allocation2 + $0xb0] sm:$0xff] 0.0
    %154 = vst [vmem:[#allocation2 + $0xb8] sm:$0xff] 0.0
    %155 = vst [vmem:[#allocation2 + $0xc0] sm:$0xff] 0.0
    %156 = vst [vmem:[#allocation2 + $0xc8] sm:$0xff] 0.0
    %157 = vst [vmem:[#allocation2 + $0xd0] sm:$0xff] 0.0
    %158 = vst [vmem:[#allocation2 + $0xd8] sm:$0xff] 0.0
    %159 = vst [vmem:[#allocation2 + $0xe0] sm:$0xff] 0.0
    %160 = vst [vmem:[#allocation2 + $0xe8] sm:$0xff] 0.0
    %161 = vst [vmem:[#allocation2 + $0xf0] sm:$0xff] 0.0
    %162 = vst [vmem:[#allocation2 + $0xf8] sm:$0xff] 0.0
    %163 = vst [vmem:[#allocation2 + $0x100] sm:$0xff] 0.0
    %164 = vst [vmem:[#allocation2 + $0x108] sm:$0xff] 0.0
    %165 = vst [vmem:[#allocation2 + $0x110] sm:$0xff] 0.0
    %166 = vst [vmem:[#allocation2 + $0x118] sm:$0xff] 0.0
    %167 = vst [vmem:[#allocation2 + $0x120] sm:$0xff] 0.0
    %168 = vst [vmem:[#allocation2 + $0x128] sm:$0xff] 0.0
    %169 = vst [vmem:[#allocation2 + $0x130] sm:$0xff] 0.0
    %170 = vst [vmem:[#allocation2 + $0x138] sm:$0xff] 0.0
    %171 = vst [vmem:[#allocation2 + $0x140] sm:$0xff] 0.0
    %172 = vst [vmem:[#allocation2 + $0x148] sm:$0xff] 0.0
    %173 = vst [vmem:[#allocation2 + $0x150] sm:$0xff] 0.0
    %174 = vst [vmem:[#allocation2 + $0x158] sm:$0xff] 0.0
    %175 = vst [vmem:[#allocation2 + $0x160] sm:$0xff] 0.0
    %176 = vst [vmem:[#allocation2 + $0x168] sm:$0xff] 0.0
    %177 = vst [vmem:[#allocation2 + $0x170] sm:$0xff] 0.0
    %178 = vst [vmem:[#allocation2 + $0x178] sm:$0xff] 0.0
    %179 = vst [vmem:[#allocation2 + $0x180] sm:$0xff] 0.0
    %180 = vst [vmem:[#allocation2 + $0x188] sm:$0xff] 0.0
    %181 = vst [vmem:[#allocation2 + $0x190] sm:$0xff] 0.0
    %182 = vst [vmem:[#allocation2 + $0x198] sm:$0xff] 0.0
    %183 = vst [vmem:[#allocation2 + $0x1a0] sm:$0xff] 0.0
    %184 = vst [vmem:[#allocation2 + $0x1a8] sm:$0xff] 0.0
    %185 = vst [vmem:[#allocation2 + $0x1b0] sm:$0xff] 0.0
    %186 = vst [vmem:[#allocation2 + $0x1b8] sm:$0xff] 0.0
    %187 = vst [vmem:[#allocation2 + $0x1c0] sm:$0xff] 0.0
    %188 = vst [vmem:[#allocation2 + $0x1c8] sm:$0xff] 0.0
    %189 = vst [vmem:[#allocation2 + $0x1d0] sm:$0xff] 0.0
    %190 = vst [vmem:[#allocation2 + $0x1d8] sm:$0xff] 0.0
    %191 = vst [vmem:[#allocation2 + $0x1e0] sm:$0xff] 0.0
    %192 = vst [vmem:[#allocation2 + $0x1e8] sm:$0xff] 0.0
    %193 = vst [vmem:[#allocation2 + $0x1f0] sm:$0xff] 0.0
    %194 = vst [vmem:[#allocation2 + $0x1f8] sm:$0xff] 0.0
    %195 = vst [vmem:[#allocation2 + $0x200] sm:$0xff] 0.0
    %196 = vst [vmem:[#allocation2 + $0x208] sm:$0xff] 0.0
    %197 = vst [vmem:[#allocation2 + $0x210] sm:$0xff] 0.0
    %198 = vst [vmem:[#allocation2 + $0x218] sm:$0xff] 0.0
    %199 = vst [vmem:[#allocation2 + $0x220] sm:$0xff] 0.0
    %200 = vst [vmem:[#allocation2 + $0x228] sm:$0xff] 0.0
    %201 = vst [vmem:[#allocation2 + $0x230] sm:$0xff] 0.0
    %202 = vst [vmem:[#allocation2 + $0x238] sm:$0xff] 0.0
    %v203 = vld [vmem:[%s1] sm:$0xff]
    %v204 = vld [vmem:[%s1 + $0x8] sm:$0xff]
    %v205 = vld [vmem:[%s1 + $0x10] sm:$0xff]
    %v206 = vld [vmem:[%s1 + $0x18] sm:$0xff]
    %v207 = vld [vmem:[%s1 + $0x20] sm:$0xff]
    %v208 = vld [vmem:[%s1 + $0x28] sm:$0xff]
    %v209 = vld [vmem:[%s1 + $0x30] sm:$0xff]
    %v210 = vld [vmem:[%s1 + $0x38] sm:$0xff]
    %v211 = vld [vmem:[%s1 + $0x40] sm:$0xff]
    %v212 = vld [vmem:[%s1 + $0x48] sm:$0xff]
    %v213 = vld [vmem:[%s1 + $0x50] sm:$0xff]
    %v214 = vld [vmem:[%s1 + $0x58] sm:$0xff]
    %v215 = vld [vmem:[%s1 + $0x60] sm:$0xff]
    %v216 = vld [vmem:[%s1 + $0x68] sm:$0xff]
    %v217 = vld [vmem:[%s1 + $0x70] sm:$0xff]
    %v218 = vld [vmem:[%s1 + $0x78] sm:$0xff]
    %v219 = vld [vmem:[%s1 + $0x80] sm:$0xff]
    %v220 = vld [vmem:[%s1 + $0x88] sm:$0xff]
    %v221 = vld [vmem:[#allocation3] sm:$0xff]
    %223 = vst [vmem:[#allocation1] ss:$2 sm:$0xff] %v221
    %v224 = vld.sshfl [vmem:[#allocation1] sm:$0xff pattern:$0x75316420]
    %v225 = vld.sshfl [vmem:[#allocation1 + $0x8] sm:$0xff pattern:$0x75316420]
    %vm226 = vcmask 31744
    %v228 = vsel %vm226, %v203, 0
    %v231 = vsel %vm226, %v204, 0
    %v234 = vsel %vm226, %v205, 0
    %v237 = vsel %vm226, %v206, 0
    %v240 = vsel %vm226, %v207, 0
    %v243 = vsel %vm226, %v208, 0
    %v246 = vsel %vm226, %v209, 0
    %v249 = vsel %vm226, %v210, 0
    %v252 = vsel %vm226, %v211, 0
    %v255 = vsel %vm226, %v212, 0
    %v258 = vsel %vm226, %v213, 0
    %v261 = vsel %vm226, %v214, 0
    %v264 = vsel %vm226, %v215, 0
    %v267 = vsel %vm226, %v216, 0
    %v270 = vsel %vm226, %v217, 0
    %v273 = vsel %vm226, %v218, 0
    %v276 = vsel %vm226, %v219, 0
    %v279 = vsel %vm226, %v220, 0
    %vm281 = vcmask 1043456
    %v282 = vsel %vm281, %v224, 0
    %v284 = vsel %vm281, %v225, 0
    %286 = vmatpush.msra.mxu0 0.0
    %287 = vmatpush.msra.mxu0 0.0
    %288 = vmatpush.msra.mxu0 0.0
    %289 = vmatpush.msra.mxu0 0.0
    %290 = vmatpush.msra.mxu0 0.0
    %291 = vmatpush.msra.mxu0 0.0
    %292 = vmatpush.msra.mxu0 0.0
    %293 = vmatpush.msra.mxu0 0.0
    %294 = vmatpush.msra.mxu0 0.0
    %295 = vmatpush.msra.mxu0 0.0
    %296 = vmatpush.msra.mxu0 0.0
    %297 = vmatpush.msra.mxu0 0.0
    %298 = vmatpush.msra.mxu0 0.0
    %299 = vmatpush.msra.mxu0 0.0
    %300 = vmatpush.msra.mxu0 0.0
    %301 = vmatpush.msra.mxu0 %v282
    %302 = vmatmul.f32.gmra.mxu0 %v228
    %v303 = vpop.f32.mrf.mxu0
    %v304 = vadd.f32 0.0, %v303
    %305 = vmatmul.f32.gmra.mxu0 %v231
    %v306 = vpop.f32.mrf.mxu0
    %v307 = vadd.f32 0.0, %v306
    %308 = vmatmul.f32.gmra.mxu0 %v234
    %v309 = vpop.f32.mrf.mxu0
    %v310 = vadd.f32 0.0, %v309
    %311 = vmatmul.f32.gmra.mxu0 %v237
    %v312 = vpop.f32.mrf.mxu0
    %v313 = vadd.f32 0.0, %v312
    %314 = vmatmul.f32.gmra.mxu0 %v240
    %v315 = vpop.f32.mrf.mxu0
    %v316 = vadd.f32 0.0, %v315
    %317 = vmatmul.f32.gmra.mxu0 %v243
    %v318 = vpop.f32.mrf.mxu0
    %v319 = vadd.f32 0.0, %v318
    %320 = vmatmul.f32.gmra.mxu0 %v246
    %v321 = vpop.f32.mrf.mxu0
    %v322 = vadd.f32 0.0, %v321
    %323 = vmatmul.f32.gmra.mxu0 %v249
    %v324 = vpop.f32.mrf.mxu0
    %v325 = vadd.f32 0.0, %v324
    %326 = vmatmul.f32.gmra.mxu0 %v252
    %v327 = vpop.f32.mrf.mxu0
    %v328 = vadd.f32 0.0, %v327
    %329 = vmatmul.f32.gmra.mxu0 %v255
    %v330 = vpop.f32.mrf.mxu0
    %v331 = vadd.f32 0.0, %v330
    %332 = vmatmul.f32.gmra.mxu0 %v258
    %v333 = vpop.f32.mrf.mxu0
    %v334 = vadd.f32 0.0, %v333
    %335 = vmatmul.f32.gmra.mxu0 %v261
    %v336 = vpop.f32.mrf.mxu0
    %v337 = vadd.f32 0.0, %v336
    %338 = vmatmul.f32.gmra.mxu0 %v264
    %v339 = vpop.f32.mrf.mxu0
    %v340 = vadd.f32 0.0, %v339
    %341 = vmatmul.f32.gmra.mxu0 %v267
    %v342 = vpop.f32.mrf.mxu0
    %v343 = vadd.f32 0.0, %v342
    %344 = vmatmul.f32.gmra.mxu0 %v270
    %v345 = vpop.f32.mrf.mxu0
    %v346 = vadd.f32 0.0, %v345
    %347 = vmatmul.f32.gmra.mxu0 %v273
    %v348 = vpop.f32.mrf.mxu0
    %v349 = vadd.f32 0.0, %v348
    %350 = vmatmul.f32.gmra.mxu0 %v276
    %v351 = vpop.f32.mrf.mxu0
    %v352 = vadd.f32 0.0, %v351
    %353 = vmatmul.f32.gmra.mxu0 %v279
    %v354 = vpop.f32.mrf.mxu0
    %v355 = vadd.f32 0.0, %v354
    %356 = vdwg.mxu0
    %357 = vmatpush.msra.mxu0 0.0
    %358 = vmatpush.msra.mxu0 0.0
    %359 = vmatpush.msra.mxu0 0.0
    %360 = vmatpush.msra.mxu0 0.0
    %361 = vmatpush.msra.mxu0 0.0
    %362 = vmatpush.msra.mxu0 0.0
    %363 = vmatpush.msra.mxu0 0.0
    %364 = vmatpush.msra.mxu0 0.0
    %365 = vmatpush.msra.mxu0 0.0
    %366 = vmatpush.msra.mxu0 0.0
    %367 = vmatpush.msra.mxu0 0.0
    %368 = vmatpush.msra.mxu0 0.0
    %369 = vmatpush.msra.mxu0 0.0
    %370 = vmatpush.msra.mxu0 0.0
    %371 = vmatpush.msra.mxu0 0.0
    %372 = vmatpush.msra.mxu0 %v284
    %373 = vmatmul.f32.gmra.mxu0 %v228
    %v374 = vpop.f32.mrf.mxu0
    %v375 = vadd.f32 0.0, %v374
    %376 = vmatmul.f32.gmra.mxu0 %v231
    %v377 = vpop.f32.mrf.mxu0
    %v378 = vadd.f32 0.0, %v377
    %379 = vmatmul.f32.gmra.mxu0 %v234
    %v380 = vpop.f32.mrf.mxu0
    %v381 = vadd.f32 0.0, %v380
    %382 = vmatmul.f32.gmra.mxu0 %v237
    %v383 = vpop.f32.mrf.mxu0
    %v384 = vadd.f32 0.0, %v383
    %385 = vmatmul.f32.gmra.mxu0 %v240
    %v386 = vpop.f32.mrf.mxu0
    %v387 = vadd.f32 0.0, %v386
    %388 = vmatmul.f32.gmra.mxu0 %v243
    %v389 = vpop.f32.mrf.mxu0
    %v390 = vadd.f32 0.0, %v389
    %391 = vmatmul.f32.gmra.mxu0 %v246
    %v392 = vpop.f32.mrf.mxu0
    %v393 = vadd.f32 0.0, %v392
    %394 = vmatmul.f32.gmra.mxu0 %v249
    %v395 = vpop.f32.mrf.mxu0
    %v396 = vadd.f32 0.0, %v395
    %397 = vmatmul.f32.gmra.mxu0 %v252
    %v398 = vpop.f32.mrf.mxu0
    %v399 = vadd.f32 0.0, %v398
    %400 = vmatmul.f32.gmra.mxu0 %v255
    %v401 = vpop.f32.mrf.mxu0
    %v402 = vadd.f32 0.0, %v401
    %403 = vmatmul.f32.gmra.mxu0 %v258
    %v404 = vpop.f32.mrf.mxu0
    %v405 = vadd.f32 0.0, %v404
    %406 = vmatmul.f32.gmra.mxu0 %v261
    %v407 = vpop.f32.mrf.mxu0
    %v408 = vadd.f32 0.0, %v407
    %409 = vmatmul.f32.gmra.mxu0 %v264
    %v410 = vpop.f32.mrf.mxu0
    %v411 = vadd.f32 0.0, %v410
    %412 = vmatmul.f32.gmra.mxu0 %v267
    %v413 = vpop.f32.mrf.mxu0
    %v414 = vadd.f32 0.0, %v413
    %415 = vmatmul.f32.gmra.mxu0 %v270
    %v416 = vpop.f32.mrf.mxu0
    %v417 = vadd.f32 0.0, %v416
    %418 = vmatmul.f32.gmra.mxu0 %v273
    %v419 = vpop.f32.mrf.mxu0
    %v420 = vadd.f32 0.0, %v419
    %421 = vmatmul.f32.gmra.mxu0 %v276
    %v422 = vpop.f32.mrf.mxu0
    %v423 = vadd.f32 0.0, %v422
    %424 = vmatmul.f32.gmra.mxu0 %v279
    %v425 = vpop.f32.mrf.mxu0
    %v426 = vadd.f32 0.0, %v425
    %427 = vdwg.mxu0
    %v428 = vpack.c.bf16 %v307, %v304
    %v429 = vpack.c.bf16 %v378, %v375
    %v430 = vpack.c.bf16 %v313, %v310
    %v431 = vpack.c.bf16 %v384, %v381
    %v432 = vpack.c.bf16 %v319, %v316
    %v433 = vpack.c.bf16 %v390, %v387
    %v434 = vpack.c.bf16 %v325, %v322
    %v435 = vpack.c.bf16 %v396, %v393
    %v436 = vpack.c.bf16 %v331, %v328
    %v437 = vpack.c.bf16 %v402, %v399
    %v438 = vpack.c.bf16 %v337, %v334
    %v439 = vpack.c.bf16 %v408, %v405
    %v440 = vpack.c.bf16 %v316, %v313
    %v441 = vpack.c.bf16 %v387, %v384
    %v442 = vpack.c.bf16 %v322, %v319
    %v443 = vpack.c.bf16 %v393, %v390
    %v444 = vpack.c.bf16 %v328, %v325
    %v445 = vpack.c.bf16 %v399, %v396
    %v446 = vpack.c.bf16 %v334, %v331
    %v447 = vpack.c.bf16 %v405, %v402
    %v448 = vpack.c.bf16 %v340, %v337
    %v449 = vpack.c.bf16 %v411, %v408
    %v450 = vpack.c.bf16 %v346, %v343
    %v451 = vpack.c.bf16 %v417, %v414
    %v452 = vpack.c.bf16 %v343, %v340
    %v453 = vpack.c.bf16 %v414, %v411
    %v454 = vpack.c.bf16 %v349, %v346
    %v455 = vpack.c.bf16 %v420, %v417
    %v456 = vpack.c.bf16 %v355, %v352
    %v457 = vpack.c.bf16 %v426, %v423
    %v458 = vld [vmem:[#allocation6] sm:$0xff]
    %v459 = vld [vmem:[#allocation6 + $0x8] sm:$0xff]
    %v460 = vld [vmem:[#allocation6 + $0x10] sm:$0xff]
    %v461 = vld [vmem:[#allocation6 + $0x18] sm:$0xff]
    %v462 = vld [vmem:[#allocation6 + $0x20] sm:$0xff]
    %v463 = vld [vmem:[#allocation6 + $0x28] sm:$0xff]
    %v464 = vld [vmem:[#allocation6 + $0x30] sm:$0xff]
    %v465 = vld [vmem:[#allocation6 + $0x38] sm:$0xff]
    %v466 = vld [vmem:[#allocation6 + $0x40] sm:$0xff]
    %v467 = vld [vmem:[#allocation6 + $0x48] sm:$0xff]
    %v468 = vld [vmem:[#allocation6 + $0x50] sm:$0xff]
    %v469 = vld [vmem:[#allocation6 + $0x58] sm:$0xff]
    %v470 = vld [vmem:[#allocation6 + $0x60] sm:$0xff]
    %v471 = vld [vmem:[#allocation6 + $0x68] sm:$0xff]
    %v472 = vld [vmem:[#allocation6 + $0x70] sm:$0xff]
    %v473 = vld [vmem:[#allocation6 + $0x78] sm:$0xff]
    %v474 = vld [vmem:[#allocation6 + $0x80] sm:$0xff]
    %v475 = vld [vmem:[#allocation6 + $0x88] sm:$0xff]
    %v476 = vld [vmem:[#allocation6 + $0x90] sm:$0xff]
    %v477 = vld [vmem:[#allocation6 + $0x98] sm:$0xff]
    %v478 = vld [vmem:[#allocation6 + $0xa0] sm:$0xff]
    %v479 = vld [vmem:[#allocation6 + $0xa8] sm:$0xff]
    %v480 = vld [vmem:[#allocation6 + $0xb0] sm:$0xff]
    %v481 = vld [vmem:[#allocation6 + $0xb8] sm:$0xff]
    %v482 = vld [vmem:[#allocation6 + $0xc0] sm:$0xff]
    %v483 = vld [vmem:[#allocation6 + $0xc8] sm:$0xff]
    %v484 = vld [vmem:[#allocation6 + $0xd0] sm:$0xff]
    %v485 = vld [vmem:[#allocation6 + $0xd8] sm:$0xff]
    %v486 = vld [vmem:[#allocation6 + $0xe0] sm:$0xff]
    %v487 = vld [vmem:[#allocation6 + $0xe8] sm:$0xff]
    %v488 = vld [vmem:[#allocation6 + $0xf0] sm:$0xff]
    %v489 = vld [vmem:[#allocation6 + $0xf8] sm:$0xff]
    %v522 = vunpack.c.l.b16 %v458
    %v523 = vunpack.c.h.b16 %v458
    %v524 = vunpack.c.l.b16 %v459
    %v525 = vunpack.c.h.b16 %v459
    %v526 = vunpack.c.l.b16 %v460
    %v527 = vunpack.c.h.b16 %v460
    %v528 = vunpack.c.l.b16 %v461
    %v529 = vunpack.c.h.b16 %v461
    %v530 = vunpack.c.l.b16 %v462
    %v531 = vunpack.c.h.b16 %v462
    %v532 = vunpack.c.l.b16 %v463
    %v533 = vunpack.c.h.b16 %v463
    %v534 = vunpack.c.l.b16 %v464
    %v535 = vunpack.c.h.b16 %v464
    %v536 = vunpack.c.l.b16 %v465
    %v537 = vunpack.c.h.b16 %v465
    %v538 = vunpack.c.l.b16 %v466
    %v539 = vunpack.c.h.b16 %v466
    %v540 = vunpack.c.l.b16 %v467
    %v541 = vunpack.c.h.b16 %v467
    %v542 = vunpack.c.l.b16 %v468
    %v543 = vunpack.c.h.b16 %v468
    %v544 = vunpack.c.l.b16 %v469
    %v545 = vunpack.c.h.b16 %v469
    %v546 = vunpack.c.l.b16 %v470
    %v547 = vunpack.c.h.b16 %v470
    %v548 = vunpack.c.l.b16 %v471
    %v549 = vunpack.c.h.b16 %v471
    %v550 = vunpack.c.l.b16 %v472
    %v551 = vunpack.c.h.b16 %v472
    %v552 = vunpack.c.l.b16 %v473
    %v553 = vunpack.c.h.b16 %v473
    %v554 = vunpack.c.l.b16 %v474
    %v555 = vunpack.c.h.b16 %v474
    %v556 = vunpack.c.l.b16 %v475
    %v557 = vunpack.c.h.b16 %v475
    %v558 = vunpack.c.l.b16 %v476
    %v559 = vunpack.c.h.b16 %v476
    %v560 = vunpack.c.l.b16 %v477
    %v561 = vunpack.c.h.b16 %v477
    %v562 = vunpack.c.l.b16 %v478
    %v563 = vunpack.c.h.b16 %v478
    %v564 = vunpack.c.l.b16 %v479
    %v565 = vunpack.c.h.b16 %v479
    %v566 = vunpack.c.l.b16 %v480
    %v567 = vunpack.c.h.b16 %v480
    %v568 = vunpack.c.l.b16 %v481
    %v569 = vunpack.c.h.b16 %v481
    %v570 = vunpack.c.l.b16 %v482
    %v571 = vunpack.c.h.b16 %v482
    %v572 = vunpack.c.l.b16 %v483
    %v573 = vunpack.c.h.b16 %v483
    %v574 = vunpack.c.l.b16 %v484
    %v575 = vunpack.c.h.b16 %v484
    %v576 = vunpack.c.l.b16 %v485
    %v577 = vunpack.c.h.b16 %v485
    %v578 = vunpack.c.l.b16 %v486
    %v579 = vunpack.c.h.b16 %v486
    %v580 = vunpack.c.l.b16 %v487
    %v581 = vunpack.c.h.b16 %v487
    %v582 = vunpack.c.l.b16 %v488
    %v583 = vunpack.c.h.b16 %v488
    %v584 = vunpack.c.l.b16 %v489
    %v585 = vunpack.c.h.b16 %v489
    %v586 = vpack.c.b16 %v524, %v522
    %v587 = vpack.c.b16 %v525, %v523
    %v588 = vpack.c.b16 %v528, %v526
    %v589 = vpack.c.b16 %v529, %v527
    %v590 = vpack.c.b16 %v532, %v530
    %v591 = vpack.c.b16 %v533, %v531
    %v592 = vpack.c.b16 %v536, %v534
    %v593 = vpack.c.b16 %v537, %v535
    %v594 = vpack.c.b16 %v540, %v538
    %v595 = vpack.c.b16 %v541, %v539
    %v596 = vpack.c.b16 %v544, %v542
    %v597 = vpack.c.b16 %v545, %v543
    %v598 = vpack.c.b16 %v548, %v546
    %v599 = vpack.c.b16 %v549, %v547
    %v600 = vpack.c.b16 %v552, %v550
    %v601 = vpack.c.b16 %v553, %v551
    %v602 = vpack.c.b16 %v556, %v554
    %v603 = vpack.c.b16 %v557, %v555
    %v604 = vpack.c.b16 %v560, %v558
    %v605 = vpack.c.b16 %v561, %v559
    %v606 = vpack.c.b16 %v564, %v562
    %v607 = vpack.c.b16 %v565, %v563
    %v608 = vpack.c.b16 %v568, %v566
    %v609 = vpack.c.b16 %v569, %v567
    %v610 = vpack.c.b16 %v572, %v570
    %v611 = vpack.c.b16 %v573, %v571
    %v612 = vpack.c.b16 %v576, %v574
    %v613 = vpack.c.b16 %v577, %v575
    %v614 = vpack.c.b16 %v580, %v578
    %v615 = vpack.c.b16 %v581, %v579
    %v616 = vpack.c.b16 %v584, %v582
    %v617 = vpack.c.b16 %v585, %v583
    %650 = vmatpush.bf16.msra.mxu0 %v600
    %651 = vmatpush.bf16.msra.mxu0 %v598
    %652 = vmatpush.bf16.msra.mxu0 %v596
    %653 = vmatpush.bf16.msra.mxu0 %v594
    %654 = vmatpush.bf16.msra.mxu0 %v592
    %655 = vmatpush.bf16.msra.mxu0 %v590
    %656 = vmatpush.bf16.msra.mxu0 %v588
    %657 = vmatpush.bf16.msra.mxu0 %v586
    %658 = vmatmul.bf16.gmra.mxu0 %v428
    %v659 = vpop.f32.mrf.mxu0
    %v660 = vadd.f32 0.0, %v659
    %v661 = vpop.f32.mrf.mxu0
    %v662 = vadd.f32 0.0, %v661
    %663 = vmatmul.bf16.gmra.mxu0 %v430
    %v664 = vpop.f32.mrf.mxu0
    %v665 = vpop.f32.mrf.mxu0
    %v666 = vadd.f32 0.0, %v665
    %667 = vmatmul.bf16.gmra.mxu0 %v432
    %v668 = vpop.f32.mrf.mxu0
    %v669 = vadd.f32 0.0, %v668
    %v670 = vpop.f32.mrf.mxu0
    %671 = vmatmul.bf16.gmra.mxu0 %v434
    %v672 = vpop.f32.mrf.mxu0
    %v673 = vadd.f32 0.0, %v672
    %v674 = vpop.f32.mrf.mxu0
    %v675 = vadd.f32 0.0, %v674
    %676 = vmatmul.bf16.gmra.mxu0 %v436
    %v677 = vpop.f32.mrf.mxu0
    %v678 = vpop.f32.mrf.mxu0
    %v679 = vadd.f32 0.0, %v678
    %680 = vmatmul.bf16.gmra.mxu0 %v438
    %v681 = vpop.f32.mrf.mxu0
    %v682 = vadd.f32 0.0, %v681
    %v683 = vpop.f32.mrf.mxu0
    %684 = vdwg.mxu0
    %685 = vmatpush.bf16.msra.mxu0 %v616
    %686 = vmatpush.bf16.msra.mxu0 %v614
    %687 = vmatpush.bf16.msra.mxu0 %v612
    %688 = vmatpush.bf16.msra.mxu0 %v610
    %689 = vmatpush.bf16.msra.mxu0 %v608
    %690 = vmatpush.bf16.msra.mxu0 %v606
    %691 = vmatpush.bf16.msra.mxu0 %v604
    %692 = vmatpush.bf16.msra.mxu0 %v602
    %693 = vmatmul.bf16.gmra.mxu0 %v429
    %v694 = vpop.f32.mrf.mxu0
    %v695 = vadd.f32 %v660, %v694
    %v696 = vpop.f32.mrf.mxu0
    %v697 = vadd.f32 %v662, %v696
    %698 = vmatmul.bf16.gmra.mxu0 %v431
    %v699 = vpop.f32.mrf.mxu0
    %v700 = vpop.f32.mrf.mxu0
    %v701 = vadd.f32 %v666, %v700
    %702 = vmatmul.bf16.gmra.mxu0 %v433
    %v703 = vpop.f32.mrf.mxu0
    %v704 = vadd.f32 %v669, %v703
    %v705 = vpop.f32.mrf.mxu0
    %706 = vmatmul.bf16.gmra.mxu0 %v435
    %v707 = vpop.f32.mrf.mxu0
    %v708 = vadd.f32 %v673, %v707
    %v709 = vpop.f32.mrf.mxu0
    %v710 = vadd.f32 %v675, %v709
    %711 = vmatmul.bf16.gmra.mxu0 %v437
    %v712 = vpop.f32.mrf.mxu0
    %v713 = vpop.f32.mrf.mxu0
    %v714 = vadd.f32 %v679, %v713
    %715 = vmatmul.bf16.gmra.mxu0 %v439
    %v716 = vpop.f32.mrf.mxu0
    %v717 = vadd.f32 %v682, %v716
    %v718 = vpop.f32.mrf.mxu0
    %719 = vdwg.mxu0
    %720 = vmatpush.bf16.msra.mxu0 %v601
    %721 = vmatpush.bf16.msra.mxu0 %v599
    %722 = vmatpush.bf16.msra.mxu0 %v597
    %723 = vmatpush.bf16.msra.mxu0 %v595
    %724 = vmatpush.bf16.msra.mxu0 %v593
    %725 = vmatpush.bf16.msra.mxu0 %v591
    %726 = vmatpush.bf16.msra.mxu0 %v589
    %727 = vmatpush.bf16.msra.mxu0 %v587
    %728 = vmatmul.bf16.gmra.mxu0 %v428
    %v729 = vpop.f32.mrf.mxu0
    %v730 = vadd.f32 0.0, %v729
    %v731 = vpop.f32.mrf.mxu0
    %v732 = vadd.f32 0.0, %v731
    %733 = vmatmul.bf16.gmra.mxu0 %v430
    %v734 = vpop.f32.mrf.mxu0
    %v735 = vpop.f32.mrf.mxu0
    %v736 = vadd.f32 0.0, %v735
    %737 = vmatmul.bf16.gmra.mxu0 %v432
    %v738 = vpop.f32.mrf.mxu0
    %v739 = vadd.f32 0.0, %v738
    %v740 = vpop.f32.mrf.mxu0
    %741 = vmatmul.bf16.gmra.mxu0 %v434
    %v742 = vpop.f32.mrf.mxu0
    %v743 = vadd.f32 0.0, %v742
    %v744 = vpop.f32.mrf.mxu0
    %v745 = vadd.f32 0.0, %v744
    %746 = vmatmul.bf16.gmra.mxu0 %v436
    %v747 = vpop.f32.mrf.mxu0
    %v748 = vpop.f32.mrf.mxu0
    %v749 = vadd.f32 0.0, %v748
    %750 = vmatmul.bf16.gmra.mxu0 %v438
    %v751 = vpop.f32.mrf.mxu0
    %v752 = vadd.f32 0.0, %v751
    %v753 = vpop.f32.mrf.mxu0
    %754 = vdwg.mxu0
    %755 = vmatpush.bf16.msra.mxu0 %v617
    %756 = vmatpush.bf16.msra.mxu0 %v615
    %757 = vmatpush.bf16.msra.mxu0 %v613
    %758 = vmatpush.bf16.msra.mxu0 %v611
    %759 = vmatpush.bf16.msra.mxu0 %v609
    %760 = vmatpush.bf16.msra.mxu0 %v607
    %761 = vmatpush.bf16.msra.mxu0 %v605
    %762 = vmatpush.bf16.msra.mxu0 %v603
    %763 = vmatmul.bf16.gmra.mxu0 %v429
    %v764 = vpop.f32.mrf.mxu0
    %v765 = vadd.f32 %v730, %v764
    %v766 = vpop.f32.mrf.mxu0
    %v767 = vadd.f32 %v732, %v766
    %768 = vmatmul.bf16.gmra.mxu0 %v431
    %v769 = vpop.f32.mrf.mxu0
    %v770 = vpop.f32.mrf.mxu0
    %v771 = vadd.f32 %v736, %v770
    %772 = vmatmul.bf16.gmra.mxu0 %v433
    %v773 = vpop.f32.mrf.mxu0
    %v774 = vadd.f32 %v739, %v773
    %v775 = vpop.f32.mrf.mxu0
    %776 = vmatmul.bf16.gmra.mxu0 %v435
    %v777 = vpop.f32.mrf.mxu0
    %v778 = vadd.f32 %v743, %v777
    %v779 = vpop.f32.mrf.mxu0
    %v780 = vadd.f32 %v745, %v779
    %781 = vmatmul.bf16.gmra.mxu0 %v437
    %v782 = vpop.f32.mrf.mxu0
    %v783 = vpop.f32.mrf.mxu0
    %v784 = vadd.f32 %v749, %v783
    %785 = vmatmul.bf16.gmra.mxu0 %v439
    %v786 = vpop.f32.mrf.mxu0
    %v787 = vadd.f32 %v752, %v786
    %v788 = vpop.f32.mrf.mxu0
    %789 = vdwg.mxu0
    %v790 = vadd.f32 %v695, 0.0
    %v791 = vadd.f32 %v765, 0.0
    %v792 = vadd.f32 %v697, 0.0
    %v793 = vadd.f32 %v767, 0.0
    %v794 = vadd.f32 %v701, 0.0
    %v795 = vadd.f32 %v771, 0.0
    %v796 = vadd.f32 %v704, 0.0
    %v797 = vadd.f32 %v774, 0.0
    %v798 = vadd.f32 %v708, 0.0
    %v799 = vadd.f32 %v778, 0.0
    %v800 = vadd.f32 %v710, 0.0
    %v801 = vadd.f32 %v780, 0.0
    %v802 = vadd.f32 %v714, 0.0
    %v803 = vadd.f32 %v784, 0.0
    %v804 = vadd.f32 %v717, 0.0
    %v805 = vadd.f32 %v787, 0.0
    %s806 = scalar_lea.vmem [#allocation6], 256
    %v807 = vld [vmem:[%s806] sm:$0xff]
    %v808 = vld [vmem:[%s806 + $0x8] sm:$0xff]
    %v809 = vld [vmem:[%s806 + $0x10] sm:$0xff]
    %v810 = vld [vmem:[%s806 + $0x18] sm:$0xff]
    %v811 = vld [vmem:[%s806 + $0x20] sm:$0xff]
    %v812 = vld [vmem:[%s806 + $0x28] sm:$0xff]
    %v813 = vld [vmem:[%s806 + $0x30] sm:$0xff]
    %v814 = vld [vmem:[%s806 + $0x38] sm:$0xff]
    %v815 = vld [vmem:[%s806 + $0x40] sm:$0xff]
    %v816 = vld [vmem:[%s806 + $0x48] sm:$0xff]
    %v817 = vld [vmem:[%s806 + $0x50] sm:$0xff]
    %v818 = vld [vmem:[%s806 + $0x58] sm:$0xff]
    %v819 = vld [vmem:[%s806 + $0x60] sm:$0xff]
    %v820 = vld [vmem:[%s806 + $0x68] sm:$0xff]
    %v821 = vld [vmem:[%s806 + $0x70] sm:$0xff]
    %v822 = vld [vmem:[%s806 + $0x78] sm:$0xff]
    %v823 = vld [vmem:[%s806 + $0x80] sm:$0xff]
    %v824 = vld [vmem:[%s806 + $0x88] sm:$0xff]
    %v825 = vld [vmem:[%s806 + $0x90] sm:$0xff]
    %v826 = vld [vmem:[%s806 + $0x98] sm:$0xff]
    %v827 = vld [vmem:[%s806 + $0xa0] sm:$0xff]
    %v828 = vld [vmem:[%s806 + $0xa8] sm:$0xff]
    %v829 = vld [vmem:[%s806 + $0xb0] sm:$0xff]
    %v830 = vld [vmem:[%s806 + $0xb8] sm:$0xff]
    %v831 = vld [vmem:[%s806 + $0xc0] sm:$0xff]
    %v832 = vld [vmem:[%s806 + $0xc8] sm:$0xff]
    %v833 = vld [vmem:[%s806 + $0xd0] sm:$0xff]
    %v834 = vld [vmem:[%s806 + $0xd8] sm:$0xff]
    %v835 = vld [vmem:[%s806 + $0xe0] sm:$0xff]
    %v836 = vld [vmem:[%s806 + $0xe8] sm:$0xff]
    %v837 = vld [vmem:[%s806 + $0xf0] sm:$0xff]
    %v838 = vld [vmem:[%s806 + $0xf8] sm:$0xff]
    %v871 = vunpack.c.l.b16 %v807
    %v872 = vunpack.c.h.b16 %v807
    %v873 = vunpack.c.l.b16 %v808
    %v874 = vunpack.c.h.b16 %v808
    %v875 = vunpack.c.l.b16 %v809
    %v876 = vunpack.c.h.b16 %v809
    %v877 = vunpack.c.l.b16 %v810
    %v878 = vunpack.c.h.b16 %v810
    %v879 = vunpack.c.l.b16 %v811
    %v880 = vunpack.c.h.b16 %v811
    %v881 = vunpack.c.l.b16 %v812
    %v882 = vunpack.c.h.b16 %v812
    %v883 = vunpack.c.l.b16 %v813
    %v884 = vunpack.c.h.b16 %v813
    %v885 = vunpack.c.l.b16 %v814
    %v886 = vunpack.c.h.b16 %v814
    %v887 = vunpack.c.l.b16 %v815
    %v888 = vunpack.c.h.b16 %v815
    %v889 = vunpack.c.l.b16 %v816
    %v890 = vunpack.c.h.b16 %v816
    %v891 = vunpack.c.l.b16 %v817
    %v892 = vunpack.c.h.b16 %v817
    %v893 = vunpack.c.l.b16 %v818
    %v894 = vunpack.c.h.b16 %v818
    %v895 = vunpack.c.l.b16 %v819
    %v896 = vunpack.c.h.b16 %v819
    %v897 = vunpack.c.l.b16 %v820
    %v898 = vunpack.c.h.b16 %v820
    %v899 = vunpack.c.l.b16 %v821
    %v900 = vunpack.c.h.b16 %v821
    %v901 = vunpack.c.l.b16 %v822
    %v902 = vunpack.c.h.b16 %v822
    %v903 = vunpack.c.l.b16 %v823
    %v904 = vunpack.c.h.b16 %v823
    %v905 = vunpack.c.l.b16 %v824
    %v906 = vunpack.c.h.b16 %v824
    %v907 = vunpack.c.l.b16 %v825
    %v908 = vunpack.c.h.b16 %v825
    %v909 = vunpack.c.l.b16 %v826
    %v910 = vunpack.c.h.b16 %v826
    %v911 = vunpack.c.l.b16 %v827
    %v912 = vunpack.c.h.b16 %v827
    %v913 = vunpack.c.l.b16 %v828
    %v914 = vunpack.c.h.b16 %v828
    %v915 = vunpack.c.l.b16 %v829
    %v916 = vunpack.c.h.b16 %v829
    %v917 = vunpack.c.l.b16 %v830
    %v918 = vunpack.c.h.b16 %v830
    %v919 = vunpack.c.l.b16 %v831
    %v920 = vunpack.c.h.b16 %v831
    %v921 = vunpack.c.l.b16 %v832
    %v922 = vunpack.c.h.b16 %v832
    %v923 = vunpack.c.l.b16 %v833
    %v924 = vunpack.c.h.b16 %v833
    %v925 = vunpack.c.l.b16 %v834
    %v926 = vunpack.c.h.b16 %v834
    %v927 = vunpack.c.l.b16 %v835
    %v928 = vunpack.c.h.b16 %v835
    %v929 = vunpack.c.l.b16 %v836
    %v930 = vunpack.c.h.b16 %v836
    %v931 = vunpack.c.l.b16 %v837
    %v932 = vunpack.c.h.b16 %v837
    %v933 = vunpack.c.l.b16 %v838
    %v934 = vunpack.c.h.b16 %v838
    %v935 = vpack.c.b16 %v873, %v871
    %v936 = vpack.c.b16 %v874, %v872
    %v937 = vpack.c.b16 %v877, %v875
    %v938 = vpack.c.b16 %v878, %v876
    %v939 = vpack.c.b16 %v881, %v879
    %v940 = vpack.c.b16 %v882, %v880
    %v941 = vpack.c.b16 %v885, %v883
    %v942 = vpack.c.b16 %v886, %v884
    %v943 = vpack.c.b16 %v889, %v887
    %v944 = vpack.c.b16 %v890, %v888
    %v945 = vpack.c.b16 %v893, %v891
    %v946 = vpack.c.b16 %v894, %v892
    %v947 = vpack.c.b16 %v897, %v895
    %v948 = vpack.c.b16 %v898, %v896
    %v949 = vpack.c.b16 %v901, %v899
    %v950 = vpack.c.b16 %v902, %v900
    %v951 = vpack.c.b16 %v905, %v903
    %v952 = vpack.c.b16 %v906, %v904
    %v953 = vpack.c.b16 %v909, %v907
    %v954 = vpack.c.b16 %v910, %v908
    %v955 = vpack.c.b16 %v913, %v911
    %v956 = vpack.c.b16 %v914, %v912
    %v957 = vpack.c.b16 %v917, %v915
    %v958 = vpack.c.b16 %v918, %v916
    %v959 = vpack.c.b16 %v921, %v919
    %v960 = vpack.c.b16 %v922, %v920
    %v961 = vpack.c.b16 %v925, %v923
    %v962 = vpack.c.b16 %v926, %v924
    %v963 = vpack.c.b16 %v929, %v927
    %v964 = vpack.c.b16 %v930, %v928
    %v965 = vpack.c.b16 %v933, %v931
    %v966 = vpack.c.b16 %v934, %v932
    %999 = vmatpush.bf16.msra.mxu0 %v949
    %1000 = vmatpush.bf16.msra.mxu0 %v947
    %1001 = vmatpush.bf16.msra.mxu0 %v945
    %1002 = vmatpush.bf16.msra.mxu0 %v943
    %1003 = vmatpush.bf16.msra.mxu0 %v941
    %1004 = vmatpush.bf16.msra.mxu0 %v939
    %1005 = vmatpush.bf16.msra.mxu0 %v937
    %1006 = vmatpush.bf16.msra.mxu0 %v935
    %1007 = vmatmul.bf16.gmra.mxu0 %v428
    %v1008 = vpop.f32.mrf.mxu0
    %v1009 = vpop.f32.mrf.mxu0
    %v1010 = vadd.f32 0.0, %v1009
    %1011 = vmatmul.bf16.gmra.mxu0 %v430
    %v1012 = vpop.f32.mrf.mxu0
    %v1013 = vpop.f32.mrf.mxu0
    %1014 = vmatmul.bf16.gmra.mxu0 %v432
    %v1015 = vpop.f32.mrf.mxu0
    %v1016 = vadd.f32 0.0, %v1015
    %v1017 = vpop.f32.mrf.mxu0
    %1018 = vmatmul.bf16.gmra.mxu0 %v434
    %v1019 = vpop.f32.mrf.mxu0
    %v1020 = vpop.f32.mrf.mxu0
    %v1021 = vadd.f32 0.0, %v1020
    %1022 = vmatmul.bf16.gmra.mxu0 %v436
    %v1023 = vpop.f32.mrf.mxu0
    %v1024 = vpop.f32.mrf.mxu0
    %1025 = vmatmul.bf16.gmra.mxu0 %v438
    %v1026 = vpop.f32.mrf.mxu0
    %v1027 = vadd.f32 0.0, %v1026
    %v1028 = vpop.f32.mrf.mxu0
    %1029 = vdwg.mxu0
    %1030 = vmatpush.bf16.msra.mxu0 %v965
    %1031 = vmatpush.bf16.msra.mxu0 %v963
    %1032 = vmatpush.bf16.msra.mxu0 %v961
    %1033 = vmatpush.bf16.msra.mxu0 %v959
    %1034 = vmatpush.bf16.msra.mxu0 %v957
    %1035 = vmatpush.bf16.msra.mxu0 %v955
    %1036 = vmatpush.bf16.msra.mxu0 %v953
    %1037 = vmatpush.bf16.msra.mxu0 %v951
    %1038 = vmatmul.bf16.gmra.mxu0 %v429
    %v1039 = vpop.f32.mrf.mxu0
    %v1040 = vpop.f32.mrf.mxu0
    %v1041 = vadd.f32 %v1010, %v1040
    %1042 = vmatmul.bf16.gmra.mxu0 %v431
    %v1043 = vpop.f32.mrf.mxu0
    %v1044 = vpop.f32.mrf.mxu0
    %1045 = vmatmul.bf16.gmra.mxu0 %v433
    %v1046 = vpop.f32.mrf.mxu0
    %v1047 = vadd.f32 %v1016, %v1046
    %v1048 = vpop.f32.mrf.mxu0
    %1049 = vmatmul.bf16.gmra.mxu0 %v435
    %v1050 = vpop.f32.mrf.mxu0
    %v1051 = vpop.f32.mrf.mxu0
    %v1052 = vadd.f32 %v1021, %v1051
    %1053 = vmatmul.bf16.gmra.mxu0 %v437
    %v1054 = vpop.f32.mrf.mxu0
    %v1055 = vpop.f32.mrf.mxu0
    %1056 = vmatmul.bf16.gmra.mxu0 %v439
    %v1057 = vpop.f32.mrf.mxu0
    %v1058 = vadd.f32 %v1027, %v1057
    %v1059 = vpop.f32.mrf.mxu0
    %1060 = vdwg.mxu0
    %1061 = vmatpush.bf16.msra.mxu0 %v950
    %1062 = vmatpush.bf16.msra.mxu0 %v948
    %1063 = vmatpush.bf16.msra.mxu0 %v946
    %1064 = vmatpush.bf16.msra.mxu0 %v944
    %1065 = vmatpush.bf16.msra.mxu0 %v942
    %1066 = vmatpush.bf16.msra.mxu0 %v940
    %1067 = vmatpush.bf16.msra.mxu0 %v938
    %1068 = vmatpush.bf16.msra.mxu0 %v936
    %1069 = vmatmul.bf16.gmra.mxu0 %v428
    %v1070 = vpop.f32.mrf.mxu0
    %v1071 = vpop.f32.mrf.mxu0
    %v1072 = vadd.f32 0.0, %v1071
    %1073 = vmatmul.bf16.gmra.mxu0 %v430
    %v1074 = vpop.f32.mrf.mxu0
    %v1075 = vpop.f32.mrf.mxu0
    %1076 = vmatmul.bf16.gmra.mxu0 %v432
    %v1077 = vpop.f32.mrf.mxu0
    %v1078 = vadd.f32 0.0, %v1077
    %v1079 = vpop.f32.mrf.mxu0
    %1080 = vmatmul.bf16.gmra.mxu0 %v434
    %v1081 = vpop.f32.mrf.mxu0
    %v1082 = vpop.f32.mrf.mxu0
    %v1083 = vadd.f32 0.0, %v1082
    %1084 = vmatmul.bf16.gmra.mxu0 %v436
    %v1085 = vpop.f32.mrf.mxu0
    %v1086 = vpop.f32.mrf.mxu0
    %1087 = vmatmul.bf16.gmra.mxu0 %v438
    %v1088 = vpop.f32.mrf.mxu0
    %v1089 = vadd.f32 0.0, %v1088
    %v1090 = vpop.f32.mrf.mxu0
    %1091 = vdwg.mxu0
    %1092 = vmatpush.bf16.msra.mxu0 %v966
    %1093 = vmatpush.bf16.msra.mxu0 %v964
    %1094 = vmatpush.bf16.msra.mxu0 %v962
    %1095 = vmatpush.bf16.msra.mxu0 %v960
    %1096 = vmatpush.bf16.msra.mxu0 %v958
    %1097 = vmatpush.bf16.msra.mxu0 %v956
    %1098 = vmatpush.bf16.msra.mxu0 %v954
    %1099 = vmatpush.bf16.msra.mxu0 %v952
    %1100 = vmatmul.bf16.gmra.mxu0 %v429
    %v1101 = vpop.f32.mrf.mxu0
    %v1102 = vpop.f32.mrf.mxu0
    %v1103 = vadd.f32 %v1072, %v1102
    %1104 = vmatmul.bf16.gmra.mxu0 %v431
    %v1105 = vpop.f32.mrf.mxu0
    %v1106 = vpop.f32.mrf.mxu0
    %1107 = vmatmul.bf16.gmra.mxu0 %v433
    %v1108 = vpop.f32.mrf.mxu0
    %v1109 = vadd.f32 %v1078, %v1108
    %v1110 = vpop.f32.mrf.mxu0
    %1111 = vmatmul.bf16.gmra.mxu0 %v435
    %v1112 = vpop.f32.mrf.mxu0
    %v1113 = vpop.f32.mrf.mxu0
    %v1114 = vadd.f32 %v1083, %v1113
    %1115 = vmatmul.bf16.gmra.mxu0 %v437
    %v1116 = vpop.f32.mrf.mxu0
    %v1117 = vpop.f32.mrf.mxu0
    %1118 = vmatmul.bf16.gmra.mxu0 %v439
    %v1119 = vpop.f32.mrf.mxu0
    %v1120 = vadd.f32 %v1089, %v1119
    %v1121 = vpop.f32.mrf.mxu0
    %1122 = vdwg.mxu0
    %v1131 = vrot.slane %v1041, 1
    %v1132 = vrot.slane %v1103, 1
    %v1133 = vrot.slane %v1047, 1
    %v1134 = vrot.slane %v1109, 1
    %v1135 = vrot.slane %v1052, 1
    %v1136 = vrot.slane %v1114, 1
    %v1137 = vrot.slane %v1058, 1
    %v1138 = vrot.slane %v1120, 1
    %v1147 = vadd.f32 %v790, %v1131
    %v1148 = vadd.f32 %v791, %v1132
    %v1149 = vadd.f32 %v792, %v1131
    %v1150 = vadd.f32 %v793, %v1132
    %v1151 = vadd.f32 %v794, %v1133
    %v1152 = vadd.f32 %v795, %v1134
    %v1153 = vadd.f32 %v796, %v1133
    %v1154 = vadd.f32 %v797, %v1134
    %v1155 = vadd.f32 %v798, %v1135
    %v1156 = vadd.f32 %v799, %v1136
    %v1157 = vadd.f32 %v800, %v1135
    %v1158 = vadd.f32 %v801, %v1136
    %v1159 = vadd.f32 %v802, %v1137
    %v1160 = vadd.f32 %v803, %v1138
    %v1161 = vadd.f32 %v804, %v1137
    %v1162 = vadd.f32 %v805, %v1138
    %s1163 = scalar_lea.vmem [#allocation6], 512
    %v1164 = vld [vmem:[%s1163] sm:$0xff]
    %v1165 = vld [vmem:[%s1163 + $0x8] sm:$0xff]
    %v1166 = vld [vmem:[%s1163 + $0x10] sm:$0xff]
    %v1167 = vld [vmem:[%s1163 + $0x18] sm:$0xff]
    %v1168 = vld [vmem:[%s1163 + $0x20] sm:$0xff]
    %v1169 = vld [vmem:[%s1163 + $0x28] sm:$0xff]
    %v1170 = vld [vmem:[%s1163 + $0x30] sm:$0xff]
    %v1171 = vld [vmem:[%s1163 + $0x38] sm:$0xff]
    %v1172 = vld [vmem:[%s1163 + $0x40] sm:$0xff]
    %v1173 = vld [vmem:[%s1163 + $0x48] sm:$0xff]
    %v1174 = vld [vmem:[%s1163 + $0x50] sm:$0xff]
    %v1175 = vld [vmem:[%s1163 + $0x58] sm:$0xff]
    %v1176 = vld [vmem:[%s1163 + $0x60] sm:$0xff]
    %v1177 = vld [vmem:[%s1163 + $0x68] sm:$0xff]
    %v1178 = vld [vmem:[%s1163 + $0x70] sm:$0xff]
    %v1179 = vld [vmem:[%s1163 + $0x78] sm:$0xff]
    %v1180 = vld [vmem:[%s1163 + $0x80] sm:$0xff]
    %v1181 = vld [vmem:[%s1163 + $0x88] sm:$0xff]
    %v1182 = vld [vmem:[%s1163 + $0x90] sm:$0xff]
    %v1183 = vld [vmem:[%s1163 + $0x98] sm:$0xff]
    %v1184 = vld [vmem:[%s1163 + $0xa0] sm:$0xff]
    %v1185 = vld [vmem:[%s1163 + $0xa8] sm:$0xff]
    %v1186 = vld [vmem:[%s1163 + $0xb0] sm:$0xff]
    %v1187 = vld [vmem:[%s1163 + $0xb8] sm:$0xff]
    %v1188 = vld [vmem:[%s1163 + $0xc0] sm:$0xff]
    %v1189 = vld [vmem:[%s1163 + $0xc8] sm:$0xff]
    %v1190 = vld [vmem:[%s1163 + $0xd0] sm:$0xff]
    %v1191 = vld [vmem:[%s1163 + $0xd8] sm:$0xff]
    %v1192 = vld [vmem:[%s1163 + $0xe0] sm:$0xff]
    %v1193 = vld [vmem:[%s1163 + $0xe8] sm:$0xff]
    %v1194 = vld [vmem:[%s1163 + $0xf0] sm:$0xff]
    %v1195 = vld [vmem:[%s1163 + $0xf8] sm:$0xff]
    %v1228 = vunpack.c.l.b16 %v1164
    %v1229 = vunpack.c.h.b16 %v1164
    %v1230 = vunpack.c.l.b16 %v1165
    %v1231 = vunpack.c.h.b16 %v1165
    %v1232 = vunpack.c.l.b16 %v1166
    %v1233 = vunpack.c.h.b16 %v1166
    %v1234 = vunpack.c.l.b16 %v1167
    %v1235 = vunpack.c.h.b16 %v1167
    %v1236 = vunpack.c.l.b16 %v1168
    %v1237 = vunpack.c.h.b16 %v1168
    %v1238 = vunpack.c.l.b16 %v1169
    %v1239 = vunpack.c.h.b16 %v1169
    %v1240 = vunpack.c.l.b16 %v1170
    %v1241 = vunpack.c.h.b16 %v1170
    %v1242 = vunpack.c.l.b16 %v1171
    %v1243 = vunpack.c.h.b16 %v1171
    %v1244 = vunpack.c.l.b16 %v1172
    %v1245 = vunpack.c.h.b16 %v1172
    %v1246 = vunpack.c.l.b16 %v1173
    %v1247 = vunpack.c.h.b16 %v1173
    %v1248 = vunpack.c.l.b16 %v1174
    %v1249 = vunpack.c.h.b16 %v1174
    %v1250 = vunpack.c.l.b16 %v1175
    %v1251 = vunpack.c.h.b16 %v1175
    %v1252 = vunpack.c.l.b16 %v1176
    %v1253 = vunpack.c.h.b16 %v1176
    %v1254 = vunpack.c.l.b16 %v1177
    %v1255 = vunpack.c.h.b16 %v1177
    %v1256 = vunpack.c.l.b16 %v1178
    %v1257 = vunpack.c.h.b16 %v1178
    %v1258 = vunpack.c.l.b16 %v1179
    %v1259 = vunpack.c.h.b16 %v1179
    %v1260 = vunpack.c.l.b16 %v1180
    %v1261 = vunpack.c.h.b16 %v1180
    %v1262 = vunpack.c.l.b16 %v1181
    %v1263 = vunpack.c.h.b16 %v1181
    %v1264 = vunpack.c.l.b16 %v1182
    %v1265 = vunpack.c.h.b16 %v1182
    %v1266 = vunpack.c.l.b16 %v1183
    %v1267 = vunpack.c.h.b16 %v1183
    %v1268 = vunpack.c.l.b16 %v1184
    %v1269 = vunpack.c.h.b16 %v1184
    %v1270 = vunpack.c.l.b16 %v1185
    %v1271 = vunpack.c.h.b16 %v1185
    %v1272 = vunpack.c.l.b16 %v1186
    %v1273 = vunpack.c.h.b16 %v1186
    %v1274 = vunpack.c.l.b16 %v1187
    %v1275 = vunpack.c.h.b16 %v1187
    %v1276 = vunpack.c.l.b16 %v1188
    %v1277 = vunpack.c.h.b16 %v1188
    %v1278 = vunpack.c.l.b16 %v1189
    %v1279 = vunpack.c.h.b16 %v1189
    %v1280 = vunpack.c.l.b16 %v1190
    %v1281 = vunpack.c.h.b16 %v1190
    %v1282 = vunpack.c.l.b16 %v1191
    %v1283 = vunpack.c.h.b16 %v1191
    %v1284 = vunpack.c.l.b16 %v1192
    %v1285 = vunpack.c.h.b16 %v1192
    %v1286 = vunpack.c.l.b16 %v1193
    %v1287 = vunpack.c.h.b16 %v1193
    %v1288 = vunpack.c.l.b16 %v1194
    %v1289 = vunpack.c.h.b16 %v1194
    %v1290 = vunpack.c.l.b16 %v1195
    %v1291 = vunpack.c.h.b16 %v1195
    %v1292 = vpack.c.b16 %v1230, %v1228
    %v1293 = vpack.c.b16 %v1231, %v1229
    %v1294 = vpack.c.b16 %v1234, %v1232
    %v1295 = vpack.c.b16 %v1235, %v1233
    %v1296 = vpack.c.b16 %v1238, %v1236
    %v1297 = vpack.c.b16 %v1239, %v1237
    %v1298 = vpack.c.b16 %v1242, %v1240
    %v1299 = vpack.c.b16 %v1243, %v1241
    %v1300 = vpack.c.b16 %v1246, %v1244
    %v1301 = vpack.c.b16 %v1247, %v1245
    %v1302 = vpack.c.b16 %v1250, %v1248
    %v1303 = vpack.c.b16 %v1251, %v1249
    %v1304 = vpack.c.b16 %v1254, %v1252
    %v1305 = vpack.c.b16 %v1255, %v1253
    %v1306 = vpack.c.b16 %v1258, %v1256
    %v1307 = vpack.c.b16 %v1259, %v1257
    %v1308 = vpack.c.b16 %v1262, %v1260
    %v1309 = vpack.c.b16 %v1263, %v1261
    %v1310 = vpack.c.b16 %v1266, %v1264
    %v1311 = vpack.c.b16 %v1267, %v1265
    %v1312 = vpack.c.b16 %v1270, %v1268
    %v1313 = vpack.c.b16 %v1271, %v1269
    %v1314 = vpack.c.b16 %v1274, %v1272
    %v1315 = vpack.c.b16 %v1275, %v1273
    %v1316 = vpack.c.b16 %v1278, %v1276
    %v1317 = vpack.c.b16 %v1279, %v1277
    %v1318 = vpack.c.b16 %v1282, %v1280
    %v1319 = vpack.c.b16 %v1283, %v1281
    %v1320 = vpack.c.b16 %v1286, %v1284
    %v1321 = vpack.c.b16 %v1287, %v1285
    %v1322 = vpack.c.b16 %v1290, %v1288
    %v1323 = vpack.c.b16 %v1291, %v1289
    %1356 = vmatpush.bf16.msra.mxu0 %v1306
    %1357 = vmatpush.bf16.msra.mxu0 %v1304
    %1358 = vmatpush.bf16.msra.mxu0 %v1302
    %1359 = vmatpush.bf16.msra.mxu0 %v1300
    %1360 = vmatpush.bf16.msra.mxu0 %v1298
    %1361 = vmatpush.bf16.msra.mxu0 %v1296
    %1362 = vmatpush.bf16.msra.mxu0 %v1294
    %1363 = vmatpush.bf16.msra.mxu0 %v1292
    %1364 = vmatmul.bf16.gmra.mxu0 %v428
    %v1365 = vpop.f32.mrf.mxu0
    %v1366 = vpop.f32.mrf.mxu0
    %v1367 = vadd.f32 0.0, %v1366
    %1368 = vmatmul.bf16.gmra.mxu0 %v430
    %v1369 = vpop.f32.mrf.mxu0
    %v1370 = vpop.f32.mrf.mxu0
    %1371 = vmatmul.bf16.gmra.mxu0 %v432
    %v1372 = vpop.f32.mrf.mxu0
    %v1373 = vadd.f32 0.0, %v1372
    %v1374 = vpop.f32.mrf.mxu0
    %1375 = vmatmul.bf16.gmra.mxu0 %v434
    %v1376 = vpop.f32.mrf.mxu0
    %v1377 = vpop.f32.mrf.mxu0
    %v1378 = vadd.f32 0.0, %v1377
    %1379 = vmatmul.bf16.gmra.mxu0 %v436
    %v1380 = vpop.f32.mrf.mxu0
    %v1381 = vpop.f32.mrf.mxu0
    %1382 = vmatmul.bf16.gmra.mxu0 %v438
    %v1383 = vpop.f32.mrf.mxu0
    %v1384 = vadd.f32 0.0, %v1383
    %v1385 = vpop.f32.mrf.mxu0
    %1386 = vdwg.mxu0
    %1387 = vmatpush.bf16.msra.mxu0 %v1322
    %1388 = vmatpush.bf16.msra.mxu0 %v1320
    %1389 = vmatpush.bf16.msra.mxu0 %v1318
    %1390 = vmatpush.bf16.msra.mxu0 %v1316
    %1391 = vmatpush.bf16.msra.mxu0 %v1314
    %1392 = vmatpush.bf16.msra.mxu0 %v1312
    %1393 = vmatpush.bf16.msra.mxu0 %v1310
    %1394 = vmatpush.bf16.msra.mxu0 %v1308
    %1395 = vmatmul.bf16.gmra.mxu0 %v429
    %v1396 = vpop.f32.mrf.mxu0
    %v1397 = vpop.f32.mrf.mxu0
    %v1398 = vadd.f32 %v1367, %v1397
    %1399 = vmatmul.bf16.gmra.mxu0 %v431
    %v1400 = vpop.f32.mrf.mxu0
    %v1401 = vpop.f32.mrf.mxu0
    %1402 = vmatmul.bf16.gmra.mxu0 %v433
    %v1403 = vpop.f32.mrf.mxu0
    %v1404 = vadd.f32 %v1373, %v1403
    %v1405 = vpop.f32.mrf.mxu0
    %1406 = vmatmul.bf16.gmra.mxu0 %v435
    %v1407 = vpop.f32.mrf.mxu0
    %v1408 = vpop.f32.mrf.mxu0
    %v1409 = vadd.f32 %v1378, %v1408
    %1410 = vmatmul.bf16.gmra.mxu0 %v437
    %v1411 = vpop.f32.mrf.mxu0
    %v1412 = vpop.f32.mrf.mxu0
    %1413 = vmatmul.bf16.gmra.mxu0 %v439
    %v1414 = vpop.f32.mrf.mxu0
    %v1415 = vadd.f32 %v1384, %v1414
    %v1416 = vpop.f32.mrf.mxu0
    %1417 = vdwg.mxu0
    %1418 = vmatpush.bf16.msra.mxu0 %v1307
    %1419 = vmatpush.bf16.msra.mxu0 %v1305
    %1420 = vmatpush.bf16.msra.mxu0 %v1303
    %1421 = vmatpush.bf16.msra.mxu0 %v1301
    %1422 = vmatpush.bf16.msra.mxu0 %v1299
    %1423 = vmatpush.bf16.msra.mxu0 %v1297
    %1424 = vmatpush.bf16.msra.mxu0 %v1295
    %1425 = vmatpush.bf16.msra.mxu0 %v1293
    %1426 = vmatmul.bf16.gmra.mxu0 %v428
    %v1427 = vpop.f32.mrf.mxu0
    %v1428 = vpop.f32.mrf.mxu0
    %v1429 = vadd.f32 0.0, %v1428
    %1430 = vmatmul.bf16.gmra.mxu0 %v430
    %v1431 = vpop.f32.mrf.mxu0
    %v1432 = vpop.f32.mrf.mxu0
    %1433 = vmatmul.bf16.gmra.mxu0 %v432
    %v1434 = vpop.f32.mrf.mxu0
    %v1435 = vadd.f32 0.0, %v1434
    %v1436 = vpop.f32.mrf.mxu0
    %1437 = vmatmul.bf16.gmra.mxu0 %v434
    %v1438 = vpop.f32.mrf.mxu0
    %v1439 = vpop.f32.mrf.mxu0
    %v1440 = vadd.f32 0.0, %v1439
    %1441 = vmatmul.bf16.gmra.mxu0 %v436
    %v1442 = vpop.f32.mrf.mxu0
    %v1443 = vpop.f32.mrf.mxu0
    %1444 = vmatmul.bf16.gmra.mxu0 %v438
    %v1445 = vpop.f32.mrf.mxu0
    %v1446 = vadd.f32 0.0, %v1445
    %v1447 = vpop.f32.mrf.mxu0
    %1448 = vdwg.mxu0
    %1449 = vmatpush.bf16.msra.mxu0 %v1323
    %1450 = vmatpush.bf16.msra.mxu0 %v1321
    %1451 = vmatpush.bf16.msra.mxu0 %v1319
    %1452 = vmatpush.bf16.msra.mxu0 %v1317
    %1453 = vmatpush.bf16.msra.mxu0 %v1315
    %1454 = vmatpush.bf16.msra.mxu0 %v1313
    %1455 = vmatpush.bf16.msra.mxu0 %v1311
    %1456 = vmatpush.bf16.msra.mxu0 %v1309
    %1457 = vmatmul.bf16.gmra.mxu0 %v429
    %v1458 = vpop.f32.mrf.mxu0
    %v1459 = vpop.f32.mrf.mxu0
    %v1460 = vadd.f32 %v1429, %v1459
    %1461 = vmatmul.bf16.gmra.mxu0 %v431
    %v1462 = vpop.f32.mrf.mxu0
    %v1463 = vpop.f32.mrf.mxu0
    %1464 = vmatmul.bf16.gmra.mxu0 %v433
    %v1465 = vpop.f32.mrf.mxu0
    %v1466 = vadd.f32 %v1435, %v1465
    %v1467 = vpop.f32.mrf.mxu0
    %1468 = vmatmul.bf16.gmra.mxu0 %v435
    %v1469 = vpop.f32.mrf.mxu0
    %v1470 = vpop.f32.mrf.mxu0
    %v1471 = vadd.f32 %v1440, %v1470
    %1472 = vmatmul.bf16.gmra.mxu0 %v437
    %v1473 = vpop.f32.mrf.mxu0
    %v1474 = vpop.f32.mrf.mxu0
    %1475 = vmatmul.bf16.gmra.mxu0 %v439
    %v1476 = vpop.f32.mrf.mxu0
    %v1477 = vadd.f32 %v1446, %v1476
    %v1478 = vpop.f32.mrf.mxu0
    %1479 = vdwg.mxu0
    %v1488 = vrot.slane %v1398, 2
    %v1489 = vrot.slane %v1460, 2
    %v1490 = vrot.slane %v1404, 2
    %v1491 = vrot.slane %v1466, 2
    %v1492 = vrot.slane %v1409, 2
    %v1493 = vrot.slane %v1471, 2
    %v1494 = vrot.slane %v1415, 2
    %v1495 = vrot.slane %v1477, 2
    %v1504 = vadd.f32 %v1147, %v1488
    %v1505 = vadd.f32 %v1148, %v1489
    %v1506 = vadd.f32 %v1149, %v1488
    %v1507 = vadd.f32 %v1150, %v1489
    %v1508 = vadd.f32 %v1151, %v1490
    %v1509 = vadd.f32 %v1152, %v1491
    %v1510 = vadd.f32 %v1153, %v1490
    %v1511 = vadd.f32 %v1154, %v1491
    %v1512 = vadd.f32 %v1155, %v1492
    %v1513 = vadd.f32 %v1156, %v1493
    %v1514 = vadd.f32 %v1157, %v1492
    %v1515 = vadd.f32 %v1158, %v1493
    %v1516 = vadd.f32 %v1159, %v1494
    %v1517 = vadd.f32 %v1160, %v1495
    %v1518 = vadd.f32 %v1161, %v1494
    %v1519 = vadd.f32 %v1162, %v1495
    %s1520 = scalar_lea.vmem [#allocation6], 768
    %v1521 = vld [vmem:[%s1520] sm:$0xff]
    %v1522 = vld [vmem:[%s1520 + $0x8] sm:$0xff]
    %v1523 = vld [vmem:[%s1520 + $0x10] sm:$0xff]
    %v1524 = vld [vmem:[%s1520 + $0x18] sm:$0xff]
    %v1525 = vld [vmem:[%s1520 + $0x20] sm:$0xff]
    %v1526 = vld [vmem:[%s1520 + $0x28] sm:$0xff]
    %v1527 = vld [vmem:[%s1520 + $0x30] sm:$0xff]
    %v1528 = vld [vmem:[%s1520 + $0x38] sm:$0xff]
    %v1529 = vld [vmem:[%s1520 + $0x40] sm:$0xff]
    %v1530 = vld [vmem:[%s1520 + $0x48] sm:$0xff]
    %v1531 = vld [vmem:[%s1520 + $0x50] sm:$0xff]
    %v1532 = vld [vmem:[%s1520 + $0x58] sm:$0xff]
    %v1533 = vld [vmem:[%s1520 + $0x60] sm:$0xff]
    %v1534 = vld [vmem:[%s1520 + $0x68] sm:$0xff]
    %v1535 = vld [vmem:[%s1520 + $0x70] sm:$0xff]
    %v1536 = vld [vmem:[%s1520 + $0x78] sm:$0xff]
    %v1537 = vld [vmem:[%s1520 + $0x80] sm:$0xff]
    %v1538 = vld [vmem:[%s1520 + $0x88] sm:$0xff]
    %v1539 = vld [vmem:[%s1520 + $0x90] sm:$0xff]
    %v1540 = vld [vmem:[%s1520 + $0x98] sm:$0xff]
    %v1541 = vld [vmem:[%s1520 + $0xa0] sm:$0xff]
    %v1542 = vld [vmem:[%s1520 + $0xa8] sm:$0xff]
    %v1543 = vld [vmem:[%s1520 + $0xb0] sm:$0xff]
    %v1544 = vld [vmem:[%s1520 + $0xb8] sm:$0xff]
    %v1545 = vld [vmem:[%s1520 + $0xc0] sm:$0xff]
    %v1546 = vld [vmem:[%s1520 + $0xc8] sm:$0xff]
    %v1547 = vld [vmem:[%s1520 + $0xd0] sm:$0xff]
    %v1548 = vld [vmem:[%s1520 + $0xd8] sm:$0xff]
    %v1549 = vld [vmem:[%s1520 + $0xe0] sm:$0xff]
    %v1550 = vld [vmem:[%s1520 + $0xe8] sm:$0xff]
    %v1551 = vld [vmem:[%s1520 + $0xf0] sm:$0xff]
    %v1552 = vld [vmem:[%s1520 + $0xf8] sm:$0xff]
    %v1585 = vunpack.c.l.b16 %v1521
    %v1586 = vunpack.c.h.b16 %v1521
    %v1587 = vunpack.c.l.b16 %v1522
    %v1588 = vunpack.c.h.b16 %v1522
    %v1589 = vunpack.c.l.b16 %v1523
    %v1590 = vunpack.c.h.b16 %v1523
    %v1591 = vunpack.c.l.b16 %v1524
    %v1592 = vunpack.c.h.b16 %v1524
    %v1593 = vunpack.c.l.b16 %v1525
    %v1594 = vunpack.c.h.b16 %v1525
    %v1595 = vunpack.c.l.b16 %v1526
    %v1596 = vunpack.c.h.b16 %v1526
    %v1597 = vunpack.c.l.b16 %v1527
    %v1598 = vunpack.c.h.b16 %v1527
    %v1599 = vunpack.c.l.b16 %v1528
    %v1600 = vunpack.c.h.b16 %v1528
    %v1601 = vunpack.c.l.b16 %v1529
    %v1602 = vunpack.c.h.b16 %v1529
    %v1603 = vunpack.c.l.b16 %v1530
    %v1604 = vunpack.c.h.b16 %v1530
    %v1605 = vunpack.c.l.b16 %v1531
    %v1606 = vunpack.c.h.b16 %v1531
    %v1607 = vunpack.c.l.b16 %v1532
    %v1608 = vunpack.c.h.b16 %v1532
    %v1609 = vunpack.c.l.b16 %v1533
    %v1610 = vunpack.c.h.b16 %v1533
    %v1611 = vunpack.c.l.b16 %v1534
    %v1612 = vunpack.c.h.b16 %v1534
    %v1613 = vunpack.c.l.b16 %v1535
    %v1614 = vunpack.c.h.b16 %v1535
    %v1615 = vunpack.c.l.b16 %v1536
    %v1616 = vunpack.c.h.b16 %v1536
    %v1617 = vunpack.c.l.b16 %v1537
    %v1618 = vunpack.c.h.b16 %v1537
    %v1619 = vunpack.c.l.b16 %v1538
    %v1620 = vunpack.c.h.b16 %v1538
    %v1621 = vunpack.c.l.b16 %v1539
    %v1622 = vunpack.c.h.b16 %v1539
    %v1623 = vunpack.c.l.b16 %v1540
    %v1624 = vunpack.c.h.b16 %v1540
    %v1625 = vunpack.c.l.b16 %v1541
    %v1626 = vunpack.c.h.b16 %v1541
    %v1627 = vunpack.c.l.b16 %v1542
    %v1628 = vunpack.c.h.b16 %v1542
    %v1629 = vunpack.c.l.b16 %v1543
    %v1630 = vunpack.c.h.b16 %v1543
    %v1631 = vunpack.c.l.b16 %v1544
    %v1632 = vunpack.c.h.b16 %v1544
    %v1633 = vunpack.c.l.b16 %v1545
    %v1634 = vunpack.c.h.b16 %v1545
    %v1635 = vunpack.c.l.b16 %v1546
    %v1636 = vunpack.c.h.b16 %v1546
    %v1637 = vunpack.c.l.b16 %v1547
    %v1638 = vunpack.c.h.b16 %v1547
    %v1639 = vunpack.c.l.b16 %v1548
    %v1640 = vunpack.c.h.b16 %v1548
    %v1641 = vunpack.c.l.b16 %v1549
    %v1642 = vunpack.c.h.b16 %v1549
    %v1643 = vunpack.c.l.b16 %v1550
    %v1644 = vunpack.c.h.b16 %v1550
    %v1645 = vunpack.c.l.b16 %v1551
    %v1646 = vunpack.c.h.b16 %v1551
    %v1647 = vunpack.c.l.b16 %v1552
    %v1648 = vunpack.c.h.b16 %v1552
    %v1649 = vpack.c.b16 %v1587, %v1585
    %v1650 = vpack.c.b16 %v1588, %v1586
    %v1651 = vpack.c.b16 %v1591, %v1589
    %v1652 = vpack.c.b16 %v1592, %v1590
    %v1653 = vpack.c.b16 %v1595, %v1593
    %v1654 = vpack.c.b16 %v1596, %v1594
    %v1655 = vpack.c.b16 %v1599, %v1597
    %v1656 = vpack.c.b16 %v1600, %v1598
    %v1657 = vpack.c.b16 %v1603, %v1601
    %v1658 = vpack.c.b16 %v1604, %v1602
    %v1659 = vpack.c.b16 %v1607, %v1605
    %v1660 = vpack.c.b16 %v1608, %v1606
    %v1661 = vpack.c.b16 %v1611, %v1609
    %v1662 = vpack.c.b16 %v1612, %v1610
    %v1663 = vpack.c.b16 %v1615, %v1613
    %v1664 = vpack.c.b16 %v1616, %v1614
    %v1665 = vpack.c.b16 %v1619, %v1617
    %v1666 = vpack.c.b16 %v1620, %v1618
    %v1667 = vpack.c.b16 %v1623, %v1621
    %v1668 = vpack.c.b16 %v1624, %v1622
    %v1669 = vpack.c.b16 %v1627, %v1625
    %v1670 = vpack.c.b16 %v1628, %v1626
    %v1671 = vpack.c.b16 %v1631, %v1629
    %v1672 = vpack.c.b16 %v1632, %v1630
    %v1673 = vpack.c.b16 %v1635, %v1633
    %v1674 = vpack.c.b16 %v1636, %v1634
    %v1675 = vpack.c.b16 %v1639, %v1637
    %v1676 = vpack.c.b16 %v1640, %v1638
    %v1677 = vpack.c.b16 %v1643, %v1641
    %v1678 = vpack.c.b16 %v1644, %v1642
    %v1679 = vpack.c.b16 %v1647, %v1645
    %v1680 = vpack.c.b16 %v1648, %v1646
    %1713 = vmatpush.bf16.msra.mxu0 %v1663
    %1714 = vmatpush.bf16.msra.mxu0 %v1661
    %1715 = vmatpush.bf16.msra.mxu0 %v1659
    %1716 = vmatpush.bf16.msra.mxu0 %v1657
    %1717 = vmatpush.bf16.msra.mxu0 %v1655
    %1718 = vmatpush.bf16.msra.mxu0 %v1653
    %1719 = vmatpush.bf16.msra.mxu0 %v1651
    %1720 = vmatpush.bf16.msra.mxu0 %v1649
    %1721 = vmatmul.bf16.gmra.mxu0 %v440
    %v1722 = vpop.f32.mrf.mxu0
    %v1723 = vadd.f32 0.0, %v1722
    %v1724 = vpop.f32.mrf.mxu0
    %v1725 = vadd.f32 0.0, %v1724
    %1726 = vmatmul.bf16.gmra.mxu0 %v442
    %v1727 = vpop.f32.mrf.mxu0
    %v1728 = vpop.f32.mrf.mxu0
    %v1729 = vadd.f32 0.0, %v1728
    %1730 = vmatmul.bf16.gmra.mxu0 %v444
    %v1731 = vpop.f32.mrf.mxu0
    %v1732 = vadd.f32 0.0, %v1731
    %v1733 = vpop.f32.mrf.mxu0
    %1734 = vmatmul.bf16.gmra.mxu0 %v446
    %v1735 = vpop.f32.mrf.mxu0
    %v1736 = vadd.f32 0.0, %v1735
    %v1737 = vpop.f32.mrf.mxu0
    %v1738 = vadd.f32 0.0, %v1737
    %1739 = vmatmul.bf16.gmra.mxu0 %v448
    %v1740 = vpop.f32.mrf.mxu0
    %v1741 = vpop.f32.mrf.mxu0
    %v1742 = vadd.f32 0.0, %v1741
    %1743 = vmatmul.bf16.gmra.mxu0 %v450
    %v1744 = vpop.f32.mrf.mxu0
    %v1745 = vadd.f32 0.0, %v1744
    %v1746 = vpop.f32.mrf.mxu0
    %1747 = vdwg.mxu0
    %1748 = vmatpush.bf16.msra.mxu0 %v1679
    %1749 = vmatpush.bf16.msra.mxu0 %v1677
    %1750 = vmatpush.bf16.msra.mxu0 %v1675
    %1751 = vmatpush.bf16.msra.mxu0 %v1673
    %1752 = vmatpush.bf16.msra.mxu0 %v1671
    %1753 = vmatpush.bf16.msra.mxu0 %v1669
    %1754 = vmatpush.bf16.msra.mxu0 %v1667
    %1755 = vmatpush.bf16.msra.mxu0 %v1665
    %1756 = vmatmul.bf16.gmra.mxu0 %v441
    %v1757 = vpop.f32.mrf.mxu0
    %v1758 = vadd.f32 %v1723, %v1757
    %v1759 = vpop.f32.mrf.mxu0
    %v1760 = vadd.f32 %v1725, %v1759
    %1761 = vmatmul.bf16.gmra.mxu0 %v443
    %v1762 = vpop.f32.mrf.mxu0
    %v1763 = vpop.f32.mrf.mxu0
    %v1764 = vadd.f32 %v1729, %v1763
    %1765 = vmatmul.bf16.gmra.mxu0 %v445
    %v1766 = vpop.f32.mrf.mxu0
    %v1767 = vadd.f32 %v1732, %v1766
    %v1768 = vpop.f32.mrf.mxu0
    %1769 = vmatmul.bf16.gmra.mxu0 %v447
    %v1770 = vpop.f32.mrf.mxu0
    %v1771 = vadd.f32 %v1736, %v1770
    %v1772 = vpop.f32.mrf.mxu0
    %v1773 = vadd.f32 %v1738, %v1772
    %1774 = vmatmul.bf16.gmra.mxu0 %v449
    %v1775 = vpop.f32.mrf.mxu0
    %v1776 = vpop.f32.mrf.mxu0
    %v1777 = vadd.f32 %v1742, %v1776
    %1778 = vmatmul.bf16.gmra.mxu0 %v451
    %v1779 = vpop.f32.mrf.mxu0
    %v1780 = vadd.f32 %v1745, %v1779
    %v1781 = vpop.f32.mrf.mxu0
    %1782 = vdwg.mxu0
    %1783 = vmatpush.bf16.msra.mxu0 %v1664
    %1784 = vmatpush.bf16.msra.mxu0 %v1662
    %1785 = vmatpush.bf16.msra.mxu0 %v1660
    %1786 = vmatpush.bf16.msra.mxu0 %v1658
    %1787 = vmatpush.bf16.msra.mxu0 %v1656
    %1788 = vmatpush.bf16.msra.mxu0 %v1654
    %1789 = vmatpush.bf16.msra.mxu0 %v1652
    %1790 = vmatpush.bf16.msra.mxu0 %v1650
    %1791 = vmatmul.bf16.gmra.mxu0 %v440
    %v1792 = vpop.f32.mrf.mxu0
    %v1793 = vadd.f32 0.0, %v1792
    %v1794 = vpop.f32.mrf.mxu0
    %v1795 = vadd.f32 0.0, %v1794
    %1796 = vmatmul.bf16.gmra.mxu0 %v442
    %v1797 = vpop.f32.mrf.mxu0
    %v1798 = vpop.f32.mrf.mxu0
    %v1799 = vadd.f32 0.0, %v1798
    %1800 = vmatmul.bf16.gmra.mxu0 %v444
    %v1801 = vpop.f32.mrf.mxu0
    %v1802 = vadd.f32 0.0, %v1801
    %v1803 = vpop.f32.mrf.mxu0
    %1804 = vmatmul.bf16.gmra.mxu0 %v446
    %v1805 = vpop.f32.mrf.mxu0
    %v1806 = vadd.f32 0.0, %v1805
    %v1807 = vpop.f32.mrf.mxu0
    %v1808 = vadd.f32 0.0, %v1807
    %1809 = vmatmul.bf16.gmra.mxu0 %v448
    %v1810 = vpop.f32.mrf.mxu0
    %v1811 = vpop.f32.mrf.mxu0
    %v1812 = vadd.f32 0.0, %v1811
    %1813 = vmatmul.bf16.gmra.mxu0 %v450
    %v1814 = vpop.f32.mrf.mxu0
    %v1815 = vadd.f32 0.0, %v1814
    %v1816 = vpop.f32.mrf.mxu0
    %1817 = vdwg.mxu0
    %1818 = vmatpush.bf16.msra.mxu0 %v1680
    %1819 = vmatpush.bf16.msra.mxu0 %v1678
    %1820 = vmatpush.bf16.msra.mxu0 %v1676
    %1821 = vmatpush.bf16.msra.mxu0 %v1674
    %1822 = vmatpush.bf16.msra.mxu0 %v1672
    %1823 = vmatpush.bf16.msra.mxu0 %v1670
    %1824 = vmatpush.bf16.msra.mxu0 %v1668
    %1825 = vmatpush.bf16.msra.mxu0 %v1666
    %1826 = vmatmul.bf16.gmra.mxu0 %v441
    %v1827 = vpop.f32.mrf.mxu0
    %v1828 = vadd.f32 %v1793, %v1827
    %v1829 = vpop.f32.mrf.mxu0
    %v1830 = vadd.f32 %v1795, %v1829
    %1831 = vmatmul.bf16.gmra.mxu0 %v443
    %v1832 = vpop.f32.mrf.mxu0
    %v1833 = vpop.f32.mrf.mxu0
    %v1834 = vadd.f32 %v1799, %v1833
    %1835 = vmatmul.bf16.gmra.mxu0 %v445
    %v1836 = vpop.f32.mrf.mxu0
    %v1837 = vadd.f32 %v1802, %v1836
    %v1838 = vpop.f32.mrf.mxu0
    %1839 = vmatmul.bf16.gmra.mxu0 %v447
    %v1840 = vpop.f32.mrf.mxu0
    %v1841 = vadd.f32 %v1806, %v1840
    %v1842 = vpop.f32.mrf.mxu0
    %v1843 = vadd.f32 %v1808, %v1842
    %1844 = vmatmul.bf16.gmra.mxu0 %v449
    %v1845 = vpop.f32.mrf.mxu0
    %v1846 = vpop.f32.mrf.mxu0
    %v1847 = vadd.f32 %v1812, %v1846
    %1848 = vmatmul.bf16.gmra.mxu0 %v451
    %v1849 = vpop.f32.mrf.mxu0
    %v1850 = vadd.f32 %v1815, %v1849
    %v1851 = vpop.f32.mrf.mxu0
    %1852 = vdwg.mxu0
    %v1853 = vadd.f32 %v1504, %v1758
    %v1854 = vadd.f32 %v1505, %v1828
    %v1855 = vadd.f32 %v1506, %v1760
    %v1856 = vadd.f32 %v1507, %v1830
    %v1857 = vadd.f32 %v1508, %v1764
    %v1858 = vadd.f32 %v1509, %v1834
    %v1859 = vadd.f32 %v1510, %v1767
    %v1860 = vadd.f32 %v1511, %v1837
    %v1861 = vadd.f32 %v1512, %v1771
    %v1862 = vadd.f32 %v1513, %v1841
    %v1863 = vadd.f32 %v1514, %v1773
    %v1864 = vadd.f32 %v1515, %v1843
    %v1865 = vadd.f32 %v1516, %v1777
    %v1866 = vadd.f32 %v1517, %v1847
    %v1867 = vadd.f32 %v1518, %v1780
    %v1868 = vadd.f32 %v1519, %v1850
    %s1869 = scalar_lea.vmem [#allocation6], 1024
    %v1870 = vld [vmem:[%s1869] sm:$0xff]
    %v1871 = vld [vmem:[%s1869 + $0x8] sm:$0xff]
    %v1872 = vld [vmem:[%s1869 + $0x10] sm:$0xff]
    %v1873 = vld [vmem:[%s1869 + $0x18] sm:$0xff]
    %v1874 = vld [vmem:[%s1869 + $0x20] sm:$0xff]
    %v1875 = vld [vmem:[%s1869 + $0x28] sm:$0xff]
    %v1876 = vld [vmem:[%s1869 + $0x30] sm:$0xff]
    %v1877 = vld [vmem:[%s1869 + $0x38] sm:$0xff]
    %v1878 = vld [vmem:[%s1869 + $0x40] sm:$0xff]
    %v1879 = vld [vmem:[%s1869 + $0x48] sm:$0xff]
    %v1880 = vld [vmem:[%s1869 + $0x50] sm:$0xff]
    %v1881 = vld [vmem:[%s1869 + $0x58] sm:$0xff]
    %v1882 = vld [vmem:[%s1869 + $0x60] sm:$0xff]
    %v1883 = vld [vmem:[%s1869 + $0x68] sm:$0xff]
    %v1884 = vld [vmem:[%s1869 + $0x70] sm:$0xff]
    %v1885 = vld [vmem:[%s1869 + $0x78] sm:$0xff]
    %v1886 = vld [vmem:[%s1869 + $0x80] sm:$0xff]
    %v1887 = vld [vmem:[%s1869 + $0x88] sm:$0xff]
    %v1888 = vld [vmem:[%s1869 + $0x90] sm:$0xff]
    %v1889 = vld [vmem:[%s1869 + $0x98] sm:$0xff]
    %v1890 = vld [vmem:[%s1869 + $0xa0] sm:$0xff]
    %v1891 = vld [vmem:[%s1869 + $0xa8] sm:$0xff]
    %v1892 = vld [vmem:[%s1869 + $0xb0] sm:$0xff]
    %v1893 = vld [vmem:[%s1869 + $0xb8] sm:$0xff]
    %v1894 = vld [vmem:[%s1869 + $0xc0] sm:$0xff]
    %v1895 = vld [vmem:[%s1869 + $0xc8] sm:$0xff]
    %v1896 = vld [vmem:[%s1869 + $0xd0] sm:$0xff]
    %v1897 = vld [vmem:[%s1869 + $0xd8] sm:$0xff]
    %v1898 = vld [vmem:[%s1869 + $0xe0] sm:$0xff]
    %v1899 = vld [vmem:[%s1869 + $0xe8] sm:$0xff]
    %v1900 = vld [vmem:[%s1869 + $0xf0] sm:$0xff]
    %v1901 = vld [vmem:[%s1869 + $0xf8] sm:$0xff]
    %v1934 = vunpack.c.l.b16 %v1870
    %v1935 = vunpack.c.h.b16 %v1870
    %v1936 = vunpack.c.l.b16 %v1871
    %v1937 = vunpack.c.h.b16 %v1871
    %v1938 = vunpack.c.l.b16 %v1872
    %v1939 = vunpack.c.h.b16 %v1872
    %v1940 = vunpack.c.l.b16 %v1873
    %v1941 = vunpack.c.h.b16 %v1873
    %v1942 = vunpack.c.l.b16 %v1874
    %v1943 = vunpack.c.h.b16 %v1874
    %v1944 = vunpack.c.l.b16 %v1875
    %v1945 = vunpack.c.h.b16 %v1875
    %v1946 = vunpack.c.l.b16 %v1876
    %v1947 = vunpack.c.h.b16 %v1876
    %v1948 = vunpack.c.l.b16 %v1877
    %v1949 = vunpack.c.h.b16 %v1877
    %v1950 = vunpack.c.l.b16 %v1878
    %v1951 = vunpack.c.h.b16 %v1878
    %v1952 = vunpack.c.l.b16 %v1879
    %v1953 = vunpack.c.h.b16 %v1879
    %v1954 = vunpack.c.l.b16 %v1880
    %v1955 = vunpack.c.h.b16 %v1880
    %v1956 = vunpack.c.l.b16 %v1881
    %v1957 = vunpack.c.h.b16 %v1881
    %v1958 = vunpack.c.l.b16 %v1882
    %v1959 = vunpack.c.h.b16 %v1882
    %v1960 = vunpack.c.l.b16 %v1883
    %v1961 = vunpack.c.h.b16 %v1883
    %v1962 = vunpack.c.l.b16 %v1884
    %v1963 = vunpack.c.h.b16 %v1884
    %v1964 = vunpack.c.l.b16 %v1885
    %v1965 = vunpack.c.h.b16 %v1885
    %v1966 = vunpack.c.l.b16 %v1886
    %v1967 = vunpack.c.h.b16 %v1886
    %v1968 = vunpack.c.l.b16 %v1887
    %v1969 = vunpack.c.h.b16 %v1887
    %v1970 = vunpack.c.l.b16 %v1888
    %v1971 = vunpack.c.h.b16 %v1888
    %v1972 = vunpack.c.l.b16 %v1889
    %v1973 = vunpack.c.h.b16 %v1889
    %v1974 = vunpack.c.l.b16 %v1890
    %v1975 = vunpack.c.h.b16 %v1890
    %v1976 = vunpack.c.l.b16 %v1891
    %v1977 = vunpack.c.h.b16 %v1891
    %v1978 = vunpack.c.l.b16 %v1892
    %v1979 = vunpack.c.h.b16 %v1892
    %v1980 = vunpack.c.l.b16 %v1893
    %v1981 = vunpack.c.h.b16 %v1893
    %v1982 = vunpack.c.l.b16 %v1894
    %v1983 = vunpack.c.h.b16 %v1894
    %v1984 = vunpack.c.l.b16 %v1895
    %v1985 = vunpack.c.h.b16 %v1895
    %v1986 = vunpack.c.l.b16 %v1896
    %v1987 = vunpack.c.h.b16 %v1896
    %v1988 = vunpack.c.l.b16 %v1897
    %v1989 = vunpack.c.h.b16 %v1897
    %v1990 = vunpack.c.l.b16 %v1898
    %v1991 = vunpack.c.h.b16 %v1898
    %v1992 = vunpack.c.l.b16 %v1899
    %v1993 = vunpack.c.h.b16 %v1899
    %v1994 = vunpack.c.l.b16 %v1900
    %v1995 = vunpack.c.h.b16 %v1900
    %v1996 = vunpack.c.l.b16 %v1901
    %v1997 = vunpack.c.h.b16 %v1901
    %v1998 = vpack.c.b16 %v1936, %v1934
    %v1999 = vpack.c.b16 %v1937, %v1935
    %v2000 = vpack.c.b16 %v1940, %v1938
    %v2001 = vpack.c.b16 %v1941, %v1939
    %v2002 = vpack.c.b16 %v1944, %v1942
    %v2003 = vpack.c.b16 %v1945, %v1943
    %v2004 = vpack.c.b16 %v1948, %v1946
    %v2005 = vpack.c.b16 %v1949, %v1947
    %v2006 = vpack.c.b16 %v1952, %v1950
    %v2007 = vpack.c.b16 %v1953, %v1951
    %v2008 = vpack.c.b16 %v1956, %v1954
    %v2009 = vpack.c.b16 %v1957, %v1955
    %v2010 = vpack.c.b16 %v1960, %v1958
    %v2011 = vpack.c.b16 %v1961, %v1959
    %v2012 = vpack.c.b16 %v1964, %v1962
    %v2013 = vpack.c.b16 %v1965, %v1963
    %v2014 = vpack.c.b16 %v1968, %v1966
    %v2015 = vpack.c.b16 %v1969, %v1967
    %v2016 = vpack.c.b16 %v1972, %v1970
    %v2017 = vpack.c.b16 %v1973, %v1971
    %v2018 = vpack.c.b16 %v1976, %v1974
    %v2019 = vpack.c.b16 %v1977, %v1975
    %v2020 = vpack.c.b16 %v1980, %v1978
    %v2021 = vpack.c.b16 %v1981, %v1979
    %v2022 = vpack.c.b16 %v1984, %v1982
    %v2023 = vpack.c.b16 %v1985, %v1983
    %v2024 = vpack.c.b16 %v1988, %v1986
    %v2025 = vpack.c.b16 %v1989, %v1987
    %v2026 = vpack.c.b16 %v1992, %v1990
    %v2027 = vpack.c.b16 %v1993, %v1991
    %v2028 = vpack.c.b16 %v1996, %v1994
    %v2029 = vpack.c.b16 %v1997, %v1995
    %2062 = vmatpush.bf16.msra.mxu0 %v2012
    %2063 = vmatpush.bf16.msra.mxu0 %v2010
    %2064 = vmatpush.bf16.msra.mxu0 %v2008
    %2065 = vmatpush.bf16.msra.mxu0 %v2006
    %2066 = vmatpush.bf16.msra.mxu0 %v2004
    %2067 = vmatpush.bf16.msra.mxu0 %v2002
    %2068 = vmatpush.bf16.msra.mxu0 %v2000
    %2069 = vmatpush.bf16.msra.mxu0 %v1998
    %2070 = vmatmul.bf16.gmra.mxu0 %v440
    %v2071 = vpop.f32.mrf.mxu0
    %v2072 = vpop.f32.mrf.mxu0
    %v2073 = vadd.f32 0.0, %v2072
    %2074 = vmatmul.bf16.gmra.mxu0 %v442
    %v2075 = vpop.f32.mrf.mxu0
    %v2076 = vpop.f32.mrf.mxu0
    %2077 = vmatmul.bf16.gmra.mxu0 %v444
    %v2078 = vpop.f32.mrf.mxu0
    %v2079 = vadd.f32 0.0, %v2078
    %v2080 = vpop.f32.mrf.mxu0
    %2081 = vmatmul.bf16.gmra.mxu0 %v446
    %v2082 = vpop.f32.mrf.mxu0
    %v2083 = vpop.f32.mrf.mxu0
    %v2084 = vadd.f32 0.0, %v2083
    %2085 = vmatmul.bf16.gmra.mxu0 %v448
    %v2086 = vpop.f32.mrf.mxu0
    %v2087 = vpop.f32.mrf.mxu0
    %2088 = vmatmul.bf16.gmra.mxu0 %v450
    %v2089 = vpop.f32.mrf.mxu0
    %v2090 = vadd.f32 0.0, %v2089
    %v2091 = vpop.f32.mrf.mxu0
    %2092 = vdwg.mxu0
    %2093 = vmatpush.bf16.msra.mxu0 %v2028
    %2094 = vmatpush.bf16.msra.mxu0 %v2026
    %2095 = vmatpush.bf16.msra.mxu0 %v2024
    %2096 = vmatpush.bf16.msra.mxu0 %v2022
    %2097 = vmatpush.bf16.msra.mxu0 %v2020
    %2098 = vmatpush.bf16.msra.mxu0 %v2018
    %2099 = vmatpush.bf16.msra.mxu0 %v2016
    %2100 = vmatpush.bf16.msra.mxu0 %v2014
    %2101 = vmatmul.bf16.gmra.mxu0 %v441
    %v2102 = vpop.f32.mrf.mxu0
    %v2103 = vpop.f32.mrf.mxu0
    %v2104 = vadd.f32 %v2073, %v2103
    %2105 = vmatmul.bf16.gmra.mxu0 %v443
    %v2106 = vpop.f32.mrf.mxu0
    %v2107 = vpop.f32.mrf.mxu0
    %2108 = vmatmul.bf16.gmra.mxu0 %v445
    %v2109 = vpop.f32.mrf.mxu0
    %v2110 = vadd.f32 %v2079, %v2109
    %v2111 = vpop.f32.mrf.mxu0
    %2112 = vmatmul.bf16.gmra.mxu0 %v447
    %v2113 = vpop.f32.mrf.mxu0
    %v2114 = vpop.f32.mrf.mxu0
    %v2115 = vadd.f32 %v2084, %v2114
    %2116 = vmatmul.bf16.gmra.mxu0 %v449
    %v2117 = vpop.f32.mrf.mxu0
    %v2118 = vpop.f32.mrf.mxu0
    %2119 = vmatmul.bf16.gmra.mxu0 %v451
    %v2120 = vpop.f32.mrf.mxu0
    %v2121 = vadd.f32 %v2090, %v2120
    %v2122 = vpop.f32.mrf.mxu0
    %2123 = vdwg.mxu0
    %2124 = vmatpush.bf16.msra.mxu0 %v2013
    %2125 = vmatpush.bf16.msra.mxu0 %v2011
    %2126 = vmatpush.bf16.msra.mxu0 %v2009
    %2127 = vmatpush.bf16.msra.mxu0 %v2007
    %2128 = vmatpush.bf16.msra.mxu0 %v2005
    %2129 = vmatpush.bf16.msra.mxu0 %v2003
    %2130 = vmatpush.bf16.msra.mxu0 %v2001
    %2131 = vmatpush.bf16.msra.mxu0 %v1999
    %2132 = vmatmul.bf16.gmra.mxu0 %v440
    %v2133 = vpop.f32.mrf.mxu0
    %v2134 = vpop.f32.mrf.mxu0
    %v2135 = vadd.f32 0.0, %v2134
    %2136 = vmatmul.bf16.gmra.mxu0 %v442
    %v2137 = vpop.f32.mrf.mxu0
    %v2138 = vpop.f32.mrf.mxu0
    %2139 = vmatmul.bf16.gmra.mxu0 %v444
    %v2140 = vpop.f32.mrf.mxu0
    %v2141 = vadd.f32 0.0, %v2140
    %v2142 = vpop.f32.mrf.mxu0
    %2143 = vmatmul.bf16.gmra.mxu0 %v446
    %v2144 = vpop.f32.mrf.mxu0
    %v2145 = vpop.f32.mrf.mxu0
    %v2146 = vadd.f32 0.0, %v2145
    %2147 = vmatmul.bf16.gmra.mxu0 %v448
    %v2148 = vpop.f32.mrf.mxu0
    %v2149 = vpop.f32.mrf.mxu0
    %2150 = vmatmul.bf16.gmra.mxu0 %v450
    %v2151 = vpop.f32.mrf.mxu0
    %v2152 = vadd.f32 0.0, %v2151
    %v2153 = vpop.f32.mrf.mxu0
    %2154 = vdwg.mxu0
    %2155 = vmatpush.bf16.msra.mxu0 %v2029
    %2156 = vmatpush.bf16.msra.mxu0 %v2027
    %2157 = vmatpush.bf16.msra.mxu0 %v2025
    %2158 = vmatpush.bf16.msra.mxu0 %v2023
    %2159 = vmatpush.bf16.msra.mxu0 %v2021
    %2160 = vmatpush.bf16.msra.mxu0 %v2019
    %2161 = vmatpush.bf16.msra.mxu0 %v2017
    %2162 = vmatpush.bf16.msra.mxu0 %v2015
    %2163 = vmatmul.bf16.gmra.mxu0 %v441
    %v2164 = vpop.f32.mrf.mxu0
    %v2165 = vpop.f32.mrf.mxu0
    %v2166 = vadd.f32 %v2135, %v2165
    %2167 = vmatmul.bf16.gmra.mxu0 %v443
    %v2168 = vpop.f32.mrf.mxu0
    %v2169 = vpop.f32.mrf.mxu0
    %2170 = vmatmul.bf16.gmra.mxu0 %v445
    %v2171 = vpop.f32.mrf.mxu0
    %v2172 = vadd.f32 %v2141, %v2171
    %v2173 = vpop.f32.mrf.mxu0
    %2174 = vmatmul.bf16.gmra.mxu0 %v447
    %v2175 = vpop.f32.mrf.mxu0
    %v2176 = vpop.f32.mrf.mxu0
    %v2177 = vadd.f32 %v2146, %v2176
    %2178 = vmatmul.bf16.gmra.mxu0 %v449
    %v2179 = vpop.f32.mrf.mxu0
    %v2180 = vpop.f32.mrf.mxu0
    %2181 = vmatmul.bf16.gmra.mxu0 %v451
    %v2182 = vpop.f32.mrf.mxu0
    %v2183 = vadd.f32 %v2152, %v2182
    %v2184 = vpop.f32.mrf.mxu0
    %2185 = vdwg.mxu0
    %v2194 = vrot.slane %v2104, 1
    %v2195 = vrot.slane %v2166, 1
    %v2196 = vrot.slane %v2110, 1
    %v2197 = vrot.slane %v2172, 1
    %v2198 = vrot.slane %v2115, 1
    %v2199 = vrot.slane %v2177, 1
    %v2200 = vrot.slane %v2121, 1
    %v2201 = vrot.slane %v2183, 1
    %v2210 = vadd.f32 %v1853, %v2194
    %v2211 = vadd.f32 %v1854, %v2195
    %v2212 = vadd.f32 %v1855, %v2194
    %v2213 = vadd.f32 %v1856, %v2195
    %v2214 = vadd.f32 %v1857, %v2196
    %v2215 = vadd.f32 %v1858, %v2197
    %v2216 = vadd.f32 %v1859, %v2196
    %v2217 = vadd.f32 %v1860, %v2197
    %v2218 = vadd.f32 %v1861, %v2198
    %v2219 = vadd.f32 %v1862, %v2199
    %v2220 = vadd.f32 %v1863, %v2198
    %v2221 = vadd.f32 %v1864, %v2199
    %v2222 = vadd.f32 %v1865, %v2200
    %v2223 = vadd.f32 %v1866, %v2201
    %v2224 = vadd.f32 %v1867, %v2200
    %v2225 = vadd.f32 %v1868, %v2201
    %s2226 = scalar_lea.vmem [#allocation6], 1280
    %v2227 = vld [vmem:[%s2226] sm:$0xff]
    %v2228 = vld [vmem:[%s2226 + $0x8] sm:$0xff]
    %v2229 = vld [vmem:[%s2226 + $0x10] sm:$0xff]
    %v2230 = vld [vmem:[%s2226 + $0x18] sm:$0xff]
    %v2231 = vld [vmem:[%s2226 + $0x20] sm:$0xff]
    %v2232 = vld [vmem:[%s2226 + $0x28] sm:$0xff]
    %v2233 = vld [vmem:[%s2226 + $0x30] sm:$0xff]
    %v2234 = vld [vmem:[%s2226 + $0x38] sm:$0xff]
    %v2235 = vld [vmem:[%s2226 + $0x40] sm:$0xff]
    %v2236 = vld [vmem:[%s2226 + $0x48] sm:$0xff]
    %v2237 = vld [vmem:[%s2226 + $0x50] sm:$0xff]
    %v2238 = vld [vmem:[%s2226 + $0x58] sm:$0xff]
    %v2239 = vld [vmem:[%s2226 + $0x60] sm:$0xff]
    %v2240 = vld [vmem:[%s2226 + $0x68] sm:$0xff]
    %v2241 = vld [vmem:[%s2226 + $0x70] sm:$0xff]
    %v2242 = vld [vmem:[%s2226 + $0x78] sm:$0xff]
    %v2243 = vld [vmem:[%s2226 + $0x80] sm:$0xff]
    %v2244 = vld [vmem:[%s2226 + $0x88] sm:$0xff]
    %v2245 = vld [vmem:[%s2226 + $0x90] sm:$0xff]
    %v2246 = vld [vmem:[%s2226 + $0x98] sm:$0xff]
    %v2247 = vld [vmem:[%s2226 + $0xa0] sm:$0xff]
    %v2248 = vld [vmem:[%s2226 + $0xa8] sm:$0xff]
    %v2249 = vld [vmem:[%s2226 + $0xb0] sm:$0xff]
    %v2250 = vld [vmem:[%s2226 + $0xb8] sm:$0xff]
    %v2251 = vld [vmem:[%s2226 + $0xc0] sm:$0xff]
    %v2252 = vld [vmem:[%s2226 + $0xc8] sm:$0xff]
    %v2253 = vld [vmem:[%s2226 + $0xd0] sm:$0xff]
    %v2254 = vld [vmem:[%s2226 + $0xd8] sm:$0xff]
    %v2255 = vld [vmem:[%s2226 + $0xe0] sm:$0xff]
    %v2256 = vld [vmem:[%s2226 + $0xe8] sm:$0xff]
    %v2257 = vld [vmem:[%s2226 + $0xf0] sm:$0xff]
    %v2258 = vld [vmem:[%s2226 + $0xf8] sm:$0xff]
    %v2291 = vunpack.c.l.b16 %v2227
    %v2292 = vunpack.c.h.b16 %v2227
    %v2293 = vunpack.c.l.b16 %v2228
    %v2294 = vunpack.c.h.b16 %v2228
    %v2295 = vunpack.c.l.b16 %v2229
    %v2296 = vunpack.c.h.b16 %v2229
    %v2297 = vunpack.c.l.b16 %v2230
    %v2298 = vunpack.c.h.b16 %v2230
    %v2299 = vunpack.c.l.b16 %v2231
    %v2300 = vunpack.c.h.b16 %v2231
    %v2301 = vunpack.c.l.b16 %v2232
    %v2302 = vunpack.c.h.b16 %v2232
    %v2303 = vunpack.c.l.b16 %v2233
    %v2304 = vunpack.c.h.b16 %v2233
    %v2305 = vunpack.c.l.b16 %v2234
    %v2306 = vunpack.c.h.b16 %v2234
    %v2307 = vunpack.c.l.b16 %v2235
    %v2308 = vunpack.c.h.b16 %v2235
    %v2309 = vunpack.c.l.b16 %v2236
    %v2310 = vunpack.c.h.b16 %v2236
    %v2311 = vunpack.c.l.b16 %v2237
    %v2312 = vunpack.c.h.b16 %v2237
    %v2313 = vunpack.c.l.b16 %v2238
    %v2314 = vunpack.c.h.b16 %v2238
    %v2315 = vunpack.c.l.b16 %v2239
    %v2316 = vunpack.c.h.b16 %v2239
    %v2317 = vunpack.c.l.b16 %v2240
    %v2318 = vunpack.c.h.b16 %v2240
    %v2319 = vunpack.c.l.b16 %v2241
    %v2320 = vunpack.c.h.b16 %v2241
    %v2321 = vunpack.c.l.b16 %v2242
    %v2322 = vunpack.c.h.b16 %v2242
    %v2323 = vunpack.c.l.b16 %v2243
    %v2324 = vunpack.c.h.b16 %v2243
    %v2325 = vunpack.c.l.b16 %v2244
    %v2326 = vunpack.c.h.b16 %v2244
    %v2327 = vunpack.c.l.b16 %v2245
    %v2328 = vunpack.c.h.b16 %v2245
    %v2329 = vunpack.c.l.b16 %v2246
    %v2330 = vunpack.c.h.b16 %v2246
    %v2331 = vunpack.c.l.b16 %v2247
    %v2332 = vunpack.c.h.b16 %v2247
    %v2333 = vunpack.c.l.b16 %v2248
    %v2334 = vunpack.c.h.b16 %v2248
    %v2335 = vunpack.c.l.b16 %v2249
    %v2336 = vunpack.c.h.b16 %v2249
    %v2337 = vunpack.c.l.b16 %v2250
    %v2338 = vunpack.c.h.b16 %v2250
    %v2339 = vunpack.c.l.b16 %v2251
    %v2340 = vunpack.c.h.b16 %v2251
    %v2341 = vunpack.c.l.b16 %v2252
    %v2342 = vunpack.c.h.b16 %v2252
    %v2343 = vunpack.c.l.b16 %v2253
    %v2344 = vunpack.c.h.b16 %v2253
    %v2345 = vunpack.c.l.b16 %v2254
    %v2346 = vunpack.c.h.b16 %v2254
    %v2347 = vunpack.c.l.b16 %v2255
    %v2348 = vunpack.c.h.b16 %v2255
    %v2349 = vunpack.c.l.b16 %v2256
    %v2350 = vunpack.c.h.b16 %v2256
    %v2351 = vunpack.c.l.b16 %v2257
    %v2352 = vunpack.c.h.b16 %v2257
    %v2353 = vunpack.c.l.b16 %v2258
    %v2354 = vunpack.c.h.b16 %v2258
    %v2355 = vpack.c.b16 %v2293, %v2291
    %v2356 = vpack.c.b16 %v2294, %v2292
    %v2357 = vpack.c.b16 %v2297, %v2295
    %v2358 = vpack.c.b16 %v2298, %v2296
    %v2359 = vpack.c.b16 %v2301, %v2299
    %v2360 = vpack.c.b16 %v2302, %v2300
    %v2361 = vpack.c.b16 %v2305, %v2303
    %v2362 = vpack.c.b16 %v2306, %v2304
    %v2363 = vpack.c.b16 %v2309, %v2307
    %v2364 = vpack.c.b16 %v2310, %v2308
    %v2365 = vpack.c.b16 %v2313, %v2311
    %v2366 = vpack.c.b16 %v2314, %v2312
    %v2367 = vpack.c.b16 %v2317, %v2315
    %v2368 = vpack.c.b16 %v2318, %v2316
    %v2369 = vpack.c.b16 %v2321, %v2319
    %v2370 = vpack.c.b16 %v2322, %v2320
    %v2371 = vpack.c.b16 %v2325, %v2323
    %v2372 = vpack.c.b16 %v2326, %v2324
    %v2373 = vpack.c.b16 %v2329, %v2327
    %v2374 = vpack.c.b16 %v2330, %v2328
    %v2375 = vpack.c.b16 %v2333, %v2331
    %v2376 = vpack.c.b16 %v2334, %v2332
    %v2377 = vpack.c.b16 %v2337, %v2335
    %v2378 = vpack.c.b16 %v2338, %v2336
    %v2379 = vpack.c.b16 %v2341, %v2339
    %v2380 = vpack.c.b16 %v2342, %v2340
    %v2381 = vpack.c.b16 %v2345, %v2343
    %v2382 = vpack.c.b16 %v2346, %v2344
    %v2383 = vpack.c.b16 %v2349, %v2347
    %v2384 = vpack.c.b16 %v2350, %v2348
    %v2385 = vpack.c.b16 %v2353, %v2351
    %v2386 = vpack.c.b16 %v2354, %v2352
    %2419 = vmatpush.bf16.msra.mxu0 %v2369
    %2420 = vmatpush.bf16.msra.mxu0 %v2367
    %2421 = vmatpush.bf16.msra.mxu0 %v2365
    %2422 = vmatpush.bf16.msra.mxu0 %v2363
    %2423 = vmatpush.bf16.msra.mxu0 %v2361
    %2424 = vmatpush.bf16.msra.mxu0 %v2359
    %2425 = vmatpush.bf16.msra.mxu0 %v2357
    %2426 = vmatpush.bf16.msra.mxu0 %v2355
    %2427 = vmatmul.bf16.gmra.mxu0 %v440
    %v2428 = vpop.f32.mrf.mxu0
    %v2429 = vpop.f32.mrf.mxu0
    %v2430 = vadd.f32 0.0, %v2429
    %2431 = vmatmul.bf16.gmra.mxu0 %v442
    %v2432 = vpop.f32.mrf.mxu0
    %v2433 = vpop.f32.mrf.mxu0
    %2434 = vmatmul.bf16.gmra.mxu0 %v444
    %v2435 = vpop.f32.mrf.mxu0
    %v2436 = vadd.f32 0.0, %v2435
    %v2437 = vpop.f32.mrf.mxu0
    %2438 = vmatmul.bf16.gmra.mxu0 %v446
    %v2439 = vpop.f32.mrf.mxu0
    %v2440 = vpop.f32.mrf.mxu0
    %v2441 = vadd.f32 0.0, %v2440
    %2442 = vmatmul.bf16.gmra.mxu0 %v448
    %v2443 = vpop.f32.mrf.mxu0
    %v2444 = vpop.f32.mrf.mxu0
    %2445 = vmatmul.bf16.gmra.mxu0 %v450
    %v2446 = vpop.f32.mrf.mxu0
    %v2447 = vadd.f32 0.0, %v2446
    %v2448 = vpop.f32.mrf.mxu0
    %2449 = vdwg.mxu0
    %2450 = vmatpush.bf16.msra.mxu0 %v2385
    %2451 = vmatpush.bf16.msra.mxu0 %v2383
    %2452 = vmatpush.bf16.msra.mxu0 %v2381
    %2453 = vmatpush.bf16.msra.mxu0 %v2379
    %2454 = vmatpush.bf16.msra.mxu0 %v2377
    %2455 = vmatpush.bf16.msra.mxu0 %v2375
    %2456 = vmatpush.bf16.msra.mxu0 %v2373
    %2457 = vmatpush.bf16.msra.mxu0 %v2371
    %2458 = vmatmul.bf16.gmra.mxu0 %v441
    %v2459 = vpop.f32.mrf.mxu0
    %v2460 = vpop.f32.mrf.mxu0
    %v2461 = vadd.f32 %v2430, %v2460
    %2462 = vmatmul.bf16.gmra.mxu0 %v443
    %v2463 = vpop.f32.mrf.mxu0
    %v2464 = vpop.f32.mrf.mxu0
    %2465 = vmatmul.bf16.gmra.mxu0 %v445
    %v2466 = vpop.f32.mrf.mxu0
    %v2467 = vadd.f32 %v2436, %v2466
    %v2468 = vpop.f32.mrf.mxu0
    %2469 = vmatmul.bf16.gmra.mxu0 %v447
    %v2470 = vpop.f32.mrf.mxu0
    %v2471 = vpop.f32.mrf.mxu0
    %v2472 = vadd.f32 %v2441, %v2471
    %2473 = vmatmul.bf16.gmra.mxu0 %v449
    %v2474 = vpop.f32.mrf.mxu0
    %v2475 = vpop.f32.mrf.mxu0
    %2476 = vmatmul.bf16.gmra.mxu0 %v451
    %v2477 = vpop.f32.mrf.mxu0
    %v2478 = vadd.f32 %v2447, %v2477
    %v2479 = vpop.f32.mrf.mxu0
    %2480 = vdwg.mxu0
    %2481 = vmatpush.bf16.msra.mxu0 %v2370
    %2482 = vmatpush.bf16.msra.mxu0 %v2368
    %2483 = vmatpush.bf16.msra.mxu0 %v2366
    %2484 = vmatpush.bf16.msra.mxu0 %v2364
    %2485 = vmatpush.bf16.msra.mxu0 %v2362
    %2486 = vmatpush.bf16.msra.mxu0 %v2360
    %2487 = vmatpush.bf16.msra.mxu0 %v2358
    %2488 = vmatpush.bf16.msra.mxu0 %v2356
    %2489 = vmatmul.bf16.gmra.mxu0 %v440
    %v2490 = vpop.f32.mrf.mxu0
    %v2491 = vpop.f32.mrf.mxu0
    %v2492 = vadd.f32 0.0, %v2491
    %2493 = vmatmul.bf16.gmra.mxu0 %v442
    %v2494 = vpop.f32.mrf.mxu0
    %v2495 = vpop.f32.mrf.mxu0
    %2496 = vmatmul.bf16.gmra.mxu0 %v444
    %v2497 = vpop.f32.mrf.mxu0
    %v2498 = vadd.f32 0.0, %v2497
    %v2499 = vpop.f32.mrf.mxu0
    %2500 = vmatmul.bf16.gmra.mxu0 %v446
    %v2501 = vpop.f32.mrf.mxu0
    %v2502 = vpop.f32.mrf.mxu0
    %v2503 = vadd.f32 0.0, %v2502
    %2504 = vmatmul.bf16.gmra.mxu0 %v448
    %v2505 = vpop.f32.mrf.mxu0
    %v2506 = vpop.f32.mrf.mxu0
    %2507 = vmatmul.bf16.gmra.mxu0 %v450
    %v2508 = vpop.f32.mrf.mxu0
    %v2509 = vadd.f32 0.0, %v2508
    %v2510 = vpop.f32.mrf.mxu0
    %2511 = vdwg.mxu0
    %2512 = vmatpush.bf16.msra.mxu0 %v2386
    %2513 = vmatpush.bf16.msra.mxu0 %v2384
    %2514 = vmatpush.bf16.msra.mxu0 %v2382
    %2515 = vmatpush.bf16.msra.mxu0 %v2380
    %2516 = vmatpush.bf16.msra.mxu0 %v2378
    %2517 = vmatpush.bf16.msra.mxu0 %v2376
    %2518 = vmatpush.bf16.msra.mxu0 %v2374
    %2519 = vmatpush.bf16.msra.mxu0 %v2372
    %2520 = vmatmul.bf16.gmra.mxu0 %v441
    %v2521 = vpop.f32.mrf.mxu0
    %v2522 = vpop.f32.mrf.mxu0
    %v2523 = vadd.f32 %v2492, %v2522
    %2524 = vmatmul.bf16.gmra.mxu0 %v443
    %v2525 = vpop.f32.mrf.mxu0
    %v2526 = vpop.f32.mrf.mxu0
    %2527 = vmatmul.bf16.gmra.mxu0 %v445
    %v2528 = vpop.f32.mrf.mxu0
    %v2529 = vadd.f32 %v2498, %v2528
    %v2530 = vpop.f32.mrf.mxu0
    %2531 = vmatmul.bf16.gmra.mxu0 %v447
    %v2532 = vpop.f32.mrf.mxu0
    %v2533 = vpop.f32.mrf.mxu0
    %v2534 = vadd.f32 %v2503, %v2533
    %2535 = vmatmul.bf16.gmra.mxu0 %v449
    %v2536 = vpop.f32.mrf.mxu0
    %v2537 = vpop.f32.mrf.mxu0
    %2538 = vmatmul.bf16.gmra.mxu0 %v451
    %v2539 = vpop.f32.mrf.mxu0
    %v2540 = vadd.f32 %v2509, %v2539
    %v2541 = vpop.f32.mrf.mxu0
    %2542 = vdwg.mxu0
    %v2551 = vrot.slane %v2461, 2
    %v2552 = vrot.slane %v2523, 2
    %v2553 = vrot.slane %v2467, 2
    %v2554 = vrot.slane %v2529, 2
    %v2555 = vrot.slane %v2472, 2
    %v2556 = vrot.slane %v2534, 2
    %v2557 = vrot.slane %v2478, 2
    %v2558 = vrot.slane %v2540, 2
    %v2567 = vadd.f32 %v2210, %v2551
    %v2568 = vadd.f32 %v2211, %v2552
    %v2569 = vadd.f32 %v2212, %v2551
    %v2570 = vadd.f32 %v2213, %v2552
    %v2571 = vadd.f32 %v2214, %v2553
    %v2572 = vadd.f32 %v2215, %v2554
    %v2573 = vadd.f32 %v2216, %v2553
    %v2574 = vadd.f32 %v2217, %v2554
    %v2575 = vadd.f32 %v2218, %v2555
    %v2576 = vadd.f32 %v2219, %v2556
    %v2577 = vadd.f32 %v2220, %v2555
    %v2578 = vadd.f32 %v2221, %v2556
    %v2579 = vadd.f32 %v2222, %v2557
    %v2580 = vadd.f32 %v2223, %v2558
    %v2581 = vadd.f32 %v2224, %v2557
    %v2582 = vadd.f32 %v2225, %v2558
    %s2583 = scalar_lea.vmem [#allocation6], 1536
    %v2584 = vld [vmem:[%s2583] sm:$0xff]
    %v2585 = vld [vmem:[%s2583 + $0x8] sm:$0xff]
    %v2586 = vld [vmem:[%s2583 + $0x10] sm:$0xff]
    %v2587 = vld [vmem:[%s2583 + $0x18] sm:$0xff]
    %v2588 = vld [vmem:[%s2583 + $0x20] sm:$0xff]
    %v2589 = vld [vmem:[%s2583 + $0x28] sm:$0xff]
    %v2590 = vld [vmem:[%s2583 + $0x30] sm:$0xff]
    %v2591 = vld [vmem:[%s2583 + $0x38] sm:$0xff]
    %v2592 = vld [vmem:[%s2583 + $0x40] sm:$0xff]
    %v2593 = vld [vmem:[%s2583 + $0x48] sm:$0xff]
    %v2594 = vld [vmem:[%s2583 + $0x50] sm:$0xff]
    %v2595 = vld [vmem:[%s2583 + $0x58] sm:$0xff]
    %v2596 = vld [vmem:[%s2583 + $0x60] sm:$0xff]
    %v2597 = vld [vmem:[%s2583 + $0x68] sm:$0xff]
    %v2598 = vld [vmem:[%s2583 + $0x70] sm:$0xff]
    %v2599 = vld [vmem:[%s2583 + $0x78] sm:$0xff]
    %v2600 = vld [vmem:[%s2583 + $0x80] sm:$0xff]
    %v2601 = vld [vmem:[%s2583 + $0x88] sm:$0xff]
    %v2602 = vld [vmem:[%s2583 + $0x90] sm:$0xff]
    %v2603 = vld [vmem:[%s2583 + $0x98] sm:$0xff]
    %v2604 = vld [vmem:[%s2583 + $0xa0] sm:$0xff]
    %v2605 = vld [vmem:[%s2583 + $0xa8] sm:$0xff]
    %v2606 = vld [vmem:[%s2583 + $0xb0] sm:$0xff]
    %v2607 = vld [vmem:[%s2583 + $0xb8] sm:$0xff]
    %v2608 = vld [vmem:[%s2583 + $0xc0] sm:$0xff]
    %v2609 = vld [vmem:[%s2583 + $0xc8] sm:$0xff]
    %v2610 = vld [vmem:[%s2583 + $0xd0] sm:$0xff]
    %v2611 = vld [vmem:[%s2583 + $0xd8] sm:$0xff]
    %v2612 = vld [vmem:[%s2583 + $0xe0] sm:$0xff]
    %v2613 = vld [vmem:[%s2583 + $0xe8] sm:$0xff]
    %v2614 = vld [vmem:[%s2583 + $0xf0] sm:$0xff]
    %v2615 = vld [vmem:[%s2583 + $0xf8] sm:$0xff]
    %v2648 = vunpack.c.l.b16 %v2584
    %v2649 = vunpack.c.h.b16 %v2584
    %v2650 = vunpack.c.l.b16 %v2585
    %v2651 = vunpack.c.h.b16 %v2585
    %v2652 = vunpack.c.l.b16 %v2586
    %v2653 = vunpack.c.h.b16 %v2586
    %v2654 = vunpack.c.l.b16 %v2587
    %v2655 = vunpack.c.h.b16 %v2587
    %v2656 = vunpack.c.l.b16 %v2588
    %v2657 = vunpack.c.h.b16 %v2588
    %v2658 = vunpack.c.l.b16 %v2589
    %v2659 = vunpack.c.h.b16 %v2589
    %v2660 = vunpack.c.l.b16 %v2590
    %v2661 = vunpack.c.h.b16 %v2590
    %v2662 = vunpack.c.l.b16 %v2591
    %v2663 = vunpack.c.h.b16 %v2591
    %v2664 = vunpack.c.l.b16 %v2592
    %v2665 = vunpack.c.h.b16 %v2592
    %v2666 = vunpack.c.l.b16 %v2593
    %v2667 = vunpack.c.h.b16 %v2593
    %v2668 = vunpack.c.l.b16 %v2594
    %v2669 = vunpack.c.h.b16 %v2594
    %v2670 = vunpack.c.l.b16 %v2595
    %v2671 = vunpack.c.h.b16 %v2595
    %v2672 = vunpack.c.l.b16 %v2596
    %v2673 = vunpack.c.h.b16 %v2596
    %v2674 = vunpack.c.l.b16 %v2597
    %v2675 = vunpack.c.h.b16 %v2597
    %v2676 = vunpack.c.l.b16 %v2598
    %v2677 = vunpack.c.h.b16 %v2598
    %v2678 = vunpack.c.l.b16 %v2599
    %v2679 = vunpack.c.h.b16 %v2599
    %v2680 = vunpack.c.l.b16 %v2600
    %v2681 = vunpack.c.h.b16 %v2600
    %v2682 = vunpack.c.l.b16 %v2601
    %v2683 = vunpack.c.h.b16 %v2601
    %v2684 = vunpack.c.l.b16 %v2602
    %v2685 = vunpack.c.h.b16 %v2602
    %v2686 = vunpack.c.l.b16 %v2603
    %v2687 = vunpack.c.h.b16 %v2603
    %v2688 = vunpack.c.l.b16 %v2604
    %v2689 = vunpack.c.h.b16 %v2604
    %v2690 = vunpack.c.l.b16 %v2605
    %v2691 = vunpack.c.h.b16 %v2605
    %v2692 = vunpack.c.l.b16 %v2606
    %v2693 = vunpack.c.h.b16 %v2606
    %v2694 = vunpack.c.l.b16 %v2607
    %v2695 = vunpack.c.h.b16 %v2607
    %v2696 = vunpack.c.l.b16 %v2608
    %v2697 = vunpack.c.h.b16 %v2608
    %v2698 = vunpack.c.l.b16 %v2609
    %v2699 = vunpack.c.h.b16 %v2609
    %v2700 = vunpack.c.l.b16 %v2610
    %v2701 = vunpack.c.h.b16 %v2610
    %v2702 = vunpack.c.l.b16 %v2611
    %v2703 = vunpack.c.h.b16 %v2611
    %v2704 = vunpack.c.l.b16 %v2612
    %v2705 = vunpack.c.h.b16 %v2612
    %v2706 = vunpack.c.l.b16 %v2613
    %v2707 = vunpack.c.h.b16 %v2613
    %v2708 = vunpack.c.l.b16 %v2614
    %v2709 = vunpack.c.h.b16 %v2614
    %v2710 = vunpack.c.l.b16 %v2615
    %v2711 = vunpack.c.h.b16 %v2615
    %v2712 = vpack.c.b16 %v2650, %v2648
    %v2713 = vpack.c.b16 %v2651, %v2649
    %v2714 = vpack.c.b16 %v2654, %v2652
    %v2715 = vpack.c.b16 %v2655, %v2653
    %v2716 = vpack.c.b16 %v2658, %v2656
    %v2717 = vpack.c.b16 %v2659, %v2657
    %v2718 = vpack.c.b16 %v2662, %v2660
    %v2719 = vpack.c.b16 %v2663, %v2661
    %v2720 = vpack.c.b16 %v2666, %v2664
    %v2721 = vpack.c.b16 %v2667, %v2665
    %v2722 = vpack.c.b16 %v2670, %v2668
    %v2723 = vpack.c.b16 %v2671, %v2669
    %v2724 = vpack.c.b16 %v2674, %v2672
    %v2725 = vpack.c.b16 %v2675, %v2673
    %v2726 = vpack.c.b16 %v2678, %v2676
    %v2727 = vpack.c.b16 %v2679, %v2677
    %v2728 = vpack.c.b16 %v2682, %v2680
    %v2729 = vpack.c.b16 %v2683, %v2681
    %v2730 = vpack.c.b16 %v2686, %v2684
    %v2731 = vpack.c.b16 %v2687, %v2685
    %v2732 = vpack.c.b16 %v2690, %v2688
    %v2733 = vpack.c.b16 %v2691, %v2689
    %v2734 = vpack.c.b16 %v2694, %v2692
    %v2735 = vpack.c.b16 %v2695, %v2693
    %v2736 = vpack.c.b16 %v2698, %v2696
    %v2737 = vpack.c.b16 %v2699, %v2697
    %v2738 = vpack.c.b16 %v2702, %v2700
    %v2739 = vpack.c.b16 %v2703, %v2701
    %v2740 = vpack.c.b16 %v2706, %v2704
    %v2741 = vpack.c.b16 %v2707, %v2705
    %v2742 = vpack.c.b16 %v2710, %v2708
    %v2743 = vpack.c.b16 %v2711, %v2709
    %2776 = vmatpush.bf16.msra.mxu0 %v2726
    %2777 = vmatpush.bf16.msra.mxu0 %v2724
    %2778 = vmatpush.bf16.msra.mxu0 %v2722
    %2779 = vmatpush.bf16.msra.mxu0 %v2720
    %2780 = vmatpush.bf16.msra.mxu0 %v2718
    %2781 = vmatpush.bf16.msra.mxu0 %v2716
    %2782 = vmatpush.bf16.msra.mxu0 %v2714
    %2783 = vmatpush.bf16.msra.mxu0 %v2712
    %2784 = vmatmul.bf16.gmra.mxu0 %v434
    %v2785 = vpop.f32.mrf.mxu0
    %v2786 = vadd.f32 0.0, %v2785
    %v2787 = vpop.f32.mrf.mxu0
    %v2788 = vadd.f32 0.0, %v2787
    %2789 = vmatmul.bf16.gmra.mxu0 %v436
    %v2790 = vpop.f32.mrf.mxu0
    %v2791 = vpop.f32.mrf.mxu0
    %v2792 = vadd.f32 0.0, %v2791
    %2793 = vmatmul.bf16.gmra.mxu0 %v438
    %v2794 = vpop.f32.mrf.mxu0
    %v2795 = vadd.f32 0.0, %v2794
    %v2796 = vpop.f32.mrf.mxu0
    %2797 = vmatmul.bf16.gmra.mxu0 %v452
    %v2798 = vpop.f32.mrf.mxu0
    %v2799 = vadd.f32 0.0, %v2798
    %v2800 = vpop.f32.mrf.mxu0
    %v2801 = vadd.f32 0.0, %v2800
    %2802 = vmatmul.bf16.gmra.mxu0 %v454
    %v2803 = vpop.f32.mrf.mxu0
    %v2804 = vpop.f32.mrf.mxu0
    %v2805 = vadd.f32 0.0, %v2804
    %2806 = vmatmul.bf16.gmra.mxu0 %v456
    %v2807 = vpop.f32.mrf.mxu0
    %v2808 = vadd.f32 0.0, %v2807
    %v2809 = vpop.f32.mrf.mxu0
    %2810 = vdwg.mxu0
    %2811 = vmatpush.bf16.msra.mxu0 %v2742
    %2812 = vmatpush.bf16.msra.mxu0 %v2740
    %2813 = vmatpush.bf16.msra.mxu0 %v2738
    %2814 = vmatpush.bf16.msra.mxu0 %v2736
    %2815 = vmatpush.bf16.msra.mxu0 %v2734
    %2816 = vmatpush.bf16.msra.mxu0 %v2732
    %2817 = vmatpush.bf16.msra.mxu0 %v2730
    %2818 = vmatpush.bf16.msra.mxu0 %v2728
    %2819 = vmatmul.bf16.gmra.mxu0 %v435
    %v2820 = vpop.f32.mrf.mxu0
    %v2821 = vadd.f32 %v2786, %v2820
    %v2822 = vpop.f32.mrf.mxu0
    %v2823 = vadd.f32 %v2788, %v2822
    %2824 = vmatmul.bf16.gmra.mxu0 %v437
    %v2825 = vpop.f32.mrf.mxu0
    %v2826 = vpop.f32.mrf.mxu0
    %v2827 = vadd.f32 %v2792, %v2826
    %2828 = vmatmul.bf16.gmra.mxu0 %v439
    %v2829 = vpop.f32.mrf.mxu0
    %v2830 = vadd.f32 %v2795, %v2829
    %v2831 = vpop.f32.mrf.mxu0
    %2832 = vmatmul.bf16.gmra.mxu0 %v453
    %v2833 = vpop.f32.mrf.mxu0
    %v2834 = vadd.f32 %v2799, %v2833
    %v2835 = vpop.f32.mrf.mxu0
    %v2836 = vadd.f32 %v2801, %v2835
    %2837 = vmatmul.bf16.gmra.mxu0 %v455
    %v2838 = vpop.f32.mrf.mxu0
    %v2839 = vpop.f32.mrf.mxu0
    %v2840 = vadd.f32 %v2805, %v2839
    %2841 = vmatmul.bf16.gmra.mxu0 %v457
    %v2842 = vpop.f32.mrf.mxu0
    %v2843 = vadd.f32 %v2808, %v2842
    %v2844 = vpop.f32.mrf.mxu0
    %2845 = vdwg.mxu0
    %2846 = vmatpush.bf16.msra.mxu0 %v2727
    %2847 = vmatpush.bf16.msra.mxu0 %v2725
    %2848 = vmatpush.bf16.msra.mxu0 %v2723
    %2849 = vmatpush.bf16.msra.mxu0 %v2721
    %2850 = vmatpush.bf16.msra.mxu0 %v2719
    %2851 = vmatpush.bf16.msra.mxu0 %v2717
    %2852 = vmatpush.bf16.msra.mxu0 %v2715
    %2853 = vmatpush.bf16.msra.mxu0 %v2713
    %2854 = vmatmul.bf16.gmra.mxu0 %v434
    %v2855 = vpop.f32.mrf.mxu0
    %v2856 = vadd.f32 0.0, %v2855
    %v2857 = vpop.f32.mrf.mxu0
    %v2858 = vadd.f32 0.0, %v2857
    %2859 = vmatmul.bf16.gmra.mxu0 %v436
    %v2860 = vpop.f32.mrf.mxu0
    %v2861 = vpop.f32.mrf.mxu0
    %v2862 = vadd.f32 0.0, %v2861
    %2863 = vmatmul.bf16.gmra.mxu0 %v438
    %v2864 = vpop.f32.mrf.mxu0
    %v2865 = vadd.f32 0.0, %v2864
    %v2866 = vpop.f32.mrf.mxu0
    %2867 = vmatmul.bf16.gmra.mxu0 %v452
    %v2868 = vpop.f32.mrf.mxu0
    %v2869 = vadd.f32 0.0, %v2868
    %v2870 = vpop.f32.mrf.mxu0
    %v2871 = vadd.f32 0.0, %v2870
    %2872 = vmatmul.bf16.gmra.mxu0 %v454
    %v2873 = vpop.f32.mrf.mxu0
    %v2874 = vpop.f32.mrf.mxu0
    %v2875 = vadd.f32 0.0, %v2874
    %2876 = vmatmul.bf16.gmra.mxu0 %v456
    %v2877 = vpop.f32.mrf.mxu0
    %v2878 = vadd.f32 0.0, %v2877
    %v2879 = vpop.f32.mrf.mxu0
    %2880 = vdwg.mxu0
    %2881 = vmatpush.bf16.msra.mxu0 %v2743
    %2882 = vmatpush.bf16.msra.mxu0 %v2741
    %2883 = vmatpush.bf16.msra.mxu0 %v2739
    %2884 = vmatpush.bf16.msra.mxu0 %v2737
    %2885 = vmatpush.bf16.msra.mxu0 %v2735
    %2886 = vmatpush.bf16.msra.mxu0 %v2733
    %2887 = vmatpush.bf16.msra.mxu0 %v2731
    %2888 = vmatpush.bf16.msra.mxu0 %v2729
    %2889 = vmatmul.bf16.gmra.mxu0 %v435
    %v2890 = vpop.f32.mrf.mxu0
    %v2891 = vadd.f32 %v2856, %v2890
    %v2892 = vpop.f32.mrf.mxu0
    %v2893 = vadd.f32 %v2858, %v2892
    %2894 = vmatmul.bf16.gmra.mxu0 %v437
    %v2895 = vpop.f32.mrf.mxu0
    %v2896 = vpop.f32.mrf.mxu0
    %v2897 = vadd.f32 %v2862, %v2896
    %2898 = vmatmul.bf16.gmra.mxu0 %v439
    %v2899 = vpop.f32.mrf.mxu0
    %v2900 = vadd.f32 %v2865, %v2899
    %v2901 = vpop.f32.mrf.mxu0
    %2902 = vmatmul.bf16.gmra.mxu0 %v453
    %v2903 = vpop.f32.mrf.mxu0
    %v2904 = vadd.f32 %v2869, %v2903
    %v2905 = vpop.f32.mrf.mxu0
    %v2906 = vadd.f32 %v2871, %v2905
    %2907 = vmatmul.bf16.gmra.mxu0 %v455
    %v2908 = vpop.f32.mrf.mxu0
    %v2909 = vpop.f32.mrf.mxu0
    %v2910 = vadd.f32 %v2875, %v2909
    %2911 = vmatmul.bf16.gmra.mxu0 %v457
    %v2912 = vpop.f32.mrf.mxu0
    %v2913 = vadd.f32 %v2878, %v2912
    %v2914 = vpop.f32.mrf.mxu0
    %2915 = vdwg.mxu0
    %v2916 = vadd.f32 %v2567, %v2821
    %v2917 = vadd.f32 %v2568, %v2891
    %v2918 = vadd.f32 %v2569, %v2823
    %v2919 = vadd.f32 %v2570, %v2893
    %v2920 = vadd.f32 %v2571, %v2827
    %v2921 = vadd.f32 %v2572, %v2897
    %v2922 = vadd.f32 %v2573, %v2830
    %v2923 = vadd.f32 %v2574, %v2900
    %v2924 = vadd.f32 %v2575, %v2834
    %v2925 = vadd.f32 %v2576, %v2904
    %v2926 = vadd.f32 %v2577, %v2836
    %v2927 = vadd.f32 %v2578, %v2906
    %v2928 = vadd.f32 %v2579, %v2840
    %v2929 = vadd.f32 %v2580, %v2910
    %v2930 = vadd.f32 %v2581, %v2843
    %v2931 = vadd.f32 %v2582, %v2913
    %s2932 = scalar_lea.vmem [#allocation6], 1792
    %v2933 = vld [vmem:[%s2932] sm:$0xff]
    %v2934 = vld [vmem:[%s2932 + $0x8] sm:$0xff]
    %v2935 = vld [vmem:[%s2932 + $0x10] sm:$0xff]
    %v2936 = vld [vmem:[%s2932 + $0x18] sm:$0xff]
    %v2937 = vld [vmem:[%s2932 + $0x20] sm:$0xff]
    %v2938 = vld [vmem:[%s2932 + $0x28] sm:$0xff]
    %v2939 = vld [vmem:[%s2932 + $0x30] sm:$0xff]
    %v2940 = vld [vmem:[%s2932 + $0x38] sm:$0xff]
    %v2941 = vld [vmem:[%s2932 + $0x40] sm:$0xff]
    %v2942 = vld [vmem:[%s2932 + $0x48] sm:$0xff]
    %v2943 = vld [vmem:[%s2932 + $0x50] sm:$0xff]
    %v2944 = vld [vmem:[%s2932 + $0x58] sm:$0xff]
    %v2945 = vld [vmem:[%s2932 + $0x60] sm:$0xff]
    %v2946 = vld [vmem:[%s2932 + $0x68] sm:$0xff]
    %v2947 = vld [vmem:[%s2932 + $0x70] sm:$0xff]
    %v2948 = vld [vmem:[%s2932 + $0x78] sm:$0xff]
    %v2949 = vld [vmem:[%s2932 + $0x80] sm:$0xff]
    %v2950 = vld [vmem:[%s2932 + $0x88] sm:$0xff]
    %v2951 = vld [vmem:[%s2932 + $0x90] sm:$0xff]
    %v2952 = vld [vmem:[%s2932 + $0x98] sm:$0xff]
    %v2953 = vld [vmem:[%s2932 + $0xa0] sm:$0xff]
    %v2954 = vld [vmem:[%s2932 + $0xa8] sm:$0xff]
    %v2955 = vld [vmem:[%s2932 + $0xb0] sm:$0xff]
    %v2956 = vld [vmem:[%s2932 + $0xb8] sm:$0xff]
    %v2957 = vld [vmem:[%s2932 + $0xc0] sm:$0xff]
    %v2958 = vld [vmem:[%s2932 + $0xc8] sm:$0xff]
    %v2959 = vld [vmem:[%s2932 + $0xd0] sm:$0xff]
    %v2960 = vld [vmem:[%s2932 + $0xd8] sm:$0xff]
    %v2961 = vld [vmem:[%s2932 + $0xe0] sm:$0xff]
    %v2962 = vld [vmem:[%s2932 + $0xe8] sm:$0xff]
    %v2963 = vld [vmem:[%s2932 + $0xf0] sm:$0xff]
    %v2964 = vld [vmem:[%s2932 + $0xf8] sm:$0xff]
    %v2997 = vunpack.c.l.b16 %v2933
    %v2998 = vunpack.c.h.b16 %v2933
    %v2999 = vunpack.c.l.b16 %v2934
    %v3000 = vunpack.c.h.b16 %v2934
    %v3001 = vunpack.c.l.b16 %v2935
    %v3002 = vunpack.c.h.b16 %v2935
    %v3003 = vunpack.c.l.b16 %v2936
    %v3004 = vunpack.c.h.b16 %v2936
    %v3005 = vunpack.c.l.b16 %v2937
    %v3006 = vunpack.c.h.b16 %v2937
    %v3007 = vunpack.c.l.b16 %v2938
    %v3008 = vunpack.c.h.b16 %v2938
    %v3009 = vunpack.c.l.b16 %v2939
    %v3010 = vunpack.c.h.b16 %v2939
    %v3011 = vunpack.c.l.b16 %v2940
    %v3012 = vunpack.c.h.b16 %v2940
    %v3013 = vunpack.c.l.b16 %v2941
    %v3014 = vunpack.c.h.b16 %v2941
    %v3015 = vunpack.c.l.b16 %v2942
    %v3016 = vunpack.c.h.b16 %v2942
    %v3017 = vunpack.c.l.b16 %v2943
    %v3018 = vunpack.c.h.b16 %v2943
    %v3019 = vunpack.c.l.b16 %v2944
    %v3020 = vunpack.c.h.b16 %v2944
    %v3021 = vunpack.c.l.b16 %v2945
    %v3022 = vunpack.c.h.b16 %v2945
    %v3023 = vunpack.c.l.b16 %v2946
    %v3024 = vunpack.c.h.b16 %v2946
    %v3025 = vunpack.c.l.b16 %v2947
    %v3026 = vunpack.c.h.b16 %v2947
    %v3027 = vunpack.c.l.b16 %v2948
    %v3028 = vunpack.c.h.b16 %v2948
    %v3029 = vunpack.c.l.b16 %v2949
    %v3030 = vunpack.c.h.b16 %v2949
    %v3031 = vunpack.c.l.b16 %v2950
    %v3032 = vunpack.c.h.b16 %v2950
    %v3033 = vunpack.c.l.b16 %v2951
    %v3034 = vunpack.c.h.b16 %v2951
    %v3035 = vunpack.c.l.b16 %v2952
    %v3036 = vunpack.c.h.b16 %v2952
    %v3037 = vunpack.c.l.b16 %v2953
    %v3038 = vunpack.c.h.b16 %v2953
    %v3039 = vunpack.c.l.b16 %v2954
    %v3040 = vunpack.c.h.b16 %v2954
    %v3041 = vunpack.c.l.b16 %v2955
    %v3042 = vunpack.c.h.b16 %v2955
    %v3043 = vunpack.c.l.b16 %v2956
    %v3044 = vunpack.c.h.b16 %v2956
    %v3045 = vunpack.c.l.b16 %v2957
    %v3046 = vunpack.c.h.b16 %v2957
    %v3047 = vunpack.c.l.b16 %v2958
    %v3048 = vunpack.c.h.b16 %v2958
    %v3049 = vunpack.c.l.b16 %v2959
    %v3050 = vunpack.c.h.b16 %v2959
    %v3051 = vunpack.c.l.b16 %v2960
    %v3052 = vunpack.c.h.b16 %v2960
    %v3053 = vunpack.c.l.b16 %v2961
    %v3054 = vunpack.c.h.b16 %v2961
    %v3055 = vunpack.c.l.b16 %v2962
    %v3056 = vunpack.c.h.b16 %v2962
    %v3057 = vunpack.c.l.b16 %v2963
    %v3058 = vunpack.c.h.b16 %v2963
    %v3059 = vunpack.c.l.b16 %v2964
    %v3060 = vunpack.c.h.b16 %v2964
    %v3061 = vpack.c.b16 %v2999, %v2997
    %v3062 = vpack.c.b16 %v3000, %v2998
    %v3063 = vpack.c.b16 %v3003, %v3001
    %v3064 = vpack.c.b16 %v3004, %v3002
    %v3065 = vpack.c.b16 %v3007, %v3005
    %v3066 = vpack.c.b16 %v3008, %v3006
    %v3067 = vpack.c.b16 %v3011, %v3009
    %v3068 = vpack.c.b16 %v3012, %v3010
    %v3069 = vpack.c.b16 %v3015, %v3013
    %v3070 = vpack.c.b16 %v3016, %v3014
    %v3071 = vpack.c.b16 %v3019, %v3017
    %v3072 = vpack.c.b16 %v3020, %v3018
    %v3073 = vpack.c.b16 %v3023, %v3021
    %v3074 = vpack.c.b16 %v3024, %v3022
    %v3075 = vpack.c.b16 %v3027, %v3025
    %v3076 = vpack.c.b16 %v3028, %v3026
    %v3077 = vpack.c.b16 %v3031, %v3029
    %v3078 = vpack.c.b16 %v3032, %v3030
    %v3079 = vpack.c.b16 %v3035, %v3033
    %v3080 = vpack.c.b16 %v3036, %v3034
    %v3081 = vpack.c.b16 %v3039, %v3037
    %v3082 = vpack.c.b16 %v3040, %v3038
    %v3083 = vpack.c.b16 %v3043, %v3041
    %v3084 = vpack.c.b16 %v3044, %v3042
    %v3085 = vpack.c.b16 %v3047, %v3045
    %v3086 = vpack.c.b16 %v3048, %v3046
    %v3087 = vpack.c.b16 %v3051, %v3049
    %v3088 = vpack.c.b16 %v3052, %v3050
    %v3089 = vpack.c.b16 %v3055, %v3053
    %v3090 = vpack.c.b16 %v3056, %v3054
    %v3091 = vpack.c.b16 %v3059, %v3057
    %v3092 = vpack.c.b16 %v3060, %v3058
    %3125 = vmatpush.bf16.msra.mxu0 %v3075
    %3126 = vmatpush.bf16.msra.mxu0 %v3073
    %3127 = vmatpush.bf16.msra.mxu0 %v3071
    %3128 = vmatpush.bf16.msra.mxu0 %v3069
    %3129 = vmatpush.bf16.msra.mxu0 %v3067
    %3130 = vmatpush.bf16.msra.mxu0 %v3065
    %3131 = vmatpush.bf16.msra.mxu0 %v3063
    %3132 = vmatpush.bf16.msra.mxu0 %v3061
    %3133 = vmatmul.bf16.gmra.mxu0 %v434
    %v3134 = vpop.f32.mrf.mxu0
    %v3135 = vpop.f32.mrf.mxu0
    %v3136 = vadd.f32 0.0, %v3135
    %3137 = vmatmul.bf16.gmra.mxu0 %v436
    %v3138 = vpop.f32.mrf.mxu0
    %v3139 = vpop.f32.mrf.mxu0
    %3140 = vmatmul.bf16.gmra.mxu0 %v438
    %v3141 = vpop.f32.mrf.mxu0
    %v3142 = vadd.f32 0.0, %v3141
    %v3143 = vpop.f32.mrf.mxu0
    %3144 = vmatmul.bf16.gmra.mxu0 %v452
    %v3145 = vpop.f32.mrf.mxu0
    %v3146 = vpop.f32.mrf.mxu0
    %v3147 = vadd.f32 0.0, %v3146
    %3148 = vmatmul.bf16.gmra.mxu0 %v454
    %v3149 = vpop.f32.mrf.mxu0
    %v3150 = vpop.f32.mrf.mxu0
    %3151 = vmatmul.bf16.gmra.mxu0 %v456
    %v3152 = vpop.f32.mrf.mxu0
    %v3153 = vadd.f32 0.0, %v3152
    %v3154 = vpop.f32.mrf.mxu0
    %3155 = vdwg.mxu0
    %3156 = vmatpush.bf16.msra.mxu0 %v3091
    %3157 = vmatpush.bf16.msra.mxu0 %v3089
    %3158 = vmatpush.bf16.msra.mxu0 %v3087
    %3159 = vmatpush.bf16.msra.mxu0 %v3085
    %3160 = vmatpush.bf16.msra.mxu0 %v3083
    %3161 = vmatpush.bf16.msra.mxu0 %v3081
    %3162 = vmatpush.bf16.msra.mxu0 %v3079
    %3163 = vmatpush.bf16.msra.mxu0 %v3077
    %3164 = vmatmul.bf16.gmra.mxu0 %v435
    %v3165 = vpop.f32.mrf.mxu0
    %v3166 = vpop.f32.mrf.mxu0
    %v3167 = vadd.f32 %v3136, %v3166
    %3168 = vmatmul.bf16.gmra.mxu0 %v437
    %v3169 = vpop.f32.mrf.mxu0
    %v3170 = vpop.f32.mrf.mxu0
    %3171 = vmatmul.bf16.gmra.mxu0 %v439
    %v3172 = vpop.f32.mrf.mxu0
    %v3173 = vadd.f32 %v3142, %v3172
    %v3174 = vpop.f32.mrf.mxu0
    %3175 = vmatmul.bf16.gmra.mxu0 %v453
    %v3176 = vpop.f32.mrf.mxu0
    %v3177 = vpop.f32.mrf.mxu0
    %v3178 = vadd.f32 %v3147, %v3177
    %3179 = vmatmul.bf16.gmra.mxu0 %v455
    %v3180 = vpop.f32.mrf.mxu0
    %v3181 = vpop.f32.mrf.mxu0
    %3182 = vmatmul.bf16.gmra.mxu0 %v457
    %v3183 = vpop.f32.mrf.mxu0
    %v3184 = vadd.f32 %v3153, %v3183
    %v3185 = vpop.f32.mrf.mxu0
    %3186 = vdwg.mxu0
    %3187 = vmatpush.bf16.msra.mxu0 %v3076
    %3188 = vmatpush.bf16.msra.mxu0 %v3074
    %3189 = vmatpush.bf16.msra.mxu0 %v3072
    %3190 = vmatpush.bf16.msra.mxu0 %v3070
    %3191 = vmatpush.bf16.msra.mxu0 %v3068
    %3192 = vmatpush.bf16.msra.mxu0 %v3066
    %3193 = vmatpush.bf16.msra.mxu0 %v3064
    %3194 = vmatpush.bf16.msra.mxu0 %v3062
    %3195 = vmatmul.bf16.gmra.mxu0 %v434
    %v3196 = vpop.f32.mrf.mxu0
    %v3197 = vpop.f32.mrf.mxu0
    %v3198 = vadd.f32 0.0, %v3197
    %3199 = vmatmul.bf16.gmra.mxu0 %v436
    %v3200 = vpop.f32.mrf.mxu0
    %v3201 = vpop.f32.mrf.mxu0
    %3202 = vmatmul.bf16.gmra.mxu0 %v438
    %v3203 = vpop.f32.mrf.mxu0
    %v3204 = vadd.f32 0.0, %v3203
    %v3205 = vpop.f32.mrf.mxu0
    %3206 = vmatmul.bf16.gmra.mxu0 %v452
    %v3207 = vpop.f32.mrf.mxu0
    %v3208 = vpop.f32.mrf.mxu0
    %v3209 = vadd.f32 0.0, %v3208
    %3210 = vmatmul.bf16.gmra.mxu0 %v454
    %v3211 = vpop.f32.mrf.mxu0
    %v3212 = vpop.f32.mrf.mxu0
    %3213 = vmatmul.bf16.gmra.mxu0 %v456
    %v3214 = vpop.f32.mrf.mxu0
    %v3215 = vadd.f32 0.0, %v3214
    %v3216 = vpop.f32.mrf.mxu0
    %3217 = vdwg.mxu0
    %3218 = vmatpush.bf16.msra.mxu0 %v3092
    %3219 = vmatpush.bf16.msra.mxu0 %v3090
    %3220 = vmatpush.bf16.msra.mxu0 %v3088
    %3221 = vmatpush.bf16.msra.mxu0 %v3086
    %3222 = vmatpush.bf16.msra.mxu0 %v3084
    %3223 = vmatpush.bf16.msra.mxu0 %v3082
    %3224 = vmatpush.bf16.msra.mxu0 %v3080
    %3225 = vmatpush.bf16.msra.mxu0 %v3078
    %3226 = vmatmul.bf16.gmra.mxu0 %v435
    %v3227 = vpop.f32.mrf.mxu0
    %v3228 = vpop.f32.mrf.mxu0
    %v3229 = vadd.f32 %v3198, %v3228
    %3230 = vmatmul.bf16.gmra.mxu0 %v437
    %v3231 = vpop.f32.mrf.mxu0
    %v3232 = vpop.f32.mrf.mxu0
    %3233 = vmatmul.bf16.gmra.mxu0 %v439
    %v3234 = vpop.f32.mrf.mxu0
    %v3235 = vadd.f32 %v3204, %v3234
    %v3236 = vpop.f32.mrf.mxu0
    %3237 = vmatmul.bf16.gmra.mxu0 %v453
    %v3238 = vpop.f32.mrf.mxu0
    %v3239 = vpop.f32.mrf.mxu0
    %v3240 = vadd.f32 %v3209, %v3239
    %3241 = vmatmul.bf16.gmra.mxu0 %v455
    %v3242 = vpop.f32.mrf.mxu0
    %v3243 = vpop.f32.mrf.mxu0
    %3244 = vmatmul.bf16.gmra.mxu0 %v457
    %v3245 = vpop.f32.mrf.mxu0
    %v3246 = vadd.f32 %v3215, %v3245
    %v3247 = vpop.f32.mrf.mxu0
    %3248 = vdwg.mxu0
    %v3257 = vrot.slane %v3167, 1
    %v3258 = vrot.slane %v3229, 1
    %v3259 = vrot.slane %v3173, 1
    %v3260 = vrot.slane %v3235, 1
    %v3261 = vrot.slane %v3178, 1
    %v3262 = vrot.slane %v3240, 1
    %v3263 = vrot.slane %v3184, 1
    %v3264 = vrot.slane %v3246, 1
    %v3273 = vadd.f32 %v2916, %v3257
    %v3274 = vadd.f32 %v2917, %v3258
    %v3275 = vadd.f32 %v2918, %v3257
    %v3276 = vadd.f32 %v2919, %v3258
    %v3277 = vadd.f32 %v2920, %v3259
    %v3278 = vadd.f32 %v2921, %v3260
    %v3279 = vadd.f32 %v2922, %v3259
    %v3280 = vadd.f32 %v2923, %v3260
    %v3281 = vadd.f32 %v2924, %v3261
    %v3282 = vadd.f32 %v2925, %v3262
    %v3283 = vadd.f32 %v2926, %v3261
    %v3284 = vadd.f32 %v2927, %v3262
    %v3285 = vadd.f32 %v2928, %v3263
    %v3286 = vadd.f32 %v2929, %v3264
    %v3287 = vadd.f32 %v2930, %v3263
    %v3288 = vadd.f32 %v2931, %v3264
    %s3289 = scalar_lea.vmem [#allocation6], 2048
    %v3290 = vld [vmem:[%s3289] sm:$0xff]
    %v3291 = vld [vmem:[%s3289 + $0x8] sm:$0xff]
    %v3292 = vld [vmem:[%s3289 + $0x10] sm:$0xff]
    %v3293 = vld [vmem:[%s3289 + $0x18] sm:$0xff]
    %v3294 = vld [vmem:[%s3289 + $0x20] sm:$0xff]
    %v3295 = vld [vmem:[%s3289 + $0x28] sm:$0xff]
    %v3296 = vld [vmem:[%s3289 + $0x30] sm:$0xff]
    %v3297 = vld [vmem:[%s3289 + $0x38] sm:$0xff]
    %v3298 = vld [vmem:[%s3289 + $0x40] sm:$0xff]
    %v3299 = vld [vmem:[%s3289 + $0x48] sm:$0xff]
    %v3300 = vld [vmem:[%s3289 + $0x50] sm:$0xff]
    %v3301 = vld [vmem:[%s3289 + $0x58] sm:$0xff]
    %v3302 = vld [vmem:[%s3289 + $0x60] sm:$0xff]
    %v3303 = vld [vmem:[%s3289 + $0x68] sm:$0xff]
    %v3304 = vld [vmem:[%s3289 + $0x70] sm:$0xff]
    %v3305 = vld [vmem:[%s3289 + $0x78] sm:$0xff]
    %v3306 = vld [vmem:[%s3289 + $0x80] sm:$0xff]
    %v3307 = vld [vmem:[%s3289 + $0x88] sm:$0xff]
    %v3308 = vld [vmem:[%s3289 + $0x90] sm:$0xff]
    %v3309 = vld [vmem:[%s3289 + $0x98] sm:$0xff]
    %v3310 = vld [vmem:[%s3289 + $0xa0] sm:$0xff]
    %v3311 = vld [vmem:[%s3289 + $0xa8] sm:$0xff]
    %v3312 = vld [vmem:[%s3289 + $0xb0] sm:$0xff]
    %v3313 = vld [vmem:[%s3289 + $0xb8] sm:$0xff]
    %v3314 = vld [vmem:[%s3289 + $0xc0] sm:$0xff]
    %v3315 = vld [vmem:[%s3289 + $0xc8] sm:$0xff]
    %v3316 = vld [vmem:[%s3289 + $0xd0] sm:$0xff]
    %v3317 = vld [vmem:[%s3289 + $0xd8] sm:$0xff]
    %v3318 = vld [vmem:[%s3289 + $0xe0] sm:$0xff]
    %v3319 = vld [vmem:[%s3289 + $0xe8] sm:$0xff]
    %v3320 = vld [vmem:[%s3289 + $0xf0] sm:$0xff]
    %v3321 = vld [vmem:[%s3289 + $0xf8] sm:$0xff]
    %v3354 = vunpack.c.l.b16 %v3290
    %v3355 = vunpack.c.h.b16 %v3290
    %v3356 = vunpack.c.l.b16 %v3291
    %v3357 = vunpack.c.h.b16 %v3291
    %v3358 = vunpack.c.l.b16 %v3292
    %v3359 = vunpack.c.h.b16 %v3292
    %v3360 = vunpack.c.l.b16 %v3293
    %v3361 = vunpack.c.h.b16 %v3293
    %v3362 = vunpack.c.l.b16 %v3294
    %v3363 = vunpack.c.h.b16 %v3294
    %v3364 = vunpack.c.l.b16 %v3295
    %v3365 = vunpack.c.h.b16 %v3295
    %v3366 = vunpack.c.l.b16 %v3296
    %v3367 = vunpack.c.h.b16 %v3296
    %v3368 = vunpack.c.l.b16 %v3297
    %v3369 = vunpack.c.h.b16 %v3297
    %v3370 = vunpack.c.l.b16 %v3298
    %v3371 = vunpack.c.h.b16 %v3298
    %v3372 = vunpack.c.l.b16 %v3299
    %v3373 = vunpack.c.h.b16 %v3299
    %v3374 = vunpack.c.l.b16 %v3300
    %v3375 = vunpack.c.h.b16 %v3300
    %v3376 = vunpack.c.l.b16 %v3301
    %v3377 = vunpack.c.h.b16 %v3301
    %v3378 = vunpack.c.l.b16 %v3302
    %v3379 = vunpack.c.h.b16 %v3302
    %v3380 = vunpack.c.l.b16 %v3303
    %v3381 = vunpack.c.h.b16 %v3303
    %v3382 = vunpack.c.l.b16 %v3304
    %v3383 = vunpack.c.h.b16 %v3304
    %v3384 = vunpack.c.l.b16 %v3305
    %v3385 = vunpack.c.h.b16 %v3305
    %v3386 = vunpack.c.l.b16 %v3306
    %v3387 = vunpack.c.h.b16 %v3306
    %v3388 = vunpack.c.l.b16 %v3307
    %v3389 = vunpack.c.h.b16 %v3307
    %v3390 = vunpack.c.l.b16 %v3308
    %v3391 = vunpack.c.h.b16 %v3308
    %v3392 = vunpack.c.l.b16 %v3309
    %v3393 = vunpack.c.h.b16 %v3309
    %v3394 = vunpack.c.l.b16 %v3310
    %v3395 = vunpack.c.h.b16 %v3310
    %v3396 = vunpack.c.l.b16 %v3311
    %v3397 = vunpack.c.h.b16 %v3311
    %v3398 = vunpack.c.l.b16 %v3312
    %v3399 = vunpack.c.h.b16 %v3312
    %v3400 = vunpack.c.l.b16 %v3313
    %v3401 = vunpack.c.h.b16 %v3313
    %v3402 = vunpack.c.l.b16 %v3314
    %v3403 = vunpack.c.h.b16 %v3314
    %v3404 = vunpack.c.l.b16 %v3315
    %v3405 = vunpack.c.h.b16 %v3315
    %v3406 = vunpack.c.l.b16 %v3316
    %v3407 = vunpack.c.h.b16 %v3316
    %v3408 = vunpack.c.l.b16 %v3317
    %v3409 = vunpack.c.h.b16 %v3317
    %v3410 = vunpack.c.l.b16 %v3318
    %v3411 = vunpack.c.h.b16 %v3318
    %v3412 = vunpack.c.l.b16 %v3319
    %v3413 = vunpack.c.h.b16 %v3319
    %v3414 = vunpack.c.l.b16 %v3320
    %v3415 = vunpack.c.h.b16 %v3320
    %v3416 = vunpack.c.l.b16 %v3321
    %v3417 = vunpack.c.h.b16 %v3321
    %v3418 = vpack.c.b16 %v3356, %v3354
    %v3419 = vpack.c.b16 %v3357, %v3355
    %v3420 = vpack.c.b16 %v3360, %v3358
    %v3421 = vpack.c.b16 %v3361, %v3359
    %v3422 = vpack.c.b16 %v3364, %v3362
    %v3423 = vpack.c.b16 %v3365, %v3363
    %v3424 = vpack.c.b16 %v3368, %v3366
    %v3425 = vpack.c.b16 %v3369, %v3367
    %v3426 = vpack.c.b16 %v3372, %v3370
    %v3427 = vpack.c.b16 %v3373, %v3371
    %v3428 = vpack.c.b16 %v3376, %v3374
    %v3429 = vpack.c.b16 %v3377, %v3375
    %v3430 = vpack.c.b16 %v3380, %v3378
    %v3431 = vpack.c.b16 %v3381, %v3379
    %v3432 = vpack.c.b16 %v3384, %v3382
    %v3433 = vpack.c.b16 %v3385, %v3383
    %v3434 = vpack.c.b16 %v3388, %v3386
    %v3435 = vpack.c.b16 %v3389, %v3387
    %v3436 = vpack.c.b16 %v3392, %v3390
    %v3437 = vpack.c.b16 %v3393, %v3391
    %v3438 = vpack.c.b16 %v3396, %v3394
    %v3439 = vpack.c.b16 %v3397, %v3395
    %v3440 = vpack.c.b16 %v3400, %v3398
    %v3441 = vpack.c.b16 %v3401, %v3399
    %v3442 = vpack.c.b16 %v3404, %v3402
    %v3443 = vpack.c.b16 %v3405, %v3403
    %v3444 = vpack.c.b16 %v3408, %v3406
    %v3445 = vpack.c.b16 %v3409, %v3407
    %v3446 = vpack.c.b16 %v3412, %v3410
    %v3447 = vpack.c.b16 %v3413, %v3411
    %v3448 = vpack.c.b16 %v3416, %v3414
    %v3449 = vpack.c.b16 %v3417, %v3415
    %3482 = vmatpush.bf16.msra.mxu0 %v3432
    %3483 = vmatpush.bf16.msra.mxu0 %v3430
    %3484 = vmatpush.bf16.msra.mxu0 %v3428
    %3485 = vmatpush.bf16.msra.mxu0 %v3426
    %3486 = vmatpush.bf16.msra.mxu0 %v3424
    %3487 = vmatpush.bf16.msra.mxu0 %v3422
    %3488 = vmatpush.bf16.msra.mxu0 %v3420
    %3489 = vmatpush.bf16.msra.mxu0 %v3418
    %3490 = vmatmul.bf16.gmra.mxu0 %v434
    %v3491 = vpop.f32.mrf.mxu0
    %v3492 = vpop.f32.mrf.mxu0
    %v3493 = vadd.f32 0.0, %v3492
    %3494 = vmatmul.bf16.gmra.mxu0 %v436
    %v3495 = vpop.f32.mrf.mxu0
    %v3496 = vpop.f32.mrf.mxu0
    %3497 = vmatmul.bf16.gmra.mxu0 %v438
    %v3498 = vpop.f32.mrf.mxu0
    %v3499 = vadd.f32 0.0, %v3498
    %v3500 = vpop.f32.mrf.mxu0
    %3501 = vmatmul.bf16.gmra.mxu0 %v452
    %v3502 = vpop.f32.mrf.mxu0
    %v3503 = vpop.f32.mrf.mxu0
    %v3504 = vadd.f32 0.0, %v3503
    %3505 = vmatmul.bf16.gmra.mxu0 %v454
    %v3506 = vpop.f32.mrf.mxu0
    %v3507 = vpop.f32.mrf.mxu0
    %3508 = vmatmul.bf16.gmra.mxu0 %v456
    %v3509 = vpop.f32.mrf.mxu0
    %v3510 = vadd.f32 0.0, %v3509
    %v3511 = vpop.f32.mrf.mxu0
    %3512 = vdwg.mxu0
    %3513 = vmatpush.bf16.msra.mxu0 %v3448
    %3514 = vmatpush.bf16.msra.mxu0 %v3446
    %3515 = vmatpush.bf16.msra.mxu0 %v3444
    %3516 = vmatpush.bf16.msra.mxu0 %v3442
    %3517 = vmatpush.bf16.msra.mxu0 %v3440
    %3518 = vmatpush.bf16.msra.mxu0 %v3438
    %3519 = vmatpush.bf16.msra.mxu0 %v3436
    %3520 = vmatpush.bf16.msra.mxu0 %v3434
    %3521 = vmatmul.bf16.gmra.mxu0 %v435
    %v3522 = vpop.f32.mrf.mxu0
    %v3523 = vpop.f32.mrf.mxu0
    %v3524 = vadd.f32 %v3493, %v3523
    %3525 = vmatmul.bf16.gmra.mxu0 %v437
    %v3526 = vpop.f32.mrf.mxu0
    %v3527 = vpop.f32.mrf.mxu0
    %3528 = vmatmul.bf16.gmra.mxu0 %v439
    %v3529 = vpop.f32.mrf.mxu0
    %v3530 = vadd.f32 %v3499, %v3529
    %v3531 = vpop.f32.mrf.mxu0
    %3532 = vmatmul.bf16.gmra.mxu0 %v453
    %v3533 = vpop.f32.mrf.mxu0
    %v3534 = vpop.f32.mrf.mxu0
    %v3535 = vadd.f32 %v3504, %v3534
    %3536 = vmatmul.bf16.gmra.mxu0 %v455
    %v3537 = vpop.f32.mrf.mxu0
    %v3538 = vpop.f32.mrf.mxu0
    %3539 = vmatmul.bf16.gmra.mxu0 %v457
    %v3540 = vpop.f32.mrf.mxu0
    %v3541 = vadd.f32 %v3510, %v3540
    %v3542 = vpop.f32.mrf.mxu0
    %3543 = vdwg.mxu0
    %3544 = vmatpush.bf16.msra.mxu0 %v3433
    %3545 = vmatpush.bf16.msra.mxu0 %v3431
    %3546 = vmatpush.bf16.msra.mxu0 %v3429
    %3547 = vmatpush.bf16.msra.mxu0 %v3427
    %3548 = vmatpush.bf16.msra.mxu0 %v3425
    %3549 = vmatpush.bf16.msra.mxu0 %v3423
    %3550 = vmatpush.bf16.msra.mxu0 %v3421
    %3551 = vmatpush.bf16.msra.mxu0 %v3419
    %3552 = vmatmul.bf16.gmra.mxu0 %v434
    %v3553 = vpop.f32.mrf.mxu0
    %v3554 = vpop.f32.mrf.mxu0
    %v3555 = vadd.f32 0.0, %v3554
    %3556 = vmatmul.bf16.gmra.mxu0 %v436
    %v3557 = vpop.f32.mrf.mxu0
    %v3558 = vpop.f32.mrf.mxu0
    %3559 = vmatmul.bf16.gmra.mxu0 %v438
    %v3560 = vpop.f32.mrf.mxu0
    %v3561 = vadd.f32 0.0, %v3560
    %v3562 = vpop.f32.mrf.mxu0
    %3563 = vmatmul.bf16.gmra.mxu0 %v452
    %v3564 = vpop.f32.mrf.mxu0
    %v3565 = vpop.f32.mrf.mxu0
    %v3566 = vadd.f32 0.0, %v3565
    %3567 = vmatmul.bf16.gmra.mxu0 %v454
    %v3568 = vpop.f32.mrf.mxu0
    %v3569 = vpop.f32.mrf.mxu0
    %3570 = vmatmul.bf16.gmra.mxu0 %v456
    %v3571 = vpop.f32.mrf.mxu0
    %v3572 = vadd.f32 0.0, %v3571
    %v3573 = vpop.f32.mrf.mxu0
    %3574 = vdwg.mxu0
    %3575 = vmatpush.bf16.msra.mxu0 %v3449
    %3576 = vmatpush.bf16.msra.mxu0 %v3447
    %3577 = vmatpush.bf16.msra.mxu0 %v3445
    %3578 = vmatpush.bf16.msra.mxu0 %v3443
    %3579 = vmatpush.bf16.msra.mxu0 %v3441
    %3580 = vmatpush.bf16.msra.mxu0 %v3439
    %3581 = vmatpush.bf16.msra.mxu0 %v3437
    %3582 = vmatpush.bf16.msra.mxu0 %v3435
    %3583 = vmatmul.bf16.gmra.mxu0 %v435
    %v3584 = vpop.f32.mrf.mxu0
    %v3585 = vpop.f32.mrf.mxu0
    %v3586 = vadd.f32 %v3555, %v3585
    %3587 = vmatmul.bf16.gmra.mxu0 %v437
    %v3588 = vpop.f32.mrf.mxu0
    %v3589 = vpop.f32.mrf.mxu0
    %3590 = vmatmul.bf16.gmra.mxu0 %v439
    %v3591 = vpop.f32.mrf.mxu0
    %v3592 = vadd.f32 %v3561, %v3591
    %v3593 = vpop.f32.mrf.mxu0
    %3594 = vmatmul.bf16.gmra.mxu0 %v453
    %v3595 = vpop.f32.mrf.mxu0
    %v3596 = vpop.f32.mrf.mxu0
    %v3597 = vadd.f32 %v3566, %v3596
    %3598 = vmatmul.bf16.gmra.mxu0 %v455
    %v3599 = vpop.f32.mrf.mxu0
    %v3600 = vpop.f32.mrf.mxu0
    %3601 = vmatmul.bf16.gmra.mxu0 %v457
    %v3602 = vpop.f32.mrf.mxu0
    %v3603 = vadd.f32 %v3572, %v3602
    %v3604 = vpop.f32.mrf.mxu0
    %3605 = vdwg.mxu0
    %v3614 = vrot.slane %v3524, 2
    %v3615 = vrot.slane %v3586, 2
    %v3616 = vrot.slane %v3530, 2
    %v3617 = vrot.slane %v3592, 2
    %v3618 = vrot.slane %v3535, 2
    %v3619 = vrot.slane %v3597, 2
    %v3620 = vrot.slane %v3541, 2
    %v3621 = vrot.slane %v3603, 2
    %v3630 = vadd.f32 %v3273, %v3614
    %v3631 = vadd.f32 %v3274, %v3615
    %v3632 = vadd.f32 %v3275, %v3614
    %v3633 = vadd.f32 %v3276, %v3615
    %v3634 = vadd.f32 %v3277, %v3616
    %v3635 = vadd.f32 %v3278, %v3617
    %v3636 = vadd.f32 %v3279, %v3616
    %v3637 = vadd.f32 %v3280, %v3617
    %v3638 = vadd.f32 %v3281, %v3618
    %v3639 = vadd.f32 %v3282, %v3619
    %v3640 = vadd.f32 %v3283, %v3618
    %v3641 = vadd.f32 %v3284, %v3619
    %v3642 = vadd.f32 %v3285, %v3620
    %v3643 = vadd.f32 %v3286, %v3621
    %v3644 = vadd.f32 %v3287, %v3620
    %v3645 = vadd.f32 %v3288, %v3621
    %s3646 = scalar_lea.vmem [#allocation3], 8
    %v3647 = vld [vmem:[%s3646] sm:$0xff]
    %3649 = vst [vmem:[#allocation1] ss:$2 sm:$0xff] %v3647
    %v3650 = vld.sshfl [vmem:[#allocation1] sm:$0xff pattern:$0x75316420]
    %v3651 = vld.sshfl [vmem:[#allocation1 + $0x8] sm:$0xff pattern:$0x75316420]
    %v3652 = vsel %vm281, %v3650, 0
    %v3654 = vsel %vm281, %v3651, 0
    %3656 = vmatpush.msra.mxu0 0.0
    %3657 = vmatpush.msra.mxu0 0.0
    %3658 = vmatpush.msra.mxu0 0.0
    %3659 = vmatpush.msra.mxu0 0.0
    %3660 = vmatpush.msra.mxu0 0.0
    %3661 = vmatpush.msra.mxu0 0.0
    %3662 = vmatpush.msra.mxu0 0.0
    %3663 = vmatpush.msra.mxu0 0.0
    %3664 = vmatpush.msra.mxu0 0.0
    %3665 = vmatpush.msra.mxu0 0.0
    %3666 = vmatpush.msra.mxu0 0.0
    %3667 = vmatpush.msra.mxu0 0.0
    %3668 = vmatpush.msra.mxu0 0.0
    %3669 = vmatpush.msra.mxu0 0.0
    %3670 = vmatpush.msra.mxu0 0.0
    %3671 = vmatpush.msra.mxu0 %v3652
    %3672 = vmatmul.f32.gmra.mxu0 %v228
    %v3673 = vpop.f32.mrf.mxu0
    %v3674 = vadd.f32 0.0, %v3673
    %3675 = vmatmul.f32.gmra.mxu0 %v231
    %v3676 = vpop.f32.mrf.mxu0
    %v3677 = vadd.f32 0.0, %v3676
    %3678 = vmatmul.f32.gmra.mxu0 %v234
    %v3679 = vpop.f32.mrf.mxu0
    %v3680 = vadd.f32 0.0, %v3679
    %3681 = vmatmul.f32.gmra.mxu0 %v237
    %v3682 = vpop.f32.mrf.mxu0
    %v3683 = vadd.f32 0.0, %v3682
    %3684 = vmatmul.f32.gmra.mxu0 %v240
    %v3685 = vpop.f32.mrf.mxu0
    %v3686 = vadd.f32 0.0, %v3685
    %3687 = vmatmul.f32.gmra.mxu0 %v243
    %v3688 = vpop.f32.mrf.mxu0
    %v3689 = vadd.f32 0.0, %v3688
    %3690 = vmatmul.f32.gmra.mxu0 %v246
    %v3691 = vpop.f32.mrf.mxu0
    %v3692 = vadd.f32 0.0, %v3691
    %3693 = vmatmul.f32.gmra.mxu0 %v249
    %v3694 = vpop.f32.mrf.mxu0
    %v3695 = vadd.f32 0.0, %v3694
    %3696 = vmatmul.f32.gmra.mxu0 %v252
    %v3697 = vpop.f32.mrf.mxu0
    %v3698 = vadd.f32 0.0, %v3697
    %3699 = vmatmul.f32.gmra.mxu0 %v255
    %v3700 = vpop.f32.mrf.mxu0
    %v3701 = vadd.f32 0.0, %v3700
    %3702 = vmatmul.f32.gmra.mxu0 %v258
    %v3703 = vpop.f32.mrf.mxu0
    %v3704 = vadd.f32 0.0, %v3703
    %3705 = vmatmul.f32.gmra.mxu0 %v261
    %v3706 = vpop.f32.mrf.mxu0
    %v3707 = vadd.f32 0.0, %v3706
    %3708 = vmatmul.f32.gmra.mxu0 %v264
    %v3709 = vpop.f32.mrf.mxu0
    %v3710 = vadd.f32 0.0, %v3709
    %3711 = vmatmul.f32.gmra.mxu0 %v267
    %v3712 = vpop.f32.mrf.mxu0
    %v3713 = vadd.f32 0.0, %v3712
    %3714 = vmatmul.f32.gmra.mxu0 %v270
    %v3715 = vpop.f32.mrf.mxu0
    %v3716 = vadd.f32 0.0, %v3715
    %3717 = vmatmul.f32.gmra.mxu0 %v273
    %v3718 = vpop.f32.mrf.mxu0
    %v3719 = vadd.f32 0.0, %v3718
    %3720 = vmatmul.f32.gmra.mxu0 %v276
    %v3721 = vpop.f32.mrf.mxu0
    %v3722 = vadd.f32 0.0, %v3721
    %3723 = vmatmul.f32.gmra.mxu0 %v279
    %v3724 = vpop.f32.mrf.mxu0
    %v3725 = vadd.f32 0.0, %v3724
    %3726 = vdwg.mxu0
    %3727 = vmatpush.msra.mxu0 0.0
    %3728 = vmatpush.msra.mxu0 0.0
    %3729 = vmatpush.msra.mxu0 0.0
    %3730 = vmatpush.msra.mxu0 0.0
    %3731 = vmatpush.msra.mxu0 0.0
    %3732 = vmatpush.msra.mxu0 0.0
    %3733 = vmatpush.msra.mxu0 0.0
    %3734 = vmatpush.msra.mxu0 0.0
    %3735 = vmatpush.msra.mxu0 0.0
    %3736 = vmatpush.msra.mxu0 0.0
    %3737 = vmatpush.msra.mxu0 0.0
    %3738 = vmatpush.msra.mxu0 0.0
    %3739 = vmatpush.msra.mxu0 0.0
    %3740 = vmatpush.msra.mxu0 0.0
    %3741 = vmatpush.msra.mxu0 0.0
    %3742 = vmatpush.msra.mxu0 %v3654
    %3743 = vmatmul.f32.gmra.mxu0 %v228
    %v3744 = vpop.f32.mrf.mxu0
    %v3745 = vadd.f32 0.0, %v3744
    %3746 = vmatmul.f32.gmra.mxu0 %v231
    %v3747 = vpop.f32.mrf.mxu0
    %v3748 = vadd.f32 0.0, %v3747
    %3749 = vmatmul.f32.gmra.mxu0 %v234
    %v3750 = vpop.f32.mrf.mxu0
    %v3751 = vadd.f32 0.0, %v3750
    %3752 = vmatmul.f32.gmra.mxu0 %v237
    %v3753 = vpop.f32.mrf.mxu0
    %v3754 = vadd.f32 0.0, %v3753
    %3755 = vmatmul.f32.gmra.mxu0 %v240
    %v3756 = vpop.f32.mrf.mxu0
    %v3757 = vadd.f32 0.0, %v3756
    %3758 = vmatmul.f32.gmra.mxu0 %v243
    %v3759 = vpop.f32.mrf.mxu0
    %v3760 = vadd.f32 0.0, %v3759
    %3761 = vmatmul.f32.gmra.mxu0 %v246
    %v3762 = vpop.f32.mrf.mxu0
    %v3763 = vadd.f32 0.0, %v3762
    %3764 = vmatmul.f32.gmra.mxu0 %v249
    %v3765 = vpop.f32.mrf.mxu0
    %v3766 = vadd.f32 0.0, %v3765
    %3767 = vmatmul.f32.gmra.mxu0 %v252
    %v3768 = vpop.f32.mrf.mxu0
    %v3769 = vadd.f32 0.0, %v3768
    %3770 = vmatmul.f32.gmra.mxu0 %v255
    %v3771 = vpop.f32.mrf.mxu0
    %v3772 = vadd.f32 0.0, %v3771
    %3773 = vmatmul.f32.gmra.mxu0 %v258
    %v3774 = vpop.f32.mrf.mxu0
    %v3775 = vadd.f32 0.0, %v3774
    %3776 = vmatmul.f32.gmra.mxu0 %v261
    %v3777 = vpop.f32.mrf.mxu0
    %v3778 = vadd.f32 0.0, %v3777
    %3779 = vmatmul.f32.gmra.mxu0 %v264
    %v3780 = vpop.f32.mrf.mxu0
    %v3781 = vadd.f32 0.0, %v3780
    %3782 = vmatmul.f32.gmra.mxu0 %v267
    %v3783 = vpop.f32.mrf.mxu0
    %v3784 = vadd.f32 0.0, %v3783
    %3785 = vmatmul.f32.gmra.mxu0 %v270
    %v3786 = vpop.f32.mrf.mxu0
    %v3787 = vadd.f32 0.0, %v3786
    %3788 = vmatmul.f32.gmra.mxu0 %v273
    %v3789 = vpop.f32.mrf.mxu0
    %v3790 = vadd.f32 0.0, %v3789
    %3791 = vmatmul.f32.gmra.mxu0 %v276
    %v3792 = vpop.f32.mrf.mxu0
    %v3793 = vadd.f32 0.0, %v3792
    %3794 = vmatmul.f32.gmra.mxu0 %v279
    %v3795 = vpop.f32.mrf.mxu0
    %v3796 = vadd.f32 0.0, %v3795
    %3797 = vdwg.mxu0
    %v3798 = vpack.c.bf16 %v3677, %v3674
    %v3799 = vpack.c.bf16 %v3748, %v3745
    %v3800 = vpack.c.bf16 %v3683, %v3680
    %v3801 = vpack.c.bf16 %v3754, %v3751
    %v3802 = vpack.c.bf16 %v3689, %v3686
    %v3803 = vpack.c.bf16 %v3760, %v3757
    %v3804 = vpack.c.bf16 %v3695, %v3692
    %v3805 = vpack.c.bf16 %v3766, %v3763
    %v3806 = vpack.c.bf16 %v3701, %v3698
    %v3807 = vpack.c.bf16 %v3772, %v3769
    %v3808 = vpack.c.bf16 %v3707, %v3704
    %v3809 = vpack.c.bf16 %v3778, %v3775
    %v3810 = vpack.c.bf16 %v3686, %v3683
    %v3811 = vpack.c.bf16 %v3757, %v3754
    %v3812 = vpack.c.bf16 %v3692, %v3689
    %v3813 = vpack.c.bf16 %v3763, %v3760
    %v3814 = vpack.c.bf16 %v3698, %v3695
    %v3815 = vpack.c.bf16 %v3769, %v3766
    %v3816 = vpack.c.bf16 %v3704, %v3701
    %v3817 = vpack.c.bf16 %v3775, %v3772
    %v3818 = vpack.c.bf16 %v3710, %v3707
    %v3819 = vpack.c.bf16 %v3781, %v3778
    %v3820 = vpack.c.bf16 %v3716, %v3713
    %v3821 = vpack.c.bf16 %v3787, %v3784
    %v3822 = vpack.c.bf16 %v3713, %v3710
    %v3823 = vpack.c.bf16 %v3784, %v3781
    %v3824 = vpack.c.bf16 %v3719, %v3716
    %v3825 = vpack.c.bf16 %v3790, %v3787
    %v3826 = vpack.c.bf16 %v3725, %v3722
    %v3827 = vpack.c.bf16 %v3796, %v3793
    %3828 = vmatpush.bf16.msra.mxu0 %v600
    %3829 = vmatpush.bf16.msra.mxu0 %v598
    %3830 = vmatpush.bf16.msra.mxu0 %v596
    %3831 = vmatpush.bf16.msra.mxu0 %v594
    %3832 = vmatpush.bf16.msra.mxu0 %v592
    %3833 = vmatpush.bf16.msra.mxu0 %v590
    %3834 = vmatpush.bf16.msra.mxu0 %v588
    %3835 = vmatpush.bf16.msra.mxu0 %v586
    %3836 = vmatmul.bf16.gmra.mxu0 %v3798
    %v3837 = vpop.f32.mrf.mxu0
    %v3838 = vadd.f32 0.0, %v3837
    %v3839 = vpop.f32.mrf.mxu0
    %v3840 = vadd.f32 0.0, %v3839
    %3841 = vmatmul.bf16.gmra.mxu0 %v3800
    %v3842 = vpop.f32.mrf.mxu0
    %v3843 = vpop.f32.mrf.mxu0
    %v3844 = vadd.f32 0.0, %v3843
    %3845 = vmatmul.bf16.gmra.mxu0 %v3802
    %v3846 = vpop.f32.mrf.mxu0
    %v3847 = vadd.f32 0.0, %v3846
    %v3848 = vpop.f32.mrf.mxu0
    %3849 = vmatmul.bf16.gmra.mxu0 %v3804
    %v3850 = vpop.f32.mrf.mxu0
    %v3851 = vadd.f32 0.0, %v3850
    %v3852 = vpop.f32.mrf.mxu0
    %v3853 = vadd.f32 0.0, %v3852
    %3854 = vmatmul.bf16.gmra.mxu0 %v3806
    %v3855 = vpop.f32.mrf.mxu0
    %v3856 = vpop.f32.mrf.mxu0
    %v3857 = vadd.f32 0.0, %v3856
    %3858 = vmatmul.bf16.gmra.mxu0 %v3808
    %v3859 = vpop.f32.mrf.mxu0
    %v3860 = vadd.f32 0.0, %v3859
    %v3861 = vpop.f32.mrf.mxu0
    %3862 = vdwg.mxu0
    %3863 = vmatpush.bf16.msra.mxu0 %v616
    %3864 = vmatpush.bf16.msra.mxu0 %v614
    %3865 = vmatpush.bf16.msra.mxu0 %v612
    %3866 = vmatpush.bf16.msra.mxu0 %v610
    %3867 = vmatpush.bf16.msra.mxu0 %v608
    %3868 = vmatpush.bf16.msra.mxu0 %v606
    %3869 = vmatpush.bf16.msra.mxu0 %v604
    %3870 = vmatpush.bf16.msra.mxu0 %v602
    %3871 = vmatmul.bf16.gmra.mxu0 %v3799
    %v3872 = vpop.f32.mrf.mxu0
    %v3873 = vadd.f32 %v3838, %v3872
    %v3874 = vpop.f32.mrf.mxu0
    %v3875 = vadd.f32 %v3840, %v3874
    %3876 = vmatmul.bf16.gmra.mxu0 %v3801
    %v3877 = vpop.f32.mrf.mxu0
    %v3878 = vpop.f32.mrf.mxu0
    %v3879 = vadd.f32 %v3844, %v3878
    %3880 = vmatmul.bf16.gmra.mxu0 %v3803
    %v3881 = vpop.f32.mrf.mxu0
    %v3882 = vadd.f32 %v3847, %v3881
    %v3883 = vpop.f32.mrf.mxu0
    %3884 = vmatmul.bf16.gmra.mxu0 %v3805
    %v3885 = vpop.f32.mrf.mxu0
    %v3886 = vadd.f32 %v3851, %v3885
    %v3887 = vpop.f32.mrf.mxu0
    %v3888 = vadd.f32 %v3853, %v3887
    %3889 = vmatmul.bf16.gmra.mxu0 %v3807
    %v3890 = vpop.f32.mrf.mxu0
    %v3891 = vpop.f32.mrf.mxu0
    %v3892 = vadd.f32 %v3857, %v3891
    %3893 = vmatmul.bf16.gmra.mxu0 %v3809
    %v3894 = vpop.f32.mrf.mxu0
    %v3895 = vadd.f32 %v3860, %v3894
    %v3896 = vpop.f32.mrf.mxu0
    %3897 = vdwg.mxu0
    %3898 = vmatpush.bf16.msra.mxu0 %v601
    %3899 = vmatpush.bf16.msra.mxu0 %v599
    %3900 = vmatpush.bf16.msra.mxu0 %v597
    %3901 = vmatpush.bf16.msra.mxu0 %v595
    %3902 = vmatpush.bf16.msra.mxu0 %v593
    %3903 = vmatpush.bf16.msra.mxu0 %v591
    %3904 = vmatpush.bf16.msra.mxu0 %v589
    %3905 = vmatpush.bf16.msra.mxu0 %v587
    %3906 = vmatmul.bf16.gmra.mxu0 %v3798
    %v3907 = vpop.f32.mrf.mxu0
    %v3908 = vadd.f32 0.0, %v3907
    %v3909 = vpop.f32.mrf.mxu0
    %v3910 = vadd.f32 0.0, %v3909
    %3911 = vmatmul.bf16.gmra.mxu0 %v3800
    %v3912 = vpop.f32.mrf.mxu0
    %v3913 = vpop.f32.mrf.mxu0
    %v3914 = vadd.f32 0.0, %v3913
    %3915 = vmatmul.bf16.gmra.mxu0 %v3802
    %v3916 = vpop.f32.mrf.mxu0
    %v3917 = vadd.f32 0.0, %v3916
    %v3918 = vpop.f32.mrf.mxu0
    %3919 = vmatmul.bf16.gmra.mxu0 %v3804
    %v3920 = vpop.f32.mrf.mxu0
    %v3921 = vadd.f32 0.0, %v3920
    %v3922 = vpop.f32.mrf.mxu0
    %v3923 = vadd.f32 0.0, %v3922
    %3924 = vmatmul.bf16.gmra.mxu0 %v3806
    %v3925 = vpop.f32.mrf.mxu0
    %v3926 = vpop.f32.mrf.mxu0
    %v3927 = vadd.f32 0.0, %v3926
    %3928 = vmatmul.bf16.gmra.mxu0 %v3808
    %v3929 = vpop.f32.mrf.mxu0
    %v3930 = vadd.f32 0.0, %v3929
    %v3931 = vpop.f32.mrf.mxu0
    %3932 = vdwg.mxu0
    %3933 = vmatpush.bf16.msra.mxu0 %v617
    %3934 = vmatpush.bf16.msra.mxu0 %v615
    %3935 = vmatpush.bf16.msra.mxu0 %v613
    %3936 = vmatpush.bf16.msra.mxu0 %v611
    %3937 = vmatpush.bf16.msra.mxu0 %v609
    %3938 = vmatpush.bf16.msra.mxu0 %v607
    %3939 = vmatpush.bf16.msra.mxu0 %v605
    %3940 = vmatpush.bf16.msra.mxu0 %v603
    %3941 = vmatmul.bf16.gmra.mxu0 %v3799
    %v3942 = vpop.f32.mrf.mxu0
    %v3943 = vadd.f32 %v3908, %v3942
    %v3944 = vpop.f32.mrf.mxu0
    %v3945 = vadd.f32 %v3910, %v3944
    %3946 = vmatmul.bf16.gmra.mxu0 %v3801
    %v3947 = vpop.f32.mrf.mxu0
    %v3948 = vpop.f32.mrf.mxu0
    %v3949 = vadd.f32 %v3914, %v3948
    %3950 = vmatmul.bf16.gmra.mxu0 %v3803
    %v3951 = vpop.f32.mrf.mxu0
    %v3952 = vadd.f32 %v3917, %v3951
    %v3953 = vpop.f32.mrf.mxu0
    %3954 = vmatmul.bf16.gmra.mxu0 %v3805
    %v3955 = vpop.f32.mrf.mxu0
    %v3956 = vadd.f32 %v3921, %v3955
    %v3957 = vpop.f32.mrf.mxu0
    %v3958 = vadd.f32 %v3923, %v3957
    %3959 = vmatmul.bf16.gmra.mxu0 %v3807
    %v3960 = vpop.f32.mrf.mxu0
    %v3961 = vpop.f32.mrf.mxu0
    %v3962 = vadd.f32 %v3927, %v3961
    %3963 = vmatmul.bf16.gmra.mxu0 %v3809
    %v3964 = vpop.f32.mrf.mxu0
    %v3965 = vadd.f32 %v3930, %v3964
    %v3966 = vpop.f32.mrf.mxu0
    %3967 = vdwg.mxu0
    %v3968 = vadd.f32 %v3873, 0.0
    %v3969 = vadd.f32 %v3943, 0.0
    %v3970 = vadd.f32 %v3875, 0.0
    %v3971 = vadd.f32 %v3945, 0.0
    %v3972 = vadd.f32 %v3879, 0.0
    %v3973 = vadd.f32 %v3949, 0.0
    %v3974 = vadd.f32 %v3882, 0.0
    %v3975 = vadd.f32 %v3952, 0.0
    %v3976 = vadd.f32 %v3886, 0.0
    %v3977 = vadd.f32 %v3956, 0.0
    %v3978 = vadd.f32 %v3888, 0.0
    %v3979 = vadd.f32 %v3958, 0.0
    %v3980 = vadd.f32 %v3892, 0.0
    %v3981 = vadd.f32 %v3962, 0.0
    %v3982 = vadd.f32 %v3895, 0.0
    %v3983 = vadd.f32 %v3965, 0.0
    %3984 = vmatpush.bf16.msra.mxu0 %v949
    %3985 = vmatpush.bf16.msra.mxu0 %v947
    %3986 = vmatpush.bf16.msra.mxu0 %v945
    %3987 = vmatpush.bf16.msra.mxu0 %v943
    %3988 = vmatpush.bf16.msra.mxu0 %v941
    %3989 = vmatpush.bf16.msra.mxu0 %v939
    %3990 = vmatpush.bf16.msra.mxu0 %v937
    %3991 = vmatpush.bf16.msra.mxu0 %v935
    %3992 = vmatmul.bf16.gmra.mxu0 %v3798
    %v3993 = vpop.f32.mrf.mxu0
    %v3994 = vpop.f32.mrf.mxu0
    %v3995 = vadd.f32 0.0, %v3994
    %3996 = vmatmul.bf16.gmra.mxu0 %v3800
    %v3997 = vpop.f32.mrf.mxu0
    %v3998 = vpop.f32.mrf.mxu0
    %3999 = vmatmul.bf16.gmra.mxu0 %v3802
    %v4000 = vpop.f32.mrf.mxu0
    %v4001 = vadd.f32 0.0, %v4000
    %v4002 = vpop.f32.mrf.mxu0
    %4003 = vmatmul.bf16.gmra.mxu0 %v3804
    %v4004 = vpop.f32.mrf.mxu0
    %v4005 = vpop.f32.mrf.mxu0
    %v4006 = vadd.f32 0.0, %v4005
    %4007 = vmatmul.bf16.gmra.mxu0 %v3806
    %v4008 = vpop.f32.mrf.mxu0
    %v4009 = vpop.f32.mrf.mxu0
    %4010 = vmatmul.bf16.gmra.mxu0 %v3808
    %v4011 = vpop.f32.mrf.mxu0
    %v4012 = vadd.f32 0.0, %v4011
    %v4013 = vpop.f32.mrf.mxu0
    %4014 = vdwg.mxu0
    %4015 = vmatpush.bf16.msra.mxu0 %v965
    %4016 = vmatpush.bf16.msra.mxu0 %v963
    %4017 = vmatpush.bf16.msra.mxu0 %v961
    %4018 = vmatpush.bf16.msra.mxu0 %v959
    %4019 = vmatpush.bf16.msra.mxu0 %v957
    %4020 = vmatpush.bf16.msra.mxu0 %v955
    %4021 = vmatpush.bf16.msra.mxu0 %v953
    %4022 = vmatpush.bf16.msra.mxu0 %v951
    %4023 = vmatmul.bf16.gmra.mxu0 %v3799
    %v4024 = vpop.f32.mrf.mxu0
    %v4025 = vpop.f32.mrf.mxu0
    %v4026 = vadd.f32 %v3995, %v4025
    %4027 = vmatmul.bf16.gmra.mxu0 %v3801
    %v4028 = vpop.f32.mrf.mxu0
    %v4029 = vpop.f32.mrf.mxu0
    %4030 = vmatmul.bf16.gmra.mxu0 %v3803
    %v4031 = vpop.f32.mrf.mxu0
    %v4032 = vadd.f32 %v4001, %v4031
    %v4033 = vpop.f32.mrf.mxu0
    %4034 = vmatmul.bf16.gmra.mxu0 %v3805
    %v4035 = vpop.f32.mrf.mxu0
    %v4036 = vpop.f32.mrf.mxu0
    %v4037 = vadd.f32 %v4006, %v4036
    %4038 = vmatmul.bf16.gmra.mxu0 %v3807
    %v4039 = vpop.f32.mrf.mxu0
    %v4040 = vpop.f32.mrf.mxu0
    %4041 = vmatmul.bf16.gmra.mxu0 %v3809
    %v4042 = vpop.f32.mrf.mxu0
    %v4043 = vadd.f32 %v4012, %v4042
    %v4044 = vpop.f32.mrf.mxu0
    %4045 = vdwg.mxu0
    %4046 = vmatpush.bf16.msra.mxu0 %v950
    %4047 = vmatpush.bf16.msra.mxu0 %v948
    %4048 = vmatpush.bf16.msra.mxu0 %v946
    %4049 = vmatpush.bf16.msra.mxu0 %v944
    %4050 = vmatpush.bf16.msra.mxu0 %v942
    %4051 = vmatpush.bf16.msra.mxu0 %v940
    %4052 = vmatpush.bf16.msra.mxu0 %v938
    %4053 = vmatpush.bf16.msra.mxu0 %v936
    %4054 = vmatmul.bf16.gmra.mxu0 %v3798
    %v4055 = vpop.f32.mrf.mxu0
    %v4056 = vpop.f32.mrf.mxu0
    %v4057 = vadd.f32 0.0, %v4056
    %4058 = vmatmul.bf16.gmra.mxu0 %v3800
    %v4059 = vpop.f32.mrf.mxu0
    %v4060 = vpop.f32.mrf.mxu0
    %4061 = vmatmul.bf16.gmra.mxu0 %v3802
    %v4062 = vpop.f32.mrf.mxu0
    %v4063 = vadd.f32 0.0, %v4062
    %v4064 = vpop.f32.mrf.mxu0
    %4065 = vmatmul.bf16.gmra.mxu0 %v3804
    %v4066 = vpop.f32.mrf.mxu0
    %v4067 = vpop.f32.mrf.mxu0
    %v4068 = vadd.f32 0.0, %v4067
    %4069 = vmatmul.bf16.gmra.mxu0 %v3806
    %v4070 = vpop.f32.mrf.mxu0
    %v4071 = vpop.f32.mrf.mxu0
    %4072 = vmatmul.bf16.gmra.mxu0 %v3808
    %v4073 = vpop.f32.mrf.mxu0
    %v4074 = vadd.f32 0.0, %v4073
    %v4075 = vpop.f32.mrf.mxu0
    %4076 = vdwg.mxu0
    %4077 = vmatpush.bf16.msra.mxu0 %v966
    %4078 = vmatpush.bf16.msra.mxu0 %v964
    %4079 = vmatpush.bf16.msra.mxu0 %v962
    %4080 = vmatpush.bf16.msra.mxu0 %v960
    %4081 = vmatpush.bf16.msra.mxu0 %v958
    %4082 = vmatpush.bf16.msra.mxu0 %v956
    %4083 = vmatpush.bf16.msra.mxu0 %v954
    %4084 = vmatpush.bf16.msra.mxu0 %v952
    %4085 = vmatmul.bf16.gmra.mxu0 %v3799
    %v4086 = vpop.f32.mrf.mxu0
    %v4087 = vpop.f32.mrf.mxu0
    %v4088 = vadd.f32 %v4057, %v4087
    %4089 = vmatmul.bf16.gmra.mxu0 %v3801
    %v4090 = vpop.f32.mrf.mxu0
    %v4091 = vpop.f32.mrf.mxu0
    %4092 = vmatmul.bf16.gmra.mxu0 %v3803
    %v4093 = vpop.f32.mrf.mxu0
    %v4094 = vadd.f32 %v4063, %v4093
    %v4095 = vpop.f32.mrf.mxu0
    %4096 = vmatmul.bf16.gmra.mxu0 %v3805
    %v4097 = vpop.f32.mrf.mxu0
    %v4098 = vpop.f32.mrf.mxu0
    %v4099 = vadd.f32 %v4068, %v4098
    %4100 = vmatmul.bf16.gmra.mxu0 %v3807
    %v4101 = vpop.f32.mrf.mxu0
    %v4102 = vpop.f32.mrf.mxu0
    %4103 = vmatmul.bf16.gmra.mxu0 %v3809
    %v4104 = vpop.f32.mrf.mxu0
    %v4105 = vadd.f32 %v4074, %v4104
    %v4106 = vpop.f32.mrf.mxu0
    %4107 = vdwg.mxu0
    %v4116 = vrot.slane %v4026, 1
    %v4117 = vrot.slane %v4088, 1
    %v4118 = vrot.slane %v4032, 1
    %v4119 = vrot.slane %v4094, 1
    %v4120 = vrot.slane %v4037, 1
    %v4121 = vrot.slane %v4099, 1
    %v4122 = vrot.slane %v4043, 1
    %v4123 = vrot.slane %v4105, 1
    %v4132 = vadd.f32 %v3968, %v4116
    %v4133 = vadd.f32 %v3969, %v4117
    %v4134 = vadd.f32 %v3970, %v4116
    %v4135 = vadd.f32 %v3971, %v4117
    %v4136 = vadd.f32 %v3972, %v4118
    %v4137 = vadd.f32 %v3973, %v4119
    %v4138 = vadd.f32 %v3974, %v4118
    %v4139 = vadd.f32 %v3975, %v4119
    %v4140 = vadd.f32 %v3976, %v4120
    %v4141 = vadd.f32 %v3977, %v4121
    %v4142 = vadd.f32 %v3978, %v4120
    %v4143 = vadd.f32 %v3979, %v4121
    %v4144 = vadd.f32 %v3980, %v4122
    %v4145 = vadd.f32 %v3981, %v4123
    %v4146 = vadd.f32 %v3982, %v4122
    %v4147 = vadd.f32 %v3983, %v4123
    %4148 = vmatpush.bf16.msra.mxu0 %v1306
    %4149 = vmatpush.bf16.msra.mxu0 %v1304
    %4150 = vmatpush.bf16.msra.mxu0 %v1302
    %4151 = vmatpush.bf16.msra.mxu0 %v1300
    %4152 = vmatpush.bf16.msra.mxu0 %v1298
    %4153 = vmatpush.bf16.msra.mxu0 %v1296
    %4154 = vmatpush.bf16.msra.mxu0 %v1294
    %4155 = vmatpush.bf16.msra.mxu0 %v1292
    %4156 = vmatmul.bf16.gmra.mxu0 %v3798
    %v4157 = vpop.f32.mrf.mxu0
    %v4158 = vpop.f32.mrf.mxu0
    %v4159 = vadd.f32 0.0, %v4158
    %4160 = vmatmul.bf16.gmra.mxu0 %v3800
    %v4161 = vpop.f32.mrf.mxu0
    %v4162 = vpop.f32.mrf.mxu0
    %4163 = vmatmul.bf16.gmra.mxu0 %v3802
    %v4164 = vpop.f32.mrf.mxu0
    %v4165 = vadd.f32 0.0, %v4164
    %v4166 = vpop.f32.mrf.mxu0
    %4167 = vmatmul.bf16.gmra.mxu0 %v3804
    %v4168 = vpop.f32.mrf.mxu0
    %v4169 = vpop.f32.mrf.mxu0
    %v4170 = vadd.f32 0.0, %v4169
    %4171 = vmatmul.bf16.gmra.mxu0 %v3806
    %v4172 = vpop.f32.mrf.mxu0
    %v4173 = vpop.f32.mrf.mxu0
    %4174 = vmatmul.bf16.gmra.mxu0 %v3808
    %v4175 = vpop.f32.mrf.mxu0
    %v4176 = vadd.f32 0.0, %v4175
    %v4177 = vpop.f32.mrf.mxu0
    %4178 = vdwg.mxu0
    %4179 = vmatpush.bf16.msra.mxu0 %v1322
    %4180 = vmatpush.bf16.msra.mxu0 %v1320
    %4181 = vmatpush.bf16.msra.mxu0 %v1318
    %4182 = vmatpush.bf16.msra.mxu0 %v1316
    %4183 = vmatpush.bf16.msra.mxu0 %v1314
    %4184 = vmatpush.bf16.msra.mxu0 %v1312
    %4185 = vmatpush.bf16.msra.mxu0 %v1310
    %4186 = vmatpush.bf16.msra.mxu0 %v1308
    %4187 = vmatmul.bf16.gmra.mxu0 %v3799
    %v4188 = vpop.f32.mrf.mxu0
    %v4189 = vpop.f32.mrf.mxu0
    %v4190 = vadd.f32 %v4159, %v4189
    %4191 = vmatmul.bf16.gmra.mxu0 %v3801
    %v4192 = vpop.f32.mrf.mxu0
    %v4193 = vpop.f32.mrf.mxu0
    %4194 = vmatmul.bf16.gmra.mxu0 %v3803
    %v4195 = vpop.f32.mrf.mxu0
    %v4196 = vadd.f32 %v4165, %v4195
    %v4197 = vpop.f32.mrf.mxu0
    %4198 = vmatmul.bf16.gmra.mxu0 %v3805
    %v4199 = vpop.f32.mrf.mxu0
    %v4200 = vpop.f32.mrf.mxu0
    %v4201 = vadd.f32 %v4170, %v4200
    %4202 = vmatmul.bf16.gmra.mxu0 %v3807
    %v4203 = vpop.f32.mrf.mxu0
    %v4204 = vpop.f32.mrf.mxu0
    %4205 = vmatmul.bf16.gmra.mxu0 %v3809
    %v4206 = vpop.f32.mrf.mxu0
    %v4207 = vadd.f32 %v4176, %v4206
    %v4208 = vpop.f32.mrf.mxu0
    %4209 = vdwg.mxu0
    %4210 = vmatpush.bf16.msra.mxu0 %v1307
    %4211 = vmatpush.bf16.msra.mxu0 %v1305
    %4212 = vmatpush.bf16.msra.mxu0 %v1303
    %4213 = vmatpush.bf16.msra.mxu0 %v1301
    %4214 = vmatpush.bf16.msra.mxu0 %v1299
    %4215 = vmatpush.bf16.msra.mxu0 %v1297
    %4216 = vmatpush.bf16.msra.mxu0 %v1295
    %4217 = vmatpush.bf16.msra.mxu0 %v1293
    %4218 = vmatmul.bf16.gmra.mxu0 %v3798
    %v4219 = vpop.f32.mrf.mxu0
    %v4220 = vpop.f32.mrf.mxu0
    %v4221 = vadd.f32 0.0, %v4220
    %4222 = vmatmul.bf16.gmra.mxu0 %v3800
    %v4223 = vpop.f32.mrf.mxu0
    %v4224 = vpop.f32.mrf.mxu0
    %4225 = vmatmul.bf16.gmra.mxu0 %v3802
    %v4226 = vpop.f32.mrf.mxu0
    %v4227 = vadd.f32 0.0, %v4226
    %v4228 = vpop.f32.mrf.mxu0
    %4229 = vmatmul.bf16.gmra.mxu0 %v3804
    %v4230 = vpop.f32.mrf.mxu0
    %v4231 = vpop.f32.mrf.mxu0
    %v4232 = vadd.f32 0.0, %v4231
    %4233 = vmatmul.bf16.gmra.mxu0 %v3806
    %v4234 = vpop.f32.mrf.mxu0
    %v4235 = vpop.f32.mrf.mxu0
    %4236 = vmatmul.bf16.gmra.mxu0 %v3808
    %v4237 = vpop.f32.mrf.mxu0
    %v4238 = vadd.f32 0.0, %v4237
    %v4239 = vpop.f32.mrf.mxu0
    %4240 = vdwg.mxu0
    %4241 = vmatpush.bf16.msra.mxu0 %v1323
    %4242 = vmatpush.bf16.msra.mxu0 %v1321
    %4243 = vmatpush.bf16.msra.mxu0 %v1319
    %4244 = vmatpush.bf16.msra.mxu0 %v1317
    %4245 = vmatpush.bf16.msra.mxu0 %v1315
    %4246 = vmatpush.bf16.msra.mxu0 %v1313
    %4247 = vmatpush.bf16.msra.mxu0 %v1311
    %4248 = vmatpush.bf16.msra.mxu0 %v1309
    %4249 = vmatmul.bf16.gmra.mxu0 %v3799
    %v4250 = vpop.f32.mrf.mxu0
    %v4251 = vpop.f32.mrf.mxu0
    %v4252 = vadd.f32 %v4221, %v4251
    %4253 = vmatmul.bf16.gmra.mxu0 %v3801
    %v4254 = vpop.f32.mrf.mxu0
    %v4255 = vpop.f32.mrf.mxu0
    %4256 = vmatmul.bf16.gmra.mxu0 %v3803
    %v4257 = vpop.f32.mrf.mxu0
    %v4258 = vadd.f32 %v4227, %v4257
    %v4259 = vpop.f32.mrf.mxu0
    %4260 = vmatmul.bf16.gmra.mxu0 %v3805
    %v4261 = vpop.f32.mrf.mxu0
    %v4262 = vpop.f32.mrf.mxu0
    %v4263 = vadd.f32 %v4232, %v4262
    %4264 = vmatmul.bf16.gmra.mxu0 %v3807
    %v4265 = vpop.f32.mrf.mxu0
    %v4266 = vpop.f32.mrf.mxu0
    %4267 = vmatmul.bf16.gmra.mxu0 %v3809
    %v4268 = vpop.f32.mrf.mxu0
    %v4269 = vadd.f32 %v4238, %v4268
    %v4270 = vpop.f32.mrf.mxu0
    %4271 = vdwg.mxu0
    %v4280 = vrot.slane %v4190, 2
    %v4281 = vrot.slane %v4252, 2
    %v4282 = vrot.slane %v4196, 2
    %v4283 = vrot.slane %v4258, 2
    %v4284 = vrot.slane %v4201, 2
    %v4285 = vrot.slane %v4263, 2
    %v4286 = vrot.slane %v4207, 2
    %v4287 = vrot.slane %v4269, 2
    %v4296 = vadd.f32 %v4132, %v4280
    %v4297 = vadd.f32 %v4133, %v4281
    %v4298 = vadd.f32 %v4134, %v4280
    %v4299 = vadd.f32 %v4135, %v4281
    %v4300 = vadd.f32 %v4136, %v4282
    %v4301 = vadd.f32 %v4137, %v4283
    %v4302 = vadd.f32 %v4138, %v4282
    %v4303 = vadd.f32 %v4139, %v4283
    %v4304 = vadd.f32 %v4140, %v4284
    %v4305 = vadd.f32 %v4141, %v4285
    %v4306 = vadd.f32 %v4142, %v4284
    %v4307 = vadd.f32 %v4143, %v4285
    %v4308 = vadd.f32 %v4144, %v4286
    %v4309 = vadd.f32 %v4145, %v4287
    %v4310 = vadd.f32 %v4146, %v4286
    %v4311 = vadd.f32 %v4147, %v4287
    %4312 = vmatpush.bf16.msra.mxu0 %v1663
    %4313 = vmatpush.bf16.msra.mxu0 %v1661
    %4314 = vmatpush.bf16.msra.mxu0 %v1659
    %4315 = vmatpush.bf16.msra.mxu0 %v1657
    %4316 = vmatpush.bf16.msra.mxu0 %v1655
    %4317 = vmatpush.bf16.msra.mxu0 %v1653
    %4318 = vmatpush.bf16.msra.mxu0 %v1651
    %4319 = vmatpush.bf16.msra.mxu0 %v1649
    %4320 = vmatmul.bf16.gmra.mxu0 %v3810
    %v4321 = vpop.f32.mrf.mxu0
    %v4322 = vadd.f32 0.0, %v4321
    %v4323 = vpop.f32.mrf.mxu0
    %v4324 = vadd.f32 0.0, %v4323
    %4325 = vmatmul.bf16.gmra.mxu0 %v3812
    %v4326 = vpop.f32.mrf.mxu0
    %v4327 = vpop.f32.mrf.mxu0
    %v4328 = vadd.f32 0.0, %v4327
    %4329 = vmatmul.bf16.gmra.mxu0 %v3814
    %v4330 = vpop.f32.mrf.mxu0
    %v4331 = vadd.f32 0.0, %v4330
    %v4332 = vpop.f32.mrf.mxu0
    %4333 = vmatmul.bf16.gmra.mxu0 %v3816
    %v4334 = vpop.f32.mrf.mxu0
    %v4335 = vadd.f32 0.0, %v4334
    %v4336 = vpop.f32.mrf.mxu0
    %v4337 = vadd.f32 0.0, %v4336
    %4338 = vmatmul.bf16.gmra.mxu0 %v3818
    %v4339 = vpop.f32.mrf.mxu0
    %v4340 = vpop.f32.mrf.mxu0
    %v4341 = vadd.f32 0.0, %v4340
    %4342 = vmatmul.bf16.gmra.mxu0 %v3820
    %v4343 = vpop.f32.mrf.mxu0
    %v4344 = vadd.f32 0.0, %v4343
    %v4345 = vpop.f32.mrf.mxu0
    %4346 = vdwg.mxu0
    %4347 = vmatpush.bf16.msra.mxu0 %v1679
    %4348 = vmatpush.bf16.msra.mxu0 %v1677
    %4349 = vmatpush.bf16.msra.mxu0 %v1675
    %4350 = vmatpush.bf16.msra.mxu0 %v1673
    %4351 = vmatpush.bf16.msra.mxu0 %v1671
    %4352 = vmatpush.bf16.msra.mxu0 %v1669
    %4353 = vmatpush.bf16.msra.mxu0 %v1667
    %4354 = vmatpush.bf16.msra.mxu0 %v1665
    %4355 = vmatmul.bf16.gmra.mxu0 %v3811
    %v4356 = vpop.f32.mrf.mxu0
    %v4357 = vadd.f32 %v4322, %v4356
    %v4358 = vpop.f32.mrf.mxu0
    %v4359 = vadd.f32 %v4324, %v4358
    %4360 = vmatmul.bf16.gmra.mxu0 %v3813
    %v4361 = vpop.f32.mrf.mxu0
    %v4362 = vpop.f32.mrf.mxu0
    %v4363 = vadd.f32 %v4328, %v4362
    %4364 = vmatmul.bf16.gmra.mxu0 %v3815
    %v4365 = vpop.f32.mrf.mxu0
    %v4366 = vadd.f32 %v4331, %v4365
    %v4367 = vpop.f32.mrf.mxu0
    %4368 = vmatmul.bf16.gmra.mxu0 %v3817
    %v4369 = vpop.f32.mrf.mxu0
    %v4370 = vadd.f32 %v4335, %v4369
    %v4371 = vpop.f32.mrf.mxu0
    %v4372 = vadd.f32 %v4337, %v4371
    %4373 = vmatmul.bf16.gmra.mxu0 %v3819
    %v4374 = vpop.f32.mrf.mxu0
    %v4375 = vpop.f32.mrf.mxu0
    %v4376 = vadd.f32 %v4341, %v4375
    %4377 = vmatmul.bf16.gmra.mxu0 %v3821
    %v4378 = vpop.f32.mrf.mxu0
    %v4379 = vadd.f32 %v4344, %v4378
    %v4380 = vpop.f32.mrf.mxu0
    %4381 = vdwg.mxu0
    %4382 = vmatpush.bf16.msra.mxu0 %v1664
    %4383 = vmatpush.bf16.msra.mxu0 %v1662
    %4384 = vmatpush.bf16.msra.mxu0 %v1660
    %4385 = vmatpush.bf16.msra.mxu0 %v1658
    %4386 = vmatpush.bf16.msra.mxu0 %v1656
    %4387 = vmatpush.bf16.msra.mxu0 %v1654
    %4388 = vmatpush.bf16.msra.mxu0 %v1652
    %4389 = vmatpush.bf16.msra.mxu0 %v1650
    %4390 = vmatmul.bf16.gmra.mxu0 %v3810
    %v4391 = vpop.f32.mrf.mxu0
    %v4392 = vadd.f32 0.0, %v4391
    %v4393 = vpop.f32.mrf.mxu0
    %v4394 = vadd.f32 0.0, %v4393
    %4395 = vmatmul.bf16.gmra.mxu0 %v3812
    %v4396 = vpop.f32.mrf.mxu0
    %v4397 = vpop.f32.mrf.mxu0
    %v4398 = vadd.f32 0.0, %v4397
    %4399 = vmatmul.bf16.gmra.mxu0 %v3814
    %v4400 = vpop.f32.mrf.mxu0
    %v4401 = vadd.f32 0.0, %v4400
    %v4402 = vpop.f32.mrf.mxu0
    %4403 = vmatmul.bf16.gmra.mxu0 %v3816
    %v4404 = vpop.f32.mrf.mxu0
    %v4405 = vadd.f32 0.0, %v4404
    %v4406 = vpop.f32.mrf.mxu0
    %v4407 = vadd.f32 0.0, %v4406
    %4408 = vmatmul.bf16.gmra.mxu0 %v3818
    %v4409 = vpop.f32.mrf.mxu0
    %v4410 = vpop.f32.mrf.mxu0
    %v4411 = vadd.f32 0.0, %v4410
    %4412 = vmatmul.bf16.gmra.mxu0 %v3820
    %v4413 = vpop.f32.mrf.mxu0
    %v4414 = vadd.f32 0.0, %v4413
    %v4415 = vpop.f32.mrf.mxu0
    %4416 = vdwg.mxu0
    %4417 = vmatpush.bf16.msra.mxu0 %v1680
    %4418 = vmatpush.bf16.msra.mxu0 %v1678
    %4419 = vmatpush.bf16.msra.mxu0 %v1676
    %4420 = vmatpush.bf16.msra.mxu0 %v1674
    %4421 = vmatpush.bf16.msra.mxu0 %v1672
    %4422 = vmatpush.bf16.msra.mxu0 %v1670
    %4423 = vmatpush.bf16.msra.mxu0 %v1668
    %4424 = vmatpush.bf16.msra.mxu0 %v1666
    %4425 = vmatmul.bf16.gmra.mxu0 %v3811
    %v4426 = vpop.f32.mrf.mxu0
    %v4427 = vadd.f32 %v4392, %v4426
    %v4428 = vpop.f32.mrf.mxu0
    %v4429 = vadd.f32 %v4394, %v4428
    %4430 = vmatmul.bf16.gmra.mxu0 %v3813
    %v4431 = vpop.f32.mrf.mxu0
    %v4432 = vpop.f32.mrf.mxu0
    %v4433 = vadd.f32 %v4398, %v4432
    %4434 = vmatmul.bf16.gmra.mxu0 %v3815
    %v4435 = vpop.f32.mrf.mxu0
    %v4436 = vadd.f32 %v4401, %v4435
    %v4437 = vpop.f32.mrf.mxu0
    %4438 = vmatmul.bf16.gmra.mxu0 %v3817
    %v4439 = vpop.f32.mrf.mxu0
    %v4440 = vadd.f32 %v4405, %v4439
    %v4441 = vpop.f32.mrf.mxu0
    %v4442 = vadd.f32 %v4407, %v4441
    %4443 = vmatmul.bf16.gmra.mxu0 %v3819
    %v4444 = vpop.f32.mrf.mxu0
    %v4445 = vpop.f32.mrf.mxu0
    %v4446 = vadd.f32 %v4411, %v4445
    %4447 = vmatmul.bf16.gmra.mxu0 %v3821
    %v4448 = vpop.f32.mrf.mxu0
    %v4449 = vadd.f32 %v4414, %v4448
    %v4450 = vpop.f32.mrf.mxu0
    %4451 = vdwg.mxu0
    %v4452 = vadd.f32 %v4296, %v4357
    %v4453 = vadd.f32 %v4297, %v4427
    %v4454 = vadd.f32 %v4298, %v4359
    %v4455 = vadd.f32 %v4299, %v4429
    %v4456 = vadd.f32 %v4300, %v4363
    %v4457 = vadd.f32 %v4301, %v4433
    %v4458 = vadd.f32 %v4302, %v4366
    %v4459 = vadd.f32 %v4303, %v4436
    %v4460 = vadd.f32 %v4304, %v4370
    %v4461 = vadd.f32 %v4305, %v4440
    %v4462 = vadd.f32 %v4306, %v4372
    %v4463 = vadd.f32 %v4307, %v4442
    %v4464 = vadd.f32 %v4308, %v4376
    %v4465 = vadd.f32 %v4309, %v4446
    %v4466 = vadd.f32 %v4310, %v4379
    %v4467 = vadd.f32 %v4311, %v4449
    %4468 = vmatpush.bf16.msra.mxu0 %v2012
    %4469 = vmatpush.bf16.msra.mxu0 %v2010
    %4470 = vmatpush.bf16.msra.mxu0 %v2008
    %4471 = vmatpush.bf16.msra.mxu0 %v2006
    %4472 = vmatpush.bf16.msra.mxu0 %v2004
    %4473 = vmatpush.bf16.msra.mxu0 %v2002
    %4474 = vmatpush.bf16.msra.mxu0 %v2000
    %4475 = vmatpush.bf16.msra.mxu0 %v1998
    %4476 = vmatmul.bf16.gmra.mxu0 %v3810
    %v4477 = vpop.f32.mrf.mxu0
    %v4478 = vpop.f32.mrf.mxu0
    %v4479 = vadd.f32 0.0, %v4478
    %4480 = vmatmul.bf16.gmra.mxu0 %v3812
    %v4481 = vpop.f32.mrf.mxu0
    %v4482 = vpop.f32.mrf.mxu0
    %4483 = vmatmul.bf16.gmra.mxu0 %v3814
    %v4484 = vpop.f32.mrf.mxu0
    %v4485 = vadd.f32 0.0, %v4484
    %v4486 = vpop.f32.mrf.mxu0
    %4487 = vmatmul.bf16.gmra.mxu0 %v3816
    %v4488 = vpop.f32.mrf.mxu0
    %v4489 = vpop.f32.mrf.mxu0
    %v4490 = vadd.f32 0.0, %v4489
    %4491 = vmatmul.bf16.gmra.mxu0 %v3818
    %v4492 = vpop.f32.mrf.mxu0
    %v4493 = vpop.f32.mrf.mxu0
    %4494 = vmatmul.bf16.gmra.mxu0 %v3820
    %v4495 = vpop.f32.mrf.mxu0
    %v4496 = vadd.f32 0.0, %v4495
    %v4497 = vpop.f32.mrf.mxu0
    %4498 = vdwg.mxu0
    %4499 = vmatpush.bf16.msra.mxu0 %v2028
    %4500 = vmatpush.bf16.msra.mxu0 %v2026
    %4501 = vmatpush.bf16.msra.mxu0 %v2024
    %4502 = vmatpush.bf16.msra.mxu0 %v2022
    %4503 = vmatpush.bf16.msra.mxu0 %v2020
    %4504 = vmatpush.bf16.msra.mxu0 %v2018
    %4505 = vmatpush.bf16.msra.mxu0 %v2016
    %4506 = vmatpush.bf16.msra.mxu0 %v2014
    %4507 = vmatmul.bf16.gmra.mxu0 %v3811
    %v4508 = vpop.f32.mrf.mxu0
    %v4509 = vpop.f32.mrf.mxu0
    %v4510 = vadd.f32 %v4479, %v4509
    %4511 = vmatmul.bf16.gmra.mxu0 %v3813
    %v4512 = vpop.f32.mrf.mxu0
    %v4513 = vpop.f32.mrf.mxu0
    %4514 = vmatmul.bf16.gmra.mxu0 %v3815
    %v4515 = vpop.f32.mrf.mxu0
    %v4516 = vadd.f32 %v4485, %v4515
    %v4517 = vpop.f32.mrf.mxu0
    %4518 = vmatmul.bf16.gmra.mxu0 %v3817
    %v4519 = vpop.f32.mrf.mxu0
    %v4520 = vpop.f32.mrf.mxu0
    %v4521 = vadd.f32 %v4490, %v4520
    %4522 = vmatmul.bf16.gmra.mxu0 %v3819
    %v4523 = vpop.f32.mrf.mxu0
    %v4524 = vpop.f32.mrf.mxu0
    %4525 = vmatmul.bf16.gmra.mxu0 %v3821
    %v4526 = vpop.f32.mrf.mxu0
    %v4527 = vadd.f32 %v4496, %v4526
    %v4528 = vpop.f32.mrf.mxu0
    %4529 = vdwg.mxu0
    %4530 = vmatpush.bf16.msra.mxu0 %v2013
    %4531 = vmatpush.bf16.msra.mxu0 %v2011
    %4532 = vmatpush.bf16.msra.mxu0 %v2009
    %4533 = vmatpush.bf16.msra.mxu0 %v2007
    %4534 = vmatpush.bf16.msra.mxu0 %v2005
    %4535 = vmatpush.bf16.msra.mxu0 %v2003
    %4536 = vmatpush.bf16.msra.mxu0 %v2001
    %4537 = vmatpush.bf16.msra.mxu0 %v1999
    %4538 = vmatmul.bf16.gmra.mxu0 %v3810
    %v4539 = vpop.f32.mrf.mxu0
    %v4540 = vpop.f32.mrf.mxu0
    %v4541 = vadd.f32 0.0, %v4540
    %4542 = vmatmul.bf16.gmra.mxu0 %v3812
    %v4543 = vpop.f32.mrf.mxu0
    %v4544 = vpop.f32.mrf.mxu0
    %4545 = vmatmul.bf16.gmra.mxu0 %v3814
    %v4546 = vpop.f32.mrf.mxu0
    %v4547 = vadd.f32 0.0, %v4546
    %v4548 = vpop.f32.mrf.mxu0
    %4549 = vmatmul.bf16.gmra.mxu0 %v3816
    %v4550 = vpop.f32.mrf.mxu0
    %v4551 = vpop.f32.mrf.mxu0
    %v4552 = vadd.f32 0.0, %v4551
    %4553 = vmatmul.bf16.gmra.mxu0 %v3818
    %v4554 = vpop.f32.mrf.mxu0
    %v4555 = vpop.f32.mrf.mxu0
    %4556 = vmatmul.bf16.gmra.mxu0 %v3820
    %v4557 = vpop.f32.mrf.mxu0
    %v4558 = vadd.f32 0.0, %v4557
    %v4559 = vpop.f32.mrf.mxu0
    %4560 = vdwg.mxu0
    %4561 = vmatpush.bf16.msra.mxu0 %v2029
    %4562 = vmatpush.bf16.msra.mxu0 %v2027
    %4563 = vmatpush.bf16.msra.mxu0 %v2025
    %4564 = vmatpush.bf16.msra.mxu0 %v2023
    %4565 = vmatpush.bf16.msra.mxu0 %v2021
    %4566 = vmatpush.bf16.msra.mxu0 %v2019
    %4567 = vmatpush.bf16.msra.mxu0 %v2017
    %4568 = vmatpush.bf16.msra.mxu0 %v2015
    %4569 = vmatmul.bf16.gmra.mxu0 %v3811
    %v4570 = vpop.f32.mrf.mxu0
    %v4571 = vpop.f32.mrf.mxu0
    %v4572 = vadd.f32 %v4541, %v4571
    %4573 = vmatmul.bf16.gmra.mxu0 %v3813
    %v4574 = vpop.f32.mrf.mxu0
    %v4575 = vpop.f32.mrf.mxu0
    %4576 = vmatmul.bf16.gmra.mxu0 %v3815
    %v4577 = vpop.f32.mrf.mxu0
    %v4578 = vadd.f32 %v4547, %v4577
    %v4579 = vpop.f32.mrf.mxu0
    %4580 = vmatmul.bf16.gmra.mxu0 %v3817
    %v4581 = vpop.f32.mrf.mxu0
    %v4582 = vpop.f32.mrf.mxu0
    %v4583 = vadd.f32 %v4552, %v4582
    %4584 = vmatmul.bf16.gmra.mxu0 %v3819
    %v4585 = vpop.f32.mrf.mxu0
    %v4586 = vpop.f32.mrf.mxu0
    %4587 = vmatmul.bf16.gmra.mxu0 %v3821
    %v4588 = vpop.f32.mrf.mxu0
    %v4589 = vadd.f32 %v4558, %v4588
    %v4590 = vpop.f32.mrf.mxu0
    %4591 = vdwg.mxu0
    %v4600 = vrot.slane %v4510, 1
    %v4601 = vrot.slane %v4572, 1
    %v4602 = vrot.slane %v4516, 1
    %v4603 = vrot.slane %v4578, 1
    %v4604 = vrot.slane %v4521, 1
    %v4605 = vrot.slane %v4583, 1
    %v4606 = vrot.slane %v4527, 1
    %v4607 = vrot.slane %v4589, 1
    %v4616 = vadd.f32 %v4452, %v4600
    %v4617 = vadd.f32 %v4453, %v4601
    %v4618 = vadd.f32 %v4454, %v4600
    %v4619 = vadd.f32 %v4455, %v4601
    %v4620 = vadd.f32 %v4456, %v4602
    %v4621 = vadd.f32 %v4457, %v4603
    %v4622 = vadd.f32 %v4458, %v4602
    %v4623 = vadd.f32 %v4459, %v4603
    %v4624 = vadd.f32 %v4460, %v4604
    %v4625 = vadd.f32 %v4461, %v4605
    %v4626 = vadd.f32 %v4462, %v4604
    %v4627 = vadd.f32 %v4463, %v4605
    %v4628 = vadd.f32 %v4464, %v4606
    %v4629 = vadd.f32 %v4465, %v4607
    %v4630 = vadd.f32 %v4466, %v4606
    %v4631 = vadd.f32 %v4467, %v4607
    %4632 = vmatpush.bf16.msra.mxu0 %v2369
    %4633 = vmatpush.bf16.msra.mxu0 %v2367
    %4634 = vmatpush.bf16.msra.mxu0 %v2365
    %4635 = vmatpush.bf16.msra.mxu0 %v2363
    %4636 = vmatpush.bf16.msra.mxu0 %v2361
    %4637 = vmatpush.bf16.msra.mxu0 %v2359
    %4638 = vmatpush.bf16.msra.mxu0 %v2357
    %4639 = vmatpush.bf16.msra.mxu0 %v2355
    %4640 = vmatmul.bf16.gmra.mxu0 %v3810
    %v4641 = vpop.f32.mrf.mxu0
    %v4642 = vpop.f32.mrf.mxu0
    %v4643 = vadd.f32 0.0, %v4642
    %4644 = vmatmul.bf16.gmra.mxu0 %v3812
    %v4645 = vpop.f32.mrf.mxu0
    %v4646 = vpop.f32.mrf.mxu0
    %4647 = vmatmul.bf16.gmra.mxu0 %v3814
    %v4648 = vpop.f32.mrf.mxu0
    %v4649 = vadd.f32 0.0, %v4648
    %v4650 = vpop.f32.mrf.mxu0
    %4651 = vmatmul.bf16.gmra.mxu0 %v3816
    %v4652 = vpop.f32.mrf.mxu0
    %v4653 = vpop.f32.mrf.mxu0
    %v4654 = vadd.f32 0.0, %v4653
    %4655 = vmatmul.bf16.gmra.mxu0 %v3818
    %v4656 = vpop.f32.mrf.mxu0
    %v4657 = vpop.f32.mrf.mxu0
    %4658 = vmatmul.bf16.gmra.mxu0 %v3820
    %v4659 = vpop.f32.mrf.mxu0
    %v4660 = vadd.f32 0.0, %v4659
    %v4661 = vpop.f32.mrf.mxu0
    %4662 = vdwg.mxu0
    %4663 = vmatpush.bf16.msra.mxu0 %v2385
    %4664 = vmatpush.bf16.msra.mxu0 %v2383
    %4665 = vmatpush.bf16.msra.mxu0 %v2381
    %4666 = vmatpush.bf16.msra.mxu0 %v2379
    %4667 = vmatpush.bf16.msra.mxu0 %v2377
    %4668 = vmatpush.bf16.msra.mxu0 %v2375
    %4669 = vmatpush.bf16.msra.mxu0 %v2373
    %4670 = vmatpush.bf16.msra.mxu0 %v2371
    %4671 = vmatmul.bf16.gmra.mxu0 %v3811
    %v4672 = vpop.f32.mrf.mxu0
    %v4673 = vpop.f32.mrf.mxu0
    %v4674 = vadd.f32 %v4643, %v4673
    %4675 = vmatmul.bf16.gmra.mxu0 %v3813
    %v4676 = vpop.f32.mrf.mxu0
    %v4677 = vpop.f32.mrf.mxu0
    %4678 = vmatmul.bf16.gmra.mxu0 %v3815
    %v4679 = vpop.f32.mrf.mxu0
    %v4680 = vadd.f32 %v4649, %v4679
    %v4681 = vpop.f32.mrf.mxu0
    %4682 = vmatmul.bf16.gmra.mxu0 %v3817
    %v4683 = vpop.f32.mrf.mxu0
    %v4684 = vpop.f32.mrf.mxu0
    %v4685 = vadd.f32 %v4654, %v4684
    %4686 = vmatmul.bf16.gmra.mxu0 %v3819
    %v4687 = vpop.f32.mrf.mxu0
    %v4688 = vpop.f32.mrf.mxu0
    %4689 = vmatmul.bf16.gmra.mxu0 %v3821
    %v4690 = vpop.f32.mrf.mxu0
    %v4691 = vadd.f32 %v4660, %v4690
    %v4692 = vpop.f32.mrf.mxu0
    %4693 = vdwg.mxu0
    %4694 = vmatpush.bf16.msra.mxu0 %v2370
    %4695 = vmatpush.bf16.msra.mxu0 %v2368
    %4696 = vmatpush.bf16.msra.mxu0 %v2366
    %4697 = vmatpush.bf16.msra.mxu0 %v2364
    %4698 = vmatpush.bf16.msra.mxu0 %v2362
    %4699 = vmatpush.bf16.msra.mxu0 %v2360
    %4700 = vmatpush.bf16.msra.mxu0 %v2358
    %4701 = vmatpush.bf16.msra.mxu0 %v2356
    %4702 = vmatmul.bf16.gmra.mxu0 %v3810
    %v4703 = vpop.f32.mrf.mxu0
    %v4704 = vpop.f32.mrf.mxu0
    %v4705 = vadd.f32 0.0, %v4704
    %4706 = vmatmul.bf16.gmra.mxu0 %v3812
    %v4707 = vpop.f32.mrf.mxu0
    %v4708 = vpop.f32.mrf.mxu0
    %4709 = vmatmul.bf16.gmra.mxu0 %v3814
    %v4710 = vpop.f32.mrf.mxu0
    %v4711 = vadd.f32 0.0, %v4710
    %v4712 = vpop.f32.mrf.mxu0
    %4713 = vmatmul.bf16.gmra.mxu0 %v3816
    %v4714 = vpop.f32.mrf.mxu0
    %v4715 = vpop.f32.mrf.mxu0
    %v4716 = vadd.f32 0.0, %v4715
    %4717 = vmatmul.bf16.gmra.mxu0 %v3818
    %v4718 = vpop.f32.mrf.mxu0
    %v4719 = vpop.f32.mrf.mxu0
    %4720 = vmatmul.bf16.gmra.mxu0 %v3820
    %v4721 = vpop.f32.mrf.mxu0
    %v4722 = vadd.f32 0.0, %v4721
    %v4723 = vpop.f32.mrf.mxu0
    %4724 = vdwg.mxu0
    %4725 = vmatpush.bf16.msra.mxu0 %v2386
    %4726 = vmatpush.bf16.msra.mxu0 %v2384
    %4727 = vmatpush.bf16.msra.mxu0 %v2382
    %4728 = vmatpush.bf16.msra.mxu0 %v2380
    %4729 = vmatpush.bf16.msra.mxu0 %v2378
    %4730 = vmatpush.bf16.msra.mxu0 %v2376
    %4731 = vmatpush.bf16.msra.mxu0 %v2374
    %4732 = vmatpush.bf16.msra.mxu0 %v2372
    %4733 = vmatmul.bf16.gmra.mxu0 %v3811
    %v4734 = vpop.f32.mrf.mxu0
    %v4735 = vpop.f32.mrf.mxu0
    %v4736 = vadd.f32 %v4705, %v4735
    %4737 = vmatmul.bf16.gmra.mxu0 %v3813
    %v4738 = vpop.f32.mrf.mxu0
    %v4739 = vpop.f32.mrf.mxu0
    %4740 = vmatmul.bf16.gmra.mxu0 %v3815
    %v4741 = vpop.f32.mrf.mxu0
    %v4742 = vadd.f32 %v4711, %v4741
    %v4743 = vpop.f32.mrf.mxu0
    %4744 = vmatmul.bf16.gmra.mxu0 %v3817
    %v4745 = vpop.f32.mrf.mxu0
    %v4746 = vpop.f32.mrf.mxu0
    %v4747 = vadd.f32 %v4716, %v4746
    %4748 = vmatmul.bf16.gmra.mxu0 %v3819
    %v4749 = vpop.f32.mrf.mxu0
    %v4750 = vpop.f32.mrf.mxu0
    %4751 = vmatmul.bf16.gmra.mxu0 %v3821
    %v4752 = vpop.f32.mrf.mxu0
    %v4753 = vadd.f32 %v4722, %v4752
    %v4754 = vpop.f32.mrf.mxu0
    %4755 = vdwg.mxu0
    %v4764 = vrot.slane %v4674, 2
    %v4765 = vrot.slane %v4736, 2
    %v4766 = vrot.slane %v4680, 2
    %v4767 = vrot.slane %v4742, 2
    %v4768 = vrot.slane %v4685, 2
    %v4769 = vrot.slane %v4747, 2
    %v4770 = vrot.slane %v4691, 2
    %v4771 = vrot.slane %v4753, 2
    %v4780 = vadd.f32 %v4616, %v4764
    %v4781 = vadd.f32 %v4617, %v4765
    %v4782 = vadd.f32 %v4618, %v4764
    %v4783 = vadd.f32 %v4619, %v4765
    %v4784 = vadd.f32 %v4620, %v4766
    %v4785 = vadd.f32 %v4621, %v4767
    %v4786 = vadd.f32 %v4622, %v4766
    %v4787 = vadd.f32 %v4623, %v4767
    %v4788 = vadd.f32 %v4624, %v4768
    %v4789 = vadd.f32 %v4625, %v4769
    %v4790 = vadd.f32 %v4626, %v4768
    %v4791 = vadd.f32 %v4627, %v4769
    %v4792 = vadd.f32 %v4628, %v4770
    %v4793 = vadd.f32 %v4629, %v4771
    %v4794 = vadd.f32 %v4630, %v4770
    %v4795 = vadd.f32 %v4631, %v4771
    %4796 = vmatpush.bf16.msra.mxu0 %v2726
    %4797 = vmatpush.bf16.msra.mxu0 %v2724
    %4798 = vmatpush.bf16.msra.mxu0 %v2722
    %4799 = vmatpush.bf16.msra.mxu0 %v2720
    %4800 = vmatpush.bf16.msra.mxu0 %v2718
    %4801 = vmatpush.bf16.msra.mxu0 %v2716
    %4802 = vmatpush.bf16.msra.mxu0 %v2714
    %4803 = vmatpush.bf16.msra.mxu0 %v2712
    %4804 = vmatmul.bf16.gmra.mxu0 %v3804
    %v4805 = vpop.f32.mrf.mxu0
    %v4806 = vadd.f32 0.0, %v4805
    %v4807 = vpop.f32.mrf.mxu0
    %v4808 = vadd.f32 0.0, %v4807
    %4809 = vmatmul.bf16.gmra.mxu0 %v3806
    %v4810 = vpop.f32.mrf.mxu0
    %v4811 = vpop.f32.mrf.mxu0
    %v4812 = vadd.f32 0.0, %v4811
    %4813 = vmatmul.bf16.gmra.mxu0 %v3808
    %v4814 = vpop.f32.mrf.mxu0
    %v4815 = vadd.f32 0.0, %v4814
    %v4816 = vpop.f32.mrf.mxu0
    %4817 = vmatmul.bf16.gmra.mxu0 %v3822
    %v4818 = vpop.f32.mrf.mxu0
    %v4819 = vadd.f32 0.0, %v4818
    %v4820 = vpop.f32.mrf.mxu0
    %v4821 = vadd.f32 0.0, %v4820
    %4822 = vmatmul.bf16.gmra.mxu0 %v3824
    %v4823 = vpop.f32.mrf.mxu0
    %v4824 = vpop.f32.mrf.mxu0
    %v4825 = vadd.f32 0.0, %v4824
    %4826 = vmatmul.bf16.gmra.mxu0 %v3826
    %v4827 = vpop.f32.mrf.mxu0
    %v4828 = vadd.f32 0.0, %v4827
    %v4829 = vpop.f32.mrf.mxu0
    %4830 = vdwg.mxu0
    %4831 = vmatpush.bf16.msra.mxu0 %v2742
    %4832 = vmatpush.bf16.msra.mxu0 %v2740
    %4833 = vmatpush.bf16.msra.mxu0 %v2738
    %4834 = vmatpush.bf16.msra.mxu0 %v2736
    %4835 = vmatpush.bf16.msra.mxu0 %v2734
    %4836 = vmatpush.bf16.msra.mxu0 %v2732
    %4837 = vmatpush.bf16.msra.mxu0 %v2730
    %4838 = vmatpush.bf16.msra.mxu0 %v2728
    %4839 = vmatmul.bf16.gmra.mxu0 %v3805
    %v4840 = vpop.f32.mrf.mxu0
    %v4841 = vadd.f32 %v4806, %v4840
    %v4842 = vpop.f32.mrf.mxu0
    %v4843 = vadd.f32 %v4808, %v4842
    %4844 = vmatmul.bf16.gmra.mxu0 %v3807
    %v4845 = vpop.f32.mrf.mxu0
    %v4846 = vpop.f32.mrf.mxu0
    %v4847 = vadd.f32 %v4812, %v4846
    %4848 = vmatmul.bf16.gmra.mxu0 %v3809
    %v4849 = vpop.f32.mrf.mxu0
    %v4850 = vadd.f32 %v4815, %v4849
    %v4851 = vpop.f32.mrf.mxu0
    %4852 = vmatmul.bf16.gmra.mxu0 %v3823
    %v4853 = vpop.f32.mrf.mxu0
    %v4854 = vadd.f32 %v4819, %v4853
    %v4855 = vpop.f32.mrf.mxu0
    %v4856 = vadd.f32 %v4821, %v4855
    %4857 = vmatmul.bf16.gmra.mxu0 %v3825
    %v4858 = vpop.f32.mrf.mxu0
    %v4859 = vpop.f32.mrf.mxu0
    %v4860 = vadd.f32 %v4825, %v4859
    %4861 = vmatmul.bf16.gmra.mxu0 %v3827
    %v4862 = vpop.f32.mrf.mxu0
    %v4863 = vadd.f32 %v4828, %v4862
    %v4864 = vpop.f32.mrf.mxu0
    %4865 = vdwg.mxu0
    %4866 = vmatpush.bf16.msra.mxu0 %v2727
    %4867 = vmatpush.bf16.msra.mxu0 %v2725
    %4868 = vmatpush.bf16.msra.mxu0 %v2723
    %4869 = vmatpush.bf16.msra.mxu0 %v2721
    %4870 = vmatpush.bf16.msra.mxu0 %v2719
    %4871 = vmatpush.bf16.msra.mxu0 %v2717
    %4872 = vmatpush.bf16.msra.mxu0 %v2715
    %4873 = vmatpush.bf16.msra.mxu0 %v2713
    %4874 = vmatmul.bf16.gmra.mxu0 %v3804
    %v4875 = vpop.f32.mrf.mxu0
    %v4876 = vadd.f32 0.0, %v4875
    %v4877 = vpop.f32.mrf.mxu0
    %v4878 = vadd.f32 0.0, %v4877
    %4879 = vmatmul.bf16.gmra.mxu0 %v3806
    %v4880 = vpop.f32.mrf.mxu0
    %v4881 = vpop.f32.mrf.mxu0
    %v4882 = vadd.f32 0.0, %v4881
    %4883 = vmatmul.bf16.gmra.mxu0 %v3808
    %v4884 = vpop.f32.mrf.mxu0
    %v4885 = vadd.f32 0.0, %v4884
    %v4886 = vpop.f32.mrf.mxu0
    %4887 = vmatmul.bf16.gmra.mxu0 %v3822
    %v4888 = vpop.f32.mrf.mxu0
    %v4889 = vadd.f32 0.0, %v4888
    %v4890 = vpop.f32.mrf.mxu0
    %v4891 = vadd.f32 0.0, %v4890
    %4892 = vmatmul.bf16.gmra.mxu0 %v3824
    %v4893 = vpop.f32.mrf.mxu0
    %v4894 = vpop.f32.mrf.mxu0
    %v4895 = vadd.f32 0.0, %v4894
    %4896 = vmatmul.bf16.gmra.mxu0 %v3826
    %v4897 = vpop.f32.mrf.mxu0
    %v4898 = vadd.f32 0.0, %v4897
    %v4899 = vpop.f32.mrf.mxu0
    %4900 = vdwg.mxu0
    %4901 = vmatpush.bf16.msra.mxu0 %v2743
    %4902 = vmatpush.bf16.msra.mxu0 %v2741
    %4903 = vmatpush.bf16.msra.mxu0 %v2739
    %4904 = vmatpush.bf16.msra.mxu0 %v2737
    %4905 = vmatpush.bf16.msra.mxu0 %v2735
    %4906 = vmatpush.bf16.msra.mxu0 %v2733
    %4907 = vmatpush.bf16.msra.mxu0 %v2731
    %4908 = vmatpush.bf16.msra.mxu0 %v2729
    %4909 = vmatmul.bf16.gmra.mxu0 %v3805
    %v4910 = vpop.f32.mrf.mxu0
    %v4911 = vadd.f32 %v4876, %v4910
    %v4912 = vpop.f32.mrf.mxu0
    %v4913 = vadd.f32 %v4878, %v4912
    %4914 = vmatmul.bf16.gmra.mxu0 %v3807
    %v4915 = vpop.f32.mrf.mxu0
    %v4916 = vpop.f32.mrf.mxu0
    %v4917 = vadd.f32 %v4882, %v4916
    %4918 = vmatmul.bf16.gmra.mxu0 %v3809
    %v4919 = vpop.f32.mrf.mxu0
    %v4920 = vadd.f32 %v4885, %v4919
    %v4921 = vpop.f32.mrf.mxu0
    %4922 = vmatmul.bf16.gmra.mxu0 %v3823
    %v4923 = vpop.f32.mrf.mxu0
    %v4924 = vadd.f32 %v4889, %v4923
    %v4925 = vpop.f32.mrf.mxu0
    %v4926 = vadd.f32 %v4891, %v4925
    %4927 = vmatmul.bf16.gmra.mxu0 %v3825
    %v4928 = vpop.f32.mrf.mxu0
    %v4929 = vpop.f32.mrf.mxu0
    %v4930 = vadd.f32 %v4895, %v4929
    %4931 = vmatmul.bf16.gmra.mxu0 %v3827
    %v4932 = vpop.f32.mrf.mxu0
    %v4933 = vadd.f32 %v4898, %v4932
    %v4934 = vpop.f32.mrf.mxu0
    %4935 = vdwg.mxu0
    %v4936 = vadd.f32 %v4780, %v4841
    %v4937 = vadd.f32 %v4781, %v4911
    %v4938 = vadd.f32 %v4782, %v4843
    %v4939 = vadd.f32 %v4783, %v4913
    %v4940 = vadd.f32 %v4784, %v4847
    %v4941 = vadd.f32 %v4785, %v4917
    %v4942 = vadd.f32 %v4786, %v4850
    %v4943 = vadd.f32 %v4787, %v4920
    %v4944 = vadd.f32 %v4788, %v4854
    %v4945 = vadd.f32 %v4789, %v4924
    %v4946 = vadd.f32 %v4790, %v4856
    %v4947 = vadd.f32 %v4791, %v4926
    %v4948 = vadd.f32 %v4792, %v4860
    %v4949 = vadd.f32 %v4793, %v4930
    %v4950 = vadd.f32 %v4794, %v4863
    %v4951 = vadd.f32 %v4795, %v4933
    %4952 = vmatpush.bf16.msra.mxu0 %v3075
    %4953 = vmatpush.bf16.msra.mxu0 %v3073
    %4954 = vmatpush.bf16.msra.mxu0 %v3071
    %4955 = vmatpush.bf16.msra.mxu0 %v3069
    %4956 = vmatpush.bf16.msra.mxu0 %v3067
    %4957 = vmatpush.bf16.msra.mxu0 %v3065
    %4958 = vmatpush.bf16.msra.mxu0 %v3063
    %4959 = vmatpush.bf16.msra.mxu0 %v3061
    %4960 = vmatmul.bf16.gmra.mxu0 %v3804
    %v4961 = vpop.f32.mrf.mxu0
    %v4962 = vpop.f32.mrf.mxu0
    %v4963 = vadd.f32 0.0, %v4962
    %4964 = vmatmul.bf16.gmra.mxu0 %v3806
    %v4965 = vpop.f32.mrf.mxu0
    %v4966 = vpop.f32.mrf.mxu0
    %4967 = vmatmul.bf16.gmra.mxu0 %v3808
    %v4968 = vpop.f32.mrf.mxu0
    %v4969 = vadd.f32 0.0, %v4968
    %v4970 = vpop.f32.mrf.mxu0
    %4971 = vmatmul.bf16.gmra.mxu0 %v3822
    %v4972 = vpop.f32.mrf.mxu0
    %v4973 = vpop.f32.mrf.mxu0
    %v4974 = vadd.f32 0.0, %v4973
    %4975 = vmatmul.bf16.gmra.mxu0 %v3824
    %v4976 = vpop.f32.mrf.mxu0
    %v4977 = vpop.f32.mrf.mxu0
    %4978 = vmatmul.bf16.gmra.mxu0 %v3826
    %v4979 = vpop.f32.mrf.mxu0
    %v4980 = vadd.f32 0.0, %v4979
    %v4981 = vpop.f32.mrf.mxu0
    %4982 = vdwg.mxu0
    %4983 = vmatpush.bf16.msra.mxu0 %v3091
    %4984 = vmatpush.bf16.msra.mxu0 %v3089
    %4985 = vmatpush.bf16.msra.mxu0 %v3087
    %4986 = vmatpush.bf16.msra.mxu0 %v3085
    %4987 = vmatpush.bf16.msra.mxu0 %v3083
    %4988 = vmatpush.bf16.msra.mxu0 %v3081
    %4989 = vmatpush.bf16.msra.mxu0 %v3079
    %4990 = vmatpush.bf16.msra.mxu0 %v3077
    %4991 = vmatmul.bf16.gmra.mxu0 %v3805
    %v4992 = vpop.f32.mrf.mxu0
    %v4993 = vpop.f32.mrf.mxu0
    %v4994 = vadd.f32 %v4963, %v4993
    %4995 = vmatmul.bf16.gmra.mxu0 %v3807
    %v4996 = vpop.f32.mrf.mxu0
    %v4997 = vpop.f32.mrf.mxu0
    %4998 = vmatmul.bf16.gmra.mxu0 %v3809
    %v4999 = vpop.f32.mrf.mxu0
    %v5000 = vadd.f32 %v4969, %v4999
    %v5001 = vpop.f32.mrf.mxu0
    %5002 = vmatmul.bf16.gmra.mxu0 %v3823
    %v5003 = vpop.f32.mrf.mxu0
    %v5004 = vpop.f32.mrf.mxu0
    %v5005 = vadd.f32 %v4974, %v5004
    %5006 = vmatmul.bf16.gmra.mxu0 %v3825
    %v5007 = vpop.f32.mrf.mxu0
    %v5008 = vpop.f32.mrf.mxu0
    %5009 = vmatmul.bf16.gmra.mxu0 %v3827
    %v5010 = vpop.f32.mrf.mxu0
    %v5011 = vadd.f32 %v4980, %v5010
    %v5012 = vpop.f32.mrf.mxu0
    %5013 = vdwg.mxu0
    %5014 = vmatpush.bf16.msra.mxu0 %v3076
    %5015 = vmatpush.bf16.msra.mxu0 %v3074
    %5016 = vmatpush.bf16.msra.mxu0 %v3072
    %5017 = vmatpush.bf16.msra.mxu0 %v3070
    %5018 = vmatpush.bf16.msra.mxu0 %v3068
    %5019 = vmatpush.bf16.msra.mxu0 %v3066
    %5020 = vmatpush.bf16.msra.mxu0 %v3064
    %5021 = vmatpush.bf16.msra.mxu0 %v3062
    %5022 = vmatmul.bf16.gmra.mxu0 %v3804
    %v5023 = vpop.f32.mrf.mxu0
    %v5024 = vpop.f32.mrf.mxu0
    %v5025 = vadd.f32 0.0, %v5024
    %5026 = vmatmul.bf16.gmra.mxu0 %v3806
    %v5027 = vpop.f32.mrf.mxu0
    %v5028 = vpop.f32.mrf.mxu0
    %5029 = vmatmul.bf16.gmra.mxu0 %v3808
    %v5030 = vpop.f32.mrf.mxu0
    %v5031 = vadd.f32 0.0, %v5030
    %v5032 = vpop.f32.mrf.mxu0
    %5033 = vmatmul.bf16.gmra.mxu0 %v3822
    %v5034 = vpop.f32.mrf.mxu0
    %v5035 = vpop.f32.mrf.mxu0
    %v5036 = vadd.f32 0.0, %v5035
    %5037 = vmatmul.bf16.gmra.mxu0 %v3824
    %v5038 = vpop.f32.mrf.mxu0
    %v5039 = vpop.f32.mrf.mxu0
    %5040 = vmatmul.bf16.gmra.mxu0 %v3826
    %v5041 = vpop.f32.mrf.mxu0
    %v5042 = vadd.f32 0.0, %v5041
    %v5043 = vpop.f32.mrf.mxu0
    %5044 = vdwg.mxu0
    %5045 = vmatpush.bf16.msra.mxu0 %v3092
    %5046 = vmatpush.bf16.msra.mxu0 %v3090
    %5047 = vmatpush.bf16.msra.mxu0 %v3088
    %5048 = vmatpush.bf16.msra.mxu0 %v3086
    %5049 = vmatpush.bf16.msra.mxu0 %v3084
    %5050 = vmatpush.bf16.msra.mxu0 %v3082
    %5051 = vmatpush.bf16.msra.mxu0 %v3080
    %5052 = vmatpush.bf16.msra.mxu0 %v3078
    %5053 = vmatmul.bf16.gmra.mxu0 %v3805
    %v5054 = vpop.f32.mrf.mxu0
    %v5055 = vpop.f32.mrf.mxu0
    %v5056 = vadd.f32 %v5025, %v5055
    %5057 = vmatmul.bf16.gmra.mxu0 %v3807
    %v5058 = vpop.f32.mrf.mxu0
    %v5059 = vpop.f32.mrf.mxu0
    %5060 = vmatmul.bf16.gmra.mxu0 %v3809
    %v5061 = vpop.f32.mrf.mxu0
    %v5062 = vadd.f32 %v5031, %v5061
    %v5063 = vpop.f32.mrf.mxu0
    %5064 = vmatmul.bf16.gmra.mxu0 %v3823
    %v5065 = vpop.f32.mrf.mxu0
    %v5066 = vpop.f32.mrf.mxu0
    %v5067 = vadd.f32 %v5036, %v5066
    %5068 = vmatmul.bf16.gmra.mxu0 %v3825
    %v5069 = vpop.f32.mrf.mxu0
    %v5070 = vpop.f32.mrf.mxu0
    %5071 = vmatmul.bf16.gmra.mxu0 %v3827
    %v5072 = vpop.f32.mrf.mxu0
    %v5073 = vadd.f32 %v5042, %v5072
    %v5074 = vpop.f32.mrf.mxu0
    %5075 = vdwg.mxu0
    %v5084 = vrot.slane %v4994, 1
    %v5085 = vrot.slane %v5056, 1
    %v5086 = vrot.slane %v5000, 1
    %v5087 = vrot.slane %v5062, 1
    %v5088 = vrot.slane %v5005, 1
    %v5089 = vrot.slane %v5067, 1
    %v5090 = vrot.slane %v5011, 1
    %v5091 = vrot.slane %v5073, 1
    %v5100 = vadd.f32 %v4936, %v5084
    %v5101 = vadd.f32 %v4937, %v5085
    %v5102 = vadd.f32 %v4938, %v5084
    %v5103 = vadd.f32 %v4939, %v5085
    %v5104 = vadd.f32 %v4940, %v5086
    %v5105 = vadd.f32 %v4941, %v5087
    %v5106 = vadd.f32 %v4942, %v5086
    %v5107 = vadd.f32 %v4943, %v5087
    %v5108 = vadd.f32 %v4944, %v5088
    %v5109 = vadd.f32 %v4945, %v5089
    %v5110 = vadd.f32 %v4946, %v5088
    %v5111 = vadd.f32 %v4947, %v5089
    %v5112 = vadd.f32 %v4948, %v5090
    %v5113 = vadd.f32 %v4949, %v5091
    %v5114 = vadd.f32 %v4950, %v5090
    %v5115 = vadd.f32 %v4951, %v5091
    %5116 = vmatpush.bf16.msra.mxu0 %v3432
    %5117 = vmatpush.bf16.msra.mxu0 %v3430
    %5118 = vmatpush.bf16.msra.mxu0 %v3428
    %5119 = vmatpush.bf16.msra.mxu0 %v3426
    %5120 = vmatpush.bf16.msra.mxu0 %v3424
    %5121 = vmatpush.bf16.msra.mxu0 %v3422
    %5122 = vmatpush.bf16.msra.mxu0 %v3420
    %5123 = vmatpush.bf16.msra.mxu0 %v3418
    %5124 = vmatmul.bf16.gmra.mxu0 %v3804
    %v5125 = vpop.f32.mrf.mxu0
    %v5126 = vpop.f32.mrf.mxu0
    %v5127 = vadd.f32 0.0, %v5126
    %5128 = vmatmul.bf16.gmra.mxu0 %v3806
    %v5129 = vpop.f32.mrf.mxu0
    %v5130 = vpop.f32.mrf.mxu0
    %5131 = vmatmul.bf16.gmra.mxu0 %v3808
    %v5132 = vpop.f32.mrf.mxu0
    %v5133 = vadd.f32 0.0, %v5132
    %v5134 = vpop.f32.mrf.mxu0
    %5135 = vmatmul.bf16.gmra.mxu0 %v3822
    %v5136 = vpop.f32.mrf.mxu0
    %v5137 = vpop.f32.mrf.mxu0
    %v5138 = vadd.f32 0.0, %v5137
    %5139 = vmatmul.bf16.gmra.mxu0 %v3824
    %v5140 = vpop.f32.mrf.mxu0
    %v5141 = vpop.f32.mrf.mxu0
    %5142 = vmatmul.bf16.gmra.mxu0 %v3826
    %v5143 = vpop.f32.mrf.mxu0
    %v5144 = vadd.f32 0.0, %v5143
    %v5145 = vpop.f32.mrf.mxu0
    %5146 = vdwg.mxu0
    %5147 = vmatpush.bf16.msra.mxu0 %v3448
    %5148 = vmatpush.bf16.msra.mxu0 %v3446
    %5149 = vmatpush.bf16.msra.mxu0 %v3444
    %5150 = vmatpush.bf16.msra.mxu0 %v3442
    %5151 = vmatpush.bf16.msra.mxu0 %v3440
    %5152 = vmatpush.bf16.msra.mxu0 %v3438
    %5153 = vmatpush.bf16.msra.mxu0 %v3436
    %5154 = vmatpush.bf16.msra.mxu0 %v3434
    %5155 = vmatmul.bf16.gmra.mxu0 %v3805
    %v5156 = vpop.f32.mrf.mxu0
    %v5157 = vpop.f32.mrf.mxu0
    %v5158 = vadd.f32 %v5127, %v5157
    %5159 = vmatmul.bf16.gmra.mxu0 %v3807
    %v5160 = vpop.f32.mrf.mxu0
    %v5161 = vpop.f32.mrf.mxu0
    %5162 = vmatmul.bf16.gmra.mxu0 %v3809
    %v5163 = vpop.f32.mrf.mxu0
    %v5164 = vadd.f32 %v5133, %v5163
    %v5165 = vpop.f32.mrf.mxu0
    %5166 = vmatmul.bf16.gmra.mxu0 %v3823
    %v5167 = vpop.f32.mrf.mxu0
    %v5168 = vpop.f32.mrf.mxu0
    %v5169 = vadd.f32 %v5138, %v5168
    %5170 = vmatmul.bf16.gmra.mxu0 %v3825
    %v5171 = vpop.f32.mrf.mxu0
    %v5172 = vpop.f32.mrf.mxu0
    %5173 = vmatmul.bf16.gmra.mxu0 %v3827
    %v5174 = vpop.f32.mrf.mxu0
    %v5175 = vadd.f32 %v5144, %v5174
    %v5176 = vpop.f32.mrf.mxu0
    %5177 = vdwg.mxu0
    %5178 = vmatpush.bf16.msra.mxu0 %v3433
    %5179 = vmatpush.bf16.msra.mxu0 %v3431
    %5180 = vmatpush.bf16.msra.mxu0 %v3429
    %5181 = vmatpush.bf16.msra.mxu0 %v3427
    %5182 = vmatpush.bf16.msra.mxu0 %v3425
    %5183 = vmatpush.bf16.msra.mxu0 %v3423
    %5184 = vmatpush.bf16.msra.mxu0 %v3421
    %5185 = vmatpush.bf16.msra.mxu0 %v3419
    %5186 = vmatmul.bf16.gmra.mxu0 %v3804
    %v5187 = vpop.f32.mrf.mxu0
    %v5188 = vpop.f32.mrf.mxu0
    %v5189 = vadd.f32 0.0, %v5188
    %5190 = vmatmul.bf16.gmra.mxu0 %v3806
    %v5191 = vpop.f32.mrf.mxu0
    %v5192 = vpop.f32.mrf.mxu0
    %5193 = vmatmul.bf16.gmra.mxu0 %v3808
    %v5194 = vpop.f32.mrf.mxu0
    %v5195 = vadd.f32 0.0, %v5194
    %v5196 = vpop.f32.mrf.mxu0
    %5197 = vmatmul.bf16.gmra.mxu0 %v3822
    %v5198 = vpop.f32.mrf.mxu0
    %v5199 = vpop.f32.mrf.mxu0
    %v5200 = vadd.f32 0.0, %v5199
    %5201 = vmatmul.bf16.gmra.mxu0 %v3824
    %v5202 = vpop.f32.mrf.mxu0
    %v5203 = vpop.f32.mrf.mxu0
    %5204 = vmatmul.bf16.gmra.mxu0 %v3826
    %v5205 = vpop.f32.mrf.mxu0
    %v5206 = vadd.f32 0.0, %v5205
    %v5207 = vpop.f32.mrf.mxu0
    %5208 = vdwg.mxu0
    %5209 = vmatpush.bf16.msra.mxu0 %v3449
    %5210 = vmatpush.bf16.msra.mxu0 %v3447
    %5211 = vmatpush.bf16.msra.mxu0 %v3445
    %5212 = vmatpush.bf16.msra.mxu0 %v3443
    %5213 = vmatpush.bf16.msra.mxu0 %v3441
    %5214 = vmatpush.bf16.msra.mxu0 %v3439
    %5215 = vmatpush.bf16.msra.mxu0 %v3437
    %5216 = vmatpush.bf16.msra.mxu0 %v3435
    %5217 = vmatmul.bf16.gmra.mxu0 %v3805
    %v5218 = vpop.f32.mrf.mxu0
    %v5219 = vpop.f32.mrf.mxu0
    %v5220 = vadd.f32 %v5189, %v5219
    %5221 = vmatmul.bf16.gmra.mxu0 %v3807
    %v5222 = vpop.f32.mrf.mxu0
    %v5223 = vpop.f32.mrf.mxu0
    %5224 = vmatmul.bf16.gmra.mxu0 %v3809
    %v5225 = vpop.f32.mrf.mxu0
    %v5226 = vadd.f32 %v5195, %v5225
    %v5227 = vpop.f32.mrf.mxu0
    %5228 = vmatmul.bf16.gmra.mxu0 %v3823
    %v5229 = vpop.f32.mrf.mxu0
    %v5230 = vpop.f32.mrf.mxu0
    %v5231 = vadd.f32 %v5200, %v5230
    %5232 = vmatmul.bf16.gmra.mxu0 %v3825
    %v5233 = vpop.f32.mrf.mxu0
    %v5234 = vpop.f32.mrf.mxu0
    %5235 = vmatmul.bf16.gmra.mxu0 %v3827
    %v5236 = vpop.f32.mrf.mxu0
    %v5237 = vadd.f32 %v5206, %v5236
    %v5238 = vpop.f32.mrf.mxu0
    %5239 = vdwg.mxu0
    %v5248 = vrot.slane %v5158, 2
    %v5249 = vrot.slane %v5220, 2
    %v5250 = vrot.slane %v5164, 2
    %v5251 = vrot.slane %v5226, 2
    %v5252 = vrot.slane %v5169, 2
    %v5253 = vrot.slane %v5231, 2
    %v5254 = vrot.slane %v5175, 2
    %v5255 = vrot.slane %v5237, 2
    %v5264 = vadd.f32 %v5100, %v5248
    %v5265 = vadd.f32 %v5101, %v5249
    %v5266 = vadd.f32 %v5102, %v5248
    %v5267 = vadd.f32 %v5103, %v5249
    %v5268 = vadd.f32 %v5104, %v5250
    %v5269 = vadd.f32 %v5105, %v5251
    %v5270 = vadd.f32 %v5106, %v5250
    %v5271 = vadd.f32 %v5107, %v5251
    %v5272 = vadd.f32 %v5108, %v5252
    %v5273 = vadd.f32 %v5109, %v5253
    %v5274 = vadd.f32 %v5110, %v5252
    %v5275 = vadd.f32 %v5111, %v5253
    %v5276 = vadd.f32 %v5112, %v5254
    %v5277 = vadd.f32 %v5113, %v5255
    %v5278 = vadd.f32 %v5114, %v5254
    %v5279 = vadd.f32 %v5115, %v5255
    %5296 = vst.sshfl [vmem:[#allocation1] sm:$0xff pattern:$0x75316420] %v3630
    %5297 = vst.sshfl [vmem:[#allocation1 + $0x8] sm:$0xff pattern:$0x75316420] %v3631
    %5298 = vst.sshfl [vmem:[#allocation1 + $0x10] sm:$0xff pattern:$0x75316420] %v3632
    %5299 = vst.sshfl [vmem:[#allocation1 + $0x18] sm:$0xff pattern:$0x75316420] %v3633
    %s5300 = scalar_lea.vmem [#allocation1], 1
    %v5301 = vld [vmem:[%s5300] ss:$2 sm:$0xff]
    %s5302 = scalar_lea.vmem [#allocation1], 16
    %v5303 = vld [vmem:[%s5302] ss:$2 sm:$0xff]
    %5304 = vst.sshfl [vmem:[#allocation1 + $0x20] sm:$0xff pattern:$0x75316420] %v3634
    %5305 = vst.sshfl [vmem:[#allocation1 + $0x28] sm:$0xff pattern:$0x75316420] %v3635
    %5306 = vst.sshfl [vmem:[#allocation1 + $0x30] sm:$0xff pattern:$0x75316420] %v3636
    %5307 = vst.sshfl [vmem:[#allocation1 + $0x38] sm:$0xff pattern:$0x75316420] %v3637
    %s5308 = scalar_lea.vmem [#allocation1], 33
    %v5309 = vld [vmem:[%s5308] ss:$2 sm:$0xff]
    %s5310 = scalar_lea.vmem [#allocation1], 48
    %v5311 = vld [vmem:[%s5310] ss:$2 sm:$0xff]
    %5312 = vst.sshfl [vmem:[#allocation1] sm:$0xff pattern:$0x75316420] %v3638
    %5313 = vst.sshfl [vmem:[#allocation1 + $0x8] sm:$0xff pattern:$0x75316420] %v3639
    %5314 = vst.sshfl [vmem:[#allocation1 + $0x10] sm:$0xff pattern:$0x75316420] %v3640
    %5315 = vst.sshfl [vmem:[#allocation1 + $0x18] sm:$0xff pattern:$0x75316420] %v3641
    %v5316 = vld [vmem:[%s5300] ss:$2 sm:$0xff]
    %v5317 = vld [vmem:[%s5302] ss:$2 sm:$0xff]
    %5318 = vst.sshfl [vmem:[#allocation1 + $0x20] sm:$0xff pattern:$0x75316420] %v3642
    %5319 = vst.sshfl [vmem:[#allocation1 + $0x28] sm:$0xff pattern:$0x75316420] %v3643
    %5320 = vst.sshfl [vmem:[#allocation1 + $0x30] sm:$0xff pattern:$0x75316420] %v3644
    %5321 = vst.sshfl [vmem:[#allocation1 + $0x38] sm:$0xff pattern:$0x75316420] %v3645
    %v5322 = vld [vmem:[%s5308] ss:$2 sm:$0xff]
    %v5323 = vld [vmem:[%s5310] ss:$2 sm:$0xff]
    %vm5324 = vcmask 1040384
    %vm5325 = vcmask 1044484
    %vm5326 = vmor %vm5324, %vm5325
    %v5327 = vrot.slane %v5301, 7
    %v5328 = vrot.slane %v5327, 4
    %v5329 = vrot.slane %v5303, 7
    %v5330 = vsel %vm5326, %v5328, %v5329
    %v5331 = vrot.slane %v5309, 7
    %v5332 = vrot.slane %v5331, 4
    %v5333 = vrot.slane %v5311, 7
    %v5334 = vsel %vm5326, %v5332, %v5333
    %v5335 = vrot.slane %v5316, 7
    %v5336 = vrot.slane %v5335, 4
    %v5337 = vrot.slane %v5317, 7
    %v5338 = vsel %vm5326, %v5336, %v5337
    %v5339 = vrot.slane %v5322, 7
    %v5340 = vrot.slane %v5339, 4
    %v5341 = vrot.slane %v5323, 7
    %v5342 = vsel %vm5326, %v5340, %v5341
    %5347 = vst [vmem:[#allocation1] ss:$2 sm:$0xff] %v5330
    %s5348 = scalar_lea.vmem [#allocation1], 1
    %5349 = vst [vmem:[%s5348] ss:$2 sm:$0xff] %v5334
    %s5350 = scalar_lea.vmem [#allocation1], 16
    %5351 = vst [vmem:[%s5350] ss:$2 sm:$0xff] %v5338
    %s5352 = scalar_lea.vmem [#allocation1], 17
    %5353 = vst [vmem:[%s5352] ss:$2 sm:$0xff] %v5342
    %v5354 = vld.sshfl [vmem:[#allocation1] sm:$0xff pattern:$0x75316420]
    %v5355 = vld.sshfl [vmem:[#allocation1 + $0x8] sm:$0xff pattern:$0x75316420]
    %v5356 = vld.sshfl [vmem:[#allocation1 + $0x10] sm:$0xff pattern:$0x75316420]
    %v5357 = vld.sshfl [vmem:[#allocation1 + $0x18] sm:$0xff pattern:$0x75316420]
    %v5362 = vadd.f32 %v5354, %v5356
    %v5363 = vrot.slane %v5362, 4
    %v5364 = vadd.f32 %v5362, %v5363
    %v5365 = vrot.slane %v5364, 2
    %v5366 = vadd.f32 %v5364, %v5365
    %v5367 = vrot.slane %v5366, 1
    %v5368 = vadd.f32 %v5366, %v5367
    %v5369 = vadd.f32 %v5355, %v5357
    %v5370 = vrot.slane %v5369, 4
    %v5371 = vadd.f32 %v5369, %v5370
    %v5372 = vrot.slane %v5371, 2
    %v5373 = vadd.f32 %v5371, %v5372
    %v5374 = vrot.slane %v5373, 1
    %v5375 = vadd.f32 %v5373, %v5374
    %v5376 = vadd.f32 %v5368, 0.0
    %v5377 = vadd.f32 %v5375, 0.0
    %v5378 = vmul.f32 %v5330, %v5330
    %v5379 = vmul.f32 %v5334, %v5334
    %v5380 = vmul.f32 %v5338, %v5338
    %v5381 = vmul.f32 %v5342, %v5342
    %5386 = vst [vmem:[#allocation1] ss:$2 sm:$0xff] %v5378
    %s5387 = scalar_lea.vmem [#allocation1], 1
    %5388 = vst [vmem:[%s5387] ss:$2 sm:$0xff] %v5379
    %s5389 = scalar_lea.vmem [#allocation1], 16
    %5390 = vst [vmem:[%s5389] ss:$2 sm:$0xff] %v5380
    %s5391 = scalar_lea.vmem [#allocation1], 17
    %5392 = vst [vmem:[%s5391] ss:$2 sm:$0xff] %v5381
    %v5393 = vld.sshfl [vmem:[#allocation1] sm:$0xff pattern:$0x75316420]
    %v5394 = vld.sshfl [vmem:[#allocation1 + $0x8] sm:$0xff pattern:$0x75316420]
    %v5395 = vld.sshfl [vmem:[#allocation1 + $0x10] sm:$0xff pattern:$0x75316420]
    %v5396 = vld.sshfl [vmem:[#allocation1 + $0x18] sm:$0xff pattern:$0x75316420]
    %v5401 = vadd.f32 %v5393, %v5395
    %v5402 = vrot.slane %v5401, 4
    %v5403 = vadd.f32 %v5401, %v5402
    %v5404 = vrot.slane %v5403, 2
    %v5405 = vadd.f32 %v5403, %v5404
    %v5406 = vrot.slane %v5405, 1
    %v5407 = vadd.f32 %v5405, %v5406
    %v5408 = vadd.f32 %v5394, %v5396
    %v5409 = vrot.slane %v5408, 4
    %v5410 = vadd.f32 %v5408, %v5409
    %v5411 = vrot.slane %v5410, 2
    %v5412 = vadd.f32 %v5410, %v5411
    %v5413 = vrot.slane %v5412, 1
    %v5414 = vadd.f32 %v5412, %v5413
    %v5415 = vadd.f32 %v5407, 0.0
    %v5416 = vadd.f32 %v5414, 0.0
    %5433 = vst.sshfl [vmem:[#allocation1] sm:$0xff pattern:$0x75316420] %v5264
    %5434 = vst.sshfl [vmem:[#allocation1 + $0x8] sm:$0xff pattern:$0x75316420] %v5265
    %5435 = vst.sshfl [vmem:[#allocation1 + $0x10] sm:$0xff pattern:$0x75316420] %v5266
    %5436 = vst.sshfl [vmem:[#allocation1 + $0x18] sm:$0xff pattern:$0x75316420] %v5267
    %s5437 = scalar_lea.vmem [#allocation1], 1
    %v5438 = vld [vmem:[%s5437] ss:$2 sm:$0xff]
    %s5439 = scalar_lea.vmem [#allocation1], 16
    %v5440 = vld [vmem:[%s5439] ss:$2 sm:$0xff]
    %5441 = vst.sshfl [vmem:[#allocation1 + $0x20] sm:$0xff pattern:$0x75316420] %v5268
    %5442 = vst.sshfl [vmem:[#allocation1 + $0x28] sm:$0xff pattern:$0x75316420] %v5269
    %5443 = vst.sshfl [vmem:[#allocation1 + $0x30] sm:$0xff pattern:$0x75316420] %v5270
    %5444 = vst.sshfl [vmem:[#allocation1 + $0x38] sm:$0xff pattern:$0x75316420] %v5271
    %s5445 = scalar_lea.vmem [#allocation1], 33
    %v5446 = vld [vmem:[%s5445] ss:$2 sm:$0xff]
    %s5447 = scalar_lea.vmem [#allocation1], 48
    %v5448 = vld [vmem:[%s5447] ss:$2 sm:$0xff]
    %5449 = vst.sshfl [vmem:[#allocation1] sm:$0xff pattern:$0x75316420] %v5272
    %5450 = vst.sshfl [vmem:[#allocation1 + $0x8] sm:$0xff pattern:$0x75316420] %v5273
    %5451 = vst.sshfl [vmem:[#allocation1 + $0x10] sm:$0xff pattern:$0x75316420] %v5274
    %5452 = vst.sshfl [vmem:[#allocation1 + $0x18] sm:$0xff pattern:$0x75316420] %v5275
    %v5453 = vld [vmem:[%s5437] ss:$2 sm:$0xff]
    %v5454 = vld [vmem:[%s5439] ss:$2 sm:$0xff]
    %5455 = vst.sshfl [vmem:[#allocation1 + $0x20] sm:$0xff pattern:$0x75316420] %v5276
    %5456 = vst.sshfl [vmem:[#allocation1 + $0x28] sm:$0xff pattern:$0x75316420] %v5277
    %5457 = vst.sshfl [vmem:[#allocation1 + $0x30] sm:$0xff pattern:$0x75316420] %v5278
    %5458 = vst.sshfl [vmem:[#allocation1 + $0x38] sm:$0xff pattern:$0x75316420] %v5279
    %v5459 = vld [vmem:[%s5445] ss:$2 sm:$0xff]
    %v5460 = vld [vmem:[%s5447] ss:$2 sm:$0xff]
    %v5461 = vrot.slane %v5438, 7
    %v5462 = vrot.slane %v5461, 4
    %v5463 = vrot.slane %v5440, 7
    %v5464 = vsel %vm5326, %v5462, %v5463
    %v5465 = vrot.slane %v5446, 7
    %v5466 = vrot.slane %v5465, 4
    %v5467 = vrot.slane %v5448, 7
    %v5468 = vsel %vm5326, %v5466, %v5467
    %v5469 = vrot.slane %v5453, 7
    %v5470 = vrot.slane %v5469, 4
    %v5471 = vrot.slane %v5454, 7
    %v5472 = vsel %vm5326, %v5470, %v5471
    %v5473 = vrot.slane %v5459, 7
    %v5474 = vrot.slane %v5473, 4
    %v5475 = vrot.slane %v5460, 7
    %v5476 = vsel %vm5326, %v5474, %v5475
    %5481 = vst [vmem:[#allocation1] ss:$2 sm:$0xff] %v5464
    %s5482 = scalar_lea.vmem [#allocation1], 1
    %5483 = vst [vmem:[%s5482] ss:$2 sm:$0xff] %v5468
    %s5484 = scalar_lea.vmem [#allocation1], 16
    %5485 = vst [vmem:[%s5484] ss:$2 sm:$0xff] %v5472
    %s5486 = scalar_lea.vmem [#allocation1], 17
    %5487 = vst [vmem:[%s5486] ss:$2 sm:$0xff] %v5476
    %v5488 = vld.sshfl [vmem:[#allocation1] sm:$0xff pattern:$0x75316420]
    %v5489 = vld.sshfl [vmem:[#allocation1 + $0x8] sm:$0xff pattern:$0x75316420]
    %v5490 = vld.sshfl [vmem:[#allocation1 + $0x10] sm:$0xff pattern:$0x75316420]
    %v5491 = vld.sshfl [vmem:[#allocation1 + $0x18] sm:$0xff pattern:$0x75316420]
    %v5496 = vadd.f32 %v5488, %v5490
    %v5497 = vrot.slane %v5496, 4
    %v5498 = vadd.f32 %v5496, %v5497
    %v5499 = vrot.slane %v5498, 2
    %v5500 = vadd.f32 %v5498, %v5499
    %v5501 = vrot.slane %v5500, 1
    %v5502 = vadd.f32 %v5500, %v5501
    %v5503 = vadd.f32 %v5489, %v5491
    %v5504 = vrot.slane %v5503, 4
    %v5505 = vadd.f32 %v5503, %v5504
    %v5506 = vrot.slane %v5505, 2
    %v5507 = vadd.f32 %v5505, %v5506
    %v5508 = vrot.slane %v5507, 1
    %v5509 = vadd.f32 %v5507, %v5508
    %v5510 = vadd.f32 %v5376, %v5502
    %v5511 = vadd.f32 %v5377, %v5509
    %v5512 = vmul.f32 %v5464, %v5464
    %v5513 = vmul.f32 %v5468, %v5468
    %v5514 = vmul.f32 %v5472, %v5472
    %v5515 = vmul.f32 %v5476, %v5476
    %5520 = vst [vmem:[#allocation1] ss:$2 sm:$0xff] %v5512
    %s5521 = scalar_lea.vmem [#allocation1], 1
    %5522 = vst [vmem:[%s5521] ss:$2 sm:$0xff] %v5513
    %s5523 = scalar_lea.vmem [#allocation1], 16
    %5524 = vst [vmem:[%s5523] ss:$2 sm:$0xff] %v5514
    %s5525 = scalar_lea.vmem [#allocation1], 17
    %5526 = vst [vmem:[%s5525] ss:$2 sm:$0xff] %v5515
    %v5527 = vld.sshfl [vmem:[#allocation1] sm:$0xff pattern:$0x75316420]
    %v5528 = vld.sshfl [vmem:[#allocation1 + $0x8] sm:$0xff pattern:$0x75316420]
    %v5529 = vld.sshfl [vmem:[#allocation1 + $0x10] sm:$0xff pattern:$0x75316420]
    %v5530 = vld.sshfl [vmem:[#allocation1 + $0x18] sm:$0xff pattern:$0x75316420]
    %v5535 = vadd.f32 %v5527, %v5529
    %v5536 = vrot.slane %v5535, 4
    %v5537 = vadd.f32 %v5535, %v5536
    %v5538 = vrot.slane %v5537, 2
    %v5539 = vadd.f32 %v5537, %v5538
    %v5540 = vrot.slane %v5539, 1
    %v5541 = vadd.f32 %v5539, %v5540
    %v5542 = vadd.f32 %v5528, %v5530
    %v5543 = vrot.slane %v5542, 4
    %v5544 = vadd.f32 %v5542, %v5543
    %v5545 = vrot.slane %v5544, 2
    %v5546 = vadd.f32 %v5544, %v5545
    %v5547 = vrot.slane %v5546, 1
    %v5548 = vadd.f32 %v5546, %v5547
    %v5549 = vadd.f32 %v5415, %v5541
    %v5550 = vadd.f32 %v5416, %v5548
    %v5551 = vrcp.pop 32.0
    %v5552 = vmul.f32 32.0, %v5551
    %v5553 = vsub.f32 1.0, %v5552
    %v5554 = vmul.f32 %v5551, %v5553
    %v5555 = vadd.f32 %v5551, %v5554
    %vm5556 = vweird.f32 %v5551
    %v5557 = vsel %vm5556, %v5551, %v5555
    %v5558 = vmul.f32 %v5510, %v5557
    %v5559 = vmul.f32 %v5511, %v5557
    %v5560 = vmul.f32 %v5549, %v5557
    %v5561 = vmul.f32 %v5550, %v5557
    %v5562 = vmul.f32 %v5558, %v5558
    %v5563 = vmul.f32 %v5559, %v5559
    %v5564 = vsub.f32 %v5560, %v5562
    %v5565 = vsub.f32 %v5561, %v5563
    %v5566 = vld [vmem:[#allocation8] sm:$0x3]
    %v5567 = vadd.f32 %v5564, 1e-05
    %v5568 = vadd.f32 %v5565, 1e-05
    %v5569 = vrsqrt.pop %v5567
    %v5570 = vmul.f32 %v5569, %v5567
    %v5571 = vmul.f32 %v5570, %v5569
    %v5572 = vmul.f32 0.5, %v5571
    %v5573 = vsub.f32 1.5, %v5572
    %v5574 = vmul.f32 %v5569, %v5573
    %vm5575 = vweird.f32 %v5567
    %vm5576 = vweird.f32 %v5569
    %vm5577 = vmor %vm5575, %vm5576
    %v5578 = vsel %vm5577, %v5569, %v5574
    %v5579 = vrsqrt.pop %v5568
    %v5580 = vmul.f32 %v5579, %v5568
    %v5581 = vmul.f32 %v5580, %v5579
    %v5582 = vmul.f32 0.5, %v5581
    %v5583 = vsub.f32 1.5, %v5582
    %v5584 = vmul.f32 %v5579, %v5583
    %vm5585 = vweird.f32 %v5568
    %vm5586 = vweird.f32 %v5579
    %vm5587 = vmor %vm5585, %vm5586
    %v5588 = vsel %vm5587, %v5579, %v5584
    %v5591 = vrot.slane %v5588, 7
    %v5592 = vsel %vm5324, %v5578, %v5591
    %v5594 = vmul.f32 %v5566, %v5592
    %v5595 = vld [vmem:[#allocation9] sm:$0x3]
    %v5597 = vperm.slane %v5594, 0
    %v5598 = vperm.slane %v5594, 1
    %v5601 = vmul.f32 %v5558, %v5597
    %v5602 = vmul.f32 %v5559, %v5598
    %v5605 = vrot.slane %v5602, 7
    %v5606 = vsel %vm5324, %v5601, %v5605
    %v5608 = vsub.f32 %v5595, %v5606
    %v5609 = vmul.f32 %v3630, %v5597
    %v5610 = vmul.f32 %v3631, %v5598
    %v5611 = vmul.f32 %v3632, %v5597
    %v5612 = vmul.f32 %v3633, %v5598
    %v5613 = vmul.f32 %v3634, %v5597
    %v5614 = vmul.f32 %v3635, %v5598
    %v5615 = vmul.f32 %v3636, %v5597
    %v5616 = vmul.f32 %v3637, %v5598
    %v5617 = vmul.f32 %v3638, %v5597
    %v5618 = vmul.f32 %v3639, %v5598
    %v5619 = vmul.f32 %v3640, %v5597
    %v5620 = vmul.f32 %v3641, %v5598
    %v5621 = vmul.f32 %v3642, %v5597
    %v5622 = vmul.f32 %v3643, %v5598
    %v5623 = vmul.f32 %v3644, %v5597
    %v5624 = vmul.f32 %v3645, %v5598
    %v5626 = vperm.slane %v5608, 0
    %v5627 = vperm.slane %v5608, 1
    %v5630 = vadd.f32 %v5609, %v5626
    %v5631 = vadd.f32 %v5610, %v5627
    %v5632 = vadd.f32 %v5611, %v5626
    %v5633 = vadd.f32 %v5612, %v5627
    %v5634 = vadd.f32 %v5613, %v5626
    %v5635 = vadd.f32 %v5614, %v5627
    %v5636 = vadd.f32 %v5615, %v5626
    %v5637 = vadd.f32 %v5616, %v5627
    %v5638 = vadd.f32 %v5617, %v5626
    %v5639 = vadd.f32 %v5618, %v5627
    %v5640 = vadd.f32 %v5619, %v5626
    %v5641 = vadd.f32 %v5620, %v5627
    %v5642 = vadd.f32 %v5621, %v5626
    %v5643 = vadd.f32 %v5622, %v5627
    %v5644 = vadd.f32 %v5623, %v5626
    %v5645 = vadd.f32 %v5624, %v5627
    %v5646 = vmax.f32 %v5630, 0.0
    %v5647 = vmax.f32 %v5631, 0.0
    %v5648 = vmax.f32 %v5632, 0.0
    %v5649 = vmax.f32 %v5633, 0.0
    %v5650 = vmax.f32 %v5634, 0.0
    %v5651 = vmax.f32 %v5635, 0.0
    %v5652 = vmax.f32 %v5636, 0.0
    %v5653 = vmax.f32 %v5637, 0.0
    %v5654 = vmax.f32 %v5638, 0.0
    %v5655 = vmax.f32 %v5639, 0.0
    %v5656 = vmax.f32 %v5640, 0.0
    %v5657 = vmax.f32 %v5641, 0.0
    %v5658 = vmax.f32 %v5642, 0.0
    %v5659 = vmax.f32 %v5643, 0.0
    %v5660 = vmax.f32 %v5644, 0.0
    %v5661 = vmax.f32 %v5645, 0.0
    %v5678 = vrot.slane %v5646, 7
    %v5679 = vrot.slane %v5648, 7
    %v5680 = vsel %vm5324, %v5678, %v5679
    %v5681 = vrot.slane %v5647, 7
    %v5682 = vrot.slane %v5649, 7
    %v5683 = vsel %vm5324, %v5681, %v5682
    %v5684 = vrot.slane %v5650, 7
    %v5685 = vrot.slane %v5652, 7
    %v5686 = vsel %vm5324, %v5684, %v5685
    %v5687 = vrot.slane %v5651, 7
    %v5688 = vrot.slane %v5653, 7
    %v5689 = vsel %vm5324, %v5687, %v5688
    %v5690 = vrot.slane %v5654, 7
    %v5691 = vrot.slane %v5656, 7
    %v5692 = vsel %vm5324, %v5690, %v5691
    %v5693 = vrot.slane %v5655, 7
    %v5694 = vrot.slane %v5657, 7
    %v5695 = vsel %vm5324, %v5693, %v5694
    %v5696 = vrot.slane %v5658, 7
    %v5697 = vrot.slane %v5660, 7
    %v5698 = vsel %vm5324, %v5696, %v5697
    %v5699 = vrot.slane %v5659, 7
    %v5700 = vrot.slane %v5661, 7
    %v5701 = vsel %vm5324, %v5699, %v5700
    %s5710 = scalar_lea.vmem [#allocation2], 48
    %5711 = vst [vmem:[%s5710 + $0x10] sm:$0xf] %v5680
    %5712 = vst [vmem:[%s5710 + $0x18] sm:$0xf] %v5683
    %5713 = vst [vmem:[%s5710 + $0x40] sm:$0xf] %v5686
    %5714 = vst [vmem:[%s5710 + $0x48] sm:$0xf] %v5689
    %5715 = vst [vmem:[%s5710 + $0x70] sm:$0xf] %v5692
    %5716 = vst [vmem:[%s5710 + $0x78] sm:$0xf] %v5695
    %5717 = vst [vmem:[%s5710 + $0xa0] sm:$0xf] %v5698
    %5718 = vst [vmem:[%s5710 + $0xa8] sm:$0xf] %v5701
    %v5719 = vmul.f32 %v5264, %v5597
    %v5720 = vmul.f32 %v5265, %v5598
    %v5721 = vmul.f32 %v5266, %v5597
    %v5722 = vmul.f32 %v5267, %v5598
    %v5723 = vmul.f32 %v5268, %v5597
    %v5724 = vmul.f32 %v5269, %v5598
    %v5725 = vmul.f32 %v5270, %v5597
    %v5726 = vmul.f32 %v5271, %v5598
    %v5727 = vmul.f32 %v5272, %v5597
    %v5728 = vmul.f32 %v5273, %v5598
    %v5729 = vmul.f32 %v5274, %v5597
    %v5730 = vmul.f32 %v5275, %v5598
    %v5731 = vmul.f32 %v5276, %v5597
    %v5732 = vmul.f32 %v5277, %v5598
    %v5733 = vmul.f32 %v5278, %v5597
    %v5734 = vmul.f32 %v5279, %v5598
    %v5735 = vadd.f32 %v5719, %v5626
    %v5736 = vadd.f32 %v5720, %v5627
    %v5737 = vadd.f32 %v5721, %v5626
    %v5738 = vadd.f32 %v5722, %v5627
    %v5739 = vadd.f32 %v5723, %v5626
    %v5740 = vadd.f32 %v5724, %v5627
    %v5741 = vadd.f32 %v5725, %v5626
    %v5742 = vadd.f32 %v5726, %v5627
    %v5743 = vadd.f32 %v5727, %v5626
    %v5744 = vadd.f32 %v5728, %v5627
    %v5745 = vadd.f32 %v5729, %v5626
    %v5746 = vadd.f32 %v5730, %v5627
    %v5747 = vadd.f32 %v5731, %v5626
    %v5748 = vadd.f32 %v5732, %v5627
    %v5749 = vadd.f32 %v5733, %v5626
    %v5750 = vadd.f32 %v5734, %v5627
    %v5751 = vmax.f32 %v5735, 0.0
    %v5752 = vmax.f32 %v5736, 0.0
    %v5753 = vmax.f32 %v5737, 0.0
    %v5754 = vmax.f32 %v5738, 0.0
    %v5755 = vmax.f32 %v5739, 0.0
    %v5756 = vmax.f32 %v5740, 0.0
    %v5757 = vmax.f32 %v5741, 0.0
    %v5758 = vmax.f32 %v5742, 0.0
    %v5759 = vmax.f32 %v5743, 0.0
    %v5760 = vmax.f32 %v5744, 0.0
    %v5761 = vmax.f32 %v5745, 0.0
    %v5762 = vmax.f32 %v5746, 0.0
    %v5763 = vmax.f32 %v5747, 0.0
    %v5764 = vmax.f32 %v5748, 0.0
    %v5765 = vmax.f32 %v5749, 0.0
    %v5766 = vmax.f32 %v5750, 0.0
    %v5783 = vrot.slane %v5751, 7
    %v5784 = vrot.slane %v5753, 7
    %v5785 = vsel %vm5324, %v5783, %v5784
    %v5786 = vrot.slane %v5752, 7
    %v5787 = vrot.slane %v5754, 7
    %v5788 = vsel %vm5324, %v5786, %v5787
    %v5789 = vrot.slane %v5755, 7
    %v5790 = vrot.slane %v5757, 7
    %v5791 = vsel %vm5324, %v5789, %v5790
    %v5792 = vrot.slane %v5756, 7
    %v5793 = vrot.slane %v5758, 7
    %v5794 = vsel %vm5324, %v5792, %v5793
    %v5795 = vrot.slane %v5759, 7
    %v5796 = vrot.slane %v5761, 7
    %v5797 = vsel %vm5324, %v5795, %v5796
    %v5798 = vrot.slane %v5760, 7
    %v5799 = vrot.slane %v5762, 7
    %v5800 = vsel %vm5324, %v5798, %v5799
    %v5801 = vrot.slane %v5763, 7
    %v5802 = vrot.slane %v5765, 7
    %v5803 = vsel %vm5324, %v5801, %v5802
    %v5804 = vrot.slane %v5764, 7
    %v5805 = vrot.slane %v5766, 7
    %v5806 = vsel %vm5324, %v5804, %v5805
    %s5815 = scalar_lea.vmem [#allocation2], 336
    %5816 = vst [vmem:[%s5815 + $0x10] sm:$0xf] %v5785
    %5817 = vst [vmem:[%s5815 + $0x18] sm:$0xf] %v5788
    %5818 = vst [vmem:[%s5815 + $0x40] sm:$0xf] %v5791
    %5819 = vst [vmem:[%s5815 + $0x48] sm:$0xf] %v5794
    %5820 = vst [vmem:[%s5815 + $0x70] sm:$0xf] %v5797
    %5821 = vst [vmem:[%s5815 + $0x78] sm:$0xf] %v5800
    %5822 = vst [vmem:[%s5815 + $0xa0] sm:$0xf] %v5803
    %5823 = vst [vmem:[%s5815 + $0xa8] sm:$0xf] %v5806
    %v5824 = vld [vmem:[#allocation2] sm:$0xff]
    %v5825 = vld [vmem:[#allocation2 + $0x8] sm:$0xff]
    %v5826 = vld [vmem:[#allocation2 + $0x10] sm:$0xff]
    %v5827 = vld [vmem:[#allocation2 + $0x18] sm:$0xff]
    %v5828 = vld [vmem:[#allocation2 + $0x20] sm:$0xff]
    %v5829 = vld [vmem:[#allocation2 + $0x28] sm:$0xff]
    %v5830 = vld [vmem:[#allocation2 + $0x30] sm:$0xff]
    %v5831 = vld [vmem:[#allocation2 + $0x38] sm:$0xff]
    %v5832 = vld [vmem:[#allocation2 + $0x40] sm:$0xff]
    %v5833 = vld [vmem:[#allocation2 + $0x48] sm:$0xff]
    %v5834 = vld [vmem:[#allocation2 + $0x50] sm:$0xff]
    %v5835 = vld [vmem:[#allocation2 + $0x58] sm:$0xff]
    %v5836 = vld [vmem:[#allocation2 + $0x60] sm:$0xff]
    %v5837 = vld [vmem:[#allocation2 + $0x68] sm:$0xff]
    %v5838 = vld [vmem:[#allocation2 + $0x70] sm:$0xff]
    %v5839 = vld [vmem:[#allocation2 + $0x78] sm:$0xff]
    %v5840 = vld [vmem:[#allocation2 + $0x80] sm:$0xff]
    %v5841 = vld [vmem:[#allocation2 + $0x88] sm:$0xff]
    %v5842 = vld [vmem:[#allocation2 + $0x90] sm:$0xff]
    %v5843 = vld [vmem:[#allocation2 + $0x98] sm:$0xff]
    %v5844 = vld [vmem:[#allocation2 + $0xa0] sm:$0xff]
    %v5845 = vld [vmem:[#allocation2 + $0xa8] sm:$0xff]
    %v5846 = vld [vmem:[#allocation2 + $0xb0] sm:$0xff]
    %v5847 = vld [vmem:[#allocation2 + $0xb8] sm:$0xff]
    %v5848 = vpack.c.bf16 %v5826, %v5824
    %v5849 = vpack.c.bf16 %v5827, %v5825
    %v5850 = vpack.c.bf16 %v5830, %v5828
    %v5851 = vpack.c.bf16 %v5831, %v5829
    %v5852 = vpack.c.bf16 %v5834, %v5832
    %v5853 = vpack.c.bf16 %v5835, %v5833
    %v5854 = vpack.c.bf16 %v5838, %v5836
    %v5855 = vpack.c.bf16 %v5839, %v5837
    %v5856 = vpack.c.bf16 %v5842, %v5840
    %v5857 = vpack.c.bf16 %v5843, %v5841
    %v5858 = vpack.c.bf16 %v5846, %v5844
    %v5859 = vpack.c.bf16 %v5847, %v5845
    %v5860 = vld [vmem:[%s5710] sm:$0xff]
    %v5861 = vld [vmem:[%s5710 + $0x8] sm:$0xff]
    %v5862 = vld [vmem:[%s5710 + $0x10] sm:$0xff]
    %v5863 = vld [vmem:[%s5710 + $0x18] sm:$0xff]
    %v5864 = vld [vmem:[%s5710 + $0x20] sm:$0xff]
    %v5865 = vld [vmem:[%s5710 + $0x28] sm:$0xff]
    %v5866 = vld [vmem:[%s5710 + $0x30] sm:$0xff]
    %v5867 = vld [vmem:[%s5710 + $0x38] sm:$0xff]
    %v5868 = vld [vmem:[%s5710 + $0x40] sm:$0xff]
    %v5869 = vld [vmem:[%s5710 + $0x48] sm:$0xff]
    %v5870 = vld [vmem:[%s5710 + $0x50] sm:$0xff]
    %v5871 = vld [vmem:[%s5710 + $0x58] sm:$0xff]
    %v5872 = vld [vmem:[%s5710 + $0x60] sm:$0xff]
    %v5873 = vld [vmem:[%s5710 + $0x68] sm:$0xff]
    %v5874 = vld [vmem:[%s5710 + $0x70] sm:$0xff]
    %v5875 = vld [vmem:[%s5710 + $0x78] sm:$0xff]
    %v5876 = vld [vmem:[%s5710 + $0x80] sm:$0xff]
    %v5877 = vld [vmem:[%s5710 + $0x88] sm:$0xff]
    %v5878 = vld [vmem:[%s5710 + $0x90] sm:$0xff]
    %v5879 = vld [vmem:[%s5710 + $0x98] sm:$0xff]
    %v5880 = vld [vmem:[%s5710 + $0xa0] sm:$0xff]
    %v5881 = vld [vmem:[%s5710 + $0xa8] sm:$0xff]
    %v5882 = vld [vmem:[%s5710 + $0xb0] sm:$0xff]
    %v5883 = vld [vmem:[%s5710 + $0xb8] sm:$0xff]
    %v5884 = vpack.c.bf16 %v5862, %v5860
    %v5885 = vpack.c.bf16 %v5863, %v5861
    %v5886 = vpack.c.bf16 %v5866, %v5864
    %v5887 = vpack.c.bf16 %v5867, %v5865
    %v5888 = vpack.c.bf16 %v5870, %v5868
    %v5889 = vpack.c.bf16 %v5871, %v5869
    %v5890 = vpack.c.bf16 %v5874, %v5872
    %v5891 = vpack.c.bf16 %v5875, %v5873
    %v5892 = vpack.c.bf16 %v5878, %v5876
    %v5893 = vpack.c.bf16 %v5879, %v5877
    %v5894 = vpack.c.bf16 %v5882, %v5880
    %v5895 = vpack.c.bf16 %v5883, %v5881
    %s5896 = scalar_lea.vmem [#allocation2], 96
    %v5897 = vld [vmem:[%s5896] sm:$0xff]
    %v5898 = vld [vmem:[%s5896 + $0x8] sm:$0xff]
    %v5899 = vld [vmem:[%s5896 + $0x10] sm:$0xff]
    %v5900 = vld [vmem:[%s5896 + $0x18] sm:$0xff]
    %v5901 = vld [vmem:[%s5896 + $0x20] sm:$0xff]
    %v5902 = vld [vmem:[%s5896 + $0x28] sm:$0xff]
    %v5903 = vld [vmem:[%s5896 + $0x30] sm:$0xff]
    %v5904 = vld [vmem:[%s5896 + $0x38] sm:$0xff]
    %v5905 = vld [vmem:[%s5896 + $0x40] sm:$0xff]
    %v5906 = vld [vmem:[%s5896 + $0x48] sm:$0xff]
    %v5907 = vld [vmem:[%s5896 + $0x50] sm:$0xff]
    %v5908 = vld [vmem:[%s5896 + $0x58] sm:$0xff]
    %v5909 = vld [vmem:[%s5896 + $0x60] sm:$0xff]
    %v5910 = vld [vmem:[%s5896 + $0x68] sm:$0xff]
    %v5911 = vld [vmem:[%s5896 + $0x70] sm:$0xff]
    %v5912 = vld [vmem:[%s5896 + $0x78] sm:$0xff]
    %v5913 = vld [vmem:[%s5896 + $0x80] sm:$0xff]
    %v5914 = vld [vmem:[%s5896 + $0x88] sm:$0xff]
    %v5915 = vld [vmem:[%s5896 + $0x90] sm:$0xff]
    %v5916 = vld [vmem:[%s5896 + $0x98] sm:$0xff]
    %v5917 = vld [vmem:[%s5896 + $0xa0] sm:$0xff]
    %v5918 = vld [vmem:[%s5896 + $0xa8] sm:$0xff]
    %v5919 = vld [vmem:[%s5896 + $0xb0] sm:$0xff]
    %v5920 = vld [vmem:[%s5896 + $0xb8] sm:$0xff]
    %v5921 = vpack.c.bf16 %v5899, %v5897
    %v5922 = vpack.c.bf16 %v5900, %v5898
    %v5923 = vpack.c.bf16 %v5903, %v5901
    %v5924 = vpack.c.bf16 %v5904, %v5902
    %v5925 = vpack.c.bf16 %v5907, %v5905
    %v5926 = vpack.c.bf16 %v5908, %v5906
    %v5927 = vpack.c.bf16 %v5911, %v5909
    %v5928 = vpack.c.bf16 %v5912, %v5910
    %v5929 = vpack.c.bf16 %v5915, %v5913
    %v5930 = vpack.c.bf16 %v5916, %v5914
    %v5931 = vpack.c.bf16 %v5919, %v5917
    %v5932 = vpack.c.bf16 %v5920, %v5918
    %v5933 = vld [vmem:[#allocation11] sm:$0xff]
    %v5934 = vld [vmem:[#allocation11 + $0x8] sm:$0xff]
    %v5935 = vld [vmem:[#allocation11 + $0x10] sm:$0xff]
    %v5936 = vld [vmem:[#allocation11 + $0x18] sm:$0xff]
    %v5937 = vld [vmem:[#allocation11 + $0x20] sm:$0xff]
    %v5938 = vld [vmem:[#allocation11 + $0x28] sm:$0xff]
    %v5939 = vld [vmem:[#allocation11 + $0x30] sm:$0xff]
    %v5940 = vld [vmem:[#allocation11 + $0x38] sm:$0xff]
    %v5941 = vld [vmem:[#allocation11 + $0x40] sm:$0xff]
    %v5942 = vld [vmem:[#allocation11 + $0x48] sm:$0xff]
    %v5943 = vld [vmem:[#allocation11 + $0x50] sm:$0xff]
    %v5944 = vld [vmem:[#allocation11 + $0x58] sm:$0xff]
    %v5945 = vld [vmem:[#allocation11 + $0x60] sm:$0xff]
    %v5946 = vld [vmem:[#allocation11 + $0x68] sm:$0xff]
    %v5947 = vld [vmem:[#allocation11 + $0x70] sm:$0xff]
    %v5948 = vld [vmem:[#allocation11 + $0x78] sm:$0xff]
    %v5949 = vld [vmem:[#allocation11 + $0x80] sm:$0xff]
    %v5950 = vld [vmem:[#allocation11 + $0x88] sm:$0xff]
    %v5951 = vld [vmem:[#allocation11 + $0x90] sm:$0xff]
    %v5952 = vld [vmem:[#allocation11 + $0x98] sm:$0xff]
    %v5953 = vld [vmem:[#allocation11 + $0xa0] sm:$0xff]
    %v5954 = vld [vmem:[#allocation11 + $0xa8] sm:$0xff]
    %v5955 = vld [vmem:[#allocation11 + $0xb0] sm:$0xff]
    %v5956 = vld [vmem:[#allocation11 + $0xb8] sm:$0xff]
    %v5957 = vld [vmem:[#allocation11 + $0xc0] sm:$0xff]
    %v5958 = vld [vmem:[#allocation11 + $0xc8] sm:$0xff]
    %v5959 = vld [vmem:[#allocation11 + $0xd0] sm:$0xff]
    %v5960 = vld [vmem:[#allocation11 + $0xd8] sm:$0xff]
    %v5961 = vld [vmem:[#allocation11 + $0xe0] sm:$0xff]
    %v5962 = vld [vmem:[#allocation11 + $0xe8] sm:$0xff]
    %v5963 = vld [vmem:[#allocation11 + $0xf0] sm:$0xff]
    %v5964 = vld [vmem:[#allocation11 + $0xf8] sm:$0xff]
    %v5997 = vunpack.c.l.b16 %v5933
    %v5998 = vunpack.c.h.b16 %v5933
    %v5999 = vunpack.c.l.b16 %v5934
    %v6000 = vunpack.c.h.b16 %v5934
    %v6001 = vunpack.c.l.b16 %v5935
    %v6002 = vunpack.c.h.b16 %v5935
    %v6003 = vunpack.c.l.b16 %v5936
    %v6004 = vunpack.c.h.b16 %v5936
    %v6005 = vunpack.c.l.b16 %v5937
    %v6006 = vunpack.c.h.b16 %v5937
    %v6007 = vunpack.c.l.b16 %v5938
    %v6008 = vunpack.c.h.b16 %v5938
    %v6009 = vunpack.c.l.b16 %v5939
    %v6010 = vunpack.c.h.b16 %v5939
    %v6011 = vunpack.c.l.b16 %v5940
    %v6012 = vunpack.c.h.b16 %v5940
    %v6013 = vunpack.c.l.b16 %v5941
    %v6014 = vunpack.c.h.b16 %v5941
    %v6015 = vunpack.c.l.b16 %v5942
    %v6016 = vunpack.c.h.b16 %v5942
    %v6017 = vunpack.c.l.b16 %v5943
    %v6018 = vunpack.c.h.b16 %v5943
    %v6019 = vunpack.c.l.b16 %v5944
    %v6020 = vunpack.c.h.b16 %v5944
    %v6021 = vunpack.c.l.b16 %v5945
    %v6022 = vunpack.c.h.b16 %v5945
    %v6023 = vunpack.c.l.b16 %v5946
    %v6024 = vunpack.c.h.b16 %v5946
    %v6025 = vunpack.c.l.b16 %v5947
    %v6026 = vunpack.c.h.b16 %v5947
    %v6027 = vunpack.c.l.b16 %v5948
    %v6028 = vunpack.c.h.b16 %v5948
    %v6029 = vunpack.c.l.b16 %v5949
    %v6030 = vunpack.c.h.b16 %v5949
    %v6031 = vunpack.c.l.b16 %v5950
    %v6032 = vunpack.c.h.b16 %v5950
    %v6033 = vunpack.c.l.b16 %v5951
    %v6034 = vunpack.c.h.b16 %v5951
    %v6035 = vunpack.c.l.b16 %v5952
    %v6036 = vunpack.c.h.b16 %v5952
    %v6037 = vunpack.c.l.b16 %v5953
    %v6038 = vunpack.c.h.b16 %v5953
    %v6039 = vunpack.c.l.b16 %v5954
    %v6040 = vunpack.c.h.b16 %v5954
    %v6041 = vunpack.c.l.b16 %v5955
    %v6042 = vunpack.c.h.b16 %v5955
    %v6043 = vunpack.c.l.b16 %v5956
    %v6044 = vunpack.c.h.b16 %v5956
    %v6045 = vunpack.c.l.b16 %v5957
    %v6046 = vunpack.c.h.b16 %v5957
    %v6047 = vunpack.c.l.b16 %v5958
    %v6048 = vunpack.c.h.b16 %v5958
    %v6049 = vunpack.c.l.b16 %v5959
    %v6050 = vunpack.c.h.b16 %v5959
    %v6051 = vunpack.c.l.b16 %v5960
    %v6052 = vunpack.c.h.b16 %v5960
    %v6053 = vunpack.c.l.b16 %v5961
    %v6054 = vunpack.c.h.b16 %v5961
    %v6055 = vunpack.c.l.b16 %v5962
    %v6056 = vunpack.c.h.b16 %v5962
    %v6057 = vunpack.c.l.b16 %v5963
    %v6058 = vunpack.c.h.b16 %v5963
    %v6059 = vunpack.c.l.b16 %v5964
    %v6060 = vunpack.c.h.b16 %v5964
    %v6061 = vpack.c.b16 %v5999, %v5997
    %v6062 = vpack.c.b16 %v6000, %v5998
    %v6063 = vpack.c.b16 %v6003, %v6001
    %v6064 = vpack.c.b16 %v6004, %v6002
    %v6065 = vpack.c.b16 %v6007, %v6005
    %v6066 = vpack.c.b16 %v6008, %v6006
    %v6067 = vpack.c.b16 %v6011, %v6009
    %v6068 = vpack.c.b16 %v6012, %v6010
    %v6069 = vpack.c.b16 %v6015, %v6013
    %v6070 = vpack.c.b16 %v6016, %v6014
    %v6071 = vpack.c.b16 %v6019, %v6017
    %v6072 = vpack.c.b16 %v6020, %v6018
    %v6073 = vpack.c.b16 %v6023, %v6021
    %v6074 = vpack.c.b16 %v6024, %v6022
    %v6075 = vpack.c.b16 %v6027, %v6025
    %v6076 = vpack.c.b16 %v6028, %v6026
    %v6077 = vpack.c.b16 %v6031, %v6029
    %v6078 = vpack.c.b16 %v6032, %v6030
    %v6079 = vpack.c.b16 %v6035, %v6033
    %v6080 = vpack.c.b16 %v6036, %v6034
    %v6081 = vpack.c.b16 %v6039, %v6037
    %v6082 = vpack.c.b16 %v6040, %v6038
    %v6083 = vpack.c.b16 %v6043, %v6041
    %v6084 = vpack.c.b16 %v6044, %v6042
    %v6085 = vpack.c.b16 %v6047, %v6045
    %v6086 = vpack.c.b16 %v6048, %v6046
    %v6087 = vpack.c.b16 %v6051, %v6049
    %v6088 = vpack.c.b16 %v6052, %v6050
    %v6089 = vpack.c.b16 %v6055, %v6053
    %v6090 = vpack.c.b16 %v6056, %v6054
    %v6091 = vpack.c.b16 %v6059, %v6057
    %v6092 = vpack.c.b16 %v6060, %v6058
    %6125 = vmatpush.bf16.msra.mxu0 %v6075
    %6126 = vmatpush.bf16.msra.mxu0 %v6073
    %6127 = vmatpush.bf16.msra.mxu0 %v6071
    %6128 = vmatpush.bf16.msra.mxu0 %v6069
    %6129 = vmatpush.bf16.msra.mxu0 %v6067
    %6130 = vmatpush.bf16.msra.mxu0 %v6065
    %6131 = vmatpush.bf16.msra.mxu0 %v6063
    %6132 = vmatpush.bf16.msra.mxu0 %v6061
    %6133 = vmatmul.bf16.gmra.mxu0 %v5848
    %v6134 = vpop.f32.mrf.mxu0
    %v6135 = vadd.f32 0.0, %v6134
    %v6136 = vpop.f32.mrf.mxu0
    %v6137 = vadd.f32 0.0, %v6136
    %6138 = vmatmul.bf16.gmra.mxu0 %v5850
    %v6139 = vpop.f32.mrf.mxu0
    %v6140 = vpop.f32.mrf.mxu0
    %v6141 = vadd.f32 0.0, %v6140
    %6142 = vmatmul.bf16.gmra.mxu0 %v5852
    %v6143 = vpop.f32.mrf.mxu0
    %v6144 = vadd.f32 0.0, %v6143
    %v6145 = vpop.f32.mrf.mxu0
    %6146 = vmatmul.bf16.gmra.mxu0 %v5854
    %v6147 = vpop.f32.mrf.mxu0
    %v6148 = vadd.f32 0.0, %v6147
    %v6149 = vpop.f32.mrf.mxu0
    %v6150 = vadd.f32 0.0, %v6149
    %6151 = vmatmul.bf16.gmra.mxu0 %v5856
    %v6152 = vpop.f32.mrf.mxu0
    %v6153 = vpop.f32.mrf.mxu0
    %v6154 = vadd.f32 0.0, %v6153
    %6155 = vmatmul.bf16.gmra.mxu0 %v5858
    %v6156 = vpop.f32.mrf.mxu0
    %v6157 = vadd.f32 0.0, %v6156
    %v6158 = vpop.f32.mrf.mxu0
    %6159 = vdwg.mxu0
    %6160 = vmatpush.bf16.msra.mxu0 %v6091
    %6161 = vmatpush.bf16.msra.mxu0 %v6089
    %6162 = vmatpush.bf16.msra.mxu0 %v6087
    %6163 = vmatpush.bf16.msra.mxu0 %v6085
    %6164 = vmatpush.bf16.msra.mxu0 %v6083
    %6165 = vmatpush.bf16.msra.mxu0 %v6081
    %6166 = vmatpush.bf16.msra.mxu0 %v6079
    %6167 = vmatpush.bf16.msra.mxu0 %v6077
    %6168 = vmatmul.bf16.gmra.mxu0 %v5849
    %v6169 = vpop.f32.mrf.mxu0
    %v6170 = vadd.f32 %v6135, %v6169
    %v6171 = vpop.f32.mrf.mxu0
    %v6172 = vadd.f32 %v6137, %v6171
    %6173 = vmatmul.bf16.gmra.mxu0 %v5851
    %v6174 = vpop.f32.mrf.mxu0
    %v6175 = vpop.f32.mrf.mxu0
    %v6176 = vadd.f32 %v6141, %v6175
    %6177 = vmatmul.bf16.gmra.mxu0 %v5853
    %v6178 = vpop.f32.mrf.mxu0
    %v6179 = vadd.f32 %v6144, %v6178
    %v6180 = vpop.f32.mrf.mxu0
    %6181 = vmatmul.bf16.gmra.mxu0 %v5855
    %v6182 = vpop.f32.mrf.mxu0
    %v6183 = vadd.f32 %v6148, %v6182
    %v6184 = vpop.f32.mrf.mxu0
    %v6185 = vadd.f32 %v6150, %v6184
    %6186 = vmatmul.bf16.gmra.mxu0 %v5857
    %v6187 = vpop.f32.mrf.mxu0
    %v6188 = vpop.f32.mrf.mxu0
    %v6189 = vadd.f32 %v6154, %v6188
    %6190 = vmatmul.bf16.gmra.mxu0 %v5859
    %v6191 = vpop.f32.mrf.mxu0
    %v6192 = vadd.f32 %v6157, %v6191
    %v6193 = vpop.f32.mrf.mxu0
    %6194 = vdwg.mxu0
    %6195 = vmatpush.bf16.msra.mxu0 %v6076
    %6196 = vmatpush.bf16.msra.mxu0 %v6074
    %6197 = vmatpush.bf16.msra.mxu0 %v6072
    %6198 = vmatpush.bf16.msra.mxu0 %v6070
    %6199 = vmatpush.bf16.msra.mxu0 %v6068
    %6200 = vmatpush.bf16.msra.mxu0 %v6066
    %6201 = vmatpush.bf16.msra.mxu0 %v6064
    %6202 = vmatpush.bf16.msra.mxu0 %v6062
    %6203 = vmatmul.bf16.gmra.mxu0 %v5848
    %v6204 = vpop.f32.mrf.mxu0
    %v6205 = vadd.f32 0.0, %v6204
    %v6206 = vpop.f32.mrf.mxu0
    %v6207 = vadd.f32 0.0, %v6206
    %6208 = vmatmul.bf16.gmra.mxu0 %v5850
    %v6209 = vpop.f32.mrf.mxu0
    %v6210 = vpop.f32.mrf.mxu0
    %v6211 = vadd.f32 0.0, %v6210
    %6212 = vmatmul.bf16.gmra.mxu0 %v5852
    %v6213 = vpop.f32.mrf.mxu0
    %v6214 = vadd.f32 0.0, %v6213
    %v6215 = vpop.f32.mrf.mxu0
    %6216 = vmatmul.bf16.gmra.mxu0 %v5854
    %v6217 = vpop.f32.mrf.mxu0
    %v6218 = vadd.f32 0.0, %v6217
    %v6219 = vpop.f32.mrf.mxu0
    %v6220 = vadd.f32 0.0, %v6219
    %6221 = vmatmul.bf16.gmra.mxu0 %v5856
    %v6222 = vpop.f32.mrf.mxu0
    %v6223 = vpop.f32.mrf.mxu0
    %v6224 = vadd.f32 0.0, %v6223
    %6225 = vmatmul.bf16.gmra.mxu0 %v5858
    %v6226 = vpop.f32.mrf.mxu0
    %v6227 = vadd.f32 0.0, %v6226
    %v6228 = vpop.f32.mrf.mxu0
    %6229 = vdwg.mxu0
    %6230 = vmatpush.bf16.msra.mxu0 %v6092
    %6231 = vmatpush.bf16.msra.mxu0 %v6090
    %6232 = vmatpush.bf16.msra.mxu0 %v6088
    %6233 = vmatpush.bf16.msra.mxu0 %v6086
    %6234 = vmatpush.bf16.msra.mxu0 %v6084
    %6235 = vmatpush.bf16.msra.mxu0 %v6082
    %6236 = vmatpush.bf16.msra.mxu0 %v6080
    %6237 = vmatpush.bf16.msra.mxu0 %v6078
    %6238 = vmatmul.bf16.gmra.mxu0 %v5849
    %v6239 = vpop.f32.mrf.mxu0
    %v6240 = vadd.f32 %v6205, %v6239
    %v6241 = vpop.f32.mrf.mxu0
    %v6242 = vadd.f32 %v6207, %v6241
    %6243 = vmatmul.bf16.gmra.mxu0 %v5851
    %v6244 = vpop.f32.mrf.mxu0
    %v6245 = vpop.f32.mrf.mxu0
    %v6246 = vadd.f32 %v6211, %v6245
    %6247 = vmatmul.bf16.gmra.mxu0 %v5853
    %v6248 = vpop.f32.mrf.mxu0
    %v6249 = vadd.f32 %v6214, %v6248
    %v6250 = vpop.f32.mrf.mxu0
    %6251 = vmatmul.bf16.gmra.mxu0 %v5855
    %v6252 = vpop.f32.mrf.mxu0
    %v6253 = vadd.f32 %v6218, %v6252
    %v6254 = vpop.f32.mrf.mxu0
    %v6255 = vadd.f32 %v6220, %v6254
    %6256 = vmatmul.bf16.gmra.mxu0 %v5857
    %v6257 = vpop.f32.mrf.mxu0
    %v6258 = vpop.f32.mrf.mxu0
    %v6259 = vadd.f32 %v6224, %v6258
    %6260 = vmatmul.bf16.gmra.mxu0 %v5859
    %v6261 = vpop.f32.mrf.mxu0
    %v6262 = vadd.f32 %v6227, %v6261
    %v6263 = vpop.f32.mrf.mxu0
    %6264 = vdwg.mxu0
    %v6265 = vadd.f32 %v6170, 0.0
    %v6266 = vadd.f32 %v6240, 0.0
    %v6267 = vadd.f32 %v6172, 0.0
    %v6268 = vadd.f32 %v6242, 0.0
    %v6269 = vadd.f32 %v6176, 0.0
    %v6270 = vadd.f32 %v6246, 0.0
    %v6271 = vadd.f32 %v6179, 0.0
    %v6272 = vadd.f32 %v6249, 0.0
    %v6273 = vadd.f32 %v6183, 0.0
    %v6274 = vadd.f32 %v6253, 0.0
    %v6275 = vadd.f32 %v6185, 0.0
    %v6276 = vadd.f32 %v6255, 0.0
    %v6277 = vadd.f32 %v6189, 0.0
    %v6278 = vadd.f32 %v6259, 0.0
    %v6279 = vadd.f32 %v6192, 0.0
    %v6280 = vadd.f32 %v6262, 0.0
    %s6281 = scalar_lea.vmem [#allocation11], 256
    %v6282 = vld [vmem:[%s6281] sm:$0xff]
    %v6283 = vld [vmem:[%s6281 + $0x8] sm:$0xff]
    %v6284 = vld [vmem:[%s6281 + $0x10] sm:$0xff]
    %v6285 = vld [vmem:[%s6281 + $0x18] sm:$0xff]
    %v6286 = vld [vmem:[%s6281 + $0x20] sm:$0xff]
    %v6287 = vld [vmem:[%s6281 + $0x28] sm:$0xff]
    %v6288 = vld [vmem:[%s6281 + $0x30] sm:$0xff]
    %v6289 = vld [vmem:[%s6281 + $0x38] sm:$0xff]
    %v6290 = vld [vmem:[%s6281 + $0x40] sm:$0xff]
    %v6291 = vld [vmem:[%s6281 + $0x48] sm:$0xff]
    %v6292 = vld [vmem:[%s6281 + $0x50] sm:$0xff]
    %v6293 = vld [vmem:[%s6281 + $0x58] sm:$0xff]
    %v6294 = vld [vmem:[%s6281 + $0x60] sm:$0xff]
    %v6295 = vld [vmem:[%s6281 + $0x68] sm:$0xff]
    %v6296 = vld [vmem:[%s6281 + $0x70] sm:$0xff]
    %v6297 = vld [vmem:[%s6281 + $0x78] sm:$0xff]
    %v6298 = vld [vmem:[%s6281 + $0x80] sm:$0xff]
    %v6299 = vld [vmem:[%s6281 + $0x88] sm:$0xff]
    %v6300 = vld [vmem:[%s6281 + $0x90] sm:$0xff]
    %v6301 = vld [vmem:[%s6281 + $0x98] sm:$0xff]
    %v6302 = vld [vmem:[%s6281 + $0xa0] sm:$0xff]
    %v6303 = vld [vmem:[%s6281 + $0xa8] sm:$0xff]
    %v6304 = vld [vmem:[%s6281 + $0xb0] sm:$0xff]
    %v6305 = vld [vmem:[%s6281 + $0xb8] sm:$0xff]
    %v6306 = vld [vmem:[%s6281 + $0xc0] sm:$0xff]
    %v6307 = vld [vmem:[%s6281 + $0xc8] sm:$0xff]
    %v6308 = vld [vmem:[%s6281 + $0xd0] sm:$0xff]
    %v6309 = vld [vmem:[%s6281 + $0xd8] sm:$0xff]
    %v6310 = vld [vmem:[%s6281 + $0xe0] sm:$0xff]
    %v6311 = vld [vmem:[%s6281 + $0xe8] sm:$0xff]
    %v6312 = vld [vmem:[%s6281 + $0xf0] sm:$0xff]
    %v6313 = vld [vmem:[%s6281 + $0xf8] sm:$0xff]
    %v6346 = vunpack.c.l.b16 %v6282
    %v6347 = vunpack.c.h.b16 %v6282
    %v6348 = vunpack.c.l.b16 %v6283
    %v6349 = vunpack.c.h.b16 %v6283
    %v6350 = vunpack.c.l.b16 %v6284
    %v6351 = vunpack.c.h.b16 %v6284
    %v6352 = vunpack.c.l.b16 %v6285
    %v6353 = vunpack.c.h.b16 %v6285
    %v6354 = vunpack.c.l.b16 %v6286
    %v6355 = vunpack.c.h.b16 %v6286
    %v6356 = vunpack.c.l.b16 %v6287
    %v6357 = vunpack.c.h.b16 %v6287
    %v6358 = vunpack.c.l.b16 %v6288
    %v6359 = vunpack.c.h.b16 %v6288
    %v6360 = vunpack.c.l.b16 %v6289
    %v6361 = vunpack.c.h.b16 %v6289
    %v6362 = vunpack.c.l.b16 %v6290
    %v6363 = vunpack.c.h.b16 %v6290
    %v6364 = vunpack.c.l.b16 %v6291
    %v6365 = vunpack.c.h.b16 %v6291
    %v6366 = vunpack.c.l.b16 %v6292
    %v6367 = vunpack.c.h.b16 %v6292
    %v6368 = vunpack.c.l.b16 %v6293
    %v6369 = vunpack.c.h.b16 %v6293
    %v6370 = vunpack.c.l.b16 %v6294
    %v6371 = vunpack.c.h.b16 %v6294
    %v6372 = vunpack.c.l.b16 %v6295
    %v6373 = vunpack.c.h.b16 %v6295
    %v6374 = vunpack.c.l.b16 %v6296
    %v6375 = vunpack.c.h.b16 %v6296
    %v6376 = vunpack.c.l.b16 %v6297
    %v6377 = vunpack.c.h.b16 %v6297
    %v6378 = vunpack.c.l.b16 %v6298
    %v6379 = vunpack.c.h.b16 %v6298
    %v6380 = vunpack.c.l.b16 %v6299
    %v6381 = vunpack.c.h.b16 %v6299
    %v6382 = vunpack.c.l.b16 %v6300
    %v6383 = vunpack.c.h.b16 %v6300
    %v6384 = vunpack.c.l.b16 %v6301
    %v6385 = vunpack.c.h.b16 %v6301
    %v6386 = vunpack.c.l.b16 %v6302
    %v6387 = vunpack.c.h.b16 %v6302
    %v6388 = vunpack.c.l.b16 %v6303
    %v6389 = vunpack.c.h.b16 %v6303
    %v6390 = vunpack.c.l.b16 %v6304
    %v6391 = vunpack.c.h.b16 %v6304
    %v6392 = vunpack.c.l.b16 %v6305
    %v6393 = vunpack.c.h.b16 %v6305
    %v6394 = vunpack.c.l.b16 %v6306
    %v6395 = vunpack.c.h.b16 %v6306
    %v6396 = vunpack.c.l.b16 %v6307
    %v6397 = vunpack.c.h.b16 %v6307
    %v6398 = vunpack.c.l.b16 %v6308
    %v6399 = vunpack.c.h.b16 %v6308
    %v6400 = vunpack.c.l.b16 %v6309
    %v6401 = vunpack.c.h.b16 %v6309
    %v6402 = vunpack.c.l.b16 %v6310
    %v6403 = vunpack.c.h.b16 %v6310
    %v6404 = vunpack.c.l.b16 %v6311
    %v6405 = vunpack.c.h.b16 %v6311
    %v6406 = vunpack.c.l.b16 %v6312
    %v6407 = vunpack.c.h.b16 %v6312
    %v6408 = vunpack.c.l.b16 %v6313
    %v6409 = vunpack.c.h.b16 %v6313
    %v6410 = vpack.c.b16 %v6348, %v6346
    %v6411 = vpack.c.b16 %v6349, %v6347
    %v6412 = vpack.c.b16 %v6352, %v6350
    %v6413 = vpack.c.b16 %v6353, %v6351
    %v6414 = vpack.c.b16 %v6356, %v6354
    %v6415 = vpack.c.b16 %v6357, %v6355
    %v6416 = vpack.c.b16 %v6360, %v6358
    %v6417 = vpack.c.b16 %v6361, %v6359
    %v6418 = vpack.c.b16 %v6364, %v6362
    %v6419 = vpack.c.b16 %v6365, %v6363
    %v6420 = vpack.c.b16 %v6368, %v6366
    %v6421 = vpack.c.b16 %v6369, %v6367
    %v6422 = vpack.c.b16 %v6372, %v6370
    %v6423 = vpack.c.b16 %v6373, %v6371
    %v6424 = vpack.c.b16 %v6376, %v6374
    %v6425 = vpack.c.b16 %v6377, %v6375
    %v6426 = vpack.c.b16 %v6380, %v6378
    %v6427 = vpack.c.b16 %v6381, %v6379
    %v6428 = vpack.c.b16 %v6384, %v6382
    %v6429 = vpack.c.b16 %v6385, %v6383
    %v6430 = vpack.c.b16 %v6388, %v6386
    %v6431 = vpack.c.b16 %v6389, %v6387
    %v6432 = vpack.c.b16 %v6392, %v6390
    %v6433 = vpack.c.b16 %v6393, %v6391
    %v6434 = vpack.c.b16 %v6396, %v6394
    %v6435 = vpack.c.b16 %v6397, %v6395
    %v6436 = vpack.c.b16 %v6400, %v6398
    %v6437 = vpack.c.b16 %v6401, %v6399
    %v6438 = vpack.c.b16 %v6404, %v6402
    %v6439 = vpack.c.b16 %v6405, %v6403
    %v6440 = vpack.c.b16 %v6408, %v6406
    %v6441 = vpack.c.b16 %v6409, %v6407
    %6474 = vmatpush.bf16.msra.mxu0 %v6424
    %6475 = vmatpush.bf16.msra.mxu0 %v6422
    %6476 = vmatpush.bf16.msra.mxu0 %v6420
    %6477 = vmatpush.bf16.msra.mxu0 %v6418
    %6478 = vmatpush.bf16.msra.mxu0 %v6416
    %6479 = vmatpush.bf16.msra.mxu0 %v6414
    %6480 = vmatpush.bf16.msra.mxu0 %v6412
    %6481 = vmatpush.bf16.msra.mxu0 %v6410
    %6482 = vmatmul.bf16.gmra.mxu0 %v5848
    %v6483 = vpop.f32.mrf.mxu0
    %v6484 = vpop.f32.mrf.mxu0
    %v6485 = vadd.f32 0.0, %v6484
    %6486 = vmatmul.bf16.gmra.mxu0 %v5850
    %v6487 = vpop.f32.mrf.mxu0
    %v6488 = vpop.f32.mrf.mxu0
    %6489 = vmatmul.bf16.gmra.mxu0 %v5852
    %v6490 = vpop.f32.mrf.mxu0
    %v6491 = vadd.f32 0.0, %v6490
    %v6492 = vpop.f32.mrf.mxu0
    %6493 = vmatmul.bf16.gmra.mxu0 %v5854
    %v6494 = vpop.f32.mrf.mxu0
    %v6495 = vpop.f32.mrf.mxu0
    %v6496 = vadd.f32 0.0, %v6495
    %6497 = vmatmul.bf16.gmra.mxu0 %v5856
    %v6498 = vpop.f32.mrf.mxu0
    %v6499 = vpop.f32.mrf.mxu0
    %6500 = vmatmul.bf16.gmra.mxu0 %v5858
    %v6501 = vpop.f32.mrf.mxu0
    %v6502 = vadd.f32 0.0, %v6501
    %v6503 = vpop.f32.mrf.mxu0
    %6504 = vdwg.mxu0
    %6505 = vmatpush.bf16.msra.mxu0 %v6440
    %6506 = vmatpush.bf16.msra.mxu0 %v6438
    %6507 = vmatpush.bf16.msra.mxu0 %v6436
    %6508 = vmatpush.bf16.msra.mxu0 %v6434
    %6509 = vmatpush.bf16.msra.mxu0 %v6432
    %6510 = vmatpush.bf16.msra.mxu0 %v6430
    %6511 = vmatpush.bf16.msra.mxu0 %v6428
    %6512 = vmatpush.bf16.msra.mxu0 %v6426
    %6513 = vmatmul.bf16.gmra.mxu0 %v5849
    %v6514 = vpop.f32.mrf.mxu0
    %v6515 = vpop.f32.mrf.mxu0
    %v6516 = vadd.f32 %v6485, %v6515
    %6517 = vmatmul.bf16.gmra.mxu0 %v5851
    %v6518 = vpop.f32.mrf.mxu0
    %v6519 = vpop.f32.mrf.mxu0
    %6520 = vmatmul.bf16.gmra.mxu0 %v5853
    %v6521 = vpop.f32.mrf.mxu0
    %v6522 = vadd.f32 %v6491, %v6521
    %v6523 = vpop.f32.mrf.mxu0
    %6524 = vmatmul.bf16.gmra.mxu0 %v5855
    %v6525 = vpop.f32.mrf.mxu0
    %v6526 = vpop.f32.mrf.mxu0
    %v6527 = vadd.f32 %v6496, %v6526
    %6528 = vmatmul.bf16.gmra.mxu0 %v5857
    %v6529 = vpop.f32.mrf.mxu0
    %v6530 = vpop.f32.mrf.mxu0
    %6531 = vmatmul.bf16.gmra.mxu0 %v5859
    %v6532 = vpop.f32.mrf.mxu0
    %v6533 = vadd.f32 %v6502, %v6532
    %v6534 = vpop.f32.mrf.mxu0
    %6535 = vdwg.mxu0
    %6536 = vmatpush.bf16.msra.mxu0 %v6425
    %6537 = vmatpush.bf16.msra.mxu0 %v6423
    %6538 = vmatpush.bf16.msra.mxu0 %v6421
    %6539 = vmatpush.bf16.msra.mxu0 %v6419
    %6540 = vmatpush.bf16.msra.mxu0 %v6417
    %6541 = vmatpush.bf16.msra.mxu0 %v6415
    %6542 = vmatpush.bf16.msra.mxu0 %v6413
    %6543 = vmatpush.bf16.msra.mxu0 %v6411
    %6544 = vmatmul.bf16.gmra.mxu0 %v5848
    %v6545 = vpop.f32.mrf.mxu0
    %v6546 = vpop.f32.mrf.mxu0
    %v6547 = vadd.f32 0.0, %v6546
    %6548 = vmatmul.bf16.gmra.mxu0 %v5850
    %v6549 = vpop.f32.mrf.mxu0
    %v6550 = vpop.f32.mrf.mxu0
    %6551 = vmatmul.bf16.gmra.mxu0 %v5852
    %v6552 = vpop.f32.mrf.mxu0
    %v6553 = vadd.f32 0.0, %v6552
    %v6554 = vpop.f32.mrf.mxu0
    %6555 = vmatmul.bf16.gmra.mxu0 %v5854
    %v6556 = vpop.f32.mrf.mxu0
    %v6557 = vpop.f32.mrf.mxu0
    %v6558 = vadd.f32 0.0, %v6557
    %6559 = vmatmul.bf16.gmra.mxu0 %v5856
    %v6560 = vpop.f32.mrf.mxu0
    %v6561 = vpop.f32.mrf.mxu0
    %6562 = vmatmul.bf16.gmra.mxu0 %v5858
    %v6563 = vpop.f32.mrf.mxu0
    %v6564 = vadd.f32 0.0, %v6563
    %v6565 = vpop.f32.mrf.mxu0
    %6566 = vdwg.mxu0
    %6567 = vmatpush.bf16.msra.mxu0 %v6441
    %6568 = vmatpush.bf16.msra.mxu0 %v6439
    %6569 = vmatpush.bf16.msra.mxu0 %v6437
    %6570 = vmatpush.bf16.msra.mxu0 %v6435
    %6571 = vmatpush.bf16.msra.mxu0 %v6433
    %6572 = vmatpush.bf16.msra.mxu0 %v6431
    %6573 = vmatpush.bf16.msra.mxu0 %v6429
    %6574 = vmatpush.bf16.msra.mxu0 %v6427
    %6575 = vmatmul.bf16.gmra.mxu0 %v5849
    %v6576 = vpop.f32.mrf.mxu0
    %v6577 = vpop.f32.mrf.mxu0
    %v6578 = vadd.f32 %v6547, %v6577
    %6579 = vmatmul.bf16.gmra.mxu0 %v5851
    %v6580 = vpop.f32.mrf.mxu0
    %v6581 = vpop.f32.mrf.mxu0
    %6582 = vmatmul.bf16.gmra.mxu0 %v5853
    %v6583 = vpop.f32.mrf.mxu0
    %v6584 = vadd.f32 %v6553, %v6583
    %v6585 = vpop.f32.mrf.mxu0
    %6586 = vmatmul.bf16.gmra.mxu0 %v5855
    %v6587 = vpop.f32.mrf.mxu0
    %v6588 = vpop.f32.mrf.mxu0
    %v6589 = vadd.f32 %v6558, %v6588
    %6590 = vmatmul.bf16.gmra.mxu0 %v5857
    %v6591 = vpop.f32.mrf.mxu0
    %v6592 = vpop.f32.mrf.mxu0
    %6593 = vmatmul.bf16.gmra.mxu0 %v5859
    %v6594 = vpop.f32.mrf.mxu0
    %v6595 = vadd.f32 %v6564, %v6594
    %v6596 = vpop.f32.mrf.mxu0
    %6597 = vdwg.mxu0
    %v6606 = vrot.slane %v6516, 1
    %v6607 = vrot.slane %v6578, 1
    %v6608 = vrot.slane %v6522, 1
    %v6609 = vrot.slane %v6584, 1
    %v6610 = vrot.slane %v6527, 1
    %v6611 = vrot.slane %v6589, 1
    %v6612 = vrot.slane %v6533, 1
    %v6613 = vrot.slane %v6595, 1
    %v6622 = vadd.f32 %v6265, %v6606
    %v6623 = vadd.f32 %v6266, %v6607
    %v6624 = vadd.f32 %v6267, %v6606
    %v6625 = vadd.f32 %v6268, %v6607
    %v6626 = vadd.f32 %v6269, %v6608
    %v6627 = vadd.f32 %v6270, %v6609
    %v6628 = vadd.f32 %v6271, %v6608
    %v6629 = vadd.f32 %v6272, %v6609
    %v6630 = vadd.f32 %v6273, %v6610
    %v6631 = vadd.f32 %v6274, %v6611
    %v6632 = vadd.f32 %v6275, %v6610
    %v6633 = vadd.f32 %v6276, %v6611
    %v6634 = vadd.f32 %v6277, %v6612
    %v6635 = vadd.f32 %v6278, %v6613
    %v6636 = vadd.f32 %v6279, %v6612
    %v6637 = vadd.f32 %v6280, %v6613
    %s6638 = scalar_lea.vmem [#allocation11], 512
    %v6639 = vld [vmem:[%s6638] sm:$0xff]
    %v6640 = vld [vmem:[%s6638 + $0x8] sm:$0xff]
    %v6641 = vld [vmem:[%s6638 + $0x10] sm:$0xff]
    %v6642 = vld [vmem:[%s6638 + $0x18] sm:$0xff]
    %v6643 = vld [vmem:[%s6638 + $0x20] sm:$0xff]
    %v6644 = vld [vmem:[%s6638 + $0x28] sm:$0xff]
    %v6645 = vld [vmem:[%s6638 + $0x30] sm:$0xff]
    %v6646 = vld [vmem:[%s6638 + $0x38] sm:$0xff]
    %v6647 = vld [vmem:[%s6638 + $0x40] sm:$0xff]
    %v6648 = vld [vmem:[%s6638 + $0x48] sm:$0xff]
    %v6649 = vld [vmem:[%s6638 + $0x50] sm:$0xff]
    %v6650 = vld [vmem:[%s6638 + $0x58] sm:$0xff]
    %v6651 = vld [vmem:[%s6638 + $0x60] sm:$0xff]
    %v6652 = vld [vmem:[%s6638 + $0x68] sm:$0xff]
    %v6653 = vld [vmem:[%s6638 + $0x70] sm:$0xff]
    %v6654 = vld [vmem:[%s6638 + $0x78] sm:$0xff]
    %v6655 = vld [vmem:[%s6638 + $0x80] sm:$0xff]
    %v6656 = vld [vmem:[%s6638 + $0x88] sm:$0xff]
    %v6657 = vld [vmem:[%s6638 + $0x90] sm:$0xff]
    %v6658 = vld [vmem:[%s6638 + $0x98] sm:$0xff]
    %v6659 = vld [vmem:[%s6638 + $0xa0] sm:$0xff]
    %v6660 = vld [vmem:[%s6638 + $0xa8] sm:$0xff]
    %v6661 = vld [vmem:[%s6638 + $0xb0] sm:$0xff]
    %v6662 = vld [vmem:[%s6638 + $0xb8] sm:$0xff]
    %v6663 = vld [vmem:[%s6638 + $0xc0] sm:$0xff]
    %v6664 = vld [vmem:[%s6638 + $0xc8] sm:$0xff]
    %v6665 = vld [vmem:[%s6638 + $0xd0] sm:$0xff]
    %v6666 = vld [vmem:[%s6638 + $0xd8] sm:$0xff]
    %v6667 = vld [vmem:[%s6638 + $0xe0] sm:$0xff]
    %v6668 = vld [vmem:[%s6638 + $0xe8] sm:$0xff]
    %v6669 = vld [vmem:[%s6638 + $0xf0] sm:$0xff]
    %v6670 = vld [vmem:[%s6638 + $0xf8] sm:$0xff]
    %v6703 = vunpack.c.l.b16 %v6639
    %v6704 = vunpack.c.h.b16 %v6639
    %v6705 = vunpack.c.l.b16 %v6640
    %v6706 = vunpack.c.h.b16 %v6640
    %v6707 = vunpack.c.l.b16 %v6641
    %v6708 = vunpack.c.h.b16 %v6641
    %v6709 = vunpack.c.l.b16 %v6642
    %v6710 = vunpack.c.h.b16 %v6642
    %v6711 = vunpack.c.l.b16 %v6643
    %v6712 = vunpack.c.h.b16 %v6643
    %v6713 = vunpack.c.l.b16 %v6644
    %v6714 = vunpack.c.h.b16 %v6644
    %v6715 = vunpack.c.l.b16 %v6645
    %v6716 = vunpack.c.h.b16 %v6645
    %v6717 = vunpack.c.l.b16 %v6646
    %v6718 = vunpack.c.h.b16 %v6646
    %v6719 = vunpack.c.l.b16 %v6647
    %v6720 = vunpack.c.h.b16 %v6647
    %v6721 = vunpack.c.l.b16 %v6648
    %v6722 = vunpack.c.h.b16 %v6648
    %v6723 = vunpack.c.l.b16 %v6649
    %v6724 = vunpack.c.h.b16 %v6649
    %v6725 = vunpack.c.l.b16 %v6650
    %v6726 = vunpack.c.h.b16 %v6650
    %v6727 = vunpack.c.l.b16 %v6651
    %v6728 = vunpack.c.h.b16 %v6651
    %v6729 = vunpack.c.l.b16 %v6652
    %v6730 = vunpack.c.h.b16 %v6652
    %v6731 = vunpack.c.l.b16 %v6653
    %v6732 = vunpack.c.h.b16 %v6653
    %v6733 = vunpack.c.l.b16 %v6654
    %v6734 = vunpack.c.h.b16 %v6654
    %v6735 = vunpack.c.l.b16 %v6655
    %v6736 = vunpack.c.h.b16 %v6655
    %v6737 = vunpack.c.l.b16 %v6656
    %v6738 = vunpack.c.h.b16 %v6656
    %v6739 = vunpack.c.l.b16 %v6657
    %v6740 = vunpack.c.h.b16 %v6657
    %v6741 = vunpack.c.l.b16 %v6658
    %v6742 = vunpack.c.h.b16 %v6658
    %v6743 = vunpack.c.l.b16 %v6659
    %v6744 = vunpack.c.h.b16 %v6659
    %v6745 = vunpack.c.l.b16 %v6660
    %v6746 = vunpack.c.h.b16 %v6660
    %v6747 = vunpack.c.l.b16 %v6661
    %v6748 = vunpack.c.h.b16 %v6661
    %v6749 = vunpack.c.l.b16 %v6662
    %v6750 = vunpack.c.h.b16 %v6662
    %v6751 = vunpack.c.l.b16 %v6663
    %v6752 = vunpack.c.h.b16 %v6663
    %v6753 = vunpack.c.l.b16 %v6664
    %v6754 = vunpack.c.h.b16 %v6664
    %v6755 = vunpack.c.l.b16 %v6665
    %v6756 = vunpack.c.h.b16 %v6665
    %v6757 = vunpack.c.l.b16 %v6666
    %v6758 = vunpack.c.h.b16 %v6666
    %v6759 = vunpack.c.l.b16 %v6667
    %v6760 = vunpack.c.h.b16 %v6667
    %v6761 = vunpack.c.l.b16 %v6668
    %v6762 = vunpack.c.h.b16 %v6668
    %v6763 = vunpack.c.l.b16 %v6669
    %v6764 = vunpack.c.h.b16 %v6669
    %v6765 = vunpack.c.l.b16 %v6670
    %v6766 = vunpack.c.h.b16 %v6670
    %v6767 = vpack.c.b16 %v6705, %v6703
    %v6768 = vpack.c.b16 %v6706, %v6704
    %v6769 = vpack.c.b16 %v6709, %v6707
    %v6770 = vpack.c.b16 %v6710, %v6708
    %v6771 = vpack.c.b16 %v6713, %v6711
    %v6772 = vpack.c.b16 %v6714, %v6712
    %v6773 = vpack.c.b16 %v6717, %v6715
    %v6774 = vpack.c.b16 %v6718, %v6716
    %v6775 = vpack.c.b16 %v6721, %v6719
    %v6776 = vpack.c.b16 %v6722, %v6720
    %v6777 = vpack.c.b16 %v6725, %v6723
    %v6778 = vpack.c.b16 %v6726, %v6724
    %v6779 = vpack.c.b16 %v6729, %v6727
    %v6780 = vpack.c.b16 %v6730, %v6728
    %v6781 = vpack.c.b16 %v6733, %v6731
    %v6782 = vpack.c.b16 %v6734, %v6732
    %v6783 = vpack.c.b16 %v6737, %v6735
    %v6784 = vpack.c.b16 %v6738, %v6736
    %v6785 = vpack.c.b16 %v6741, %v6739
    %v6786 = vpack.c.b16 %v6742, %v6740
    %v6787 = vpack.c.b16 %v6745, %v6743
    %v6788 = vpack.c.b16 %v6746, %v6744
    %v6789 = vpack.c.b16 %v6749, %v6747
    %v6790 = vpack.c.b16 %v6750, %v6748
    %v6791 = vpack.c.b16 %v6753, %v6751
    %v6792 = vpack.c.b16 %v6754, %v6752
    %v6793 = vpack.c.b16 %v6757, %v6755
    %v6794 = vpack.c.b16 %v6758, %v6756
    %v6795 = vpack.c.b16 %v6761, %v6759
    %v6796 = vpack.c.b16 %v6762, %v6760
    %v6797 = vpack.c.b16 %v6765, %v6763
    %v6798 = vpack.c.b16 %v6766, %v6764
    %6831 = vmatpush.bf16.msra.mxu0 %v6781
    %6832 = vmatpush.bf16.msra.mxu0 %v6779
    %6833 = vmatpush.bf16.msra.mxu0 %v6777
    %6834 = vmatpush.bf16.msra.mxu0 %v6775
    %6835 = vmatpush.bf16.msra.mxu0 %v6773
    %6836 = vmatpush.bf16.msra.mxu0 %v6771
    %6837 = vmatpush.bf16.msra.mxu0 %v6769
    %6838 = vmatpush.bf16.msra.mxu0 %v6767
    %6839 = vmatmul.bf16.gmra.mxu0 %v5848
    %v6840 = vpop.f32.mrf.mxu0
    %v6841 = vpop.f32.mrf.mxu0
    %v6842 = vadd.f32 0.0, %v6841
    %6843 = vmatmul.bf16.gmra.mxu0 %v5850
    %v6844 = vpop.f32.mrf.mxu0
    %v6845 = vpop.f32.mrf.mxu0
    %6846 = vmatmul.bf16.gmra.mxu0 %v5852
    %v6847 = vpop.f32.mrf.mxu0
    %v6848 = vadd.f32 0.0, %v6847
    %v6849 = vpop.f32.mrf.mxu0
    %6850 = vmatmul.bf16.gmra.mxu0 %v5854
    %v6851 = vpop.f32.mrf.mxu0
    %v6852 = vpop.f32.mrf.mxu0
    %v6853 = vadd.f32 0.0, %v6852
    %6854 = vmatmul.bf16.gmra.mxu0 %v5856
    %v6855 = vpop.f32.mrf.mxu0
    %v6856 = vpop.f32.mrf.mxu0
    %6857 = vmatmul.bf16.gmra.mxu0 %v5858
    %v6858 = vpop.f32.mrf.mxu0
    %v6859 = vadd.f32 0.0, %v6858
    %v6860 = vpop.f32.mrf.mxu0
    %6861 = vdwg.mxu0
    %6862 = vmatpush.bf16.msra.mxu0 %v6797
    %6863 = vmatpush.bf16.msra.mxu0 %v6795
    %6864 = vmatpush.bf16.msra.mxu0 %v6793
    %6865 = vmatpush.bf16.msra.mxu0 %v6791
    %6866 = vmatpush.bf16.msra.mxu0 %v6789
    %6867 = vmatpush.bf16.msra.mxu0 %v6787
    %6868 = vmatpush.bf16.msra.mxu0 %v6785
    %6869 = vmatpush.bf16.msra.mxu0 %v6783
    %6870 = vmatmul.bf16.gmra.mxu0 %v5849
    %v6871 = vpop.f32.mrf.mxu0
    %v6872 = vpop.f32.mrf.mxu0
    %v6873 = vadd.f32 %v6842, %v6872
    %6874 = vmatmul.bf16.gmra.mxu0 %v5851
    %v6875 = vpop.f32.mrf.mxu0
    %v6876 = vpop.f32.mrf.mxu0
    %6877 = vmatmul.bf16.gmra.mxu0 %v5853
    %v6878 = vpop.f32.mrf.mxu0
    %v6879 = vadd.f32 %v6848, %v6878
    %v6880 = vpop.f32.mrf.mxu0
    %6881 = vmatmul.bf16.gmra.mxu0 %v5855
    %v6882 = vpop.f32.mrf.mxu0
    %v6883 = vpop.f32.mrf.mxu0
    %v6884 = vadd.f32 %v6853, %v6883
    %6885 = vmatmul.bf16.gmra.mxu0 %v5857
    %v6886 = vpop.f32.mrf.mxu0
    %v6887 = vpop.f32.mrf.mxu0
    %6888 = vmatmul.bf16.gmra.mxu0 %v5859
    %v6889 = vpop.f32.mrf.mxu0
    %v6890 = vadd.f32 %v6859, %v6889
    %v6891 = vpop.f32.mrf.mxu0
    %6892 = vdwg.mxu0
    %6893 = vmatpush.bf16.msra.mxu0 %v6782
    %6894 = vmatpush.bf16.msra.mxu0 %v6780
    %6895 = vmatpush.bf16.msra.mxu0 %v6778
    %6896 = vmatpush.bf16.msra.mxu0 %v6776
    %6897 = vmatpush.bf16.msra.mxu0 %v6774
    %6898 = vmatpush.bf16.msra.mxu0 %v6772
    %6899 = vmatpush.bf16.msra.mxu0 %v6770
    %6900 = vmatpush.bf16.msra.mxu0 %v6768
    %6901 = vmatmul.bf16.gmra.mxu0 %v5848
    %v6902 = vpop.f32.mrf.mxu0
    %v6903 = vpop.f32.mrf.mxu0
    %v6904 = vadd.f32 0.0, %v6903
    %6905 = vmatmul.bf16.gmra.mxu0 %v5850
    %v6906 = vpop.f32.mrf.mxu0
    %v6907 = vpop.f32.mrf.mxu0
    %6908 = vmatmul.bf16.gmra.mxu0 %v5852
    %v6909 = vpop.f32.mrf.mxu0
    %v6910 = vadd.f32 0.0, %v6909
    %v6911 = vpop.f32.mrf.mxu0
    %6912 = vmatmul.bf16.gmra.mxu0 %v5854
    %v6913 = vpop.f32.mrf.mxu0
    %v6914 = vpop.f32.mrf.mxu0
    %v6915 = vadd.f32 0.0, %v6914
    %6916 = vmatmul.bf16.gmra.mxu0 %v5856
    %v6917 = vpop.f32.mrf.mxu0
    %v6918 = vpop.f32.mrf.mxu0
    %6919 = vmatmul.bf16.gmra.mxu0 %v5858
    %v6920 = vpop.f32.mrf.mxu0
    %v6921 = vadd.f32 0.0, %v6920
    %v6922 = vpop.f32.mrf.mxu0
    %6923 = vdwg.mxu0
    %6924 = vmatpush.bf16.msra.mxu0 %v6798
    %6925 = vmatpush.bf16.msra.mxu0 %v6796
    %6926 = vmatpush.bf16.msra.mxu0 %v6794
    %6927 = vmatpush.bf16.msra.mxu0 %v6792
    %6928 = vmatpush.bf16.msra.mxu0 %v6790
    %6929 = vmatpush.bf16.msra.mxu0 %v6788
    %6930 = vmatpush.bf16.msra.mxu0 %v6786
    %6931 = vmatpush.bf16.msra.mxu0 %v6784
    %6932 = vmatmul.bf16.gmra.mxu0 %v5849
    %v6933 = vpop.f32.mrf.mxu0
    %v6934 = vpop.f32.mrf.mxu0
    %v6935 = vadd.f32 %v6904, %v6934
    %6936 = vmatmul.bf16.gmra.mxu0 %v5851
    %v6937 = vpop.f32.mrf.mxu0
    %v6938 = vpop.f32.mrf.mxu0
    %6939 = vmatmul.bf16.gmra.mxu0 %v5853
    %v6940 = vpop.f32.mrf.mxu0
    %v6941 = vadd.f32 %v6910, %v6940
    %v6942 = vpop.f32.mrf.mxu0
    %6943 = vmatmul.bf16.gmra.mxu0 %v5855
    %v6944 = vpop.f32.mrf.mxu0
    %v6945 = vpop.f32.mrf.mxu0
    %v6946 = vadd.f32 %v6915, %v6945
    %6947 = vmatmul.bf16.gmra.mxu0 %v5857
    %v6948 = vpop.f32.mrf.mxu0
    %v6949 = vpop.f32.mrf.mxu0
    %6950 = vmatmul.bf16.gmra.mxu0 %v5859
    %v6951 = vpop.f32.mrf.mxu0
    %v6952 = vadd.f32 %v6921, %v6951
    %v6953 = vpop.f32.mrf.mxu0
    %6954 = vdwg.mxu0
    %v6963 = vrot.slane %v6873, 2
    %v6964 = vrot.slane %v6935, 2
    %v6965 = vrot.slane %v6879, 2
    %v6966 = vrot.slane %v6941, 2
    %v6967 = vrot.slane %v6884, 2
    %v6968 = vrot.slane %v6946, 2
    %v6969 = vrot.slane %v6890, 2
    %v6970 = vrot.slane %v6952, 2
    %v6979 = vadd.f32 %v6622, %v6963
    %v6980 = vadd.f32 %v6623, %v6964
    %v6981 = vadd.f32 %v6624, %v6963
    %v6982 = vadd.f32 %v6625, %v6964
    %v6983 = vadd.f32 %v6626, %v6965
    %v6984 = vadd.f32 %v6627, %v6966
    %v6985 = vadd.f32 %v6628, %v6965
    %v6986 = vadd.f32 %v6629, %v6966
    %v6987 = vadd.f32 %v6630, %v6967
    %v6988 = vadd.f32 %v6631, %v6968
    %v6989 = vadd.f32 %v6632, %v6967
    %v6990 = vadd.f32 %v6633, %v6968
    %v6991 = vadd.f32 %v6634, %v6969
    %v6992 = vadd.f32 %v6635, %v6970
    %v6993 = vadd.f32 %v6636, %v6969
    %v6994 = vadd.f32 %v6637, %v6970
    %s6995 = scalar_lea.vmem [#allocation11], 768
    %v6996 = vld [vmem:[%s6995] sm:$0xff]
    %v6997 = vld [vmem:[%s6995 + $0x8] sm:$0xff]
    %v6998 = vld [vmem:[%s6995 + $0x10] sm:$0xff]
    %v6999 = vld [vmem:[%s6995 + $0x18] sm:$0xff]
    %v7000 = vld [vmem:[%s6995 + $0x20] sm:$0xff]
    %v7001 = vld [vmem:[%s6995 + $0x28] sm:$0xff]
    %v7002 = vld [vmem:[%s6995 + $0x30] sm:$0xff]
    %v7003 = vld [vmem:[%s6995 + $0x38] sm:$0xff]
    %v7004 = vld [vmem:[%s6995 + $0x40] sm:$0xff]
    %v7005 = vld [vmem:[%s6995 + $0x48] sm:$0xff]
    %v7006 = vld [vmem:[%s6995 + $0x50] sm:$0xff]
    %v7007 = vld [vmem:[%s6995 + $0x58] sm:$0xff]
    %v7008 = vld [vmem:[%s6995 + $0x60] sm:$0xff]
    %v7009 = vld [vmem:[%s6995 + $0x68] sm:$0xff]
    %v7010 = vld [vmem:[%s6995 + $0x70] sm:$0xff]
    %v7011 = vld [vmem:[%s6995 + $0x78] sm:$0xff]
    %v7012 = vld [vmem:[%s6995 + $0x80] sm:$0xff]
    %v7013 = vld [vmem:[%s6995 + $0x88] sm:$0xff]
    %v7014 = vld [vmem:[%s6995 + $0x90] sm:$0xff]
    %v7015 = vld [vmem:[%s6995 + $0x98] sm:$0xff]
    %v7016 = vld [vmem:[%s6995 + $0xa0] sm:$0xff]
    %v7017 = vld [vmem:[%s6995 + $0xa8] sm:$0xff]
    %v7018 = vld [vmem:[%s6995 + $0xb0] sm:$0xff]
    %v7019 = vld [vmem:[%s6995 + $0xb8] sm:$0xff]
    %v7020 = vld [vmem:[%s6995 + $0xc0] sm:$0xff]
    %v7021 = vld [vmem:[%s6995 + $0xc8] sm:$0xff]
    %v7022 = vld [vmem:[%s6995 + $0xd0] sm:$0xff]
    %v7023 = vld [vmem:[%s6995 + $0xd8] sm:$0xff]
    %v7024 = vld [vmem:[%s6995 + $0xe0] sm:$0xff]
    %v7025 = vld [vmem:[%s6995 + $0xe8] sm:$0xff]
    %v7026 = vld [vmem:[%s6995 + $0xf0] sm:$0xff]
    %v7027 = vld [vmem:[%s6995 + $0xf8] sm:$0xff]
    %v7060 = vunpack.c.l.b16 %v6996
    %v7061 = vunpack.c.h.b16 %v6996
    %v7062 = vunpack.c.l.b16 %v6997
    %v7063 = vunpack.c.h.b16 %v6997
    %v7064 = vunpack.c.l.b16 %v6998
    %v7065 = vunpack.c.h.b16 %v6998
    %v7066 = vunpack.c.l.b16 %v6999
    %v7067 = vunpack.c.h.b16 %v6999
    %v7068 = vunpack.c.l.b16 %v7000
    %v7069 = vunpack.c.h.b16 %v7000
    %v7070 = vunpack.c.l.b16 %v7001
    %v7071 = vunpack.c.h.b16 %v7001
    %v7072 = vunpack.c.l.b16 %v7002
    %v7073 = vunpack.c.h.b16 %v7002
    %v7074 = vunpack.c.l.b16 %v7003
    %v7075 = vunpack.c.h.b16 %v7003
    %v7076 = vunpack.c.l.b16 %v7004
    %v7077 = vunpack.c.h.b16 %v7004
    %v7078 = vunpack.c.l.b16 %v7005
    %v7079 = vunpack.c.h.b16 %v7005
    %v7080 = vunpack.c.l.b16 %v7006
    %v7081 = vunpack.c.h.b16 %v7006
    %v7082 = vunpack.c.l.b16 %v7007
    %v7083 = vunpack.c.h.b16 %v7007
    %v7084 = vunpack.c.l.b16 %v7008
    %v7085 = vunpack.c.h.b16 %v7008
    %v7086 = vunpack.c.l.b16 %v7009
    %v7087 = vunpack.c.h.b16 %v7009
    %v7088 = vunpack.c.l.b16 %v7010
    %v7089 = vunpack.c.h.b16 %v7010
    %v7090 = vunpack.c.l.b16 %v7011
    %v7091 = vunpack.c.h.b16 %v7011
    %v7092 = vunpack.c.l.b16 %v7012
    %v7093 = vunpack.c.h.b16 %v7012
    %v7094 = vunpack.c.l.b16 %v7013
    %v7095 = vunpack.c.h.b16 %v7013
    %v7096 = vunpack.c.l.b16 %v7014
    %v7097 = vunpack.c.h.b16 %v7014
    %v7098 = vunpack.c.l.b16 %v7015
    %v7099 = vunpack.c.h.b16 %v7015
    %v7100 = vunpack.c.l.b16 %v7016
    %v7101 = vunpack.c.h.b16 %v7016
    %v7102 = vunpack.c.l.b16 %v7017
    %v7103 = vunpack.c.h.b16 %v7017
    %v7104 = vunpack.c.l.b16 %v7018
    %v7105 = vunpack.c.h.b16 %v7018
    %v7106 = vunpack.c.l.b16 %v7019
    %v7107 = vunpack.c.h.b16 %v7019
    %v7108 = vunpack.c.l.b16 %v7020
    %v7109 = vunpack.c.h.b16 %v7020
    %v7110 = vunpack.c.l.b16 %v7021
    %v7111 = vunpack.c.h.b16 %v7021
    %v7112 = vunpack.c.l.b16 %v7022
    %v7113 = vunpack.c.h.b16 %v7022
    %v7114 = vunpack.c.l.b16 %v7023
    %v7115 = vunpack.c.h.b16 %v7023
    %v7116 = vunpack.c.l.b16 %v7024
    %v7117 = vunpack.c.h.b16 %v7024
    %v7118 = vunpack.c.l.b16 %v7025
    %v7119 = vunpack.c.h.b16 %v7025
    %v7120 = vunpack.c.l.b16 %v7026
    %v7121 = vunpack.c.h.b16 %v7026
    %v7122 = vunpack.c.l.b16 %v7027
    %v7123 = vunpack.c.h.b16 %v7027
    %v7124 = vpack.c.b16 %v7062, %v7060
    %v7125 = vpack.c.b16 %v7063, %v7061
    %v7126 = vpack.c.b16 %v7066, %v7064
    %v7127 = vpack.c.b16 %v7067, %v7065
    %v7128 = vpack.c.b16 %v7070, %v7068
    %v7129 = vpack.c.b16 %v7071, %v7069
    %v7130 = vpack.c.b16 %v7074, %v7072
    %v7131 = vpack.c.b16 %v7075, %v7073
    %v7132 = vpack.c.b16 %v7078, %v7076
    %v7133 = vpack.c.b16 %v7079, %v7077
    %v7134 = vpack.c.b16 %v7082, %v7080
    %v7135 = vpack.c.b16 %v7083, %v7081
    %v7136 = vpack.c.b16 %v7086, %v7084
    %v7137 = vpack.c.b16 %v7087, %v7085
    %v7138 = vpack.c.b16 %v7090, %v7088
    %v7139 = vpack.c.b16 %v7091, %v7089
    %v7140 = vpack.c.b16 %v7094, %v7092
    %v7141 = vpack.c.b16 %v7095, %v7093
    %v7142 = vpack.c.b16 %v7098, %v7096
    %v7143 = vpack.c.b16 %v7099, %v7097
    %v7144 = vpack.c.b16 %v7102, %v7100
    %v7145 = vpack.c.b16 %v7103, %v7101
    %v7146 = vpack.c.b16 %v7106, %v7104
    %v7147 = vpack.c.b16 %v7107, %v7105
    %v7148 = vpack.c.b16 %v7110, %v7108
    %v7149 = vpack.c.b16 %v7111, %v7109
    %v7150 = vpack.c.b16 %v7114, %v7112
    %v7151 = vpack.c.b16 %v7115, %v7113
    %v7152 = vpack.c.b16 %v7118, %v7116
    %v7153 = vpack.c.b16 %v7119, %v7117
    %v7154 = vpack.c.b16 %v7122, %v7120
    %v7155 = vpack.c.b16 %v7123, %v7121
    %7188 = vmatpush.bf16.msra.mxu0 %v7138
    %7189 = vmatpush.bf16.msra.mxu0 %v7136
    %7190 = vmatpush.bf16.msra.mxu0 %v7134
    %7191 = vmatpush.bf16.msra.mxu0 %v7132
    %7192 = vmatpush.bf16.msra.mxu0 %v7130
    %7193 = vmatpush.bf16.msra.mxu0 %v7128
    %7194 = vmatpush.bf16.msra.mxu0 %v7126
    %7195 = vmatpush.bf16.msra.mxu0 %v7124
    %7196 = vmatmul.bf16.gmra.mxu0 %v5884
    %v7197 = vpop.f32.mrf.mxu0
    %v7198 = vadd.f32 0.0, %v7197
    %v7199 = vpop.f32.mrf.mxu0
    %v7200 = vadd.f32 0.0, %v7199
    %7201 = vmatmul.bf16.gmra.mxu0 %v5886
    %v7202 = vpop.f32.mrf.mxu0
    %v7203 = vpop.f32.mrf.mxu0
    %v7204 = vadd.f32 0.0, %v7203
    %7205 = vmatmul.bf16.gmra.mxu0 %v5888
    %v7206 = vpop.f32.mrf.mxu0
    %v7207 = vadd.f32 0.0, %v7206
    %v7208 = vpop.f32.mrf.mxu0
    %7209 = vmatmul.bf16.gmra.mxu0 %v5890
    %v7210 = vpop.f32.mrf.mxu0
    %v7211 = vadd.f32 0.0, %v7210
    %v7212 = vpop.f32.mrf.mxu0
    %v7213 = vadd.f32 0.0, %v7212
    %7214 = vmatmul.bf16.gmra.mxu0 %v5892
    %v7215 = vpop.f32.mrf.mxu0
    %v7216 = vpop.f32.mrf.mxu0
    %v7217 = vadd.f32 0.0, %v7216
    %7218 = vmatmul.bf16.gmra.mxu0 %v5894
    %v7219 = vpop.f32.mrf.mxu0
    %v7220 = vadd.f32 0.0, %v7219
    %v7221 = vpop.f32.mrf.mxu0
    %7222 = vdwg.mxu0
    %7223 = vmatpush.bf16.msra.mxu0 %v7154
    %7224 = vmatpush.bf16.msra.mxu0 %v7152
    %7225 = vmatpush.bf16.msra.mxu0 %v7150
    %7226 = vmatpush.bf16.msra.mxu0 %v7148
    %7227 = vmatpush.bf16.msra.mxu0 %v7146
    %7228 = vmatpush.bf16.msra.mxu0 %v7144
    %7229 = vmatpush.bf16.msra.mxu0 %v7142
    %7230 = vmatpush.bf16.msra.mxu0 %v7140
    %7231 = vmatmul.bf16.gmra.mxu0 %v5885
    %v7232 = vpop.f32.mrf.mxu0
    %v7233 = vadd.f32 %v7198, %v7232
    %v7234 = vpop.f32.mrf.mxu0
    %v7235 = vadd.f32 %v7200, %v7234
    %7236 = vmatmul.bf16.gmra.mxu0 %v5887
    %v7237 = vpop.f32.mrf.mxu0
    %v7238 = vpop.f32.mrf.mxu0
    %v7239 = vadd.f32 %v7204, %v7238
    %7240 = vmatmul.bf16.gmra.mxu0 %v5889
    %v7241 = vpop.f32.mrf.mxu0
    %v7242 = vadd.f32 %v7207, %v7241
    %v7243 = vpop.f32.mrf.mxu0
    %7244 = vmatmul.bf16.gmra.mxu0 %v5891
    %v7245 = vpop.f32.mrf.mxu0
    %v7246 = vadd.f32 %v7211, %v7245
    %v7247 = vpop.f32.mrf.mxu0
    %v7248 = vadd.f32 %v7213, %v7247
    %7249 = vmatmul.bf16.gmra.mxu0 %v5893
    %v7250 = vpop.f32.mrf.mxu0
    %v7251 = vpop.f32.mrf.mxu0
    %v7252 = vadd.f32 %v7217, %v7251
    %7253 = vmatmul.bf16.gmra.mxu0 %v5895
    %v7254 = vpop.f32.mrf.mxu0
    %v7255 = vadd.f32 %v7220, %v7254
    %v7256 = vpop.f32.mrf.mxu0
    %7257 = vdwg.mxu0
    %7258 = vmatpush.bf16.msra.mxu0 %v7139
    %7259 = vmatpush.bf16.msra.mxu0 %v7137
    %7260 = vmatpush.bf16.msra.mxu0 %v7135
    %7261 = vmatpush.bf16.msra.mxu0 %v7133
    %7262 = vmatpush.bf16.msra.mxu0 %v7131
    %7263 = vmatpush.bf16.msra.mxu0 %v7129
    %7264 = vmatpush.bf16.msra.mxu0 %v7127
    %7265 = vmatpush.bf16.msra.mxu0 %v7125
    %7266 = vmatmul.bf16.gmra.mxu0 %v5884
    %v7267 = vpop.f32.mrf.mxu0
    %v7268 = vadd.f32 0.0, %v7267
    %v7269 = vpop.f32.mrf.mxu0
    %v7270 = vadd.f32 0.0, %v7269
    %7271 = vmatmul.bf16.gmra.mxu0 %v5886
    %v7272 = vpop.f32.mrf.mxu0
    %v7273 = vpop.f32.mrf.mxu0
    %v7274 = vadd.f32 0.0, %v7273
    %7275 = vmatmul.bf16.gmra.mxu0 %v5888
    %v7276 = vpop.f32.mrf.mxu0
    %v7277 = vadd.f32 0.0, %v7276
    %v7278 = vpop.f32.mrf.mxu0
    %7279 = vmatmul.bf16.gmra.mxu0 %v5890
    %v7280 = vpop.f32.mrf.mxu0
    %v7281 = vadd.f32 0.0, %v7280
    %v7282 = vpop.f32.mrf.mxu0
    %v7283 = vadd.f32 0.0, %v7282
    %7284 = vmatmul.bf16.gmra.mxu0 %v5892
    %v7285 = vpop.f32.mrf.mxu0
    %v7286 = vpop.f32.mrf.mxu0
    %v7287 = vadd.f32 0.0, %v7286
    %7288 = vmatmul.bf16.gmra.mxu0 %v5894
    %v7289 = vpop.f32.mrf.mxu0
    %v7290 = vadd.f32 0.0, %v7289
    %v7291 = vpop.f32.mrf.mxu0
    %7292 = vdwg.mxu0
    %7293 = vmatpush.bf16.msra.mxu0 %v7155
    %7294 = vmatpush.bf16.msra.mxu0 %v7153
    %7295 = vmatpush.bf16.msra.mxu0 %v7151
    %7296 = vmatpush.bf16.msra.mxu0 %v7149
    %7297 = vmatpush.bf16.msra.mxu0 %v7147
    %7298 = vmatpush.bf16.msra.mxu0 %v7145
    %7299 = vmatpush.bf16.msra.mxu0 %v7143
    %7300 = vmatpush.bf16.msra.mxu0 %v7141
    %7301 = vmatmul.bf16.gmra.mxu0 %v5885
    %v7302 = vpop.f32.mrf.mxu0
    %v7303 = vadd.f32 %v7268, %v7302
    %v7304 = vpop.f32.mrf.mxu0
    %v7305 = vadd.f32 %v7270, %v7304
    %7306 = vmatmul.bf16.gmra.mxu0 %v5887
    %v7307 = vpop.f32.mrf.mxu0
    %v7308 = vpop.f32.mrf.mxu0
    %v7309 = vadd.f32 %v7274, %v7308
    %7310 = vmatmul.bf16.gmra.mxu0 %v5889
    %v7311 = vpop.f32.mrf.mxu0
    %v7312 = vadd.f32 %v7277, %v7311
    %v7313 = vpop.f32.mrf.mxu0
    %7314 = vmatmul.bf16.gmra.mxu0 %v5891
    %v7315 = vpop.f32.mrf.mxu0
    %v7316 = vadd.f32 %v7281, %v7315
    %v7317 = vpop.f32.mrf.mxu0
    %v7318 = vadd.f32 %v7283, %v7317
    %7319 = vmatmul.bf16.gmra.mxu0 %v5893
    %v7320 = vpop.f32.mrf.mxu0
    %v7321 = vpop.f32.mrf.mxu0
    %v7322 = vadd.f32 %v7287, %v7321
    %7323 = vmatmul.bf16.gmra.mxu0 %v5895
    %v7324 = vpop.f32.mrf.mxu0
    %v7325 = vadd.f32 %v7290, %v7324
    %v7326 = vpop.f32.mrf.mxu0
    %7327 = vdwg.mxu0
    %v7328 = vadd.f32 %v6979, %v7233
    %v7329 = vadd.f32 %v6980, %v7303
    %v7330 = vadd.f32 %v6981, %v7235
    %v7331 = vadd.f32 %v6982, %v7305
    %v7332 = vadd.f32 %v6983, %v7239
    %v7333 = vadd.f32 %v6984, %v7309
    %v7334 = vadd.f32 %v6985, %v7242
    %v7335 = vadd.f32 %v6986, %v7312
    %v7336 = vadd.f32 %v6987, %v7246
    %v7337 = vadd.f32 %v6988, %v7316
    %v7338 = vadd.f32 %v6989, %v7248
    %v7339 = vadd.f32 %v6990, %v7318
    %v7340 = vadd.f32 %v6991, %v7252
    %v7341 = vadd.f32 %v6992, %v7322
    %v7342 = vadd.f32 %v6993, %v7255
    %v7343 = vadd.f32 %v6994, %v7325
    %s7344 = scalar_lea.vmem [#allocation11], 1024
    %v7345 = vld [vmem:[%s7344] sm:$0xff]
    %v7346 = vld [vmem:[%s7344 + $0x8] sm:$0xff]
    %v7347 = vld [vmem:[%s7344 + $0x10] sm:$0xff]
    %v7348 = vld [vmem:[%s7344 + $0x18] sm:$0xff]
    %v7349 = vld [vmem:[%s7344 + $0x20] sm:$0xff]
    %v7350 = vld [vmem:[%s7344 + $0x28] sm:$0xff]
    %v7351 = vld [vmem:[%s7344 + $0x30] sm:$0xff]
    %v7352 = vld [vmem:[%s7344 + $0x38] sm:$0xff]
    %v7353 = vld [vmem:[%s7344 + $0x40] sm:$0xff]
    %v7354 = vld [vmem:[%s7344 + $0x48] sm:$0xff]
    %v7355 = vld [vmem:[%s7344 + $0x50] sm:$0xff]
    %v7356 = vld [vmem:[%s7344 + $0x58] sm:$0xff]
    %v7357 = vld [vmem:[%s7344 + $0x60] sm:$0xff]
    %v7358 = vld [vmem:[%s7344 + $0x68] sm:$0xff]
    %v7359 = vld [vmem:[%s7344 + $0x70] sm:$0xff]
    %v7360 = vld [vmem:[%s7344 + $0x78] sm:$0xff]
    %v7361 = vld [vmem:[%s7344 + $0x80] sm:$0xff]
    %v7362 = vld [vmem:[%s7344 + $0x88] sm:$0xff]
    %v7363 = vld [vmem:[%s7344 + $0x90] sm:$0xff]
    %v7364 = vld [vmem:[%s7344 + $0x98] sm:$0xff]
    %v7365 = vld [vmem:[%s7344 + $0xa0] sm:$0xff]
    %v7366 = vld [vmem:[%s7344 + $0xa8] sm:$0xff]
    %v7367 = vld [vmem:[%s7344 + $0xb0] sm:$0xff]
    %v7368 = vld [vmem:[%s7344 + $0xb8] sm:$0xff]
    %v7369 = vld [vmem:[%s7344 + $0xc0] sm:$0xff]
    %v7370 = vld [vmem:[%s7344 + $0xc8] sm:$0xff]
    %v7371 = vld [vmem:[%s7344 + $0xd0] sm:$0xff]
    %v7372 = vld [vmem:[%s7344 + $0xd8] sm:$0xff]
    %v7373 = vld [vmem:[%s7344 + $0xe0] sm:$0xff]
    %v7374 = vld [vmem:[%s7344 + $0xe8] sm:$0xff]
    %v7375 = vld [vmem:[%s7344 + $0xf0] sm:$0xff]
    %v7376 = vld [vmem:[%s7344 + $0xf8] sm:$0xff]
    %v7409 = vunpack.c.l.b16 %v7345
    %v7410 = vunpack.c.h.b16 %v7345
    %v7411 = vunpack.c.l.b16 %v7346
    %v7412 = vunpack.c.h.b16 %v7346
    %v7413 = vunpack.c.l.b16 %v7347
    %v7414 = vunpack.c.h.b16 %v7347
    %v7415 = vunpack.c.l.b16 %v7348
    %v7416 = vunpack.c.h.b16 %v7348
    %v7417 = vunpack.c.l.b16 %v7349
    %v7418 = vunpack.c.h.b16 %v7349
    %v7419 = vunpack.c.l.b16 %v7350
    %v7420 = vunpack.c.h.b16 %v7350
    %v7421 = vunpack.c.l.b16 %v7351
    %v7422 = vunpack.c.h.b16 %v7351
    %v7423 = vunpack.c.l.b16 %v7352
    %v7424 = vunpack.c.h.b16 %v7352
    %v7425 = vunpack.c.l.b16 %v7353
    %v7426 = vunpack.c.h.b16 %v7353
    %v7427 = vunpack.c.l.b16 %v7354
    %v7428 = vunpack.c.h.b16 %v7354
    %v7429 = vunpack.c.l.b16 %v7355
    %v7430 = vunpack.c.h.b16 %v7355
    %v7431 = vunpack.c.l.b16 %v7356
    %v7432 = vunpack.c.h.b16 %v7356
    %v7433 = vunpack.c.l.b16 %v7357
    %v7434 = vunpack.c.h.b16 %v7357
    %v7435 = vunpack.c.l.b16 %v7358
    %v7436 = vunpack.c.h.b16 %v7358
    %v7437 = vunpack.c.l.b16 %v7359
    %v7438 = vunpack.c.h.b16 %v7359
    %v7439 = vunpack.c.l.b16 %v7360
    %v7440 = vunpack.c.h.b16 %v7360
    %v7441 = vunpack.c.l.b16 %v7361
    %v7442 = vunpack.c.h.b16 %v7361
    %v7443 = vunpack.c.l.b16 %v7362
    %v7444 = vunpack.c.h.b16 %v7362
    %v7445 = vunpack.c.l.b16 %v7363
    %v7446 = vunpack.c.h.b16 %v7363
    %v7447 = vunpack.c.l.b16 %v7364
    %v7448 = vunpack.c.h.b16 %v7364
    %v7449 = vunpack.c.l.b16 %v7365
    %v7450 = vunpack.c.h.b16 %v7365
    %v7451 = vunpack.c.l.b16 %v7366
    %v7452 = vunpack.c.h.b16 %v7366
    %v7453 = vunpack.c.l.b16 %v7367
    %v7454 = vunpack.c.h.b16 %v7367
    %v7455 = vunpack.c.l.b16 %v7368
    %v7456 = vunpack.c.h.b16 %v7368
    %v7457 = vunpack.c.l.b16 %v7369
    %v7458 = vunpack.c.h.b16 %v7369
    %v7459 = vunpack.c.l.b16 %v7370
    %v7460 = vunpack.c.h.b16 %v7370
    %v7461 = vunpack.c.l.b16 %v7371
    %v7462 = vunpack.c.h.b16 %v7371
    %v7463 = vunpack.c.l.b16 %v7372
    %v7464 = vunpack.c.h.b16 %v7372
    %v7465 = vunpack.c.l.b16 %v7373
    %v7466 = vunpack.c.h.b16 %v7373
    %v7467 = vunpack.c.l.b16 %v7374
    %v7468 = vunpack.c.h.b16 %v7374
    %v7469 = vunpack.c.l.b16 %v7375
    %v7470 = vunpack.c.h.b16 %v7375
    %v7471 = vunpack.c.l.b16 %v7376
    %v7472 = vunpack.c.h.b16 %v7376
    %v7473 = vpack.c.b16 %v7411, %v7409
    %v7474 = vpack.c.b16 %v7412, %v7410
    %v7475 = vpack.c.b16 %v7415, %v7413
    %v7476 = vpack.c.b16 %v7416, %v7414
    %v7477 = vpack.c.b16 %v7419, %v7417
    %v7478 = vpack.c.b16 %v7420, %v7418
    %v7479 = vpack.c.b16 %v7423, %v7421
    %v7480 = vpack.c.b16 %v7424, %v7422
    %v7481 = vpack.c.b16 %v7427, %v7425
    %v7482 = vpack.c.b16 %v7428, %v7426
    %v7483 = vpack.c.b16 %v7431, %v7429
    %v7484 = vpack.c.b16 %v7432, %v7430
    %v7485 = vpack.c.b16 %v7435, %v7433
    %v7486 = vpack.c.b16 %v7436, %v7434
    %v7487 = vpack.c.b16 %v7439, %v7437
    %v7488 = vpack.c.b16 %v7440, %v7438
    %v7489 = vpack.c.b16 %v7443, %v7441
    %v7490 = vpack.c.b16 %v7444, %v7442
    %v7491 = vpack.c.b16 %v7447, %v7445
    %v7492 = vpack.c.b16 %v7448, %v7446
    %v7493 = vpack.c.b16 %v7451, %v7449
    %v7494 = vpack.c.b16 %v7452, %v7450
    %v7495 = vpack.c.b16 %v7455, %v7453
    %v7496 = vpack.c.b16 %v7456, %v7454
    %v7497 = vpack.c.b16 %v7459, %v7457
    %v7498 = vpack.c.b16 %v7460, %v7458
    %v7499 = vpack.c.b16 %v7463, %v7461
    %v7500 = vpack.c.b16 %v7464, %v7462
    %v7501 = vpack.c.b16 %v7467, %v7465
    %v7502 = vpack.c.b16 %v7468, %v7466
    %v7503 = vpack.c.b16 %v7471, %v7469
    %v7504 = vpack.c.b16 %v7472, %v7470
    %7537 = vmatpush.bf16.msra.mxu0 %v7487
    %7538 = vmatpush.bf16.msra.mxu0 %v7485
    %7539 = vmatpush.bf16.msra.mxu0 %v7483
    %7540 = vmatpush.bf16.msra.mxu0 %v7481
    %7541 = vmatpush.bf16.msra.mxu0 %v7479
    %7542 = vmatpush.bf16.msra.mxu0 %v7477
    %7543 = vmatpush.bf16.msra.mxu0 %v7475
    %7544 = vmatpush.bf16.msra.mxu0 %v7473
    %7545 = vmatmul.bf16.gmra.mxu0 %v5884
    %v7546 = vpop.f32.mrf.mxu0
    %v7547 = vpop.f32.mrf.mxu0
    %v7548 = vadd.f32 0.0, %v7547
    %7549 = vmatmul.bf16.gmra.mxu0 %v5886
    %v7550 = vpop.f32.mrf.mxu0
    %v7551 = vpop.f32.mrf.mxu0
    %7552 = vmatmul.bf16.gmra.mxu0 %v5888
    %v7553 = vpop.f32.mrf.mxu0
    %v7554 = vadd.f32 0.0, %v7553
    %v7555 = vpop.f32.mrf.mxu0
    %7556 = vmatmul.bf16.gmra.mxu0 %v5890
    %v7557 = vpop.f32.mrf.mxu0
    %v7558 = vpop.f32.mrf.mxu0
    %v7559 = vadd.f32 0.0, %v7558
    %7560 = vmatmul.bf16.gmra.mxu0 %v5892
    %v7561 = vpop.f32.mrf.mxu0
    %v7562 = vpop.f32.mrf.mxu0
    %7563 = vmatmul.bf16.gmra.mxu0 %v5894
    %v7564 = vpop.f32.mrf.mxu0
    %v7565 = vadd.f32 0.0, %v7564
    %v7566 = vpop.f32.mrf.mxu0
    %7567 = vdwg.mxu0
    %7568 = vmatpush.bf16.msra.mxu0 %v7503
    %7569 = vmatpush.bf16.msra.mxu0 %v7501
    %7570 = vmatpush.bf16.msra.mxu0 %v7499
    %7571 = vmatpush.bf16.msra.mxu0 %v7497
    %7572 = vmatpush.bf16.msra.mxu0 %v7495
    %7573 = vmatpush.bf16.msra.mxu0 %v7493
    %7574 = vmatpush.bf16.msra.mxu0 %v7491
    %7575 = vmatpush.bf16.msra.mxu0 %v7489
    %7576 = vmatmul.bf16.gmra.mxu0 %v5885
    %v7577 = vpop.f32.mrf.mxu0
    %v7578 = vpop.f32.mrf.mxu0
    %v7579 = vadd.f32 %v7548, %v7578
    %7580 = vmatmul.bf16.gmra.mxu0 %v5887
    %v7581 = vpop.f32.mrf.mxu0
    %v7582 = vpop.f32.mrf.mxu0
    %7583 = vmatmul.bf16.gmra.mxu0 %v5889
    %v7584 = vpop.f32.mrf.mxu0
    %v7585 = vadd.f32 %v7554, %v7584
    %v7586 = vpop.f32.mrf.mxu0
    %7587 = vmatmul.bf16.gmra.mxu0 %v5891
    %v7588 = vpop.f32.mrf.mxu0
    %v7589 = vpop.f32.mrf.mxu0
    %v7590 = vadd.f32 %v7559, %v7589
    %7591 = vmatmul.bf16.gmra.mxu0 %v5893
    %v7592 = vpop.f32.mrf.mxu0
    %v7593 = vpop.f32.mrf.mxu0
    %7594 = vmatmul.bf16.gmra.mxu0 %v5895
    %v7595 = vpop.f32.mrf.mxu0
    %v7596 = vadd.f32 %v7565, %v7595
    %v7597 = vpop.f32.mrf.mxu0
    %7598 = vdwg.mxu0
    %7599 = vmatpush.bf16.msra.mxu0 %v7488
    %7600 = vmatpush.bf16.msra.mxu0 %v7486
    %7601 = vmatpush.bf16.msra.mxu0 %v7484
    %7602 = vmatpush.bf16.msra.mxu0 %v7482
    %7603 = vmatpush.bf16.msra.mxu0 %v7480
    %7604 = vmatpush.bf16.msra.mxu0 %v7478
    %7605 = vmatpush.bf16.msra.mxu0 %v7476
    %7606 = vmatpush.bf16.msra.mxu0 %v7474
    %7607 = vmatmul.bf16.gmra.mxu0 %v5884
    %v7608 = vpop.f32.mrf.mxu0
    %v7609 = vpop.f32.mrf.mxu0
    %v7610 = vadd.f32 0.0, %v7609
    %7611 = vmatmul.bf16.gmra.mxu0 %v5886
    %v7612 = vpop.f32.mrf.mxu0
    %v7613 = vpop.f32.mrf.mxu0
    %7614 = vmatmul.bf16.gmra.mxu0 %v5888
    %v7615 = vpop.f32.mrf.mxu0
    %v7616 = vadd.f32 0.0, %v7615
    %v7617 = vpop.f32.mrf.mxu0
    %7618 = vmatmul.bf16.gmra.mxu0 %v5890
    %v7619 = vpop.f32.mrf.mxu0
    %v7620 = vpop.f32.mrf.mxu0
    %v7621 = vadd.f32 0.0, %v7620
    %7622 = vmatmul.bf16.gmra.mxu0 %v5892
    %v7623 = vpop.f32.mrf.mxu0
    %v7624 = vpop.f32.mrf.mxu0
    %7625 = vmatmul.bf16.gmra.mxu0 %v5894
    %v7626 = vpop.f32.mrf.mxu0
    %v7627 = vadd.f32 0.0, %v7626
    %v7628 = vpop.f32.mrf.mxu0
    %7629 = vdwg.mxu0
    %7630 = vmatpush.bf16.msra.mxu0 %v7504
    %7631 = vmatpush.bf16.msra.mxu0 %v7502
    %7632 = vmatpush.bf16.msra.mxu0 %v7500
    %7633 = vmatpush.bf16.msra.mxu0 %v7498
    %7634 = vmatpush.bf16.msra.mxu0 %v7496
    %7635 = vmatpush.bf16.msra.mxu0 %v7494
    %7636 = vmatpush.bf16.msra.mxu0 %v7492
    %7637 = vmatpush.bf16.msra.mxu0 %v7490
    %7638 = vmatmul.bf16.gmra.mxu0 %v5885
    %v7639 = vpop.f32.mrf.mxu0
    %v7640 = vpop.f32.mrf.mxu0
    %v7641 = vadd.f32 %v7610, %v7640
    %7642 = vmatmul.bf16.gmra.mxu0 %v5887
    %v7643 = vpop.f32.mrf.mxu0
    %v7644 = vpop.f32.mrf.mxu0
    %7645 = vmatmul.bf16.gmra.mxu0 %v5889
    %v7646 = vpop.f32.mrf.mxu0
    %v7647 = vadd.f32 %v7616, %v7646
    %v7648 = vpop.f32.mrf.mxu0
    %7649 = vmatmul.bf16.gmra.mxu0 %v5891
    %v7650 = vpop.f32.mrf.mxu0
    %v7651 = vpop.f32.mrf.mxu0
    %v7652 = vadd.f32 %v7621, %v7651
    %7653 = vmatmul.bf16.gmra.mxu0 %v5893
    %v7654 = vpop.f32.mrf.mxu0
    %v7655 = vpop.f32.mrf.mxu0
    %7656 = vmatmul.bf16.gmra.mxu0 %v5895
    %v7657 = vpop.f32.mrf.mxu0
    %v7658 = vadd.f32 %v7627, %v7657
    %v7659 = vpop.f32.mrf.mxu0
    %7660 = vdwg.mxu0
    %v7669 = vrot.slane %v7579, 1
    %v7670 = vrot.slane %v7641, 1
    %v7671 = vrot.slane %v7585, 1
    %v7672 = vrot.slane %v7647, 1
    %v7673 = vrot.slane %v7590, 1
    %v7674 = vrot.slane %v7652, 1
    %v7675 = vrot.slane %v7596, 1
    %v7676 = vrot.slane %v7658, 1
    %v7685 = vadd.f32 %v7328, %v7669
    %v7686 = vadd.f32 %v7329, %v7670
    %v7687 = vadd.f32 %v7330, %v7669
    %v7688 = vadd.f32 %v7331, %v7670
    %v7689 = vadd.f32 %v7332, %v7671
    %v7690 = vadd.f32 %v7333, %v7672
    %v7691 = vadd.f32 %v7334, %v7671
    %v7692 = vadd.f32 %v7335, %v7672
    %v7693 = vadd.f32 %v7336, %v7673
    %v7694 = vadd.f32 %v7337, %v7674
    %v7695 = vadd.f32 %v7338, %v7673
    %v7696 = vadd.f32 %v7339, %v7674
    %v7697 = vadd.f32 %v7340, %v7675
    %v7698 = vadd.f32 %v7341, %v7676
    %v7699 = vadd.f32 %v7342, %v7675
    %v7700 = vadd.f32 %v7343, %v7676
    %s7701 = scalar_lea.vmem [#allocation11], 1280
    %v7702 = vld [vmem:[%s7701] sm:$0xff]
    %v7703 = vld [vmem:[%s7701 + $0x8] sm:$0xff]
    %v7704 = vld [vmem:[%s7701 + $0x10] sm:$0xff]
    %v7705 = vld [vmem:[%s7701 + $0x18] sm:$0xff]
    %v7706 = vld [vmem:[%s7701 + $0x20] sm:$0xff]
    %v7707 = vld [vmem:[%s7701 + $0x28] sm:$0xff]
    %v7708 = vld [vmem:[%s7701 + $0x30] sm:$0xff]
    %v7709 = vld [vmem:[%s7701 + $0x38] sm:$0xff]
    %v7710 = vld [vmem:[%s7701 + $0x40] sm:$0xff]
    %v7711 = vld [vmem:[%s7701 + $0x48] sm:$0xff]
    %v7712 = vld [vmem:[%s7701 + $0x50] sm:$0xff]
    %v7713 = vld [vmem:[%s7701 + $0x58] sm:$0xff]
    %v7714 = vld [vmem:[%s7701 + $0x60] sm:$0xff]
    %v7715 = vld [vmem:[%s7701 + $0x68] sm:$0xff]
    %v7716 = vld [vmem:[%s7701 + $0x70] sm:$0xff]
    %v7717 = vld [vmem:[%s7701 + $0x78] sm:$0xff]
    %v7718 = vld [vmem:[%s7701 + $0x80] sm:$0xff]
    %v7719 = vld [vmem:[%s7701 + $0x88] sm:$0xff]
    %v7720 = vld [vmem:[%s7701 + $0x90] sm:$0xff]
    %v7721 = vld [vmem:[%s7701 + $0x98] sm:$0xff]
    %v7722 = vld [vmem:[%s7701 + $0xa0] sm:$0xff]
    %v7723 = vld [vmem:[%s7701 + $0xa8] sm:$0xff]
    %v7724 = vld [vmem:[%s7701 + $0xb0] sm:$0xff]
    %v7725 = vld [vmem:[%s7701 + $0xb8] sm:$0xff]
    %v7726 = vld [vmem:[%s7701 + $0xc0] sm:$0xff]
    %v7727 = vld [vmem:[%s7701 + $0xc8] sm:$0xff]
    %v7728 = vld [vmem:[%s7701 + $0xd0] sm:$0xff]
    %v7729 = vld [vmem:[%s7701 + $0xd8] sm:$0xff]
    %v7730 = vld [vmem:[%s7701 + $0xe0] sm:$0xff]
    %v7731 = vld [vmem:[%s7701 + $0xe8] sm:$0xff]
    %v7732 = vld [vmem:[%s7701 + $0xf0] sm:$0xff]
    %v7733 = vld [vmem:[%s7701 + $0xf8] sm:$0xff]
    %v7766 = vunpack.c.l.b16 %v7702
    %v7767 = vunpack.c.h.b16 %v7702
    %v7768 = vunpack.c.l.b16 %v7703
    %v7769 = vunpack.c.h.b16 %v7703
    %v7770 = vunpack.c.l.b16 %v7704
    %v7771 = vunpack.c.h.b16 %v7704
    %v7772 = vunpack.c.l.b16 %v7705
    %v7773 = vunpack.c.h.b16 %v7705
    %v7774 = vunpack.c.l.b16 %v7706
    %v7775 = vunpack.c.h.b16 %v7706
    %v7776 = vunpack.c.l.b16 %v7707
    %v7777 = vunpack.c.h.b16 %v7707
    %v7778 = vunpack.c.l.b16 %v7708
    %v7779 = vunpack.c.h.b16 %v7708
    %v7780 = vunpack.c.l.b16 %v7709
    %v7781 = vunpack.c.h.b16 %v7709
    %v7782 = vunpack.c.l.b16 %v7710
    %v7783 = vunpack.c.h.b16 %v7710
    %v7784 = vunpack.c.l.b16 %v7711
    %v7785 = vunpack.c.h.b16 %v7711
    %v7786 = vunpack.c.l.b16 %v7712
    %v7787 = vunpack.c.h.b16 %v7712
    %v7788 = vunpack.c.l.b16 %v7713
    %v7789 = vunpack.c.h.b16 %v7713
    %v7790 = vunpack.c.l.b16 %v7714
    %v7791 = vunpack.c.h.b16 %v7714
    %v7792 = vunpack.c.l.b16 %v7715
    %v7793 = vunpack.c.h.b16 %v7715
    %v7794 = vunpack.c.l.b16 %v7716
    %v7795 = vunpack.c.h.b16 %v7716
    %v7796 = vunpack.c.l.b16 %v7717
    %v7797 = vunpack.c.h.b16 %v7717
    %v7798 = vunpack.c.l.b16 %v7718
    %v7799 = vunpack.c.h.b16 %v7718
    %v7800 = vunpack.c.l.b16 %v7719
    %v7801 = vunpack.c.h.b16 %v7719
    %v7802 = vunpack.c.l.b16 %v7720
    %v7803 = vunpack.c.h.b16 %v7720
    %v7804 = vunpack.c.l.b16 %v7721
    %v7805 = vunpack.c.h.b16 %v7721
    %v7806 = vunpack.c.l.b16 %v7722
    %v7807 = vunpack.c.h.b16 %v7722
    %v7808 = vunpack.c.l.b16 %v7723
    %v7809 = vunpack.c.h.b16 %v7723
    %v7810 = vunpack.c.l.b16 %v7724
    %v7811 = vunpack.c.h.b16 %v7724
    %v7812 = vunpack.c.l.b16 %v7725
    %v7813 = vunpack.c.h.b16 %v7725
    %v7814 = vunpack.c.l.b16 %v7726
    %v7815 = vunpack.c.h.b16 %v7726
    %v7816 = vunpack.c.l.b16 %v7727
    %v7817 = vunpack.c.h.b16 %v7727
    %v7818 = vunpack.c.l.b16 %v7728
    %v7819 = vunpack.c.h.b16 %v7728
    %v7820 = vunpack.c.l.b16 %v7729
    %v7821 = vunpack.c.h.b16 %v7729
    %v7822 = vunpack.c.l.b16 %v7730
    %v7823 = vunpack.c.h.b16 %v7730
    %v7824 = vunpack.c.l.b16 %v7731
    %v7825 = vunpack.c.h.b16 %v7731
    %v7826 = vunpack.c.l.b16 %v7732
    %v7827 = vunpack.c.h.b16 %v7732
    %v7828 = vunpack.c.l.b16 %v7733
    %v7829 = vunpack.c.h.b16 %v7733
    %v7830 = vpack.c.b16 %v7768, %v7766
    %v7831 = vpack.c.b16 %v7769, %v7767
    %v7832 = vpack.c.b16 %v7772, %v7770
    %v7833 = vpack.c.b16 %v7773, %v7771
    %v7834 = vpack.c.b16 %v7776, %v7774
    %v7835 = vpack.c.b16 %v7777, %v7775
    %v7836 = vpack.c.b16 %v7780, %v7778
    %v7837 = vpack.c.b16 %v7781, %v7779
    %v7838 = vpack.c.b16 %v7784, %v7782
    %v7839 = vpack.c.b16 %v7785, %v7783
    %v7840 = vpack.c.b16 %v7788, %v7786
    %v7841 = vpack.c.b16 %v7789, %v7787
    %v7842 = vpack.c.b16 %v7792, %v7790
    %v7843 = vpack.c.b16 %v7793, %v7791
    %v7844 = vpack.c.b16 %v7796, %v7794
    %v7845 = vpack.c.b16 %v7797, %v7795
    %v7846 = vpack.c.b16 %v7800, %v7798
    %v7847 = vpack.c.b16 %v7801, %v7799
    %v7848 = vpack.c.b16 %v7804, %v7802
    %v7849 = vpack.c.b16 %v7805, %v7803
    %v7850 = vpack.c.b16 %v7808, %v7806
    %v7851 = vpack.c.b16 %v7809, %v7807
    %v7852 = vpack.c.b16 %v7812, %v7810
    %v7853 = vpack.c.b16 %v7813, %v7811
    %v7854 = vpack.c.b16 %v7816, %v7814
    %v7855 = vpack.c.b16 %v7817, %v7815
    %v7856 = vpack.c.b16 %v7820, %v7818
    %v7857 = vpack.c.b16 %v7821, %v7819
    %v7858 = vpack.c.b16 %v7824, %v7822
    %v7859 = vpack.c.b16 %v7825, %v7823
    %v7860 = vpack.c.b16 %v7828, %v7826
    %v7861 = vpack.c.b16 %v7829, %v7827
    %7894 = vmatpush.bf16.msra.mxu0 %v7844
    %7895 = vmatpush.bf16.msra.mxu0 %v7842
    %7896 = vmatpush.bf16.msra.mxu0 %v7840
    %7897 = vmatpush.bf16.msra.mxu0 %v7838
    %7898 = vmatpush.bf16.msra.mxu0 %v7836
    %7899 = vmatpush.bf16.msra.mxu0 %v7834
    %7900 = vmatpush.bf16.msra.mxu0 %v7832
    %7901 = vmatpush.bf16.msra.mxu0 %v7830
    %7902 = vmatmul.bf16.gmra.mxu0 %v5884
    %v7903 = vpop.f32.mrf.mxu0
    %v7904 = vpop.f32.mrf.mxu0
    %v7905 = vadd.f32 0.0, %v7904
    %7906 = vmatmul.bf16.gmra.mxu0 %v5886
    %v7907 = vpop.f32.mrf.mxu0
    %v7908 = vpop.f32.mrf.mxu0
    %7909 = vmatmul.bf16.gmra.mxu0 %v5888
    %v7910 = vpop.f32.mrf.mxu0
    %v7911 = vadd.f32 0.0, %v7910
    %v7912 = vpop.f32.mrf.mxu0
    %7913 = vmatmul.bf16.gmra.mxu0 %v5890
    %v7914 = vpop.f32.mrf.mxu0
    %v7915 = vpop.f32.mrf.mxu0
    %v7916 = vadd.f32 0.0, %v7915
    %7917 = vmatmul.bf16.gmra.mxu0 %v5892
    %v7918 = vpop.f32.mrf.mxu0
    %v7919 = vpop.f32.mrf.mxu0
    %7920 = vmatmul.bf16.gmra.mxu0 %v5894
    %v7921 = vpop.f32.mrf.mxu0
    %v7922 = vadd.f32 0.0, %v7921
    %v7923 = vpop.f32.mrf.mxu0
    %7924 = vdwg.mxu0
    %7925 = vmatpush.bf16.msra.mxu0 %v7860
    %7926 = vmatpush.bf16.msra.mxu0 %v7858
    %7927 = vmatpush.bf16.msra.mxu0 %v7856
    %7928 = vmatpush.bf16.msra.mxu0 %v7854
    %7929 = vmatpush.bf16.msra.mxu0 %v7852
    %7930 = vmatpush.bf16.msra.mxu0 %v7850
    %7931 = vmatpush.bf16.msra.mxu0 %v7848
    %7932 = vmatpush.bf16.msra.mxu0 %v7846
    %7933 = vmatmul.bf16.gmra.mxu0 %v5885
    %v7934 = vpop.f32.mrf.mxu0
    %v7935 = vpop.f32.mrf.mxu0
    %v7936 = vadd.f32 %v7905, %v7935
    %7937 = vmatmul.bf16.gmra.mxu0 %v5887
    %v7938 = vpop.f32.mrf.mxu0
    %v7939 = vpop.f32.mrf.mxu0
    %7940 = vmatmul.bf16.gmra.mxu0 %v5889
    %v7941 = vpop.f32.mrf.mxu0
    %v7942 = vadd.f32 %v7911, %v7941
    %v7943 = vpop.f32.mrf.mxu0
    %7944 = vmatmul.bf16.gmra.mxu0 %v5891
    %v7945 = vpop.f32.mrf.mxu0
    %v7946 = vpop.f32.mrf.mxu0
    %v7947 = vadd.f32 %v7916, %v7946
    %7948 = vmatmul.bf16.gmra.mxu0 %v5893
    %v7949 = vpop.f32.mrf.mxu0
    %v7950 = vpop.f32.mrf.mxu0
    %7951 = vmatmul.bf16.gmra.mxu0 %v5895
    %v7952 = vpop.f32.mrf.mxu0
    %v7953 = vadd.f32 %v7922, %v7952
    %v7954 = vpop.f32.mrf.mxu0
    %7955 = vdwg.mxu0
    %7956 = vmatpush.bf16.msra.mxu0 %v7845
    %7957 = vmatpush.bf16.msra.mxu0 %v7843
    %7958 = vmatpush.bf16.msra.mxu0 %v7841
    %7959 = vmatpush.bf16.msra.mxu0 %v7839
    %7960 = vmatpush.bf16.msra.mxu0 %v7837
    %7961 = vmatpush.bf16.msra.mxu0 %v7835
    %7962 = vmatpush.bf16.msra.mxu0 %v7833
    %7963 = vmatpush.bf16.msra.mxu0 %v7831
    %7964 = vmatmul.bf16.gmra.mxu0 %v5884
    %v7965 = vpop.f32.mrf.mxu0
    %v7966 = vpop.f32.mrf.mxu0
    %v7967 = vadd.f32 0.0, %v7966
    %7968 = vmatmul.bf16.gmra.mxu0 %v5886
    %v7969 = vpop.f32.mrf.mxu0
    %v7970 = vpop.f32.mrf.mxu0
    %7971 = vmatmul.bf16.gmra.mxu0 %v5888
    %v7972 = vpop.f32.mrf.mxu0
    %v7973 = vadd.f32 0.0, %v7972
    %v7974 = vpop.f32.mrf.mxu0
    %7975 = vmatmul.bf16.gmra.mxu0 %v5890
    %v7976 = vpop.f32.mrf.mxu0
    %v7977 = vpop.f32.mrf.mxu0
    %v7978 = vadd.f32 0.0, %v7977
    %7979 = vmatmul.bf16.gmra.mxu0 %v5892
    %v7980 = vpop.f32.mrf.mxu0
    %v7981 = vpop.f32.mrf.mxu0
    %7982 = vmatmul.bf16.gmra.mxu0 %v5894
    %v7983 = vpop.f32.mrf.mxu0
    %v7984 = vadd.f32 0.0, %v7983
    %v7985 = vpop.f32.mrf.mxu0
    %7986 = vdwg.mxu0
    %7987 = vmatpush.bf16.msra.mxu0 %v7861
    %7988 = vmatpush.bf16.msra.mxu0 %v7859
    %7989 = vmatpush.bf16.msra.mxu0 %v7857
    %7990 = vmatpush.bf16.msra.mxu0 %v7855
    %7991 = vmatpush.bf16.msra.mxu0 %v7853
    %7992 = vmatpush.bf16.msra.mxu0 %v7851
    %7993 = vmatpush.bf16.msra.mxu0 %v7849
    %7994 = vmatpush.bf16.msra.mxu0 %v7847
    %7995 = vmatmul.bf16.gmra.mxu0 %v5885
    %v7996 = vpop.f32.mrf.mxu0
    %v7997 = vpop.f32.mrf.mxu0
    %v7998 = vadd.f32 %v7967, %v7997
    %7999 = vmatmul.bf16.gmra.mxu0 %v5887
    %v8000 = vpop.f32.mrf.mxu0
    %v8001 = vpop.f32.mrf.mxu0
    %8002 = vmatmul.bf16.gmra.mxu0 %v5889
    %v8003 = vpop.f32.mrf.mxu0
    %v8004 = vadd.f32 %v7973, %v8003
    %v8005 = vpop.f32.mrf.mxu0
    %8006 = vmatmul.bf16.gmra.mxu0 %v5891
    %v8007 = vpop.f32.mrf.mxu0
    %v8008 = vpop.f32.mrf.mxu0
    %v8009 = vadd.f32 %v7978, %v8008
    %8010 = vmatmul.bf16.gmra.mxu0 %v5893
    %v8011 = vpop.f32.mrf.mxu0
    %v8012 = vpop.f32.mrf.mxu0
    %8013 = vmatmul.bf16.gmra.mxu0 %v5895
    %v8014 = vpop.f32.mrf.mxu0
    %v8015 = vadd.f32 %v7984, %v8014
    %v8016 = vpop.f32.mrf.mxu0
    %8017 = vdwg.mxu0
    %v8026 = vrot.slane %v7936, 2
    %v8027 = vrot.slane %v7998, 2
    %v8028 = vrot.slane %v7942, 2
    %v8029 = vrot.slane %v8004, 2
    %v8030 = vrot.slane %v7947, 2
    %v8031 = vrot.slane %v8009, 2
    %v8032 = vrot.slane %v7953, 2
    %v8033 = vrot.slane %v8015, 2
    %v8042 = vadd.f32 %v7685, %v8026
    %v8043 = vadd.f32 %v7686, %v8027
    %v8044 = vadd.f32 %v7687, %v8026
    %v8045 = vadd.f32 %v7688, %v8027
    %v8046 = vadd.f32 %v7689, %v8028
    %v8047 = vadd.f32 %v7690, %v8029
    %v8048 = vadd.f32 %v7691, %v8028
    %v8049 = vadd.f32 %v7692, %v8029
    %v8050 = vadd.f32 %v7693, %v8030
    %v8051 = vadd.f32 %v7694, %v8031
    %v8052 = vadd.f32 %v7695, %v8030
    %v8053 = vadd.f32 %v7696, %v8031
    %v8054 = vadd.f32 %v7697, %v8032
    %v8055 = vadd.f32 %v7698, %v8033
    %v8056 = vadd.f32 %v7699, %v8032
    %v8057 = vadd.f32 %v7700, %v8033
    %s8058 = scalar_lea.vmem [#allocation11], 1536
    %v8059 = vld [vmem:[%s8058] sm:$0xff]
    %v8060 = vld [vmem:[%s8058 + $0x8] sm:$0xff]
    %v8061 = vld [vmem:[%s8058 + $0x10] sm:$0xff]
    %v8062 = vld [vmem:[%s8058 + $0x18] sm:$0xff]
    %v8063 = vld [vmem:[%s8058 + $0x20] sm:$0xff]
    %v8064 = vld [vmem:[%s8058 + $0x28] sm:$0xff]
    %v8065 = vld [vmem:[%s8058 + $0x30] sm:$0xff]
    %v8066 = vld [vmem:[%s8058 + $0x38] sm:$0xff]
    %v8067 = vld [vmem:[%s8058 + $0x40] sm:$0xff]
    %v8068 = vld [vmem:[%s8058 + $0x48] sm:$0xff]
    %v8069 = vld [vmem:[%s8058 + $0x50] sm:$0xff]
    %v8070 = vld [vmem:[%s8058 + $0x58] sm:$0xff]
    %v8071 = vld [vmem:[%s8058 + $0x60] sm:$0xff]
    %v8072 = vld [vmem:[%s8058 + $0x68] sm:$0xff]
    %v8073 = vld [vmem:[%s8058 + $0x70] sm:$0xff]
    %v8074 = vld [vmem:[%s8058 + $0x78] sm:$0xff]
    %v8075 = vld [vmem:[%s8058 + $0x80] sm:$0xff]
    %v8076 = vld [vmem:[%s8058 + $0x88] sm:$0xff]
    %v8077 = vld [vmem:[%s8058 + $0x90] sm:$0xff]
    %v8078 = vld [vmem:[%s8058 + $0x98] sm:$0xff]
    %v8079 = vld [vmem:[%s8058 + $0xa0] sm:$0xff]
    %v8080 = vld [vmem:[%s8058 + $0xa8] sm:$0xff]
    %v8081 = vld [vmem:[%s8058 + $0xb0] sm:$0xff]
    %v8082 = vld [vmem:[%s8058 + $0xb8] sm:$0xff]
    %v8083 = vld [vmem:[%s8058 + $0xc0] sm:$0xff]
    %v8084 = vld [vmem:[%s8058 + $0xc8] sm:$0xff]
    %v8085 = vld [vmem:[%s8058 + $0xd0] sm:$0xff]
    %v8086 = vld [vmem:[%s8058 + $0xd8] sm:$0xff]
    %v8087 = vld [vmem:[%s8058 + $0xe0] sm:$0xff]
    %v8088 = vld [vmem:[%s8058 + $0xe8] sm:$0xff]
    %v8089 = vld [vmem:[%s8058 + $0xf0] sm:$0xff]
    %v8090 = vld [vmem:[%s8058 + $0xf8] sm:$0xff]
    %v8123 = vunpack.c.l.b16 %v8059
    %v8124 = vunpack.c.h.b16 %v8059
    %v8125 = vunpack.c.l.b16 %v8060
    %v8126 = vunpack.c.h.b16 %v8060
    %v8127 = vunpack.c.l.b16 %v8061
    %v8128 = vunpack.c.h.b16 %v8061
    %v8129 = vunpack.c.l.b16 %v8062
    %v8130 = vunpack.c.h.b16 %v8062
    %v8131 = vunpack.c.l.b16 %v8063
    %v8132 = vunpack.c.h.b16 %v8063
    %v8133 = vunpack.c.l.b16 %v8064
    %v8134 = vunpack.c.h.b16 %v8064
    %v8135 = vunpack.c.l.b16 %v8065
    %v8136 = vunpack.c.h.b16 %v8065
    %v8137 = vunpack.c.l.b16 %v8066
    %v8138 = vunpack.c.h.b16 %v8066
    %v8139 = vunpack.c.l.b16 %v8067
    %v8140 = vunpack.c.h.b16 %v8067
    %v8141 = vunpack.c.l.b16 %v8068
    %v8142 = vunpack.c.h.b16 %v8068
    %v8143 = vunpack.c.l.b16 %v8069
    %v8144 = vunpack.c.h.b16 %v8069
    %v8145 = vunpack.c.l.b16 %v8070
    %v8146 = vunpack.c.h.b16 %v8070
    %v8147 = vunpack.c.l.b16 %v8071
    %v8148 = vunpack.c.h.b16 %v8071
    %v8149 = vunpack.c.l.b16 %v8072
    %v8150 = vunpack.c.h.b16 %v8072
    %v8151 = vunpack.c.l.b16 %v8073
    %v8152 = vunpack.c.h.b16 %v8073
    %v8153 = vunpack.c.l.b16 %v8074
    %v8154 = vunpack.c.h.b16 %v8074
    %v8155 = vunpack.c.l.b16 %v8075
    %v8156 = vunpack.c.h.b16 %v8075
    %v8157 = vunpack.c.l.b16 %v8076
    %v8158 = vunpack.c.h.b16 %v8076
    %v8159 = vunpack.c.l.b16 %v8077
    %v8160 = vunpack.c.h.b16 %v8077
    %v8161 = vunpack.c.l.b16 %v8078
    %v8162 = vunpack.c.h.b16 %v8078
    %v8163 = vunpack.c.l.b16 %v8079
    %v8164 = vunpack.c.h.b16 %v8079
    %v8165 = vunpack.c.l.b16 %v8080
    %v8166 = vunpack.c.h.b16 %v8080
    %v8167 = vunpack.c.l.b16 %v8081
    %v8168 = vunpack.c.h.b16 %v8081
    %v8169 = vunpack.c.l.b16 %v8082
    %v8170 = vunpack.c.h.b16 %v8082
    %v8171 = vunpack.c.l.b16 %v8083
    %v8172 = vunpack.c.h.b16 %v8083
    %v8173 = vunpack.c.l.b16 %v8084
    %v8174 = vunpack.c.h.b16 %v8084
    %v8175 = vunpack.c.l.b16 %v8085
    %v8176 = vunpack.c.h.b16 %v8085
    %v8177 = vunpack.c.l.b16 %v8086
    %v8178 = vunpack.c.h.b16 %v8086
    %v8179 = vunpack.c.l.b16 %v8087
    %v8180 = vunpack.c.h.b16 %v8087
    %v8181 = vunpack.c.l.b16 %v8088
    %v8182 = vunpack.c.h.b16 %v8088
    %v8183 = vunpack.c.l.b16 %v8089
    %v8184 = vunpack.c.h.b16 %v8089
    %v8185 = vunpack.c.l.b16 %v8090
    %v8186 = vunpack.c.h.b16 %v8090
    %v8187 = vpack.c.b16 %v8125, %v8123
    %v8188 = vpack.c.b16 %v8126, %v8124
    %v8189 = vpack.c.b16 %v8129, %v8127
    %v8190 = vpack.c.b16 %v8130, %v8128
    %v8191 = vpack.c.b16 %v8133, %v8131
    %v8192 = vpack.c.b16 %v8134, %v8132
    %v8193 = vpack.c.b16 %v8137, %v8135
    %v8194 = vpack.c.b16 %v8138, %v8136
    %v8195 = vpack.c.b16 %v8141, %v8139
    %v8196 = vpack.c.b16 %v8142, %v8140
    %v8197 = vpack.c.b16 %v8145, %v8143
    %v8198 = vpack.c.b16 %v8146, %v8144
    %v8199 = vpack.c.b16 %v8149, %v8147
    %v8200 = vpack.c.b16 %v8150, %v8148
    %v8201 = vpack.c.b16 %v8153, %v8151
    %v8202 = vpack.c.b16 %v8154, %v8152
    %v8203 = vpack.c.b16 %v8157, %v8155
    %v8204 = vpack.c.b16 %v8158, %v8156
    %v8205 = vpack.c.b16 %v8161, %v8159
    %v8206 = vpack.c.b16 %v8162, %v8160
    %v8207 = vpack.c.b16 %v8165, %v8163
    %v8208 = vpack.c.b16 %v8166, %v8164
    %v8209 = vpack.c.b16 %v8169, %v8167
    %v8210 = vpack.c.b16 %v8170, %v8168
    %v8211 = vpack.c.b16 %v8173, %v8171
    %v8212 = vpack.c.b16 %v8174, %v8172
    %v8213 = vpack.c.b16 %v8177, %v8175
    %v8214 = vpack.c.b16 %v8178, %v8176
    %v8215 = vpack.c.b16 %v8181, %v8179
    %v8216 = vpack.c.b16 %v8182, %v8180
    %v8217 = vpack.c.b16 %v8185, %v8183
    %v8218 = vpack.c.b16 %v8186, %v8184
    %8251 = vmatpush.bf16.msra.mxu0 %v8201
    %8252 = vmatpush.bf16.msra.mxu0 %v8199
    %8253 = vmatpush.bf16.msra.mxu0 %v8197
    %8254 = vmatpush.bf16.msra.mxu0 %v8195
    %8255 = vmatpush.bf16.msra.mxu0 %v8193
    %8256 = vmatpush.bf16.msra.mxu0 %v8191
    %8257 = vmatpush.bf16.msra.mxu0 %v8189
    %8258 = vmatpush.bf16.msra.mxu0 %v8187
    %8259 = vmatmul.bf16.gmra.mxu0 %v5921
    %v8260 = vpop.f32.mrf.mxu0
    %v8261 = vadd.f32 0.0, %v8260
    %v8262 = vpop.f32.mrf.mxu0
    %v8263 = vadd.f32 0.0, %v8262
    %8264 = vmatmul.bf16.gmra.mxu0 %v5923
    %v8265 = vpop.f32.mrf.mxu0
    %v8266 = vpop.f32.mrf.mxu0
    %v8267 = vadd.f32 0.0, %v8266
    %8268 = vmatmul.bf16.gmra.mxu0 %v5925
    %v8269 = vpop.f32.mrf.mxu0
    %v8270 = vadd.f32 0.0, %v8269
    %v8271 = vpop.f32.mrf.mxu0
    %8272 = vmatmul.bf16.gmra.mxu0 %v5927
    %v8273 = vpop.f32.mrf.mxu0
    %v8274 = vadd.f32 0.0, %v8273
    %v8275 = vpop.f32.mrf.mxu0
    %v8276 = vadd.f32 0.0, %v8275
    %8277 = vmatmul.bf16.gmra.mxu0 %v5929
    %v8278 = vpop.f32.mrf.mxu0
    %v8279 = vpop.f32.mrf.mxu0
    %v8280 = vadd.f32 0.0, %v8279
    %8281 = vmatmul.bf16.gmra.mxu0 %v5931
    %v8282 = vpop.f32.mrf.mxu0
    %v8283 = vadd.f32 0.0, %v8282
    %v8284 = vpop.f32.mrf.mxu0
    %8285 = vdwg.mxu0
    %8286 = vmatpush.bf16.msra.mxu0 %v8217
    %8287 = vmatpush.bf16.msra.mxu0 %v8215
    %8288 = vmatpush.bf16.msra.mxu0 %v8213
    %8289 = vmatpush.bf16.msra.mxu0 %v8211
    %8290 = vmatpush.bf16.msra.mxu0 %v8209
    %8291 = vmatpush.bf16.msra.mxu0 %v8207
    %8292 = vmatpush.bf16.msra.mxu0 %v8205
    %8293 = vmatpush.bf16.msra.mxu0 %v8203
    %8294 = vmatmul.bf16.gmra.mxu0 %v5922
    %v8295 = vpop.f32.mrf.mxu0
    %v8296 = vadd.f32 %v8261, %v8295
    %v8297 = vpop.f32.mrf.mxu0
    %v8298 = vadd.f32 %v8263, %v8297
    %8299 = vmatmul.bf16.gmra.mxu0 %v5924
    %v8300 = vpop.f32.mrf.mxu0
    %v8301 = vpop.f32.mrf.mxu0
    %v8302 = vadd.f32 %v8267, %v8301
    %8303 = vmatmul.bf16.gmra.mxu0 %v5926
    %v8304 = vpop.f32.mrf.mxu0
    %v8305 = vadd.f32 %v8270, %v8304
    %v8306 = vpop.f32.mrf.mxu0
    %8307 = vmatmul.bf16.gmra.mxu0 %v5928
    %v8308 = vpop.f32.mrf.mxu0
    %v8309 = vadd.f32 %v8274, %v8308
    %v8310 = vpop.f32.mrf.mxu0
    %v8311 = vadd.f32 %v8276, %v8310
    %8312 = vmatmul.bf16.gmra.mxu0 %v5930
    %v8313 = vpop.f32.mrf.mxu0
    %v8314 = vpop.f32.mrf.mxu0
    %v8315 = vadd.f32 %v8280, %v8314
    %8316 = vmatmul.bf16.gmra.mxu0 %v5932
    %v8317 = vpop.f32.mrf.mxu0
    %v8318 = vadd.f32 %v8283, %v8317
    %v8319 = vpop.f32.mrf.mxu0
    %8320 = vdwg.mxu0
    %8321 = vmatpush.bf16.msra.mxu0 %v8202
    %8322 = vmatpush.bf16.msra.mxu0 %v8200
    %8323 = vmatpush.bf16.msra.mxu0 %v8198
    %8324 = vmatpush.bf16.msra.mxu0 %v8196
    %8325 = vmatpush.bf16.msra.mxu0 %v8194
    %8326 = vmatpush.bf16.msra.mxu0 %v8192
    %8327 = vmatpush.bf16.msra.mxu0 %v8190
    %8328 = vmatpush.bf16.msra.mxu0 %v8188
    %8329 = vmatmul.bf16.gmra.mxu0 %v5921
    %v8330 = vpop.f32.mrf.mxu0
    %v8331 = vadd.f32 0.0, %v8330
    %v8332 = vpop.f32.mrf.mxu0
    %v8333 = vadd.f32 0.0, %v8332
    %8334 = vmatmul.bf16.gmra.mxu0 %v5923
    %v8335 = vpop.f32.mrf.mxu0
    %v8336 = vpop.f32.mrf.mxu0
    %v8337 = vadd.f32 0.0, %v8336
    %8338 = vmatmul.bf16.gmra.mxu0 %v5925
    %v8339 = vpop.f32.mrf.mxu0
    %v8340 = vadd.f32 0.0, %v8339
    %v8341 = vpop.f32.mrf.mxu0
    %8342 = vmatmul.bf16.gmra.mxu0 %v5927
    %v8343 = vpop.f32.mrf.mxu0
    %v8344 = vadd.f32 0.0, %v8343
    %v8345 = vpop.f32.mrf.mxu0
    %v8346 = vadd.f32 0.0, %v8345
    %8347 = vmatmul.bf16.gmra.mxu0 %v5929
    %v8348 = vpop.f32.mrf.mxu0
    %v8349 = vpop.f32.mrf.mxu0
    %v8350 = vadd.f32 0.0, %v8349
    %8351 = vmatmul.bf16.gmra.mxu0 %v5931
    %v8352 = vpop.f32.mrf.mxu0
    %v8353 = vadd.f32 0.0, %v8352
    %v8354 = vpop.f32.mrf.mxu0
    %8355 = vdwg.mxu0
    %8356 = vmatpush.bf16.msra.mxu0 %v8218
    %8357 = vmatpush.bf16.msra.mxu0 %v8216
    %8358 = vmatpush.bf16.msra.mxu0 %v8214
    %8359 = vmatpush.bf16.msra.mxu0 %v8212
    %8360 = vmatpush.bf16.msra.mxu0 %v8210
    %8361 = vmatpush.bf16.msra.mxu0 %v8208
    %8362 = vmatpush.bf16.msra.mxu0 %v8206
    %8363 = vmatpush.bf16.msra.mxu0 %v8204
    %8364 = vmatmul.bf16.gmra.mxu0 %v5922
    %v8365 = vpop.f32.mrf.mxu0
    %v8366 = vadd.f32 %v8331, %v8365
    %v8367 = vpop.f32.mrf.mxu0
    %v8368 = vadd.f32 %v8333, %v8367
    %8369 = vmatmul.bf16.gmra.mxu0 %v5924
    %v8370 = vpop.f32.mrf.mxu0
    %v8371 = vpop.f32.mrf.mxu0
    %v8372 = vadd.f32 %v8337, %v8371
    %8373 = vmatmul.bf16.gmra.mxu0 %v5926
    %v8374 = vpop.f32.mrf.mxu0
    %v8375 = vadd.f32 %v8340, %v8374
    %v8376 = vpop.f32.mrf.mxu0
    %8377 = vmatmul.bf16.gmra.mxu0 %v5928
    %v8378 = vpop.f32.mrf.mxu0
    %v8379 = vadd.f32 %v8344, %v8378
    %v8380 = vpop.f32.mrf.mxu0
    %v8381 = vadd.f32 %v8346, %v8380
    %8382 = vmatmul.bf16.gmra.mxu0 %v5930
    %v8383 = vpop.f32.mrf.mxu0
    %v8384 = vpop.f32.mrf.mxu0
    %v8385 = vadd.f32 %v8350, %v8384
    %8386 = vmatmul.bf16.gmra.mxu0 %v5932
    %v8387 = vpop.f32.mrf.mxu0
    %v8388 = vadd.f32 %v8353, %v8387
    %v8389 = vpop.f32.mrf.mxu0
    %8390 = vdwg.mxu0
    %v8391 = vadd.f32 %v8042, %v8296
    %v8392 = vadd.f32 %v8043, %v8366
    %v8393 = vadd.f32 %v8044, %v8298
    %v8394 = vadd.f32 %v8045, %v8368
    %v8395 = vadd.f32 %v8046, %v8302
    %v8396 = vadd.f32 %v8047, %v8372
    %v8397 = vadd.f32 %v8048, %v8305
    %v8398 = vadd.f32 %v8049, %v8375
    %v8399 = vadd.f32 %v8050, %v8309
    %v8400 = vadd.f32 %v8051, %v8379
    %v8401 = vadd.f32 %v8052, %v8311
    %v8402 = vadd.f32 %v8053, %v8381
    %v8403 = vadd.f32 %v8054, %v8315
    %v8404 = vadd.f32 %v8055, %v8385
    %v8405 = vadd.f32 %v8056, %v8318
    %v8406 = vadd.f32 %v8057, %v8388
    %s8407 = scalar_lea.vmem [#allocation11], 1792
    %v8408 = vld [vmem:[%s8407] sm:$0xff]
    %v8409 = vld [vmem:[%s8407 + $0x8] sm:$0xff]
    %v8410 = vld [vmem:[%s8407 + $0x10] sm:$0xff]
    %v8411 = vld [vmem:[%s8407 + $0x18] sm:$0xff]
    %v8412 = vld [vmem:[%s8407 + $0x20] sm:$0xff]
    %v8413 = vld [vmem:[%s8407 + $0x28] sm:$0xff]
    %v8414 = vld [vmem:[%s8407 + $0x30] sm:$0xff]
    %v8415 = vld [vmem:[%s8407 + $0x38] sm:$0xff]
    %v8416 = vld [vmem:[%s8407 + $0x40] sm:$0xff]
    %v8417 = vld [vmem:[%s8407 + $0x48] sm:$0xff]
    %v8418 = vld [vmem:[%s8407 + $0x50] sm:$0xff]
    %v8419 = vld [vmem:[%s8407 + $0x58] sm:$0xff]
    %v8420 = vld [vmem:[%s8407 + $0x60] sm:$0xff]
    %v8421 = vld [vmem:[%s8407 + $0x68] sm:$0xff]
    %v8422 = vld [vmem:[%s8407 + $0x70] sm:$0xff]
    %v8423 = vld [vmem:[%s8407 + $0x78] sm:$0xff]
    %v8424 = vld [vmem:[%s8407 + $0x80] sm:$0xff]
    %v8425 = vld [vmem:[%s8407 + $0x88] sm:$0xff]
    %v8426 = vld [vmem:[%s8407 + $0x90] sm:$0xff]
    %v8427 = vld [vmem:[%s8407 + $0x98] sm:$0xff]
    %v8428 = vld [vmem:[%s8407 + $0xa0] sm:$0xff]
    %v8429 = vld [vmem:[%s8407 + $0xa8] sm:$0xff]
    %v8430 = vld [vmem:[%s8407 + $0xb0] sm:$0xff]
    %v8431 = vld [vmem:[%s8407 + $0xb8] sm:$0xff]
    %v8432 = vld [vmem:[%s8407 + $0xc0] sm:$0xff]
    %v8433 = vld [vmem:[%s8407 + $0xc8] sm:$0xff]
    %v8434 = vld [vmem:[%s8407 + $0xd0] sm:$0xff]
    %v8435 = vld [vmem:[%s8407 + $0xd8] sm:$0xff]
    %v8436 = vld [vmem:[%s8407 + $0xe0] sm:$0xff]
    %v8437 = vld [vmem:[%s8407 + $0xe8] sm:$0xff]
    %v8438 = vld [vmem:[%s8407 + $0xf0] sm:$0xff]
    %v8439 = vld [vmem:[%s8407 + $0xf8] sm:$0xff]
    %v8472 = vunpack.c.l.b16 %v8408
    %v8473 = vunpack.c.h.b16 %v8408
    %v8474 = vunpack.c.l.b16 %v8409
    %v8475 = vunpack.c.h.b16 %v8409
    %v8476 = vunpack.c.l.b16 %v8410
    %v8477 = vunpack.c.h.b16 %v8410
    %v8478 = vunpack.c.l.b16 %v8411
    %v8479 = vunpack.c.h.b16 %v8411
    %v8480 = vunpack.c.l.b16 %v8412
    %v8481 = vunpack.c.h.b16 %v8412
    %v8482 = vunpack.c.l.b16 %v8413
    %v8483 = vunpack.c.h.b16 %v8413
    %v8484 = vunpack.c.l.b16 %v8414
    %v8485 = vunpack.c.h.b16 %v8414
    %v8486 = vunpack.c.l.b16 %v8415
    %v8487 = vunpack.c.h.b16 %v8415
    %v8488 = vunpack.c.l.b16 %v8416
    %v8489 = vunpack.c.h.b16 %v8416
    %v8490 = vunpack.c.l.b16 %v8417
    %v8491 = vunpack.c.h.b16 %v8417
    %v8492 = vunpack.c.l.b16 %v8418
    %v8493 = vunpack.c.h.b16 %v8418
    %v8494 = vunpack.c.l.b16 %v8419
    %v8495 = vunpack.c.h.b16 %v8419
    %v8496 = vunpack.c.l.b16 %v8420
    %v8497 = vunpack.c.h.b16 %v8420
    %v8498 = vunpack.c.l.b16 %v8421
    %v8499 = vunpack.c.h.b16 %v8421
    %v8500 = vunpack.c.l.b16 %v8422
    %v8501 = vunpack.c.h.b16 %v8422
    %v8502 = vunpack.c.l.b16 %v8423
    %v8503 = vunpack.c.h.b16 %v8423
    %v8504 = vunpack.c.l.b16 %v8424
    %v8505 = vunpack.c.h.b16 %v8424
    %v8506 = vunpack.c.l.b16 %v8425
    %v8507 = vunpack.c.h.b16 %v8425
    %v8508 = vunpack.c.l.b16 %v8426
    %v8509 = vunpack.c.h.b16 %v8426
    %v8510 = vunpack.c.l.b16 %v8427
    %v8511 = vunpack.c.h.b16 %v8427
    %v8512 = vunpack.c.l.b16 %v8428
    %v8513 = vunpack.c.h.b16 %v8428
    %v8514 = vunpack.c.l.b16 %v8429
    %v8515 = vunpack.c.h.b16 %v8429
    %v8516 = vunpack.c.l.b16 %v8430
    %v8517 = vunpack.c.h.b16 %v8430
    %v8518 = vunpack.c.l.b16 %v8431
    %v8519 = vunpack.c.h.b16 %v8431
    %v8520 = vunpack.c.l.b16 %v8432
    %v8521 = vunpack.c.h.b16 %v8432
    %v8522 = vunpack.c.l.b16 %v8433
    %v8523 = vunpack.c.h.b16 %v8433
    %v8524 = vunpack.c.l.b16 %v8434
    %v8525 = vunpack.c.h.b16 %v8434
    %v8526 = vunpack.c.l.b16 %v8435
    %v8527 = vunpack.c.h.b16 %v8435
    %v8528 = vunpack.c.l.b16 %v8436
    %v8529 = vunpack.c.h.b16 %v8436
    %v8530 = vunpack.c.l.b16 %v8437
    %v8531 = vunpack.c.h.b16 %v8437
    %v8532 = vunpack.c.l.b16 %v8438
    %v8533 = vunpack.c.h.b16 %v8438
    %v8534 = vunpack.c.l.b16 %v8439
    %v8535 = vunpack.c.h.b16 %v8439
    %v8536 = vpack.c.b16 %v8474, %v8472
    %v8537 = vpack.c.b16 %v8475, %v8473
    %v8538 = vpack.c.b16 %v8478, %v8476
    %v8539 = vpack.c.b16 %v8479, %v8477
    %v8540 = vpack.c.b16 %v8482, %v8480
    %v8541 = vpack.c.b16 %v8483, %v8481
    %v8542 = vpack.c.b16 %v8486, %v8484
    %v8543 = vpack.c.b16 %v8487, %v8485
    %v8544 = vpack.c.b16 %v8490, %v8488
    %v8545 = vpack.c.b16 %v8491, %v8489
    %v8546 = vpack.c.b16 %v8494, %v8492
    %v8547 = vpack.c.b16 %v8495, %v8493
    %v8548 = vpack.c.b16 %v8498, %v8496
    %v8549 = vpack.c.b16 %v8499, %v8497
    %v8550 = vpack.c.b16 %v8502, %v8500
    %v8551 = vpack.c.b16 %v8503, %v8501
    %v8552 = vpack.c.b16 %v8506, %v8504
    %v8553 = vpack.c.b16 %v8507, %v8505
    %v8554 = vpack.c.b16 %v8510, %v8508
    %v8555 = vpack.c.b16 %v8511, %v8509
    %v8556 = vpack.c.b16 %v8514, %v8512
    %v8557 = vpack.c.b16 %v8515, %v8513
    %v8558 = vpack.c.b16 %v8518, %v8516
    %v8559 = vpack.c.b16 %v8519, %v8517
    %v8560 = vpack.c.b16 %v8522, %v8520
    %v8561 = vpack.c.b16 %v8523, %v8521
    %v8562 = vpack.c.b16 %v8526, %v8524
    %v8563 = vpack.c.b16 %v8527, %v8525
    %v8564 = vpack.c.b16 %v8530, %v8528
    %v8565 = vpack.c.b16 %v8531, %v8529
    %v8566 = vpack.c.b16 %v8534, %v8532
    %v8567 = vpack.c.b16 %v8535, %v8533
    %8600 = vmatpush.bf16.msra.mxu0 %v8550
    %8601 = vmatpush.bf16.msra.mxu0 %v8548
    %8602 = vmatpush.bf16.msra.mxu0 %v8546
    %8603 = vmatpush.bf16.msra.mxu0 %v8544
    %8604 = vmatpush.bf16.msra.mxu0 %v8542
    %8605 = vmatpush.bf16.msra.mxu0 %v8540
    %8606 = vmatpush.bf16.msra.mxu0 %v8538
    %8607 = vmatpush.bf16.msra.mxu0 %v8536
    %8608 = vmatmul.bf16.gmra.mxu0 %v5921
    %v8609 = vpop.f32.mrf.mxu0
    %v8610 = vpop.f32.mrf.mxu0
    %v8611 = vadd.f32 0.0, %v8610
    %8612 = vmatmul.bf16.gmra.mxu0 %v5923
    %v8613 = vpop.f32.mrf.mxu0
    %v8614 = vpop.f32.mrf.mxu0
    %8615 = vmatmul.bf16.gmra.mxu0 %v5925
    %v8616 = vpop.f32.mrf.mxu0
    %v8617 = vadd.f32 0.0, %v8616
    %v8618 = vpop.f32.mrf.mxu0
    %8619 = vmatmul.bf16.gmra.mxu0 %v5927
    %v8620 = vpop.f32.mrf.mxu0
    %v8621 = vpop.f32.mrf.mxu0
    %v8622 = vadd.f32 0.0, %v8621
    %8623 = vmatmul.bf16.gmra.mxu0 %v5929
    %v8624 = vpop.f32.mrf.mxu0
    %v8625 = vpop.f32.mrf.mxu0
    %8626 = vmatmul.bf16.gmra.mxu0 %v5931
    %v8627 = vpop.f32.mrf.mxu0
    %v8628 = vadd.f32 0.0, %v8627
    %v8629 = vpop.f32.mrf.mxu0
    %8630 = vdwg.mxu0
    %8631 = vmatpush.bf16.msra.mxu0 %v8566
    %8632 = vmatpush.bf16.msra.mxu0 %v8564
    %8633 = vmatpush.bf16.msra.mxu0 %v8562
    %8634 = vmatpush.bf16.msra.mxu0 %v8560
    %8635 = vmatpush.bf16.msra.mxu0 %v8558
    %8636 = vmatpush.bf16.msra.mxu0 %v8556
    %8637 = vmatpush.bf16.msra.mxu0 %v8554
    %8638 = vmatpush.bf16.msra.mxu0 %v8552
    %8639 = vmatmul.bf16.gmra.mxu0 %v5922
    %v8640 = vpop.f32.mrf.mxu0
    %v8641 = vpop.f32.mrf.mxu0
    %v8642 = vadd.f32 %v8611, %v8641
    %8643 = vmatmul.bf16.gmra.mxu0 %v5924
    %v8644 = vpop.f32.mrf.mxu0
    %v8645 = vpop.f32.mrf.mxu0
    %8646 = vmatmul.bf16.gmra.mxu0 %v5926
    %v8647 = vpop.f32.mrf.mxu0
    %v8648 = vadd.f32 %v8617, %v8647
    %v8649 = vpop.f32.mrf.mxu0
    %8650 = vmatmul.bf16.gmra.mxu0 %v5928
    %v8651 = vpop.f32.mrf.mxu0
    %v8652 = vpop.f32.mrf.mxu0
    %v8653 = vadd.f32 %v8622, %v8652
    %8654 = vmatmul.bf16.gmra.mxu0 %v5930
    %v8655 = vpop.f32.mrf.mxu0
    %v8656 = vpop.f32.mrf.mxu0
    %8657 = vmatmul.bf16.gmra.mxu0 %v5932
    %v8658 = vpop.f32.mrf.mxu0
    %v8659 = vadd.f32 %v8628, %v8658
    %v8660 = vpop.f32.mrf.mxu0
    %8661 = vdwg.mxu0
    %8662 = vmatpush.bf16.msra.mxu0 %v8551
    %8663 = vmatpush.bf16.msra.mxu0 %v8549
    %8664 = vmatpush.bf16.msra.mxu0 %v8547
    %8665 = vmatpush.bf16.msra.mxu0 %v8545
    %8666 = vmatpush.bf16.msra.mxu0 %v8543
    %8667 = vmatpush.bf16.msra.mxu0 %v8541
    %8668 = vmatpush.bf16.msra.mxu0 %v8539
    %8669 = vmatpush.bf16.msra.mxu0 %v8537
    %8670 = vmatmul.bf16.gmra.mxu0 %v5921
    %v8671 = vpop.f32.mrf.mxu0
    %v8672 = vpop.f32.mrf.mxu0
    %v8673 = vadd.f32 0.0, %v8672
    %8674 = vmatmul.bf16.gmra.mxu0 %v5923
    %v8675 = vpop.f32.mrf.mxu0
    %v8676 = vpop.f32.mrf.mxu0
    %8677 = vmatmul.bf16.gmra.mxu0 %v5925
    %v8678 = vpop.f32.mrf.mxu0
    %v8679 = vadd.f32 0.0, %v8678
    %v8680 = vpop.f32.mrf.mxu0
    %8681 = vmatmul.bf16.gmra.mxu0 %v5927
    %v8682 = vpop.f32.mrf.mxu0
    %v8683 = vpop.f32.mrf.mxu0
    %v8684 = vadd.f32 0.0, %v8683
    %8685 = vmatmul.bf16.gmra.mxu0 %v5929
    %v8686 = vpop.f32.mrf.mxu0
    %v8687 = vpop.f32.mrf.mxu0
    %8688 = vmatmul.bf16.gmra.mxu0 %v5931
    %v8689 = vpop.f32.mrf.mxu0
    %v8690 = vadd.f32 0.0, %v8689
    %v8691 = vpop.f32.mrf.mxu0
    %8692 = vdwg.mxu0
    %8693 = vmatpush.bf16.msra.mxu0 %v8567
    %8694 = vmatpush.bf16.msra.mxu0 %v8565
    %8695 = vmatpush.bf16.msra.mxu0 %v8563
    %8696 = vmatpush.bf16.msra.mxu0 %v8561
    %8697 = vmatpush.bf16.msra.mxu0 %v8559
    %8698 = vmatpush.bf16.msra.mxu0 %v8557
    %8699 = vmatpush.bf16.msra.mxu0 %v8555
    %8700 = vmatpush.bf16.msra.mxu0 %v8553
    %8701 = vmatmul.bf16.gmra.mxu0 %v5922
    %v8702 = vpop.f32.mrf.mxu0
    %v8703 = vpop.f32.mrf.mxu0
    %v8704 = vadd.f32 %v8673, %v8703
    %8705 = vmatmul.bf16.gmra.mxu0 %v5924
    %v8706 = vpop.f32.mrf.mxu0
    %v8707 = vpop.f32.mrf.mxu0
    %8708 = vmatmul.bf16.gmra.mxu0 %v5926
    %v8709 = vpop.f32.mrf.mxu0
    %v8710 = vadd.f32 %v8679, %v8709
    %v8711 = vpop.f32.mrf.mxu0
    %8712 = vmatmul.bf16.gmra.mxu0 %v5928
    %v8713 = vpop.f32.mrf.mxu0
    %v8714 = vpop.f32.mrf.mxu0
    %v8715 = vadd.f32 %v8684, %v8714
    %8716 = vmatmul.bf16.gmra.mxu0 %v5930
    %v8717 = vpop.f32.mrf.mxu0
    %v8718 = vpop.f32.mrf.mxu0
    %8719 = vmatmul.bf16.gmra.mxu0 %v5932
    %v8720 = vpop.f32.mrf.mxu0
    %v8721 = vadd.f32 %v8690, %v8720
    %v8722 = vpop.f32.mrf.mxu0
    %8723 = vdwg.mxu0
    %v8732 = vrot.slane %v8642, 1
    %v8733 = vrot.slane %v8704, 1
    %v8734 = vrot.slane %v8648, 1
    %v8735 = vrot.slane %v8710, 1
    %v8736 = vrot.slane %v8653, 1
    %v8737 = vrot.slane %v8715, 1
    %v8738 = vrot.slane %v8659, 1
    %v8739 = vrot.slane %v8721, 1
    %v8748 = vadd.f32 %v8391, %v8732
    %v8749 = vadd.f32 %v8392, %v8733
    %v8750 = vadd.f32 %v8393, %v8732
    %v8751 = vadd.f32 %v8394, %v8733
    %v8752 = vadd.f32 %v8395, %v8734
    %v8753 = vadd.f32 %v8396, %v8735
    %v8754 = vadd.f32 %v8397, %v8734
    %v8755 = vadd.f32 %v8398, %v8735
    %v8756 = vadd.f32 %v8399, %v8736
    %v8757 = vadd.f32 %v8400, %v8737
    %v8758 = vadd.f32 %v8401, %v8736
    %v8759 = vadd.f32 %v8402, %v8737
    %v8760 = vadd.f32 %v8403, %v8738
    %v8761 = vadd.f32 %v8404, %v8739
    %v8762 = vadd.f32 %v8405, %v8738
    %v8763 = vadd.f32 %v8406, %v8739
    %s8764 = scalar_lea.vmem [#allocation11], 2048
    %v8765 = vld [vmem:[%s8764] sm:$0xff]
    %v8766 = vld [vmem:[%s8764 + $0x8] sm:$0xff]
    %v8767 = vld [vmem:[%s8764 + $0x10] sm:$0xff]
    %v8768 = vld [vmem:[%s8764 + $0x18] sm:$0xff]
    %v8769 = vld [vmem:[%s8764 + $0x20] sm:$0xff]
    %v8770 = vld [vmem:[%s8764 + $0x28] sm:$0xff]
    %v8771 = vld [vmem:[%s8764 + $0x30] sm:$0xff]
    %v8772 = vld [vmem:[%s8764 + $0x38] sm:$0xff]
    %v8773 = vld [vmem:[%s8764 + $0x40] sm:$0xff]
    %v8774 = vld [vmem:[%s8764 + $0x48] sm:$0xff]
    %v8775 = vld [vmem:[%s8764 + $0x50] sm:$0xff]
    %v8776 = vld [vmem:[%s8764 + $0x58] sm:$0xff]
    %v8777 = vld [vmem:[%s8764 + $0x60] sm:$0xff]
    %v8778 = vld [vmem:[%s8764 + $0x68] sm:$0xff]
    %v8779 = vld [vmem:[%s8764 + $0x70] sm:$0xff]
    %v8780 = vld [vmem:[%s8764 + $0x78] sm:$0xff]
    %v8781 = vld [vmem:[%s8764 + $0x80] sm:$0xff]
    %v8782 = vld [vmem:[%s8764 + $0x88] sm:$0xff]
    %v8783 = vld [vmem:[%s8764 + $0x90] sm:$0xff]
    %v8784 = vld [vmem:[%s8764 + $0x98] sm:$0xff]
    %v8785 = vld [vmem:[%s8764 + $0xa0] sm:$0xff]
    %v8786 = vld [vmem:[%s8764 + $0xa8] sm:$0xff]
    %v8787 = vld [vmem:[%s8764 + $0xb0] sm:$0xff]
    %v8788 = vld [vmem:[%s8764 + $0xb8] sm:$0xff]
    %v8789 = vld [vmem:[%s8764 + $0xc0] sm:$0xff]
    %v8790 = vld [vmem:[%s8764 + $0xc8] sm:$0xff]
    %v8791 = vld [vmem:[%s8764 + $0xd0] sm:$0xff]
    %v8792 = vld [vmem:[%s8764 + $0xd8] sm:$0xff]
    %v8793 = vld [vmem:[%s8764 + $0xe0] sm:$0xff]
    %v8794 = vld [vmem:[%s8764 + $0xe8] sm:$0xff]
    %v8795 = vld [vmem:[%s8764 + $0xf0] sm:$0xff]
    %v8796 = vld [vmem:[%s8764 + $0xf8] sm:$0xff]
    %v8829 = vunpack.c.l.b16 %v8765
    %v8830 = vunpack.c.h.b16 %v8765
    %v8831 = vunpack.c.l.b16 %v8766
    %v8832 = vunpack.c.h.b16 %v8766
    %v8833 = vunpack.c.l.b16 %v8767
    %v8834 = vunpack.c.h.b16 %v8767
    %v8835 = vunpack.c.l.b16 %v8768
    %v8836 = vunpack.c.h.b16 %v8768
    %v8837 = vunpack.c.l.b16 %v8769
    %v8838 = vunpack.c.h.b16 %v8769
    %v8839 = vunpack.c.l.b16 %v8770
    %v8840 = vunpack.c.h.b16 %v8770
    %v8841 = vunpack.c.l.b16 %v8771
    %v8842 = vunpack.c.h.b16 %v8771
    %v8843 = vunpack.c.l.b16 %v8772
    %v8844 = vunpack.c.h.b16 %v8772
    %v8845 = vunpack.c.l.b16 %v8773
    %v8846 = vunpack.c.h.b16 %v8773
    %v8847 = vunpack.c.l.b16 %v8774
    %v8848 = vunpack.c.h.b16 %v8774
    %v8849 = vunpack.c.l.b16 %v8775
    %v8850 = vunpack.c.h.b16 %v8775
    %v8851 = vunpack.c.l.b16 %v8776
    %v8852 = vunpack.c.h.b16 %v8776
    %v8853 = vunpack.c.l.b16 %v8777
    %v8854 = vunpack.c.h.b16 %v8777
    %v8855 = vunpack.c.l.b16 %v8778
    %v8856 = vunpack.c.h.b16 %v8778
    %v8857 = vunpack.c.l.b16 %v8779
    %v8858 = vunpack.c.h.b16 %v8779
    %v8859 = vunpack.c.l.b16 %v8780
    %v8860 = vunpack.c.h.b16 %v8780
    %v8861 = vunpack.c.l.b16 %v8781
    %v8862 = vunpack.c.h.b16 %v8781
    %v8863 = vunpack.c.l.b16 %v8782
    %v8864 = vunpack.c.h.b16 %v8782
    %v8865 = vunpack.c.l.b16 %v8783
    %v8866 = vunpack.c.h.b16 %v8783
    %v8867 = vunpack.c.l.b16 %v8784
    %v8868 = vunpack.c.h.b16 %v8784
    %v8869 = vunpack.c.l.b16 %v8785
    %v8870 = vunpack.c.h.b16 %v8785
    %v8871 = vunpack.c.l.b16 %v8786
    %v8872 = vunpack.c.h.b16 %v8786
    %v8873 = vunpack.c.l.b16 %v8787
    %v8874 = vunpack.c.h.b16 %v8787
    %v8875 = vunpack.c.l.b16 %v8788
    %v8876 = vunpack.c.h.b16 %v8788
    %v8877 = vunpack.c.l.b16 %v8789
    %v8878 = vunpack.c.h.b16 %v8789
    %v8879 = vunpack.c.l.b16 %v8790
    %v8880 = vunpack.c.h.b16 %v8790
    %v8881 = vunpack.c.l.b16 %v8791
    %v8882 = vunpack.c.h.b16 %v8791
    %v8883 = vunpack.c.l.b16 %v8792
    %v8884 = vunpack.c.h.b16 %v8792
    %v8885 = vunpack.c.l.b16 %v8793
    %v8886 = vunpack.c.h.b16 %v8793
    %v8887 = vunpack.c.l.b16 %v8794
    %v8888 = vunpack.c.h.b16 %v8794
    %v8889 = vunpack.c.l.b16 %v8795
    %v8890 = vunpack.c.h.b16 %v8795
    %v8891 = vunpack.c.l.b16 %v8796
    %v8892 = vunpack.c.h.b16 %v8796
    %v8893 = vpack.c.b16 %v8831, %v8829
    %v8894 = vpack.c.b16 %v8832, %v8830
    %v8895 = vpack.c.b16 %v8835, %v8833
    %v8896 = vpack.c.b16 %v8836, %v8834
    %v8897 = vpack.c.b16 %v8839, %v8837
    %v8898 = vpack.c.b16 %v8840, %v8838
    %v8899 = vpack.c.b16 %v8843, %v8841
    %v8900 = vpack.c.b16 %v8844, %v8842
    %v8901 = vpack.c.b16 %v8847, %v8845
    %v8902 = vpack.c.b16 %v8848, %v8846
    %v8903 = vpack.c.b16 %v8851, %v8849
    %v8904 = vpack.c.b16 %v8852, %v8850
    %v8905 = vpack.c.b16 %v8855, %v8853
    %v8906 = vpack.c.b16 %v8856, %v8854
    %v8907 = vpack.c.b16 %v8859, %v8857
    %v8908 = vpack.c.b16 %v8860, %v8858
    %v8909 = vpack.c.b16 %v8863, %v8861
    %v8910 = vpack.c.b16 %v8864, %v8862
    %v8911 = vpack.c.b16 %v8867, %v8865
    %v8912 = vpack.c.b16 %v8868, %v8866
    %v8913 = vpack.c.b16 %v8871, %v8869
    %v8914 = vpack.c.b16 %v8872, %v8870
    %v8915 = vpack.c.b16 %v8875, %v8873
    %v8916 = vpack.c.b16 %v8876, %v8874
    %v8917 = vpack.c.b16 %v8879, %v8877
    %v8918 = vpack.c.b16 %v8880, %v8878
    %v8919 = vpack.c.b16 %v8883, %v8881
    %v8920 = vpack.c.b16 %v8884, %v8882
    %v8921 = vpack.c.b16 %v8887, %v8885
    %v8922 = vpack.c.b16 %v8888, %v8886
    %v8923 = vpack.c.b16 %v8891, %v8889
    %v8924 = vpack.c.b16 %v8892, %v8890
    %8957 = vmatpush.bf16.msra.mxu0 %v8907
    %8958 = vmatpush.bf16.msra.mxu0 %v8905
    %8959 = vmatpush.bf16.msra.mxu0 %v8903
    %8960 = vmatpush.bf16.msra.mxu0 %v8901
    %8961 = vmatpush.bf16.msra.mxu0 %v8899
    %8962 = vmatpush.bf16.msra.mxu0 %v8897
    %8963 = vmatpush.bf16.msra.mxu0 %v8895
    %8964 = vmatpush.bf16.msra.mxu0 %v8893
    %8965 = vmatmul.bf16.gmra.mxu0 %v5921
    %v8966 = vpop.f32.mrf.mxu0
    %v8967 = vpop.f32.mrf.mxu0
    %v8968 = vadd.f32 0.0, %v8967
    %8969 = vmatmul.bf16.gmra.mxu0 %v5923
    %v8970 = vpop.f32.mrf.mxu0
    %v8971 = vpop.f32.mrf.mxu0
    %8972 = vmatmul.bf16.gmra.mxu0 %v5925
    %v8973 = vpop.f32.mrf.mxu0
    %v8974 = vadd.f32 0.0, %v8973
    %v8975 = vpop.f32.mrf.mxu0
    %8976 = vmatmul.bf16.gmra.mxu0 %v5927
    %v8977 = vpop.f32.mrf.mxu0
    %v8978 = vpop.f32.mrf.mxu0
    %v8979 = vadd.f32 0.0, %v8978
    %8980 = vmatmul.bf16.gmra.mxu0 %v5929
    %v8981 = vpop.f32.mrf.mxu0
    %v8982 = vpop.f32.mrf.mxu0
    %8983 = vmatmul.bf16.gmra.mxu0 %v5931
    %v8984 = vpop.f32.mrf.mxu0
    %v8985 = vadd.f32 0.0, %v8984
    %v8986 = vpop.f32.mrf.mxu0
    %8987 = vdwg.mxu0
    %8988 = vmatpush.bf16.msra.mxu0 %v8923
    %8989 = vmatpush.bf16.msra.mxu0 %v8921
    %8990 = vmatpush.bf16.msra.mxu0 %v8919
    %8991 = vmatpush.bf16.msra.mxu0 %v8917
    %8992 = vmatpush.bf16.msra.mxu0 %v8915
    %8993 = vmatpush.bf16.msra.mxu0 %v8913
    %8994 = vmatpush.bf16.msra.mxu0 %v8911
    %8995 = vmatpush.bf16.msra.mxu0 %v8909
    %8996 = vmatmul.bf16.gmra.mxu0 %v5922
    %v8997 = vpop.f32.mrf.mxu0
    %v8998 = vpop.f32.mrf.mxu0
    %v8999 = vadd.f32 %v8968, %v8998
    %9000 = vmatmul.bf16.gmra.mxu0 %v5924
    %v9001 = vpop.f32.mrf.mxu0
    %v9002 = vpop.f32.mrf.mxu0
    %9003 = vmatmul.bf16.gmra.mxu0 %v5926
    %v9004 = vpop.f32.mrf.mxu0
    %v9005 = vadd.f32 %v8974, %v9004
    %v9006 = vpop.f32.mrf.mxu0
    %9007 = vmatmul.bf16.gmra.mxu0 %v5928
    %v9008 = vpop.f32.mrf.mxu0
    %v9009 = vpop.f32.mrf.mxu0
    %v9010 = vadd.f32 %v8979, %v9009
    %9011 = vmatmul.bf16.gmra.mxu0 %v5930
    %v9012 = vpop.f32.mrf.mxu0
    %v9013 = vpop.f32.mrf.mxu0
    %9014 = vmatmul.bf16.gmra.mxu0 %v5932
    %v9015 = vpop.f32.mrf.mxu0
    %v9016 = vadd.f32 %v8985, %v9015
    %v9017 = vpop.f32.mrf.mxu0
    %9018 = vdwg.mxu0
    %9019 = vmatpush.bf16.msra.mxu0 %v8908
    %9020 = vmatpush.bf16.msra.mxu0 %v8906
    %9021 = vmatpush.bf16.msra.mxu0 %v8904
    %9022 = vmatpush.bf16.msra.mxu0 %v8902
    %9023 = vmatpush.bf16.msra.mxu0 %v8900
    %9024 = vmatpush.bf16.msra.mxu0 %v8898
    %9025 = vmatpush.bf16.msra.mxu0 %v8896
    %9026 = vmatpush.bf16.msra.mxu0 %v8894
    %9027 = vmatmul.bf16.gmra.mxu0 %v5921
    %v9028 = vpop.f32.mrf.mxu0
    %v9029 = vpop.f32.mrf.mxu0
    %v9030 = vadd.f32 0.0, %v9029
    %9031 = vmatmul.bf16.gmra.mxu0 %v5923
    %v9032 = vpop.f32.mrf.mxu0
    %v9033 = vpop.f32.mrf.mxu0
    %9034 = vmatmul.bf16.gmra.mxu0 %v5925
    %v9035 = vpop.f32.mrf.mxu0
    %v9036 = vadd.f32 0.0, %v9035
    %v9037 = vpop.f32.mrf.mxu0
    %9038 = vmatmul.bf16.gmra.mxu0 %v5927
    %v9039 = vpop.f32.mrf.mxu0
    %v9040 = vpop.f32.mrf.mxu0
    %v9041 = vadd.f32 0.0, %v9040
    %9042 = vmatmul.bf16.gmra.mxu0 %v5929
    %v9043 = vpop.f32.mrf.mxu0
    %v9044 = vpop.f32.mrf.mxu0
    %9045 = vmatmul.bf16.gmra.mxu0 %v5931
    %v9046 = vpop.f32.mrf.mxu0
    %v9047 = vadd.f32 0.0, %v9046
    %v9048 = vpop.f32.mrf.mxu0
    %9049 = vdwg.mxu0
    %9050 = vmatpush.bf16.msra.mxu0 %v8924
    %9051 = vmatpush.bf16.msra.mxu0 %v8922
    %9052 = vmatpush.bf16.msra.mxu0 %v8920
    %9053 = vmatpush.bf16.msra.mxu0 %v8918
    %9054 = vmatpush.bf16.msra.mxu0 %v8916
    %9055 = vmatpush.bf16.msra.mxu0 %v8914
    %9056 = vmatpush.bf16.msra.mxu0 %v8912
    %9057 = vmatpush.bf16.msra.mxu0 %v8910
    %9058 = vmatmul.bf16.gmra.mxu0 %v5922
    %v9059 = vpop.f32.mrf.mxu0
    %v9060 = vpop.f32.mrf.mxu0
    %v9061 = vadd.f32 %v9030, %v9060
    %9062 = vmatmul.bf16.gmra.mxu0 %v5924
    %v9063 = vpop.f32.mrf.mxu0
    %v9064 = vpop.f32.mrf.mxu0
    %9065 = vmatmul.bf16.gmra.mxu0 %v5926
    %v9066 = vpop.f32.mrf.mxu0
    %v9067 = vadd.f32 %v9036, %v9066
    %v9068 = vpop.f32.mrf.mxu0
    %9069 = vmatmul.bf16.gmra.mxu0 %v5928
    %v9070 = vpop.f32.mrf.mxu0
    %v9071 = vpop.f32.mrf.mxu0
    %v9072 = vadd.f32 %v9041, %v9071
    %9073 = vmatmul.bf16.gmra.mxu0 %v5930
    %v9074 = vpop.f32.mrf.mxu0
    %v9075 = vpop.f32.mrf.mxu0
    %9076 = vmatmul.bf16.gmra.mxu0 %v5932
    %v9077 = vpop.f32.mrf.mxu0
    %v9078 = vadd.f32 %v9047, %v9077
    %v9079 = vpop.f32.mrf.mxu0
    %9080 = vdwg.mxu0
    %v9089 = vrot.slane %v8999, 2
    %v9090 = vrot.slane %v9061, 2
    %v9091 = vrot.slane %v9005, 2
    %v9092 = vrot.slane %v9067, 2
    %v9093 = vrot.slane %v9010, 2
    %v9094 = vrot.slane %v9072, 2
    %v9095 = vrot.slane %v9016, 2
    %v9096 = vrot.slane %v9078, 2
    %v9105 = vadd.f32 %v8748, %v9089
    %v9106 = vadd.f32 %v8749, %v9090
    %v9107 = vadd.f32 %v8750, %v9089
    %v9108 = vadd.f32 %v8751, %v9090
    %v9109 = vadd.f32 %v8752, %v9091
    %v9110 = vadd.f32 %v8753, %v9092
    %v9111 = vadd.f32 %v8754, %v9091
    %v9112 = vadd.f32 %v8755, %v9092
    %v9113 = vadd.f32 %v8756, %v9093
    %v9114 = vadd.f32 %v8757, %v9094
    %v9115 = vadd.f32 %v8758, %v9093
    %v9116 = vadd.f32 %v8759, %v9094
    %v9117 = vadd.f32 %v8760, %v9095
    %v9118 = vadd.f32 %v8761, %v9096
    %v9119 = vadd.f32 %v8762, %v9095
    %v9120 = vadd.f32 %v8763, %v9096
    %s9121 = scalar_lea.vmem [#allocation2], 288
    %v9122 = vld [vmem:[%s9121] sm:$0xff]
    %v9123 = vld [vmem:[%s9121 + $0x8] sm:$0xff]
    %v9124 = vld [vmem:[%s9121 + $0x10] sm:$0xff]
    %v9125 = vld [vmem:[%s9121 + $0x18] sm:$0xff]
    %v9126 = vld [vmem:[%s9121 + $0x20] sm:$0xff]
    %v9127 = vld [vmem:[%s9121 + $0x28] sm:$0xff]
    %v9128 = vld [vmem:[%s9121 + $0x30] sm:$0xff]
    %v9129 = vld [vmem:[%s9121 + $0x38] sm:$0xff]
    %v9130 = vld [vmem:[%s9121 + $0x40] sm:$0xff]
    %v9131 = vld [vmem:[%s9121 + $0x48] sm:$0xff]
    %v9132 = vld [vmem:[%s9121 + $0x50] sm:$0xff]
    %v9133 = vld [vmem:[%s9121 + $0x58] sm:$0xff]
    %v9134 = vld [vmem:[%s9121 + $0x60] sm:$0xff]
    %v9135 = vld [vmem:[%s9121 + $0x68] sm:$0xff]
    %v9136 = vld [vmem:[%s9121 + $0x70] sm:$0xff]
    %v9137 = vld [vmem:[%s9121 + $0x78] sm:$0xff]
    %v9138 = vld [vmem:[%s9121 + $0x80] sm:$0xff]
    %v9139 = vld [vmem:[%s9121 + $0x88] sm:$0xff]
    %v9140 = vld [vmem:[%s9121 + $0x90] sm:$0xff]
    %v9141 = vld [vmem:[%s9121 + $0x98] sm:$0xff]
    %v9142 = vld [vmem:[%s9121 + $0xa0] sm:$0xff]
    %v9143 = vld [vmem:[%s9121 + $0xa8] sm:$0xff]
    %v9144 = vld [vmem:[%s9121 + $0xb0] sm:$0xff]
    %v9145 = vld [vmem:[%s9121 + $0xb8] sm:$0xff]
    %v9146 = vpack.c.bf16 %v9124, %v9122
    %v9147 = vpack.c.bf16 %v9125, %v9123
    %v9148 = vpack.c.bf16 %v9128, %v9126
    %v9149 = vpack.c.bf16 %v9129, %v9127
    %v9150 = vpack.c.bf16 %v9132, %v9130
    %v9151 = vpack.c.bf16 %v9133, %v9131
    %v9152 = vpack.c.bf16 %v9136, %v9134
    %v9153 = vpack.c.bf16 %v9137, %v9135
    %v9154 = vpack.c.bf16 %v9140, %v9138
    %v9155 = vpack.c.bf16 %v9141, %v9139
    %v9156 = vpack.c.bf16 %v9144, %v9142
    %v9157 = vpack.c.bf16 %v9145, %v9143
    %v9158 = vld [vmem:[%s5815] sm:$0xff]
    %v9159 = vld [vmem:[%s5815 + $0x8] sm:$0xff]
    %v9160 = vld [vmem:[%s5815 + $0x10] sm:$0xff]
    %v9161 = vld [vmem:[%s5815 + $0x18] sm:$0xff]
    %v9162 = vld [vmem:[%s5815 + $0x20] sm:$0xff]
    %v9163 = vld [vmem:[%s5815 + $0x28] sm:$0xff]
    %v9164 = vld [vmem:[%s5815 + $0x30] sm:$0xff]
    %v9165 = vld [vmem:[%s5815 + $0x38] sm:$0xff]
    %v9166 = vld [vmem:[%s5815 + $0x40] sm:$0xff]
    %v9167 = vld [vmem:[%s5815 + $0x48] sm:$0xff]
    %v9168 = vld [vmem:[%s5815 + $0x50] sm:$0xff]
    %v9169 = vld [vmem:[%s5815 + $0x58] sm:$0xff]
    %v9170 = vld [vmem:[%s5815 + $0x60] sm:$0xff]
    %v9171 = vld [vmem:[%s5815 + $0x68] sm:$0xff]
    %v9172 = vld [vmem:[%s5815 + $0x70] sm:$0xff]
    %v9173 = vld [vmem:[%s5815 + $0x78] sm:$0xff]
    %v9174 = vld [vmem:[%s5815 + $0x80] sm:$0xff]
    %v9175 = vld [vmem:[%s5815 + $0x88] sm:$0xff]
    %v9176 = vld [vmem:[%s5815 + $0x90] sm:$0xff]
    %v9177 = vld [vmem:[%s5815 + $0x98] sm:$0xff]
    %v9178 = vld [vmem:[%s5815 + $0xa0] sm:$0xff]
    %v9179 = vld [vmem:[%s5815 + $0xa8] sm:$0xff]
    %v9180 = vld [vmem:[%s5815 + $0xb0] sm:$0xff]
    %v9181 = vld [vmem:[%s5815 + $0xb8] sm:$0xff]
    %v9182 = vpack.c.bf16 %v9160, %v9158
    %v9183 = vpack.c.bf16 %v9161, %v9159
    %v9184 = vpack.c.bf16 %v9164, %v9162
    %v9185 = vpack.c.bf16 %v9165, %v9163
    %v9186 = vpack.c.bf16 %v9168, %v9166
    %v9187 = vpack.c.bf16 %v9169, %v9167
    %v9188 = vpack.c.bf16 %v9172, %v9170
    %v9189 = vpack.c.bf16 %v9173, %v9171
    %v9190 = vpack.c.bf16 %v9176, %v9174
    %v9191 = vpack.c.bf16 %v9177, %v9175
    %v9192 = vpack.c.bf16 %v9180, %v9178
    %v9193 = vpack.c.bf16 %v9181, %v9179
    %s9194 = scalar_lea.vmem [#allocation2], 384
    %v9195 = vld [vmem:[%s9194] sm:$0xff]
    %v9196 = vld [vmem:[%s9194 + $0x8] sm:$0xff]
    %v9197 = vld [vmem:[%s9194 + $0x10] sm:$0xff]
    %v9198 = vld [vmem:[%s9194 + $0x18] sm:$0xff]
    %v9199 = vld [vmem:[%s9194 + $0x20] sm:$0xff]
    %v9200 = vld [vmem:[%s9194 + $0x28] sm:$0xff]
    %v9201 = vld [vmem:[%s9194 + $0x30] sm:$0xff]
    %v9202 = vld [vmem:[%s9194 + $0x38] sm:$0xff]
    %v9203 = vld [vmem:[%s9194 + $0x40] sm:$0xff]
    %v9204 = vld [vmem:[%s9194 + $0x48] sm:$0xff]
    %v9205 = vld [vmem:[%s9194 + $0x50] sm:$0xff]
    %v9206 = vld [vmem:[%s9194 + $0x58] sm:$0xff]
    %v9207 = vld [vmem:[%s9194 + $0x60] sm:$0xff]
    %v9208 = vld [vmem:[%s9194 + $0x68] sm:$0xff]
    %v9209 = vld [vmem:[%s9194 + $0x70] sm:$0xff]
    %v9210 = vld [vmem:[%s9194 + $0x78] sm:$0xff]
    %v9211 = vld [vmem:[%s9194 + $0x80] sm:$0xff]
    %v9212 = vld [vmem:[%s9194 + $0x88] sm:$0xff]
    %v9213 = vld [vmem:[%s9194 + $0x90] sm:$0xff]
    %v9214 = vld [vmem:[%s9194 + $0x98] sm:$0xff]
    %v9215 = vld [vmem:[%s9194 + $0xa0] sm:$0xff]
    %v9216 = vld [vmem:[%s9194 + $0xa8] sm:$0xff]
    %v9217 = vld [vmem:[%s9194 + $0xb0] sm:$0xff]
    %v9218 = vld [vmem:[%s9194 + $0xb8] sm:$0xff]
    %v9219 = vpack.c.bf16 %v9197, %v9195
    %v9220 = vpack.c.bf16 %v9198, %v9196
    %v9221 = vpack.c.bf16 %v9201, %v9199
    %v9222 = vpack.c.bf16 %v9202, %v9200
    %v9223 = vpack.c.bf16 %v9205, %v9203
    %v9224 = vpack.c.bf16 %v9206, %v9204
    %v9225 = vpack.c.bf16 %v9209, %v9207
    %v9226 = vpack.c.bf16 %v9210, %v9208
    %v9227 = vpack.c.bf16 %v9213, %v9211
    %v9228 = vpack.c.bf16 %v9214, %v9212
    %v9229 = vpack.c.bf16 %v9217, %v9215
    %v9230 = vpack.c.bf16 %v9218, %v9216
    %9231 = vmatpush.bf16.msra.mxu0 %v6075
    %9232 = vmatpush.bf16.msra.mxu0 %v6073
    %9233 = vmatpush.bf16.msra.mxu0 %v6071
    %9234 = vmatpush.bf16.msra.mxu0 %v6069
    %9235 = vmatpush.bf16.msra.mxu0 %v6067
    %9236 = vmatpush.bf16.msra.mxu0 %v6065
    %9237 = vmatpush.bf16.msra.mxu0 %v6063
    %9238 = vmatpush.bf16.msra.mxu0 %v6061
    %9239 = vmatmul.bf16.gmra.mxu0 %v9146
    %v9240 = vpop.f32.mrf.mxu0
    %v9241 = vadd.f32 0.0, %v9240
    %v9242 = vpop.f32.mrf.mxu0
    %v9243 = vadd.f32 0.0, %v9242
    %9244 = vmatmul.bf16.gmra.mxu0 %v9148
    %v9245 = vpop.f32.mrf.mxu0
    %v9246 = vpop.f32.mrf.mxu0
    %v9247 = vadd.f32 0.0, %v9246
    %9248 = vmatmul.bf16.gmra.mxu0 %v9150
    %v9249 = vpop.f32.mrf.mxu0
    %v9250 = vadd.f32 0.0, %v9249
    %v9251 = vpop.f32.mrf.mxu0
    %9252 = vmatmul.bf16.gmra.mxu0 %v9152
    %v9253 = vpop.f32.mrf.mxu0
    %v9254 = vadd.f32 0.0, %v9253
    %v9255 = vpop.f32.mrf.mxu0
    %v9256 = vadd.f32 0.0, %v9255
    %9257 = vmatmul.bf16.gmra.mxu0 %v9154
    %v9258 = vpop.f32.mrf.mxu0
    %v9259 = vpop.f32.mrf.mxu0
    %v9260 = vadd.f32 0.0, %v9259
    %9261 = vmatmul.bf16.gmra.mxu0 %v9156
    %v9262 = vpop.f32.mrf.mxu0
    %v9263 = vadd.f32 0.0, %v9262
    %v9264 = vpop.f32.mrf.mxu0
    %9265 = vdwg.mxu0
    %9266 = vmatpush.bf16.msra.mxu0 %v6091
    %9267 = vmatpush.bf16.msra.mxu0 %v6089
    %9268 = vmatpush.bf16.msra.mxu0 %v6087
    %9269 = vmatpush.bf16.msra.mxu0 %v6085
    %9270 = vmatpush.bf16.msra.mxu0 %v6083
    %9271 = vmatpush.bf16.msra.mxu0 %v6081
    %9272 = vmatpush.bf16.msra.mxu0 %v6079
    %9273 = vmatpush.bf16.msra.mxu0 %v6077
    %9274 = vmatmul.bf16.gmra.mxu0 %v9147
    %v9275 = vpop.f32.mrf.mxu0
    %v9276 = vadd.f32 %v9241, %v9275
    %v9277 = vpop.f32.mrf.mxu0
    %v9278 = vadd.f32 %v9243, %v9277
    %9279 = vmatmul.bf16.gmra.mxu0 %v9149
    %v9280 = vpop.f32.mrf.mxu0
    %v9281 = vpop.f32.mrf.mxu0
    %v9282 = vadd.f32 %v9247, %v9281
    %9283 = vmatmul.bf16.gmra.mxu0 %v9151
    %v9284 = vpop.f32.mrf.mxu0
    %v9285 = vadd.f32 %v9250, %v9284
    %v9286 = vpop.f32.mrf.mxu0
    %9287 = vmatmul.bf16.gmra.mxu0 %v9153
    %v9288 = vpop.f32.mrf.mxu0
    %v9289 = vadd.f32 %v9254, %v9288
    %v9290 = vpop.f32.mrf.mxu0
    %v9291 = vadd.f32 %v9256, %v9290
    %9292 = vmatmul.bf16.gmra.mxu0 %v9155
    %v9293 = vpop.f32.mrf.mxu0
    %v9294 = vpop.f32.mrf.mxu0
    %v9295 = vadd.f32 %v9260, %v9294
    %9296 = vmatmul.bf16.gmra.mxu0 %v9157
    %v9297 = vpop.f32.mrf.mxu0
    %v9298 = vadd.f32 %v9263, %v9297
    %v9299 = vpop.f32.mrf.mxu0
    %9300 = vdwg.mxu0
    %9301 = vmatpush.bf16.msra.mxu0 %v6076
    %9302 = vmatpush.bf16.msra.mxu0 %v6074
    %9303 = vmatpush.bf16.msra.mxu0 %v6072
    %9304 = vmatpush.bf16.msra.mxu0 %v6070
    %9305 = vmatpush.bf16.msra.mxu0 %v6068
    %9306 = vmatpush.bf16.msra.mxu0 %v6066
    %9307 = vmatpush.bf16.msra.mxu0 %v6064
    %9308 = vmatpush.bf16.msra.mxu0 %v6062
    %9309 = vmatmul.bf16.gmra.mxu0 %v9146
    %v9310 = vpop.f32.mrf.mxu0
    %v9311 = vadd.f32 0.0, %v9310
    %v9312 = vpop.f32.mrf.mxu0
    %v9313 = vadd.f32 0.0, %v9312
    %9314 = vmatmul.bf16.gmra.mxu0 %v9148
    %v9315 = vpop.f32.mrf.mxu0
    %v9316 = vpop.f32.mrf.mxu0
    %v9317 = vadd.f32 0.0, %v9316
    %9318 = vmatmul.bf16.gmra.mxu0 %v9150
    %v9319 = vpop.f32.mrf.mxu0
    %v9320 = vadd.f32 0.0, %v9319
    %v9321 = vpop.f32.mrf.mxu0
    %9322 = vmatmul.bf16.gmra.mxu0 %v9152
    %v9323 = vpop.f32.mrf.mxu0
    %v9324 = vadd.f32 0.0, %v9323
    %v9325 = vpop.f32.mrf.mxu0
    %v9326 = vadd.f32 0.0, %v9325
    %9327 = vmatmul.bf16.gmra.mxu0 %v9154
    %v9328 = vpop.f32.mrf.mxu0
    %v9329 = vpop.f32.mrf.mxu0
    %v9330 = vadd.f32 0.0, %v9329
    %9331 = vmatmul.bf16.gmra.mxu0 %v9156
    %v9332 = vpop.f32.mrf.mxu0
    %v9333 = vadd.f32 0.0, %v9332
    %v9334 = vpop.f32.mrf.mxu0
    %9335 = vdwg.mxu0
    %9336 = vmatpush.bf16.msra.mxu0 %v6092
    %9337 = vmatpush.bf16.msra.mxu0 %v6090
    %9338 = vmatpush.bf16.msra.mxu0 %v6088
    %9339 = vmatpush.bf16.msra.mxu0 %v6086
    %9340 = vmatpush.bf16.msra.mxu0 %v6084
    %9341 = vmatpush.bf16.msra.mxu0 %v6082
    %9342 = vmatpush.bf16.msra.mxu0 %v6080
    %9343 = vmatpush.bf16.msra.mxu0 %v6078
    %9344 = vmatmul.bf16.gmra.mxu0 %v9147
    %v9345 = vpop.f32.mrf.mxu0
    %v9346 = vadd.f32 %v9311, %v9345
    %v9347 = vpop.f32.mrf.mxu0
    %v9348 = vadd.f32 %v9313, %v9347
    %9349 = vmatmul.bf16.gmra.mxu0 %v9149
    %v9350 = vpop.f32.mrf.mxu0
    %v9351 = vpop.f32.mrf.mxu0
    %v9352 = vadd.f32 %v9317, %v9351
    %9353 = vmatmul.bf16.gmra.mxu0 %v9151
    %v9354 = vpop.f32.mrf.mxu0
    %v9355 = vadd.f32 %v9320, %v9354
    %v9356 = vpop.f32.mrf.mxu0
    %9357 = vmatmul.bf16.gmra.mxu0 %v9153
    %v9358 = vpop.f32.mrf.mxu0
    %v9359 = vadd.f32 %v9324, %v9358
    %v9360 = vpop.f32.mrf.mxu0
    %v9361 = vadd.f32 %v9326, %v9360
    %9362 = vmatmul.bf16.gmra.mxu0 %v9155
    %v9363 = vpop.f32.mrf.mxu0
    %v9364 = vpop.f32.mrf.mxu0
    %v9365 = vadd.f32 %v9330, %v9364
    %9366 = vmatmul.bf16.gmra.mxu0 %v9157
    %v9367 = vpop.f32.mrf.mxu0
    %v9368 = vadd.f32 %v9333, %v9367
    %v9369 = vpop.f32.mrf.mxu0
    %9370 = vdwg.mxu0
    %v9371 = vadd.f32 %v9276, 0.0
    %v9372 = vadd.f32 %v9346, 0.0
    %v9373 = vadd.f32 %v9278, 0.0
    %v9374 = vadd.f32 %v9348, 0.0
    %v9375 = vadd.f32 %v9282, 0.0
    %v9376 = vadd.f32 %v9352, 0.0
    %v9377 = vadd.f32 %v9285, 0.0
    %v9378 = vadd.f32 %v9355, 0.0
    %v9379 = vadd.f32 %v9289, 0.0
    %v9380 = vadd.f32 %v9359, 0.0
    %v9381 = vadd.f32 %v9291, 0.0
    %v9382 = vadd.f32 %v9361, 0.0
    %v9383 = vadd.f32 %v9295, 0.0
    %v9384 = vadd.f32 %v9365, 0.0
    %v9385 = vadd.f32 %v9298, 0.0
    %v9386 = vadd.f32 %v9368, 0.0
    %9387 = vmatpush.bf16.msra.mxu0 %v6424
    %9388 = vmatpush.bf16.msra.mxu0 %v6422
    %9389 = vmatpush.bf16.msra.mxu0 %v6420
    %9390 = vmatpush.bf16.msra.mxu0 %v6418
    %9391 = vmatpush.bf16.msra.mxu0 %v6416
    %9392 = vmatpush.bf16.msra.mxu0 %v6414
    %9393 = vmatpush.bf16.msra.mxu0 %v6412
    %9394 = vmatpush.bf16.msra.mxu0 %v6410
    %9395 = vmatmul.bf16.gmra.mxu0 %v9146
    %v9396 = vpop.f32.mrf.mxu0
    %v9397 = vpop.f32.mrf.mxu0
    %v9398 = vadd.f32 0.0, %v9397
    %9399 = vmatmul.bf16.gmra.mxu0 %v9148
    %v9400 = vpop.f32.mrf.mxu0
    %v9401 = vpop.f32.mrf.mxu0
    %9402 = vmatmul.bf16.gmra.mxu0 %v9150
    %v9403 = vpop.f32.mrf.mxu0
    %v9404 = vadd.f32 0.0, %v9403
    %v9405 = vpop.f32.mrf.mxu0
    %9406 = vmatmul.bf16.gmra.mxu0 %v9152
    %v9407 = vpop.f32.mrf.mxu0
    %v9408 = vpop.f32.mrf.mxu0
    %v9409 = vadd.f32 0.0, %v9408
    %9410 = vmatmul.bf16.gmra.mxu0 %v9154
    %v9411 = vpop.f32.mrf.mxu0
    %v9412 = vpop.f32.mrf.mxu0
    %9413 = vmatmul.bf16.gmra.mxu0 %v9156
    %v9414 = vpop.f32.mrf.mxu0
    %v9415 = vadd.f32 0.0, %v9414
    %v9416 = vpop.f32.mrf.mxu0
    %9417 = vdwg.mxu0
    %9418 = vmatpush.bf16.msra.mxu0 %v6440
    %9419 = vmatpush.bf16.msra.mxu0 %v6438
    %9420 = vmatpush.bf16.msra.mxu0 %v6436
    %9421 = vmatpush.bf16.msra.mxu0 %v6434
    %9422 = vmatpush.bf16.msra.mxu0 %v6432
    %9423 = vmatpush.bf16.msra.mxu0 %v6430
    %9424 = vmatpush.bf16.msra.mxu0 %v6428
    %9425 = vmatpush.bf16.msra.mxu0 %v6426
    %9426 = vmatmul.bf16.gmra.mxu0 %v9147
    %v9427 = vpop.f32.mrf.mxu0
    %v9428 = vpop.f32.mrf.mxu0
    %v9429 = vadd.f32 %v9398, %v9428
    %9430 = vmatmul.bf16.gmra.mxu0 %v9149
    %v9431 = vpop.f32.mrf.mxu0
    %v9432 = vpop.f32.mrf.mxu0
    %9433 = vmatmul.bf16.gmra.mxu0 %v9151
    %v9434 = vpop.f32.mrf.mxu0
    %v9435 = vadd.f32 %v9404, %v9434
    %v9436 = vpop.f32.mrf.mxu0
    %9437 = vmatmul.bf16.gmra.mxu0 %v9153
    %v9438 = vpop.f32.mrf.mxu0
    %v9439 = vpop.f32.mrf.mxu0
    %v9440 = vadd.f32 %v9409, %v9439
    %9441 = vmatmul.bf16.gmra.mxu0 %v9155
    %v9442 = vpop.f32.mrf.mxu0
    %v9443 = vpop.f32.mrf.mxu0
    %9444 = vmatmul.bf16.gmra.mxu0 %v9157
    %v9445 = vpop.f32.mrf.mxu0
    %v9446 = vadd.f32 %v9415, %v9445
    %v9447 = vpop.f32.mrf.mxu0
    %9448 = vdwg.mxu0
    %9449 = vmatpush.bf16.msra.mxu0 %v6425
    %9450 = vmatpush.bf16.msra.mxu0 %v6423
    %9451 = vmatpush.bf16.msra.mxu0 %v6421
    %9452 = vmatpush.bf16.msra.mxu0 %v6419
    %9453 = vmatpush.bf16.msra.mxu0 %v6417
    %9454 = vmatpush.bf16.msra.mxu0 %v6415
    %9455 = vmatpush.bf16.msra.mxu0 %v6413
    %9456 = vmatpush.bf16.msra.mxu0 %v6411
    %9457 = vmatmul.bf16.gmra.mxu0 %v9146
    %v9458 = vpop.f32.mrf.mxu0
    %v9459 = vpop.f32.mrf.mxu0
    %v9460 = vadd.f32 0.0, %v9459
    %9461 = vmatmul.bf16.gmra.mxu0 %v9148
    %v9462 = vpop.f32.mrf.mxu0
    %v9463 = vpop.f32.mrf.mxu0
    %9464 = vmatmul.bf16.gmra.mxu0 %v9150
    %v9465 = vpop.f32.mrf.mxu0
    %v9466 = vadd.f32 0.0, %v9465
    %v9467 = vpop.f32.mrf.mxu0
    %9468 = vmatmul.bf16.gmra.mxu0 %v9152
    %v9469 = vpop.f32.mrf.mxu0
    %v9470 = vpop.f32.mrf.mxu0
    %v9471 = vadd.f32 0.0, %v9470
    %9472 = vmatmul.bf16.gmra.mxu0 %v9154
    %v9473 = vpop.f32.mrf.mxu0
    %v9474 = vpop.f32.mrf.mxu0
    %9475 = vmatmul.bf16.gmra.mxu0 %v9156
    %v9476 = vpop.f32.mrf.mxu0
    %v9477 = vadd.f32 0.0, %v9476
    %v9478 = vpop.f32.mrf.mxu0
    %9479 = vdwg.mxu0
    %9480 = vmatpush.bf16.msra.mxu0 %v6441
    %9481 = vmatpush.bf16.msra.mxu0 %v6439
    %9482 = vmatpush.bf16.msra.mxu0 %v6437
    %9483 = vmatpush.bf16.msra.mxu0 %v6435
    %9484 = vmatpush.bf16.msra.mxu0 %v6433
    %9485 = vmatpush.bf16.msra.mxu0 %v6431
    %9486 = vmatpush.bf16.msra.mxu0 %v6429
    %9487 = vmatpush.bf16.msra.mxu0 %v6427
    %9488 = vmatmul.bf16.gmra.mxu0 %v9147
    %v9489 = vpop.f32.mrf.mxu0
    %v9490 = vpop.f32.mrf.mxu0
    %v9491 = vadd.f32 %v9460, %v9490
    %9492 = vmatmul.bf16.gmra.mxu0 %v9149
    %v9493 = vpop.f32.mrf.mxu0
    %v9494 = vpop.f32.mrf.mxu0
    %9495 = vmatmul.bf16.gmra.mxu0 %v9151
    %v9496 = vpop.f32.mrf.mxu0
    %v9497 = vadd.f32 %v9466, %v9496
    %v9498 = vpop.f32.mrf.mxu0
    %9499 = vmatmul.bf16.gmra.mxu0 %v9153
    %v9500 = vpop.f32.mrf.mxu0
    %v9501 = vpop.f32.mrf.mxu0
    %v9502 = vadd.f32 %v9471, %v9501
    %9503 = vmatmul.bf16.gmra.mxu0 %v9155
    %v9504 = vpop.f32.mrf.mxu0
    %v9505 = vpop.f32.mrf.mxu0
    %9506 = vmatmul.bf16.gmra.mxu0 %v9157
    %v9507 = vpop.f32.mrf.mxu0
    %v9508 = vadd.f32 %v9477, %v9507
    %v9509 = vpop.f32.mrf.mxu0
    %9510 = vdwg.mxu0
    %v9519 = vrot.slane %v9429, 1
    %v9520 = vrot.slane %v9491, 1
    %v9521 = vrot.slane %v9435, 1
    %v9522 = vrot.slane %v9497, 1
    %v9523 = vrot.slane %v9440, 1
    %v9524 = vrot.slane %v9502, 1
    %v9525 = vrot.slane %v9446, 1
    %v9526 = vrot.slane %v9508, 1
    %v9535 = vadd.f32 %v9371, %v9519
    %v9536 = vadd.f32 %v9372, %v9520
    %v9537 = vadd.f32 %v9373, %v9519
    %v9538 = vadd.f32 %v9374, %v9520
    %v9539 = vadd.f32 %v9375, %v9521
    %v9540 = vadd.f32 %v9376, %v9522
    %v9541 = vadd.f32 %v9377, %v9521
    %v9542 = vadd.f32 %v9378, %v9522
    %v9543 = vadd.f32 %v9379, %v9523
    %v9544 = vadd.f32 %v9380, %v9524
    %v9545 = vadd.f32 %v9381, %v9523
    %v9546 = vadd.f32 %v9382, %v9524
    %v9547 = vadd.f32 %v9383, %v9525
    %v9548 = vadd.f32 %v9384, %v9526
    %v9549 = vadd.f32 %v9385, %v9525
    %v9550 = vadd.f32 %v9386, %v9526
    %9551 = vmatpush.bf16.msra.mxu0 %v6781
    %9552 = vmatpush.bf16.msra.mxu0 %v6779
    %9553 = vmatpush.bf16.msra.mxu0 %v6777
    %9554 = vmatpush.bf16.msra.mxu0 %v6775
    %9555 = vmatpush.bf16.msra.mxu0 %v6773
    %9556 = vmatpush.bf16.msra.mxu0 %v6771
    %9557 = vmatpush.bf16.msra.mxu0 %v6769
    %9558 = vmatpush.bf16.msra.mxu0 %v6767
    %9559 = vmatmul.bf16.gmra.mxu0 %v9146
    %v9560 = vpop.f32.mrf.mxu0
    %v9561 = vpop.f32.mrf.mxu0
    %v9562 = vadd.f32 0.0, %v9561
    %9563 = vmatmul.bf16.gmra.mxu0 %v9148
    %v9564 = vpop.f32.mrf.mxu0
    %v9565 = vpop.f32.mrf.mxu0
    %9566 = vmatmul.bf16.gmra.mxu0 %v9150
    %v9567 = vpop.f32.mrf.mxu0
    %v9568 = vadd.f32 0.0, %v9567
    %v9569 = vpop.f32.mrf.mxu0
    %9570 = vmatmul.bf16.gmra.mxu0 %v9152
    %v9571 = vpop.f32.mrf.mxu0
    %v9572 = vpop.f32.mrf.mxu0
    %v9573 = vadd.f32 0.0, %v9572
    %9574 = vmatmul.bf16.gmra.mxu0 %v9154
    %v9575 = vpop.f32.mrf.mxu0
    %v9576 = vpop.f32.mrf.mxu0
    %9577 = vmatmul.bf16.gmra.mxu0 %v9156
    %v9578 = vpop.f32.mrf.mxu0
    %v9579 = vadd.f32 0.0, %v9578
    %v9580 = vpop.f32.mrf.mxu0
    %9581 = vdwg.mxu0
    %9582 = vmatpush.bf16.msra.mxu0 %v6797
    %9583 = vmatpush.bf16.msra.mxu0 %v6795
    %9584 = vmatpush.bf16.msra.mxu0 %v6793
    %9585 = vmatpush.bf16.msra.mxu0 %v6791
    %9586 = vmatpush.bf16.msra.mxu0 %v6789
    %9587 = vmatpush.bf16.msra.mxu0 %v6787
    %9588 = vmatpush.bf16.msra.mxu0 %v6785
    %9589 = vmatpush.bf16.msra.mxu0 %v6783
    %9590 = vmatmul.bf16.gmra.mxu0 %v9147
    %v9591 = vpop.f32.mrf.mxu0
    %v9592 = vpop.f32.mrf.mxu0
    %v9593 = vadd.f32 %v9562, %v9592
    %9594 = vmatmul.bf16.gmra.mxu0 %v9149
    %v9595 = vpop.f32.mrf.mxu0
    %v9596 = vpop.f32.mrf.mxu0
    %9597 = vmatmul.bf16.gmra.mxu0 %v9151
    %v9598 = vpop.f32.mrf.mxu0
    %v9599 = vadd.f32 %v9568, %v9598
    %v9600 = vpop.f32.mrf.mxu0
    %9601 = vmatmul.bf16.gmra.mxu0 %v9153
    %v9602 = vpop.f32.mrf.mxu0
    %v9603 = vpop.f32.mrf.mxu0
    %v9604 = vadd.f32 %v9573, %v9603
    %9605 = vmatmul.bf16.gmra.mxu0 %v9155
    %v9606 = vpop.f32.mrf.mxu0
    %v9607 = vpop.f32.mrf.mxu0
    %9608 = vmatmul.bf16.gmra.mxu0 %v9157
    %v9609 = vpop.f32.mrf.mxu0
    %v9610 = vadd.f32 %v9579, %v9609
    %v9611 = vpop.f32.mrf.mxu0
    %9612 = vdwg.mxu0
    %9613 = vmatpush.bf16.msra.mxu0 %v6782
    %9614 = vmatpush.bf16.msra.mxu0 %v6780
    %9615 = vmatpush.bf16.msra.mxu0 %v6778
    %9616 = vmatpush.bf16.msra.mxu0 %v6776
    %9617 = vmatpush.bf16.msra.mxu0 %v6774
    %9618 = vmatpush.bf16.msra.mxu0 %v6772
    %9619 = vmatpush.bf16.msra.mxu0 %v6770
    %9620 = vmatpush.bf16.msra.mxu0 %v6768
    %9621 = vmatmul.bf16.gmra.mxu0 %v9146
    %v9622 = vpop.f32.mrf.mxu0
    %v9623 = vpop.f32.mrf.mxu0
    %v9624 = vadd.f32 0.0, %v9623
    %9625 = vmatmul.bf16.gmra.mxu0 %v9148
    %v9626 = vpop.f32.mrf.mxu0
    %v9627 = vpop.f32.mrf.mxu0
    %9628 = vmatmul.bf16.gmra.mxu0 %v9150
    %v9629 = vpop.f32.mrf.mxu0
    %v9630 = vadd.f32 0.0, %v9629
    %v9631 = vpop.f32.mrf.mxu0
    %9632 = vmatmul.bf16.gmra.mxu0 %v9152
    %v9633 = vpop.f32.mrf.mxu0
    %v9634 = vpop.f32.mrf.mxu0
    %v9635 = vadd.f32 0.0, %v9634
    %9636 = vmatmul.bf16.gmra.mxu0 %v9154
    %v9637 = vpop.f32.mrf.mxu0
    %v9638 = vpop.f32.mrf.mxu0
    %9639 = vmatmul.bf16.gmra.mxu0 %v9156
    %v9640 = vpop.f32.mrf.mxu0
    %v9641 = vadd.f32 0.0, %v9640
    %v9642 = vpop.f32.mrf.mxu0
    %9643 = vdwg.mxu0
    %9644 = vmatpush.bf16.msra.mxu0 %v6798
    %9645 = vmatpush.bf16.msra.mxu0 %v6796
    %9646 = vmatpush.bf16.msra.mxu0 %v6794
    %9647 = vmatpush.bf16.msra.mxu0 %v6792
    %9648 = vmatpush.bf16.msra.mxu0 %v6790
    %9649 = vmatpush.bf16.msra.mxu0 %v6788
    %9650 = vmatpush.bf16.msra.mxu0 %v6786
    %9651 = vmatpush.bf16.msra.mxu0 %v6784
    %9652 = vmatmul.bf16.gmra.mxu0 %v9147
    %v9653 = vpop.f32.mrf.mxu0
    %v9654 = vpop.f32.mrf.mxu0
    %v9655 = vadd.f32 %v9624, %v9654
    %9656 = vmatmul.bf16.gmra.mxu0 %v9149
    %v9657 = vpop.f32.mrf.mxu0
    %v9658 = vpop.f32.mrf.mxu0
    %9659 = vmatmul.bf16.gmra.mxu0 %v9151
    %v9660 = vpop.f32.mrf.mxu0
    %v9661 = vadd.f32 %v9630, %v9660
    %v9662 = vpop.f32.mrf.mxu0
    %9663 = vmatmul.bf16.gmra.mxu0 %v9153
    %v9664 = vpop.f32.mrf.mxu0
    %v9665 = vpop.f32.mrf.mxu0
    %v9666 = vadd.f32 %v9635, %v9665
    %9667 = vmatmul.bf16.gmra.mxu0 %v9155
    %v9668 = vpop.f32.mrf.mxu0
    %v9669 = vpop.f32.mrf.mxu0
    %9670 = vmatmul.bf16.gmra.mxu0 %v9157
    %v9671 = vpop.f32.mrf.mxu0
    %v9672 = vadd.f32 %v9641, %v9671
    %v9673 = vpop.f32.mrf.mxu0
    %9674 = vdwg.mxu0
    %v9683 = vrot.slane %v9593, 2
    %v9684 = vrot.slane %v9655, 2
    %v9685 = vrot.slane %v9599, 2
    %v9686 = vrot.slane %v9661, 2
    %v9687 = vrot.slane %v9604, 2
    %v9688 = vrot.slane %v9666, 2
    %v9689 = vrot.slane %v9610, 2
    %v9690 = vrot.slane %v9672, 2
    %v9699 = vadd.f32 %v9535, %v9683
    %v9700 = vadd.f32 %v9536, %v9684
    %v9701 = vadd.f32 %v9537, %v9683
    %v9702 = vadd.f32 %v9538, %v9684
    %v9703 = vadd.f32 %v9539, %v9685
    %v9704 = vadd.f32 %v9540, %v9686
    %v9705 = vadd.f32 %v9541, %v9685
    %v9706 = vadd.f32 %v9542, %v9686
    %v9707 = vadd.f32 %v9543, %v9687
    %v9708 = vadd.f32 %v9544, %v9688
    %v9709 = vadd.f32 %v9545, %v9687
    %v9710 = vadd.f32 %v9546, %v9688
    %v9711 = vadd.f32 %v9547, %v9689
    %v9712 = vadd.f32 %v9548, %v9690
    %v9713 = vadd.f32 %v9549, %v9689
    %v9714 = vadd.f32 %v9550, %v9690
    %9715 = vmatpush.bf16.msra.mxu0 %v7138
    %9716 = vmatpush.bf16.msra.mxu0 %v7136
    %9717 = vmatpush.bf16.msra.mxu0 %v7134
    %9718 = vmatpush.bf16.msra.mxu0 %v7132
    %9719 = vmatpush.bf16.msra.mxu0 %v7130
    %9720 = vmatpush.bf16.msra.mxu0 %v7128
    %9721 = vmatpush.bf16.msra.mxu0 %v7126
    %9722 = vmatpush.bf16.msra.mxu0 %v7124
    %9723 = vmatmul.bf16.gmra.mxu0 %v9182
    %v9724 = vpop.f32.mrf.mxu0
    %v9725 = vadd.f32 0.0, %v9724
    %v9726 = vpop.f32.mrf.mxu0
    %v9727 = vadd.f32 0.0, %v9726
    %9728 = vmatmul.bf16.gmra.mxu0 %v9184
    %v9729 = vpop.f32.mrf.mxu0
    %v9730 = vpop.f32.mrf.mxu0
    %v9731 = vadd.f32 0.0, %v9730
    %9732 = vmatmul.bf16.gmra.mxu0 %v9186
    %v9733 = vpop.f32.mrf.mxu0
    %v9734 = vadd.f32 0.0, %v9733
    %v9735 = vpop.f32.mrf.mxu0
    %9736 = vmatmul.bf16.gmra.mxu0 %v9188
    %v9737 = vpop.f32.mrf.mxu0
    %v9738 = vadd.f32 0.0, %v9737
    %v9739 = vpop.f32.mrf.mxu0
    %v9740 = vadd.f32 0.0, %v9739
    %9741 = vmatmul.bf16.gmra.mxu0 %v9190
    %v9742 = vpop.f32.mrf.mxu0
    %v9743 = vpop.f32.mrf.mxu0
    %v9744 = vadd.f32 0.0, %v9743
    %9745 = vmatmul.bf16.gmra.mxu0 %v9192
    %v9746 = vpop.f32.mrf.mxu0
    %v9747 = vadd.f32 0.0, %v9746
    %v9748 = vpop.f32.mrf.mxu0
    %9749 = vdwg.mxu0
    %9750 = vmatpush.bf16.msra.mxu0 %v7154
    %9751 = vmatpush.bf16.msra.mxu0 %v7152
    %9752 = vmatpush.bf16.msra.mxu0 %v7150
    %9753 = vmatpush.bf16.msra.mxu0 %v7148
    %9754 = vmatpush.bf16.msra.mxu0 %v7146
    %9755 = vmatpush.bf16.msra.mxu0 %v7144
    %9756 = vmatpush.bf16.msra.mxu0 %v7142
    %9757 = vmatpush.bf16.msra.mxu0 %v7140
    %9758 = vmatmul.bf16.gmra.mxu0 %v9183
    %v9759 = vpop.f32.mrf.mxu0
    %v9760 = vadd.f32 %v9725, %v9759
    %v9761 = vpop.f32.mrf.mxu0
    %v9762 = vadd.f32 %v9727, %v9761
    %9763 = vmatmul.bf16.gmra.mxu0 %v9185
    %v9764 = vpop.f32.mrf.mxu0
    %v9765 = vpop.f32.mrf.mxu0
    %v9766 = vadd.f32 %v9731, %v9765
    %9767 = vmatmul.bf16.gmra.mxu0 %v9187
    %v9768 = vpop.f32.mrf.mxu0
    %v9769 = vadd.f32 %v9734, %v9768
    %v9770 = vpop.f32.mrf.mxu0
    %9771 = vmatmul.bf16.gmra.mxu0 %v9189
    %v9772 = vpop.f32.mrf.mxu0
    %v9773 = vadd.f32 %v9738, %v9772
    %v9774 = vpop.f32.mrf.mxu0
    %v9775 = vadd.f32 %v9740, %v9774
    %9776 = vmatmul.bf16.gmra.mxu0 %v9191
    %v9777 = vpop.f32.mrf.mxu0
    %v9778 = vpop.f32.mrf.mxu0
    %v9779 = vadd.f32 %v9744, %v9778
    %9780 = vmatmul.bf16.gmra.mxu0 %v9193
    %v9781 = vpop.f32.mrf.mxu0
    %v9782 = vadd.f32 %v9747, %v9781
    %v9783 = vpop.f32.mrf.mxu0
    %9784 = vdwg.mxu0
    %9785 = vmatpush.bf16.msra.mxu0 %v7139
    %9786 = vmatpush.bf16.msra.mxu0 %v7137
    %9787 = vmatpush.bf16.msra.mxu0 %v7135
    %9788 = vmatpush.bf16.msra.mxu0 %v7133
    %9789 = vmatpush.bf16.msra.mxu0 %v7131
    %9790 = vmatpush.bf16.msra.mxu0 %v7129
    %9791 = vmatpush.bf16.msra.mxu0 %v7127
    %9792 = vmatpush.bf16.msra.mxu0 %v7125
    %9793 = vmatmul.bf16.gmra.mxu0 %v9182
    %v9794 = vpop.f32.mrf.mxu0
    %v9795 = vadd.f32 0.0, %v9794
    %v9796 = vpop.f32.mrf.mxu0
    %v9797 = vadd.f32 0.0, %v9796
    %9798 = vmatmul.bf16.gmra.mxu0 %v9184
    %v9799 = vpop.f32.mrf.mxu0
    %v9800 = vpop.f32.mrf.mxu0
    %v9801 = vadd.f32 0.0, %v9800
    %9802 = vmatmul.bf16.gmra.mxu0 %v9186
    %v9803 = vpop.f32.mrf.mxu0
    %v9804 = vadd.f32 0.0, %v9803
    %v9805 = vpop.f32.mrf.mxu0
    %9806 = vmatmul.bf16.gmra.mxu0 %v9188
    %v9807 = vpop.f32.mrf.mxu0
    %v9808 = vadd.f32 0.0, %v9807
    %v9809 = vpop.f32.mrf.mxu0
    %v9810 = vadd.f32 0.0, %v9809
    %9811 = vmatmul.bf16.gmra.mxu0 %v9190
    %v9812 = vpop.f32.mrf.mxu0
    %v9813 = vpop.f32.mrf.mxu0
    %v9814 = vadd.f32 0.0, %v9813
    %9815 = vmatmul.bf16.gmra.mxu0 %v9192
    %v9816 = vpop.f32.mrf.mxu0
    %v9817 = vadd.f32 0.0, %v9816
    %v9818 = vpop.f32.mrf.mxu0
    %9819 = vdwg.mxu0
    %9820 = vmatpush.bf16.msra.mxu0 %v7155
    %9821 = vmatpush.bf16.msra.mxu0 %v7153
    %9822 = vmatpush.bf16.msra.mxu0 %v7151
    %9823 = vmatpush.bf16.msra.mxu0 %v7149
    %9824 = vmatpush.bf16.msra.mxu0 %v7147
    %9825 = vmatpush.bf16.msra.mxu0 %v7145
    %9826 = vmatpush.bf16.msra.mxu0 %v7143
    %9827 = vmatpush.bf16.msra.mxu0 %v7141
    %9828 = vmatmul.bf16.gmra.mxu0 %v9183
    %v9829 = vpop.f32.mrf.mxu0
    %v9830 = vadd.f32 %v9795, %v9829
    %v9831 = vpop.f32.mrf.mxu0
    %v9832 = vadd.f32 %v9797, %v9831
    %9833 = vmatmul.bf16.gmra.mxu0 %v9185
    %v9834 = vpop.f32.mrf.mxu0
    %v9835 = vpop.f32.mrf.mxu0
    %v9836 = vadd.f32 %v9801, %v9835
    %9837 = vmatmul.bf16.gmra.mxu0 %v9187
    %v9838 = vpop.f32.mrf.mxu0
    %v9839 = vadd.f32 %v9804, %v9838
    %v9840 = vpop.f32.mrf.mxu0
    %9841 = vmatmul.bf16.gmra.mxu0 %v9189
    %v9842 = vpop.f32.mrf.mxu0
    %v9843 = vadd.f32 %v9808, %v9842
    %v9844 = vpop.f32.mrf.mxu0
    %v9845 = vadd.f32 %v9810, %v9844
    %9846 = vmatmul.bf16.gmra.mxu0 %v9191
    %v9847 = vpop.f32.mrf.mxu0
    %v9848 = vpop.f32.mrf.mxu0
    %v9849 = vadd.f32 %v9814, %v9848
    %9850 = vmatmul.bf16.gmra.mxu0 %v9193
    %v9851 = vpop.f32.mrf.mxu0
    %v9852 = vadd.f32 %v9817, %v9851
    %v9853 = vpop.f32.mrf.mxu0
    %9854 = vdwg.mxu0
    %v9855 = vadd.f32 %v9699, %v9760
    %v9856 = vadd.f32 %v9700, %v9830
    %v9857 = vadd.f32 %v9701, %v9762
    %v9858 = vadd.f32 %v9702, %v9832
    %v9859 = vadd.f32 %v9703, %v9766
    %v9860 = vadd.f32 %v9704, %v9836
    %v9861 = vadd.f32 %v9705, %v9769
    %v9862 = vadd.f32 %v9706, %v9839
    %v9863 = vadd.f32 %v9707, %v9773
    %v9864 = vadd.f32 %v9708, %v9843
    %v9865 = vadd.f32 %v9709, %v9775
    %v9866 = vadd.f32 %v9710, %v9845
    %v9867 = vadd.f32 %v9711, %v9779
    %v9868 = vadd.f32 %v9712, %v9849
    %v9869 = vadd.f32 %v9713, %v9782
    %v9870 = vadd.f32 %v9714, %v9852
    %9871 = vmatpush.bf16.msra.mxu0 %v7487
    %9872 = vmatpush.bf16.msra.mxu0 %v7485
    %9873 = vmatpush.bf16.msra.mxu0 %v7483
    %9874 = vmatpush.bf16.msra.mxu0 %v7481
    %9875 = vmatpush.bf16.msra.mxu0 %v7479
    %9876 = vmatpush.bf16.msra.mxu0 %v7477
    %9877 = vmatpush.bf16.msra.mxu0 %v7475
    %9878 = vmatpush.bf16.msra.mxu0 %v7473
    %9879 = vmatmul.bf16.gmra.mxu0 %v9182
    %v9880 = vpop.f32.mrf.mxu0
    %v9881 = vpop.f32.mrf.mxu0
    %v9882 = vadd.f32 0.0, %v9881
    %9883 = vmatmul.bf16.gmra.mxu0 %v9184
    %v9884 = vpop.f32.mrf.mxu0
    %v9885 = vpop.f32.mrf.mxu0
    %9886 = vmatmul.bf16.gmra.mxu0 %v9186
    %v9887 = vpop.f32.mrf.mxu0
    %v9888 = vadd.f32 0.0, %v9887
    %v9889 = vpop.f32.mrf.mxu0
    %9890 = vmatmul.bf16.gmra.mxu0 %v9188
    %v9891 = vpop.f32.mrf.mxu0
    %v9892 = vpop.f32.mrf.mxu0
    %v9893 = vadd.f32 0.0, %v9892
    %9894 = vmatmul.bf16.gmra.mxu0 %v9190
    %v9895 = vpop.f32.mrf.mxu0
    %v9896 = vpop.f32.mrf.mxu0
    %9897 = vmatmul.bf16.gmra.mxu0 %v9192
    %v9898 = vpop.f32.mrf.mxu0
    %v9899 = vadd.f32 0.0, %v9898
    %v9900 = vpop.f32.mrf.mxu0
    %9901 = vdwg.mxu0
    %9902 = vmatpush.bf16.msra.mxu0 %v7503
    %9903 = vmatpush.bf16.msra.mxu0 %v7501
    %9904 = vmatpush.bf16.msra.mxu0 %v7499
    %9905 = vmatpush.bf16.msra.mxu0 %v7497
    %9906 = vmatpush.bf16.msra.mxu0 %v7495
    %9907 = vmatpush.bf16.msra.mxu0 %v7493
    %9908 = vmatpush.bf16.msra.mxu0 %v7491
    %9909 = vmatpush.bf16.msra.mxu0 %v7489
    %9910 = vmatmul.bf16.gmra.mxu0 %v9183
    %v9911 = vpop.f32.mrf.mxu0
    %v9912 = vpop.f32.mrf.mxu0
    %v9913 = vadd.f32 %v9882, %v9912
    %9914 = vmatmul.bf16.gmra.mxu0 %v9185
    %v9915 = vpop.f32.mrf.mxu0
    %v9916 = vpop.f32.mrf.mxu0
    %9917 = vmatmul.bf16.gmra.mxu0 %v9187
    %v9918 = vpop.f32.mrf.mxu0
    %v9919 = vadd.f32 %v9888, %v9918
    %v9920 = vpop.f32.mrf.mxu0
    %9921 = vmatmul.bf16.gmra.mxu0 %v9189
    %v9922 = vpop.f32.mrf.mxu0
    %v9923 = vpop.f32.mrf.mxu0
    %v9924 = vadd.f32 %v9893, %v9923
    %9925 = vmatmul.bf16.gmra.mxu0 %v9191
    %v9926 = vpop.f32.mrf.mxu0
    %v9927 = vpop.f32.mrf.mxu0
    %9928 = vmatmul.bf16.gmra.mxu0 %v9193
    %v9929 = vpop.f32.mrf.mxu0
    %v9930 = vadd.f32 %v9899, %v9929
    %v9931 = vpop.f32.mrf.mxu0
    %9932 = vdwg.mxu0
    %9933 = vmatpush.bf16.msra.mxu0 %v7488
    %9934 = vmatpush.bf16.msra.mxu0 %v7486
    %9935 = vmatpush.bf16.msra.mxu0 %v7484
    %9936 = vmatpush.bf16.msra.mxu0 %v7482
    %9937 = vmatpush.bf16.msra.mxu0 %v7480
    %9938 = vmatpush.bf16.msra.mxu0 %v7478
    %9939 = vmatpush.bf16.msra.mxu0 %v7476
    %9940 = vmatpush.bf16.msra.mxu0 %v7474
    %9941 = vmatmul.bf16.gmra.mxu0 %v9182
    %v9942 = vpop.f32.mrf.mxu0
    %v9943 = vpop.f32.mrf.mxu0
    %v9944 = vadd.f32 0.0, %v9943
    %9945 = vmatmul.bf16.gmra.mxu0 %v9184
    %v9946 = vpop.f32.mrf.mxu0
    %v9947 = vpop.f32.mrf.mxu0
    %9948 = vmatmul.bf16.gmra.mxu0 %v9186
    %v9949 = vpop.f32.mrf.mxu0
    %v9950 = vadd.f32 0.0, %v9949
    %v9951 = vpop.f32.mrf.mxu0
    %9952 = vmatmul.bf16.gmra.mxu0 %v9188
    %v9953 = vpop.f32.mrf.mxu0
    %v9954 = vpop.f32.mrf.mxu0
    %v9955 = vadd.f32 0.0, %v9954
    %9956 = vmatmul.bf16.gmra.mxu0 %v9190
    %v9957 = vpop.f32.mrf.mxu0
    %v9958 = vpop.f32.mrf.mxu0
    %9959 = vmatmul.bf16.gmra.mxu0 %v9192
    %v9960 = vpop.f32.mrf.mxu0
    %v9961 = vadd.f32 0.0, %v9960
    %v9962 = vpop.f32.mrf.mxu0
    %9963 = vdwg.mxu0
    %9964 = vmatpush.bf16.msra.mxu0 %v7504
    %9965 = vmatpush.bf16.msra.mxu0 %v7502
    %9966 = vmatpush.bf16.msra.mxu0 %v7500
    %9967 = vmatpush.bf16.msra.mxu0 %v7498
    %9968 = vmatpush.bf16.msra.mxu0 %v7496
    %9969 = vmatpush.bf16.msra.mxu0 %v7494
    %9970 = vmatpush.bf16.msra.mxu0 %v7492
    %9971 = vmatpush.bf16.msra.mxu0 %v7490
    %9972 = vmatmul.bf16.gmra.mxu0 %v9183
    %v9973 = vpop.f32.mrf.mxu0
    %v9974 = vpop.f32.mrf.mxu0
    %v9975 = vadd.f32 %v9944, %v9974
    %9976 = vmatmul.bf16.gmra.mxu0 %v9185
    %v9977 = vpop.f32.mrf.mxu0
    %v9978 = vpop.f32.mrf.mxu0
    %9979 = vmatmul.bf16.gmra.mxu0 %v9187
    %v9980 = vpop.f32.mrf.mxu0
    %v9981 = vadd.f32 %v9950, %v9980
    %v9982 = vpop.f32.mrf.mxu0
    %9983 = vmatmul.bf16.gmra.mxu0 %v9189
    %v9984 = vpop.f32.mrf.mxu0
    %v9985 = vpop.f32.mrf.mxu0
    %v9986 = vadd.f32 %v9955, %v9985
    %9987 = vmatmul.bf16.gmra.mxu0 %v9191
    %v9988 = vpop.f32.mrf.mxu0
    %v9989 = vpop.f32.mrf.mxu0
    %9990 = vmatmul.bf16.gmra.mxu0 %v9193
    %v9991 = vpop.f32.mrf.mxu0
    %v9992 = vadd.f32 %v9961, %v9991
    %v9993 = vpop.f32.mrf.mxu0
    %9994 = vdwg.mxu0
    %v10003 = vrot.slane %v9913, 1
    %v10004 = vrot.slane %v9975, 1
    %v10005 = vrot.slane %v9919, 1
    %v10006 = vrot.slane %v9981, 1
    %v10007 = vrot.slane %v9924, 1
    %v10008 = vrot.slane %v9986, 1
    %v10009 = vrot.slane %v9930, 1
    %v10010 = vrot.slane %v9992, 1
    %v10019 = vadd.f32 %v9855, %v10003
    %v10020 = vadd.f32 %v9856, %v10004
    %v10021 = vadd.f32 %v9857, %v10003
    %v10022 = vadd.f32 %v9858, %v10004
    %v10023 = vadd.f32 %v9859, %v10005
    %v10024 = vadd.f32 %v9860, %v10006
    %v10025 = vadd.f32 %v9861, %v10005
    %v10026 = vadd.f32 %v9862, %v10006
    %v10027 = vadd.f32 %v9863, %v10007
    %v10028 = vadd.f32 %v9864, %v10008
    %v10029 = vadd.f32 %v9865, %v10007
    %v10030 = vadd.f32 %v9866, %v10008
    %v10031 = vadd.f32 %v9867, %v10009
    %v10032 = vadd.f32 %v9868, %v10010
    %v10033 = vadd.f32 %v9869, %v10009
    %v10034 = vadd.f32 %v9870, %v10010
    %10035 = vmatpush.bf16.msra.mxu0 %v7844
    %10036 = vmatpush.bf16.msra.mxu0 %v7842
    %10037 = vmatpush.bf16.msra.mxu0 %v7840
    %10038 = vmatpush.bf16.msra.mxu0 %v7838
    %10039 = vmatpush.bf16.msra.mxu0 %v7836
    %10040 = vmatpush.bf16.msra.mxu0 %v7834
    %10041 = vmatpush.bf16.msra.mxu0 %v7832
    %10042 = vmatpush.bf16.msra.mxu0 %v7830
    %10043 = vmatmul.bf16.gmra.mxu0 %v9182
    %v10044 = vpop.f32.mrf.mxu0
    %v10045 = vpop.f32.mrf.mxu0
    %v10046 = vadd.f32 0.0, %v10045
    %10047 = vmatmul.bf16.gmra.mxu0 %v9184
    %v10048 = vpop.f32.mrf.mxu0
    %v10049 = vpop.f32.mrf.mxu0
    %10050 = vmatmul.bf16.gmra.mxu0 %v9186
    %v10051 = vpop.f32.mrf.mxu0
    %v10052 = vadd.f32 0.0, %v10051
    %v10053 = vpop.f32.mrf.mxu0
    %10054 = vmatmul.bf16.gmra.mxu0 %v9188
    %v10055 = vpop.f32.mrf.mxu0
    %v10056 = vpop.f32.mrf.mxu0
    %v10057 = vadd.f32 0.0, %v10056
    %10058 = vmatmul.bf16.gmra.mxu0 %v9190
    %v10059 = vpop.f32.mrf.mxu0
    %v10060 = vpop.f32.mrf.mxu0
    %10061 = vmatmul.bf16.gmra.mxu0 %v9192
    %v10062 = vpop.f32.mrf.mxu0
    %v10063 = vadd.f32 0.0, %v10062
    %v10064 = vpop.f32.mrf.mxu0
    %10065 = vdwg.mxu0
    %10066 = vmatpush.bf16.msra.mxu0 %v7860
    %10067 = vmatpush.bf16.msra.mxu0 %v7858
    %10068 = vmatpush.bf16.msra.mxu0 %v7856
    %10069 = vmatpush.bf16.msra.mxu0 %v7854
    %10070 = vmatpush.bf16.msra.mxu0 %v7852
    %10071 = vmatpush.bf16.msra.mxu0 %v7850
    %10072 = vmatpush.bf16.msra.mxu0 %v7848
    %10073 = vmatpush.bf16.msra.mxu0 %v7846
    %10074 = vmatmul.bf16.gmra.mxu0 %v9183
    %v10075 = vpop.f32.mrf.mxu0
    %v10076 = vpop.f32.mrf.mxu0
    %v10077 = vadd.f32 %v10046, %v10076
    %10078 = vmatmul.bf16.gmra.mxu0 %v9185
    %v10079 = vpop.f32.mrf.mxu0
    %v10080 = vpop.f32.mrf.mxu0
    %10081 = vmatmul.bf16.gmra.mxu0 %v9187
    %v10082 = vpop.f32.mrf.mxu0
    %v10083 = vadd.f32 %v10052, %v10082
    %v10084 = vpop.f32.mrf.mxu0
    %10085 = vmatmul.bf16.gmra.mxu0 %v9189
    %v10086 = vpop.f32.mrf.mxu0
    %v10087 = vpop.f32.mrf.mxu0
    %v10088 = vadd.f32 %v10057, %v10087
    %10089 = vmatmul.bf16.gmra.mxu0 %v9191
    %v10090 = vpop.f32.mrf.mxu0
    %v10091 = vpop.f32.mrf.mxu0
    %10092 = vmatmul.bf16.gmra.mxu0 %v9193
    %v10093 = vpop.f32.mrf.mxu0
    %v10094 = vadd.f32 %v10063, %v10093
    %v10095 = vpop.f32.mrf.mxu0
    %10096 = vdwg.mxu0
    %10097 = vmatpush.bf16.msra.mxu0 %v7845
    %10098 = vmatpush.bf16.msra.mxu0 %v7843
    %10099 = vmatpush.bf16.msra.mxu0 %v7841
    %10100 = vmatpush.bf16.msra.mxu0 %v7839
    %10101 = vmatpush.bf16.msra.mxu0 %v7837
    %10102 = vmatpush.bf16.msra.mxu0 %v7835
    %10103 = vmatpush.bf16.msra.mxu0 %v7833
    %10104 = vmatpush.bf16.msra.mxu0 %v7831
    %10105 = vmatmul.bf16.gmra.mxu0 %v9182
    %v10106 = vpop.f32.mrf.mxu0
    %v10107 = vpop.f32.mrf.mxu0
    %v10108 = vadd.f32 0.0, %v10107
    %10109 = vmatmul.bf16.gmra.mxu0 %v9184
    %v10110 = vpop.f32.mrf.mxu0
    %v10111 = vpop.f32.mrf.mxu0
    %10112 = vmatmul.bf16.gmra.mxu0 %v9186
    %v10113 = vpop.f32.mrf.mxu0
    %v10114 = vadd.f32 0.0, %v10113
    %v10115 = vpop.f32.mrf.mxu0
    %10116 = vmatmul.bf16.gmra.mxu0 %v9188
    %v10117 = vpop.f32.mrf.mxu0
    %v10118 = vpop.f32.mrf.mxu0
    %v10119 = vadd.f32 0.0, %v10118
    %10120 = vmatmul.bf16.gmra.mxu0 %v9190
    %v10121 = vpop.f32.mrf.mxu0
    %v10122 = vpop.f32.mrf.mxu0
    %10123 = vmatmul.bf16.gmra.mxu0 %v9192
    %v10124 = vpop.f32.mrf.mxu0
    %v10125 = vadd.f32 0.0, %v10124
    %v10126 = vpop.f32.mrf.mxu0
    %10127 = vdwg.mxu0
    %10128 = vmatpush.bf16.msra.mxu0 %v7861
    %10129 = vmatpush.bf16.msra.mxu0 %v7859
    %10130 = vmatpush.bf16.msra.mxu0 %v7857
    %10131 = vmatpush.bf16.msra.mxu0 %v7855
    %10132 = vmatpush.bf16.msra.mxu0 %v7853
    %10133 = vmatpush.bf16.msra.mxu0 %v7851
    %10134 = vmatpush.bf16.msra.mxu0 %v7849
    %10135 = vmatpush.bf16.msra.mxu0 %v7847
    %10136 = vmatmul.bf16.gmra.mxu0 %v9183
    %v10137 = vpop.f32.mrf.mxu0
    %v10138 = vpop.f32.mrf.mxu0
    %v10139 = vadd.f32 %v10108, %v10138
    %10140 = vmatmul.bf16.gmra.mxu0 %v9185
    %v10141 = vpop.f32.mrf.mxu0
    %v10142 = vpop.f32.mrf.mxu0
    %10143 = vmatmul.bf16.gmra.mxu0 %v9187
    %v10144 = vpop.f32.mrf.mxu0
    %v10145 = vadd.f32 %v10114, %v10144
    %v10146 = vpop.f32.mrf.mxu0
    %10147 = vmatmul.bf16.gmra.mxu0 %v9189
    %v10148 = vpop.f32.mrf.mxu0
    %v10149 = vpop.f32.mrf.mxu0
    %v10150 = vadd.f32 %v10119, %v10149
    %10151 = vmatmul.bf16.gmra.mxu0 %v9191
    %v10152 = vpop.f32.mrf.mxu0
    %v10153 = vpop.f32.mrf.mxu0
    %10154 = vmatmul.bf16.gmra.mxu0 %v9193
    %v10155 = vpop.f32.mrf.mxu0
    %v10156 = vadd.f32 %v10125, %v10155
    %v10157 = vpop.f32.mrf.mxu0
    %10158 = vdwg.mxu0
    %v10167 = vrot.slane %v10077, 2
    %v10168 = vrot.slane %v10139, 2
    %v10169 = vrot.slane %v10083, 2
    %v10170 = vrot.slane %v10145, 2
    %v10171 = vrot.slane %v10088, 2
    %v10172 = vrot.slane %v10150, 2
    %v10173 = vrot.slane %v10094, 2
    %v10174 = vrot.slane %v10156, 2
    %v10183 = vadd.f32 %v10019, %v10167
    %v10184 = vadd.f32 %v10020, %v10168
    %v10185 = vadd.f32 %v10021, %v10167
    %v10186 = vadd.f32 %v10022, %v10168
    %v10187 = vadd.f32 %v10023, %v10169
    %v10188 = vadd.f32 %v10024, %v10170
    %v10189 = vadd.f32 %v10025, %v10169
    %v10190 = vadd.f32 %v10026, %v10170
    %v10191 = vadd.f32 %v10027, %v10171
    %v10192 = vadd.f32 %v10028, %v10172
    %v10193 = vadd.f32 %v10029, %v10171
    %v10194 = vadd.f32 %v10030, %v10172
    %v10195 = vadd.f32 %v10031, %v10173
    %v10196 = vadd.f32 %v10032, %v10174
    %v10197 = vadd.f32 %v10033, %v10173
    %v10198 = vadd.f32 %v10034, %v10174
    %10199 = vmatpush.bf16.msra.mxu0 %v8201
    %10200 = vmatpush.bf16.msra.mxu0 %v8199
    %10201 = vmatpush.bf16.msra.mxu0 %v8197
    %10202 = vmatpush.bf16.msra.mxu0 %v8195
    %10203 = vmatpush.bf16.msra.mxu0 %v8193
    %10204 = vmatpush.bf16.msra.mxu0 %v8191
    %10205 = vmatpush.bf16.msra.mxu0 %v8189
    %10206 = vmatpush.bf16.msra.mxu0 %v8187
    %10207 = vmatmul.bf16.gmra.mxu0 %v9219
    %v10208 = vpop.f32.mrf.mxu0
    %v10209 = vadd.f32 0.0, %v10208
    %v10210 = vpop.f32.mrf.mxu0
    %v10211 = vadd.f32 0.0, %v10210
    %10212 = vmatmul.bf16.gmra.mxu0 %v9221
    %v10213 = vpop.f32.mrf.mxu0
    %v10214 = vpop.f32.mrf.mxu0
    %v10215 = vadd.f32 0.0, %v10214
    %10216 = vmatmul.bf16.gmra.mxu0 %v9223
    %v10217 = vpop.f32.mrf.mxu0
    %v10218 = vadd.f32 0.0, %v10217
    %v10219 = vpop.f32.mrf.mxu0
    %10220 = vmatmul.bf16.gmra.mxu0 %v9225
    %v10221 = vpop.f32.mrf.mxu0
    %v10222 = vadd.f32 0.0, %v10221
    %v10223 = vpop.f32.mrf.mxu0
    %v10224 = vadd.f32 0.0, %v10223
    %10225 = vmatmul.bf16.gmra.mxu0 %v9227
    %v10226 = vpop.f32.mrf.mxu0
    %v10227 = vpop.f32.mrf.mxu0
    %v10228 = vadd.f32 0.0, %v10227
    %10229 = vmatmul.bf16.gmra.mxu0 %v9229
    %v10230 = vpop.f32.mrf.mxu0
    %v10231 = vadd.f32 0.0, %v10230
    %v10232 = vpop.f32.mrf.mxu0
    %10233 = vdwg.mxu0
    %10234 = vmatpush.bf16.msra.mxu0 %v8217
    %10235 = vmatpush.bf16.msra.mxu0 %v8215
    %10236 = vmatpush.bf16.msra.mxu0 %v8213
    %10237 = vmatpush.bf16.msra.mxu0 %v8211
    %10238 = vmatpush.bf16.msra.mxu0 %v8209
    %10239 = vmatpush.bf16.msra.mxu0 %v8207
    %10240 = vmatpush.bf16.msra.mxu0 %v8205
    %10241 = vmatpush.bf16.msra.mxu0 %v8203
    %10242 = vmatmul.bf16.gmra.mxu0 %v9220
    %v10243 = vpop.f32.mrf.mxu0
    %v10244 = vadd.f32 %v10209, %v10243
    %v10245 = vpop.f32.mrf.mxu0
    %v10246 = vadd.f32 %v10211, %v10245
    %10247 = vmatmul.bf16.gmra.mxu0 %v9222
    %v10248 = vpop.f32.mrf.mxu0
    %v10249 = vpop.f32.mrf.mxu0
    %v10250 = vadd.f32 %v10215, %v10249
    %10251 = vmatmul.bf16.gmra.mxu0 %v9224
    %v10252 = vpop.f32.mrf.mxu0
    %v10253 = vadd.f32 %v10218, %v10252
    %v10254 = vpop.f32.mrf.mxu0
    %10255 = vmatmul.bf16.gmra.mxu0 %v9226
    %v10256 = vpop.f32.mrf.mxu0
    %v10257 = vadd.f32 %v10222, %v10256
    %v10258 = vpop.f32.mrf.mxu0
    %v10259 = vadd.f32 %v10224, %v10258
    %10260 = vmatmul.bf16.gmra.mxu0 %v9228
    %v10261 = vpop.f32.mrf.mxu0
    %v10262 = vpop.f32.mrf.mxu0
    %v10263 = vadd.f32 %v10228, %v10262
    %10264 = vmatmul.bf16.gmra.mxu0 %v9230
    %v10265 = vpop.f32.mrf.mxu0
    %v10266 = vadd.f32 %v10231, %v10265
    %v10267 = vpop.f32.mrf.mxu0
    %10268 = vdwg.mxu0
    %10269 = vmatpush.bf16.msra.mxu0 %v8202
    %10270 = vmatpush.bf16.msra.mxu0 %v8200
    %10271 = vmatpush.bf16.msra.mxu0 %v8198
    %10272 = vmatpush.bf16.msra.mxu0 %v8196
    %10273 = vmatpush.bf16.msra.mxu0 %v8194
    %10274 = vmatpush.bf16.msra.mxu0 %v8192
    %10275 = vmatpush.bf16.msra.mxu0 %v8190
    %10276 = vmatpush.bf16.msra.mxu0 %v8188
    %10277 = vmatmul.bf16.gmra.mxu0 %v9219
    %v10278 = vpop.f32.mrf.mxu0
    %v10279 = vadd.f32 0.0, %v10278
    %v10280 = vpop.f32.mrf.mxu0
    %v10281 = vadd.f32 0.0, %v10280
    %10282 = vmatmul.bf16.gmra.mxu0 %v9221
    %v10283 = vpop.f32.mrf.mxu0
    %v10284 = vpop.f32.mrf.mxu0
    %v10285 = vadd.f32 0.0, %v10284
    %10286 = vmatmul.bf16.gmra.mxu0 %v9223
    %v10287 = vpop.f32.mrf.mxu0
    %v10288 = vadd.f32 0.0, %v10287
    %v10289 = vpop.f32.mrf.mxu0
    %10290 = vmatmul.bf16.gmra.mxu0 %v9225
    %v10291 = vpop.f32.mrf.mxu0
    %v10292 = vadd.f32 0.0, %v10291
    %v10293 = vpop.f32.mrf.mxu0
    %v10294 = vadd.f32 0.0, %v10293
    %10295 = vmatmul.bf16.gmra.mxu0 %v9227
    %v10296 = vpop.f32.mrf.mxu0
    %v10297 = vpop.f32.mrf.mxu0
    %v10298 = vadd.f32 0.0, %v10297
    %10299 = vmatmul.bf16.gmra.mxu0 %v9229
    %v10300 = vpop.f32.mrf.mxu0
    %v10301 = vadd.f32 0.0, %v10300
    %v10302 = vpop.f32.mrf.mxu0
    %10303 = vdwg.mxu0
    %10304 = vmatpush.bf16.msra.mxu0 %v8218
    %10305 = vmatpush.bf16.msra.mxu0 %v8216
    %10306 = vmatpush.bf16.msra.mxu0 %v8214
    %10307 = vmatpush.bf16.msra.mxu0 %v8212
    %10308 = vmatpush.bf16.msra.mxu0 %v8210
    %10309 = vmatpush.bf16.msra.mxu0 %v8208
    %10310 = vmatpush.bf16.msra.mxu0 %v8206
    %10311 = vmatpush.bf16.msra.mxu0 %v8204
    %10312 = vmatmul.bf16.gmra.mxu0 %v9220
    %v10313 = vpop.f32.mrf.mxu0
    %v10314 = vadd.f32 %v10279, %v10313
    %v10315 = vpop.f32.mrf.mxu0
    %v10316 = vadd.f32 %v10281, %v10315
    %10317 = vmatmul.bf16.gmra.mxu0 %v9222
    %v10318 = vpop.f32.mrf.mxu0
    %v10319 = vpop.f32.mrf.mxu0
    %v10320 = vadd.f32 %v10285, %v10319
    %10321 = vmatmul.bf16.gmra.mxu0 %v9224
    %v10322 = vpop.f32.mrf.mxu0
    %v10323 = vadd.f32 %v10288, %v10322
    %v10324 = vpop.f32.mrf.mxu0
    %10325 = vmatmul.bf16.gmra.mxu0 %v9226
    %v10326 = vpop.f32.mrf.mxu0
    %v10327 = vadd.f32 %v10292, %v10326
    %v10328 = vpop.f32.mrf.mxu0
    %v10329 = vadd.f32 %v10294, %v10328
    %10330 = vmatmul.bf16.gmra.mxu0 %v9228
    %v10331 = vpop.f32.mrf.mxu0
    %v10332 = vpop.f32.mrf.mxu0
    %v10333 = vadd.f32 %v10298, %v10332
    %10334 = vmatmul.bf16.gmra.mxu0 %v9230
    %v10335 = vpop.f32.mrf.mxu0
    %v10336 = vadd.f32 %v10301, %v10335
    %v10337 = vpop.f32.mrf.mxu0
    %10338 = vdwg.mxu0
    %v10339 = vadd.f32 %v10183, %v10244
    %v10340 = vadd.f32 %v10184, %v10314
    %v10341 = vadd.f32 %v10185, %v10246
    %v10342 = vadd.f32 %v10186, %v10316
    %v10343 = vadd.f32 %v10187, %v10250
    %v10344 = vadd.f32 %v10188, %v10320
    %v10345 = vadd.f32 %v10189, %v10253
    %v10346 = vadd.f32 %v10190, %v10323
    %v10347 = vadd.f32 %v10191, %v10257
    %v10348 = vadd.f32 %v10192, %v10327
    %v10349 = vadd.f32 %v10193, %v10259
    %v10350 = vadd.f32 %v10194, %v10329
    %v10351 = vadd.f32 %v10195, %v10263
    %v10352 = vadd.f32 %v10196, %v10333
    %v10353 = vadd.f32 %v10197, %v10266
    %v10354 = vadd.f32 %v10198, %v10336
    %10355 = vmatpush.bf16.msra.mxu0 %v8550
    %10356 = vmatpush.bf16.msra.mxu0 %v8548
    %10357 = vmatpush.bf16.msra.mxu0 %v8546
    %10358 = vmatpush.bf16.msra.mxu0 %v8544
    %10359 = vmatpush.bf16.msra.mxu0 %v8542
    %10360 = vmatpush.bf16.msra.mxu0 %v8540
    %10361 = vmatpush.bf16.msra.mxu0 %v8538
    %10362 = vmatpush.bf16.msra.mxu0 %v8536
    %10363 = vmatmul.bf16.gmra.mxu0 %v9219
    %v10364 = vpop.f32.mrf.mxu0
    %v10365 = vpop.f32.mrf.mxu0
    %v10366 = vadd.f32 0.0, %v10365
    %10367 = vmatmul.bf16.gmra.mxu0 %v9221
    %v10368 = vpop.f32.mrf.mxu0
    %v10369 = vpop.f32.mrf.mxu0
    %10370 = vmatmul.bf16.gmra.mxu0 %v9223
    %v10371 = vpop.f32.mrf.mxu0
    %v10372 = vadd.f32 0.0, %v10371
    %v10373 = vpop.f32.mrf.mxu0
    %10374 = vmatmul.bf16.gmra.mxu0 %v9225
    %v10375 = vpop.f32.mrf.mxu0
    %v10376 = vpop.f32.mrf.mxu0
    %v10377 = vadd.f32 0.0, %v10376
    %10378 = vmatmul.bf16.gmra.mxu0 %v9227
    %v10379 = vpop.f32.mrf.mxu0
    %v10380 = vpop.f32.mrf.mxu0
    %10381 = vmatmul.bf16.gmra.mxu0 %v9229
    %v10382 = vpop.f32.mrf.mxu0
    %v10383 = vadd.f32 0.0, %v10382
    %v10384 = vpop.f32.mrf.mxu0
    %10385 = vdwg.mxu0
    %10386 = vmatpush.bf16.msra.mxu0 %v8566
    %10387 = vmatpush.bf16.msra.mxu0 %v8564
    %10388 = vmatpush.bf16.msra.mxu0 %v8562
    %10389 = vmatpush.bf16.msra.mxu0 %v8560
    %10390 = vmatpush.bf16.msra.mxu0 %v8558
    %10391 = vmatpush.bf16.msra.mxu0 %v8556
    %10392 = vmatpush.bf16.msra.mxu0 %v8554
    %10393 = vmatpush.bf16.msra.mxu0 %v8552
    %10394 = vmatmul.bf16.gmra.mxu0 %v9220
    %v10395 = vpop.f32.mrf.mxu0
    %v10396 = vpop.f32.mrf.mxu0
    %v10397 = vadd.f32 %v10366, %v10396
    %10398 = vmatmul.bf16.gmra.mxu0 %v9222
    %v10399 = vpop.f32.mrf.mxu0
    %v10400 = vpop.f32.mrf.mxu0
    %10401 = vmatmul.bf16.gmra.mxu0 %v9224
    %v10402 = vpop.f32.mrf.mxu0
    %v10403 = vadd.f32 %v10372, %v10402
    %v10404 = vpop.f32.mrf.mxu0
    %10405 = vmatmul.bf16.gmra.mxu0 %v9226
    %v10406 = vpop.f32.mrf.mxu0
    %v10407 = vpop.f32.mrf.mxu0
    %v10408 = vadd.f32 %v10377, %v10407
    %10409 = vmatmul.bf16.gmra.mxu0 %v9228
    %v10410 = vpop.f32.mrf.mxu0
    %v10411 = vpop.f32.mrf.mxu0
    %10412 = vmatmul.bf16.gmra.mxu0 %v9230
    %v10413 = vpop.f32.mrf.mxu0
    %v10414 = vadd.f32 %v10383, %v10413
    %v10415 = vpop.f32.mrf.mxu0
    %10416 = vdwg.mxu0
    %10417 = vmatpush.bf16.msra.mxu0 %v8551
    %10418 = vmatpush.bf16.msra.mxu0 %v8549
    %10419 = vmatpush.bf16.msra.mxu0 %v8547
    %10420 = vmatpush.bf16.msra.mxu0 %v8545
    %10421 = vmatpush.bf16.msra.mxu0 %v8543
    %10422 = vmatpush.bf16.msra.mxu0 %v8541
    %10423 = vmatpush.bf16.msra.mxu0 %v8539
    %10424 = vmatpush.bf16.msra.mxu0 %v8537
    %10425 = vmatmul.bf16.gmra.mxu0 %v9219
    %v10426 = vpop.f32.mrf.mxu0
    %v10427 = vpop.f32.mrf.mxu0
    %v10428 = vadd.f32 0.0, %v10427
    %10429 = vmatmul.bf16.gmra.mxu0 %v9221
    %v10430 = vpop.f32.mrf.mxu0
    %v10431 = vpop.f32.mrf.mxu0
    %10432 = vmatmul.bf16.gmra.mxu0 %v9223
    %v10433 = vpop.f32.mrf.mxu0
    %v10434 = vadd.f32 0.0, %v10433
    %v10435 = vpop.f32.mrf.mxu0
    %10436 = vmatmul.bf16.gmra.mxu0 %v9225
    %v10437 = vpop.f32.mrf.mxu0
    %v10438 = vpop.f32.mrf.mxu0
    %v10439 = vadd.f32 0.0, %v10438
    %10440 = vmatmul.bf16.gmra.mxu0 %v9227
    %v10441 = vpop.f32.mrf.mxu0
    %v10442 = vpop.f32.mrf.mxu0
    %10443 = vmatmul.bf16.gmra.mxu0 %v9229
    %v10444 = vpop.f32.mrf.mxu0
    %v10445 = vadd.f32 0.0, %v10444
    %v10446 = vpop.f32.mrf.mxu0
    %10447 = vdwg.mxu0
    %10448 = vmatpush.bf16.msra.mxu0 %v8567
    %10449 = vmatpush.bf16.msra.mxu0 %v8565
    %10450 = vmatpush.bf16.msra.mxu0 %v8563
    %10451 = vmatpush.bf16.msra.mxu0 %v8561
    %10452 = vmatpush.bf16.msra.mxu0 %v8559
    %10453 = vmatpush.bf16.msra.mxu0 %v8557
    %10454 = vmatpush.bf16.msra.mxu0 %v8555
    %10455 = vmatpush.bf16.msra.mxu0 %v8553
    %10456 = vmatmul.bf16.gmra.mxu0 %v9220
    %v10457 = vpop.f32.mrf.mxu0
    %v10458 = vpop.f32.mrf.mxu0
    %v10459 = vadd.f32 %v10428, %v10458
    %10460 = vmatmul.bf16.gmra.mxu0 %v9222
    %v10461 = vpop.f32.mrf.mxu0
    %v10462 = vpop.f32.mrf.mxu0
    %10463 = vmatmul.bf16.gmra.mxu0 %v9224
    %v10464 = vpop.f32.mrf.mxu0
    %v10465 = vadd.f32 %v10434, %v10464
    %v10466 = vpop.f32.mrf.mxu0
    %10467 = vmatmul.bf16.gmra.mxu0 %v9226
    %v10468 = vpop.f32.mrf.mxu0
    %v10469 = vpop.f32.mrf.mxu0
    %v10470 = vadd.f32 %v10439, %v10469
    %10471 = vmatmul.bf16.gmra.mxu0 %v9228
    %v10472 = vpop.f32.mrf.mxu0
    %v10473 = vpop.f32.mrf.mxu0
    %10474 = vmatmul.bf16.gmra.mxu0 %v9230
    %v10475 = vpop.f32.mrf.mxu0
    %v10476 = vadd.f32 %v10445, %v10475
    %v10477 = vpop.f32.mrf.mxu0
    %10478 = vdwg.mxu0
    %v10487 = vrot.slane %v10397, 1
    %v10488 = vrot.slane %v10459, 1
    %v10489 = vrot.slane %v10403, 1
    %v10490 = vrot.slane %v10465, 1
    %v10491 = vrot.slane %v10408, 1
    %v10492 = vrot.slane %v10470, 1
    %v10493 = vrot.slane %v10414, 1
    %v10494 = vrot.slane %v10476, 1
    %v10503 = vadd.f32 %v10339, %v10487
    %v10504 = vadd.f32 %v10340, %v10488
    %v10505 = vadd.f32 %v10341, %v10487
    %v10506 = vadd.f32 %v10342, %v10488
    %v10507 = vadd.f32 %v10343, %v10489
    %v10508 = vadd.f32 %v10344, %v10490
    %v10509 = vadd.f32 %v10345, %v10489
    %v10510 = vadd.f32 %v10346, %v10490
    %v10511 = vadd.f32 %v10347, %v10491
    %v10512 = vadd.f32 %v10348, %v10492
    %v10513 = vadd.f32 %v10349, %v10491
    %v10514 = vadd.f32 %v10350, %v10492
    %v10515 = vadd.f32 %v10351, %v10493
    %v10516 = vadd.f32 %v10352, %v10494
    %v10517 = vadd.f32 %v10353, %v10493
    %v10518 = vadd.f32 %v10354, %v10494
    %10519 = vmatpush.bf16.msra.mxu0 %v8907
    %10520 = vmatpush.bf16.msra.mxu0 %v8905
    %10521 = vmatpush.bf16.msra.mxu0 %v8903
    %10522 = vmatpush.bf16.msra.mxu0 %v8901
    %10523 = vmatpush.bf16.msra.mxu0 %v8899
    %10524 = vmatpush.bf16.msra.mxu0 %v8897
    %10525 = vmatpush.bf16.msra.mxu0 %v8895
    %10526 = vmatpush.bf16.msra.mxu0 %v8893
    %10527 = vmatmul.bf16.gmra.mxu0 %v9219
    %v10528 = vpop.f32.mrf.mxu0
    %v10529 = vpop.f32.mrf.mxu0
    %v10530 = vadd.f32 0.0, %v10529
    %10531 = vmatmul.bf16.gmra.mxu0 %v9221
    %v10532 = vpop.f32.mrf.mxu0
    %v10533 = vpop.f32.mrf.mxu0
    %10534 = vmatmul.bf16.gmra.mxu0 %v9223
    %v10535 = vpop.f32.mrf.mxu0
    %v10536 = vadd.f32 0.0, %v10535
    %v10537 = vpop.f32.mrf.mxu0
    %10538 = vmatmul.bf16.gmra.mxu0 %v9225
    %v10539 = vpop.f32.mrf.mxu0
    %v10540 = vpop.f32.mrf.mxu0
    %v10541 = vadd.f32 0.0, %v10540
    %10542 = vmatmul.bf16.gmra.mxu0 %v9227
    %v10543 = vpop.f32.mrf.mxu0
    %v10544 = vpop.f32.mrf.mxu0
    %10545 = vmatmul.bf16.gmra.mxu0 %v9229
    %v10546 = vpop.f32.mrf.mxu0
    %v10547 = vadd.f32 0.0, %v10546
    %v10548 = vpop.f32.mrf.mxu0
    %10549 = vdwg.mxu0
    %10550 = vmatpush.bf16.msra.mxu0 %v8923
    %10551 = vmatpush.bf16.msra.mxu0 %v8921
    %10552 = vmatpush.bf16.msra.mxu0 %v8919
    %10553 = vmatpush.bf16.msra.mxu0 %v8917
    %10554 = vmatpush.bf16.msra.mxu0 %v8915
    %10555 = vmatpush.bf16.msra.mxu0 %v8913
    %10556 = vmatpush.bf16.msra.mxu0 %v8911
    %10557 = vmatpush.bf16.msra.mxu0 %v8909
    %10558 = vmatmul.bf16.gmra.mxu0 %v9220
    %v10559 = vpop.f32.mrf.mxu0
    %v10560 = vpop.f32.mrf.mxu0
    %v10561 = vadd.f32 %v10530, %v10560
    %10562 = vmatmul.bf16.gmra.mxu0 %v9222
    %v10563 = vpop.f32.mrf.mxu0
    %v10564 = vpop.f32.mrf.mxu0
    %10565 = vmatmul.bf16.gmra.mxu0 %v9224
    %v10566 = vpop.f32.mrf.mxu0
    %v10567 = vadd.f32 %v10536, %v10566
    %v10568 = vpop.f32.mrf.mxu0
    %10569 = vmatmul.bf16.gmra.mxu0 %v9226
    %v10570 = vpop.f32.mrf.mxu0
    %v10571 = vpop.f32.mrf.mxu0
    %v10572 = vadd.f32 %v10541, %v10571
    %10573 = vmatmul.bf16.gmra.mxu0 %v9228
    %v10574 = vpop.f32.mrf.mxu0
    %v10575 = vpop.f32.mrf.mxu0
    %10576 = vmatmul.bf16.gmra.mxu0 %v9230
    %v10577 = vpop.f32.mrf.mxu0
    %v10578 = vadd.f32 %v10547, %v10577
    %v10579 = vpop.f32.mrf.mxu0
    %10580 = vdwg.mxu0
    %10581 = vmatpush.bf16.msra.mxu0 %v8908
    %10582 = vmatpush.bf16.msra.mxu0 %v8906
    %10583 = vmatpush.bf16.msra.mxu0 %v8904
    %10584 = vmatpush.bf16.msra.mxu0 %v8902
    %10585 = vmatpush.bf16.msra.mxu0 %v8900
    %10586 = vmatpush.bf16.msra.mxu0 %v8898
    %10587 = vmatpush.bf16.msra.mxu0 %v8896
    %10588 = vmatpush.bf16.msra.mxu0 %v8894
    %10589 = vmatmul.bf16.gmra.mxu0 %v9219
    %v10590 = vpop.f32.mrf.mxu0
    %v10591 = vpop.f32.mrf.mxu0
    %v10592 = vadd.f32 0.0, %v10591
    %10593 = vmatmul.bf16.gmra.mxu0 %v9221
    %v10594 = vpop.f32.mrf.mxu0
    %v10595 = vpop.f32.mrf.mxu0
    %10596 = vmatmul.bf16.gmra.mxu0 %v9223
    %v10597 = vpop.f32.mrf.mxu0
    %v10598 = vadd.f32 0.0, %v10597
    %v10599 = vpop.f32.mrf.mxu0
    %10600 = vmatmul.bf16.gmra.mxu0 %v9225
    %v10601 = vpop.f32.mrf.mxu0
    %v10602 = vpop.f32.mrf.mxu0
    %v10603 = vadd.f32 0.0, %v10602
    %10604 = vmatmul.bf16.gmra.mxu0 %v9227
    %v10605 = vpop.f32.mrf.mxu0
    %v10606 = vpop.f32.mrf.mxu0
    %10607 = vmatmul.bf16.gmra.mxu0 %v9229
    %v10608 = vpop.f32.mrf.mxu0
    %v10609 = vadd.f32 0.0, %v10608
    %v10610 = vpop.f32.mrf.mxu0
    %10611 = vdwg.mxu0
    %10612 = vmatpush.bf16.msra.mxu0 %v8924
    %10613 = vmatpush.bf16.msra.mxu0 %v8922
    %10614 = vmatpush.bf16.msra.mxu0 %v8920
    %10615 = vmatpush.bf16.msra.mxu0 %v8918
    %10616 = vmatpush.bf16.msra.mxu0 %v8916
    %10617 = vmatpush.bf16.msra.mxu0 %v8914
    %10618 = vmatpush.bf16.msra.mxu0 %v8912
    %10619 = vmatpush.bf16.msra.mxu0 %v8910
    %10620 = vmatmul.bf16.gmra.mxu0 %v9220
    %v10621 = vpop.f32.mrf.mxu0
    %v10622 = vpop.f32.mrf.mxu0
    %v10623 = vadd.f32 %v10592, %v10622
    %10624 = vmatmul.bf16.gmra.mxu0 %v9222
    %v10625 = vpop.f32.mrf.mxu0
    %v10626 = vpop.f32.mrf.mxu0
    %10627 = vmatmul.bf16.gmra.mxu0 %v9224
    %v10628 = vpop.f32.mrf.mxu0
    %v10629 = vadd.f32 %v10598, %v10628
    %v10630 = vpop.f32.mrf.mxu0
    %10631 = vmatmul.bf16.gmra.mxu0 %v9226
    %v10632 = vpop.f32.mrf.mxu0
    %v10633 = vpop.f32.mrf.mxu0
    %v10634 = vadd.f32 %v10603, %v10633
    %10635 = vmatmul.bf16.gmra.mxu0 %v9228
    %v10636 = vpop.f32.mrf.mxu0
    %v10637 = vpop.f32.mrf.mxu0
    %10638 = vmatmul.bf16.gmra.mxu0 %v9230
    %v10639 = vpop.f32.mrf.mxu0
    %v10640 = vadd.f32 %v10609, %v10639
    %v10641 = vpop.f32.mrf.mxu0
    %10642 = vdwg.mxu0
    %v10651 = vrot.slane %v10561, 2
    %v10652 = vrot.slane %v10623, 2
    %v10653 = vrot.slane %v10567, 2
    %v10654 = vrot.slane %v10629, 2
    %v10655 = vrot.slane %v10572, 2
    %v10656 = vrot.slane %v10634, 2
    %v10657 = vrot.slane %v10578, 2
    %v10658 = vrot.slane %v10640, 2
    %v10667 = vadd.f32 %v10503, %v10651
    %v10668 = vadd.f32 %v10504, %v10652
    %v10669 = vadd.f32 %v10505, %v10651
    %v10670 = vadd.f32 %v10506, %v10652
    %v10671 = vadd.f32 %v10507, %v10653
    %v10672 = vadd.f32 %v10508, %v10654
    %v10673 = vadd.f32 %v10509, %v10653
    %v10674 = vadd.f32 %v10510, %v10654
    %v10675 = vadd.f32 %v10511, %v10655
    %v10676 = vadd.f32 %v10512, %v10656
    %v10677 = vadd.f32 %v10513, %v10655
    %v10678 = vadd.f32 %v10514, %v10656
    %v10679 = vadd.f32 %v10515, %v10657
    %v10680 = vadd.f32 %v10516, %v10658
    %v10681 = vadd.f32 %v10517, %v10657
    %v10682 = vadd.f32 %v10518, %v10658
    %10699 = vst.sshfl [vmem:[#allocation1] sm:$0xff pattern:$0x75316420] %v9105
    %10700 = vst.sshfl [vmem:[#allocation1 + $0x8] sm:$0xff pattern:$0x75316420] %v9106
    %10701 = vst.sshfl [vmem:[#allocation1 + $0x10] sm:$0xff pattern:$0x75316420] %v9107
    %10702 = vst.sshfl [vmem:[#allocation1 + $0x18] sm:$0xff pattern:$0x75316420] %v9108
    %s10703 = scalar_lea.vmem [#allocation1], 1
    %v10704 = vld [vmem:[%s10703] ss:$2 sm:$0xff]
    %s10705 = scalar_lea.vmem [#allocation1], 16
    %v10706 = vld [vmem:[%s10705] ss:$2 sm:$0xff]
    %10707 = vst.sshfl [vmem:[#allocation1 + $0x20] sm:$0xff pattern:$0x75316420] %v9109
    %10708 = vst.sshfl [vmem:[#allocation1 + $0x28] sm:$0xff pattern:$0x75316420] %v9110
    %10709 = vst.sshfl [vmem:[#allocation1 + $0x30] sm:$0xff pattern:$0x75316420] %v9111
    %10710 = vst.sshfl [vmem:[#allocation1 + $0x38] sm:$0xff pattern:$0x75316420] %v9112
    %s10711 = scalar_lea.vmem [#allocation1], 33
    %v10712 = vld [vmem:[%s10711] ss:$2 sm:$0xff]
    %s10713 = scalar_lea.vmem [#allocation1], 48
    %v10714 = vld [vmem:[%s10713] ss:$2 sm:$0xff]
    %10715 = vst.sshfl [vmem:[#allocation1] sm:$0xff pattern:$0x75316420] %v9113
    %10716 = vst.sshfl [vmem:[#allocation1 + $0x8] sm:$0xff pattern:$0x75316420] %v9114
    %10717 = vst.sshfl [vmem:[#allocation1 + $0x10] sm:$0xff pattern:$0x75316420] %v9115
    %10718 = vst.sshfl [vmem:[#allocation1 + $0x18] sm:$0xff pattern:$0x75316420] %v9116
    %v10719 = vld [vmem:[%s10703] ss:$2 sm:$0xff]
    %v10720 = vld [vmem:[%s10705] ss:$2 sm:$0xff]
    %10721 = vst.sshfl [vmem:[#allocation1 + $0x20] sm:$0xff pattern:$0x75316420] %v9117
    %10722 = vst.sshfl [vmem:[#allocation1 + $0x28] sm:$0xff pattern:$0x75316420] %v9118
    %10723 = vst.sshfl [vmem:[#allocation1 + $0x30] sm:$0xff pattern:$0x75316420] %v9119
    %10724 = vst.sshfl [vmem:[#allocation1 + $0x38] sm:$0xff pattern:$0x75316420] %v9120
    %v10725 = vld [vmem:[%s10711] ss:$2 sm:$0xff]
    %v10726 = vld [vmem:[%s10713] ss:$2 sm:$0xff]
    %v10727 = vrot.slane %v10704, 7
    %v10728 = vrot.slane %v10727, 4
    %v10729 = vrot.slane %v10706, 7
    %v10730 = vsel %vm5326, %v10728, %v10729
    %v10731 = vrot.slane %v10712, 7
    %v10732 = vrot.slane %v10731, 4
    %v10733 = vrot.slane %v10714, 7
    %v10734 = vsel %vm5326, %v10732, %v10733
    %v10735 = vrot.slane %v10719, 7
    %v10736 = vrot.slane %v10735, 4
    %v10737 = vrot.slane %v10720, 7
    %v10738 = vsel %vm5326, %v10736, %v10737
    %v10739 = vrot.slane %v10725, 7
    %v10740 = vrot.slane %v10739, 4
    %v10741 = vrot.slane %v10726, 7
    %v10742 = vsel %vm5326, %v10740, %v10741
    %10747 = vst [vmem:[#allocation1] ss:$2 sm:$0xff] %v10730
    %s10748 = scalar_lea.vmem [#allocation1], 1
    %10749 = vst [vmem:[%s10748] ss:$2 sm:$0xff] %v10734
    %s10750 = scalar_lea.vmem [#allocation1], 16
    %10751 = vst [vmem:[%s10750] ss:$2 sm:$0xff] %v10738
    %s10752 = scalar_lea.vmem [#allocation1], 17
    %10753 = vst [vmem:[%s10752] ss:$2 sm:$0xff] %v10742
    %v10754 = vld.sshfl [vmem:[#allocation1] sm:$0xff pattern:$0x75316420]
    %v10755 = vld.sshfl [vmem:[#allocation1 + $0x8] sm:$0xff pattern:$0x75316420]
    %v10756 = vld.sshfl [vmem:[#allocation1 + $0x10] sm:$0xff pattern:$0x75316420]
    %v10757 = vld.sshfl [vmem:[#allocation1 + $0x18] sm:$0xff pattern:$0x75316420]
    %v10762 = vadd.f32 %v10754, %v10756
    %v10763 = vrot.slane %v10762, 4
    %v10764 = vadd.f32 %v10762, %v10763
    %v10765 = vrot.slane %v10764, 2
    %v10766 = vadd.f32 %v10764, %v10765
    %v10767 = vrot.slane %v10766, 1
    %v10768 = vadd.f32 %v10766, %v10767
    %v10769 = vadd.f32 %v10755, %v10757
    %v10770 = vrot.slane %v10769, 4
    %v10771 = vadd.f32 %v10769, %v10770
    %v10772 = vrot.slane %v10771, 2
    %v10773 = vadd.f32 %v10771, %v10772
    %v10774 = vrot.slane %v10773, 1
    %v10775 = vadd.f32 %v10773, %v10774
    %v10776 = vadd.f32 %v10768, 0.0
    %v10777 = vadd.f32 %v10775, 0.0
    %v10778 = vmul.f32 %v10730, %v10730
    %v10779 = vmul.f32 %v10734, %v10734
    %v10780 = vmul.f32 %v10738, %v10738
    %v10781 = vmul.f32 %v10742, %v10742
    %10786 = vst [vmem:[#allocation1] ss:$2 sm:$0xff] %v10778
    %s10787 = scalar_lea.vmem [#allocation1], 1
    %10788 = vst [vmem:[%s10787] ss:$2 sm:$0xff] %v10779
    %s10789 = scalar_lea.vmem [#allocation1], 16
    %10790 = vst [vmem:[%s10789] ss:$2 sm:$0xff] %v10780
    %s10791 = scalar_lea.vmem [#allocation1], 17
    %10792 = vst [vmem:[%s10791] ss:$2 sm:$0xff] %v10781
    %v10793 = vld.sshfl [vmem:[#allocation1] sm:$0xff pattern:$0x75316420]
    %v10794 = vld.sshfl [vmem:[#allocation1 + $0x8] sm:$0xff pattern:$0x75316420]
    %v10795 = vld.sshfl [vmem:[#allocation1 + $0x10] sm:$0xff pattern:$0x75316420]
    %v10796 = vld.sshfl [vmem:[#allocation1 + $0x18] sm:$0xff pattern:$0x75316420]
    %v10801 = vadd.f32 %v10793, %v10795
    %v10802 = vrot.slane %v10801, 4
    %v10803 = vadd.f32 %v10801, %v10802
    %v10804 = vrot.slane %v10803, 2
    %v10805 = vadd.f32 %v10803, %v10804
    %v10806 = vrot.slane %v10805, 1
    %v10807 = vadd.f32 %v10805, %v10806
    %v10808 = vadd.f32 %v10794, %v10796
    %v10809 = vrot.slane %v10808, 4
    %v10810 = vadd.f32 %v10808, %v10809
    %v10811 = vrot.slane %v10810, 2
    %v10812 = vadd.f32 %v10810, %v10811
    %v10813 = vrot.slane %v10812, 1
    %v10814 = vadd.f32 %v10812, %v10813
    %v10815 = vadd.f32 %v10807, 0.0
    %v10816 = vadd.f32 %v10814, 0.0
    %10833 = vst.sshfl [vmem:[#allocation1] sm:$0xff pattern:$0x75316420] %v10667
    %10834 = vst.sshfl [vmem:[#allocation1 + $0x8] sm:$0xff pattern:$0x75316420] %v10668
    %10835 = vst.sshfl [vmem:[#allocation1 + $0x10] sm:$0xff pattern:$0x75316420] %v10669
    %10836 = vst.sshfl [vmem:[#allocation1 + $0x18] sm:$0xff pattern:$0x75316420] %v10670
    %s10837 = scalar_lea.vmem [#allocation1], 1
    %v10838 = vld [vmem:[%s10837] ss:$2 sm:$0xff]
    %s10839 = scalar_lea.vmem [#allocation1], 16
    %v10840 = vld [vmem:[%s10839] ss:$2 sm:$0xff]
    %10841 = vst.sshfl [vmem:[#allocation1 + $0x20] sm:$0xff pattern:$0x75316420] %v10671
    %10842 = vst.sshfl [vmem:[#allocation1 + $0x28] sm:$0xff pattern:$0x75316420] %v10672
    %10843 = vst.sshfl [vmem:[#allocation1 + $0x30] sm:$0xff pattern:$0x75316420] %v10673
    %10844 = vst.sshfl [vmem:[#allocation1 + $0x38] sm:$0xff pattern:$0x75316420] %v10674
    %s10845 = scalar_lea.vmem [#allocation1], 33
    %v10846 = vld [vmem:[%s10845] ss:$2 sm:$0xff]
    %s10847 = scalar_lea.vmem [#allocation1], 48
    %v10848 = vld [vmem:[%s10847] ss:$2 sm:$0xff]
    %10849 = vst.sshfl [vmem:[#allocation1] sm:$0xff pattern:$0x75316420] %v10675
    %10850 = vst.sshfl [vmem:[#allocation1 + $0x8] sm:$0xff pattern:$0x75316420] %v10676
    %10851 = vst.sshfl [vmem:[#allocation1 + $0x10] sm:$0xff pattern:$0x75316420] %v10677
    %10852 = vst.sshfl [vmem:[#allocation1 + $0x18] sm:$0xff pattern:$0x75316420] %v10678
    %v10853 = vld [vmem:[%s10837] ss:$2 sm:$0xff]
    %v10854 = vld [vmem:[%s10839] ss:$2 sm:$0xff]
    %10855 = vst.sshfl [vmem:[#allocation1 + $0x20] sm:$0xff pattern:$0x75316420] %v10679
    %10856 = vst.sshfl [vmem:[#allocation1 + $0x28] sm:$0xff pattern:$0x75316420] %v10680
    %10857 = vst.sshfl [vmem:[#allocation1 + $0x30] sm:$0xff pattern:$0x75316420] %v10681
    %10858 = vst.sshfl [vmem:[#allocation1 + $0x38] sm:$0xff pattern:$0x75316420] %v10682
    %v10859 = vld [vmem:[%s10845] ss:$2 sm:$0xff]
    %v10860 = vld [vmem:[%s10847] ss:$2 sm:$0xff]
    %v10861 = vrot.slane %v10838, 7
    %v10862 = vrot.slane %v10861, 4
    %v10863 = vrot.slane %v10840, 7
    %v10864 = vsel %vm5326, %v10862, %v10863
    %v10865 = vrot.slane %v10846, 7
    %v10866 = vrot.slane %v10865, 4
    %v10867 = vrot.slane %v10848, 7
    %v10868 = vsel %vm5326, %v10866, %v10867
    %v10869 = vrot.slane %v10853, 7
    %v10870 = vrot.slane %v10869, 4
    %v10871 = vrot.slane %v10854, 7
    %v10872 = vsel %vm5326, %v10870, %v10871
    %v10873 = vrot.slane %v10859, 7
    %v10874 = vrot.slane %v10873, 4
    %v10875 = vrot.slane %v10860, 7
    %v10876 = vsel %vm5326, %v10874, %v10875
    %10881 = vst [vmem:[#allocation1] ss:$2 sm:$0xff] %v10864
    %s10882 = scalar_lea.vmem [#allocation1], 1
    %10883 = vst [vmem:[%s10882] ss:$2 sm:$0xff] %v10868
    %s10884 = scalar_lea.vmem [#allocation1], 16
    %10885 = vst [vmem:[%s10884] ss:$2 sm:$0xff] %v10872
    %s10886 = scalar_lea.vmem [#allocation1], 17
    %10887 = vst [vmem:[%s10886] ss:$2 sm:$0xff] %v10876
    %v10888 = vld.sshfl [vmem:[#allocation1] sm:$0xff pattern:$0x75316420]
    %v10889 = vld.sshfl [vmem:[#allocation1 + $0x8] sm:$0xff pattern:$0x75316420]
    %v10890 = vld.sshfl [vmem:[#allocation1 + $0x10] sm:$0xff pattern:$0x75316420]
    %v10891 = vld.sshfl [vmem:[#allocation1 + $0x18] sm:$0xff pattern:$0x75316420]
    %v10896 = vadd.f32 %v10888, %v10890
    %v10897 = vrot.slane %v10896, 4
    %v10898 = vadd.f32 %v10896, %v10897
    %v10899 = vrot.slane %v10898, 2
    %v10900 = vadd.f32 %v10898, %v10899
    %v10901 = vrot.slane %v10900, 1
    %v10902 = vadd.f32 %v10900, %v10901
    %v10903 = vadd.f32 %v10889, %v10891
    %v10904 = vrot.slane %v10903, 4
    %v10905 = vadd.f32 %v10903, %v10904
    %v10906 = vrot.slane %v10905, 2
    %v10907 = vadd.f32 %v10905, %v10906
    %v10908 = vrot.slane %v10907, 1
    %v10909 = vadd.f32 %v10907, %v10908
    %v10910 = vadd.f32 %v10776, %v10902
    %v10911 = vadd.f32 %v10777, %v10909
    %v10912 = vmul.f32 %v10864, %v10864
    %v10913 = vmul.f32 %v10868, %v10868
    %v10914 = vmul.f32 %v10872, %v10872
    %v10915 = vmul.f32 %v10876, %v10876
    %10920 = vst [vmem:[#allocation1] ss:$2 sm:$0xff] %v10912
    %s10921 = scalar_lea.vmem [#allocation1], 1
    %10922 = vst [vmem:[%s10921] ss:$2 sm:$0xff] %v10913
    %s10923 = scalar_lea.vmem [#allocation1], 16
    %10924 = vst [vmem:[%s10923] ss:$2 sm:$0xff] %v10914
    %s10925 = scalar_lea.vmem [#allocation1], 17
    %10926 = vst [vmem:[%s10925] ss:$2 sm:$0xff] %v10915
    %v10927 = vld.sshfl [vmem:[#allocation1] sm:$0xff pattern:$0x75316420]
    %v10928 = vld.sshfl [vmem:[#allocation1 + $0x8] sm:$0xff pattern:$0x75316420]
    %v10929 = vld.sshfl [vmem:[#allocation1 + $0x10] sm:$0xff pattern:$0x75316420]
    %v10930 = vld.sshfl [vmem:[#allocation1 + $0x18] sm:$0xff pattern:$0x75316420]
    %v10935 = vadd.f32 %v10927, %v10929
    %v10936 = vrot.slane %v10935, 4
    %v10937 = vadd.f32 %v10935, %v10936
    %v10938 = vrot.slane %v10937, 2
    %v10939 = vadd.f32 %v10937, %v10938
    %v10940 = vrot.slane %v10939, 1
    %v10941 = vadd.f32 %v10939, %v10940
    %v10942 = vadd.f32 %v10928, %v10930
    %v10943 = vrot.slane %v10942, 4
    %v10944 = vadd.f32 %v10942, %v10943
    %v10945 = vrot.slane %v10944, 2
    %v10946 = vadd.f32 %v10944, %v10945
    %v10947 = vrot.slane %v10946, 1
    %v10948 = vadd.f32 %v10946, %v10947
    %v10949 = vadd.f32 %v10815, %v10941
    %v10950 = vadd.f32 %v10816, %v10948
    %v10951 = vmul.f32 %v10910, %v5557
    %v10952 = vmul.f32 %v10911, %v5557
    %v10953 = vmul.f32 %v10949, %v5557
    %v10954 = vmul.f32 %v10950, %v5557
    %v10955 = vmul.f32 %v10951, %v10951
    %v10956 = vmul.f32 %v10952, %v10952
    %v10957 = vsub.f32 %v10953, %v10955
    %v10958 = vsub.f32 %v10954, %v10956
    %v10959 = vld [vmem:[#allocation12] sm:$0x3]
    %v10960 = vadd.f32 %v10957, 1e-05
    %v10961 = vadd.f32 %v10958, 1e-05
    %v10962 = vrsqrt.pop %v10960
    %v10963 = vmul.f32 %v10962, %v10960
    %v10964 = vmul.f32 %v10963, %v10962
    %v10965 = vmul.f32 0.5, %v10964
    %v10966 = vsub.f32 1.5, %v10965
    %v10967 = vmul.f32 %v10962, %v10966
    %vm10968 = vweird.f32 %v10960
    %vm10969 = vweird.f32 %v10962
    %vm10970 = vmor %vm10968, %vm10969
    %v10971 = vsel %vm10970, %v10962, %v10967
    %v10972 = vrsqrt.pop %v10961
    %v10973 = vmul.f32 %v10972, %v10961
    %v10974 = vmul.f32 %v10973, %v10972
    %v10975 = vmul.f32 0.5, %v10974
    %v10976 = vsub.f32 1.5, %v10975
    %v10977 = vmul.f32 %v10972, %v10976
    %vm10978 = vweird.f32 %v10961
    %vm10979 = vweird.f32 %v10972
    %vm10980 = vmor %vm10978, %vm10979
    %v10981 = vsel %vm10980, %v10972, %v10977
    %v10984 = vrot.slane %v10981, 7
    %v10985 = vsel %vm5324, %v10971, %v10984
    %v10987 = vmul.f32 %v10959, %v10985
    %v10988 = vld [vmem:[#allocation14] sm:$0x3]
    %v10990 = vperm.slane %v10987, 0
    %v10991 = vperm.slane %v10987, 1
    %v10994 = vmul.f32 %v10951, %v10990
    %v10995 = vmul.f32 %v10952, %v10991
    %v10998 = vrot.slane %v10995, 7
    %v10999 = vsel %vm5324, %v10994, %v10998
    %v11001 = vsub.f32 %v10988, %v10999
    %v11002 = vmul.f32 %v9105, %v10990
    %v11003 = vmul.f32 %v9106, %v10991
    %v11004 = vmul.f32 %v9107, %v10990
    %v11005 = vmul.f32 %v9108, %v10991
    %v11006 = vmul.f32 %v9109, %v10990
    %v11007 = vmul.f32 %v9110, %v10991
    %v11008 = vmul.f32 %v9111, %v10990
    %v11009 = vmul.f32 %v9112, %v10991
    %v11010 = vmul.f32 %v9113, %v10990
    %v11011 = vmul.f32 %v9114, %v10991
    %v11012 = vmul.f32 %v9115, %v10990
    %v11013 = vmul.f32 %v9116, %v10991
    %v11014 = vmul.f32 %v9117, %v10990
    %v11015 = vmul.f32 %v9118, %v10991
    %v11016 = vmul.f32 %v9119, %v10990
    %v11017 = vmul.f32 %v9120, %v10991
    %v11019 = vperm.slane %v11001, 0
    %v11020 = vperm.slane %v11001, 1
    %v11023 = vadd.f32 %v11002, %v11019
    %v11024 = vadd.f32 %v11003, %v11020
    %v11025 = vadd.f32 %v11004, %v11019
    %v11026 = vadd.f32 %v11005, %v11020
    %v11027 = vadd.f32 %v11006, %v11019
    %v11028 = vadd.f32 %v11007, %v11020
    %v11029 = vadd.f32 %v11008, %v11019
    %v11030 = vadd.f32 %v11009, %v11020
    %v11031 = vadd.f32 %v11010, %v11019
    %v11032 = vadd.f32 %v11011, %v11020
    %v11033 = vadd.f32 %v11012, %v11019
    %v11034 = vadd.f32 %v11013, %v11020
    %v11035 = vadd.f32 %v11014, %v11019
    %v11036 = vadd.f32 %v11015, %v11020
    %v11037 = vadd.f32 %v11016, %v11019
    %v11038 = vadd.f32 %v11017, %v11020
    %v11039 = vmax.f32 %v11023, 0.0
    %v11040 = vmax.f32 %v11024, 0.0
    %v11041 = vmax.f32 %v11025, 0.0
    %v11042 = vmax.f32 %v11026, 0.0
    %v11043 = vmax.f32 %v11027, 0.0
    %v11044 = vmax.f32 %v11028, 0.0
    %v11045 = vmax.f32 %v11029, 0.0
    %v11046 = vmax.f32 %v11030, 0.0
    %v11047 = vmax.f32 %v11031, 0.0
    %v11048 = vmax.f32 %v11032, 0.0
    %v11049 = vmax.f32 %v11033, 0.0
    %v11050 = vmax.f32 %v11034, 0.0
    %v11051 = vmax.f32 %v11035, 0.0
    %v11052 = vmax.f32 %v11036, 0.0
    %v11053 = vmax.f32 %v11037, 0.0
    %v11054 = vmax.f32 %v11038, 0.0
    %11071 = vst.sshfl [vmem:[#allocation1] sm:$0xff pattern:$0x75316420] %v11039
    %11072 = vst.sshfl [vmem:[#allocation1 + $0x8] sm:$0xff pattern:$0x75316420] %v11040
    %11073 = vst.sshfl [vmem:[#allocation1 + $0x10] sm:$0xff pattern:$0x75316420] %v11041
    %11074 = vst.sshfl [vmem:[#allocation1 + $0x18] sm:$0xff pattern:$0x75316420] %v11042
    %s11075 = scalar_lea.vmem [#allocation1], 1
    %v11076 = vld [vmem:[%s11075] ss:$2 sm:$0xff]
    %s11077 = scalar_lea.vmem [#allocation1], 16
    %v11078 = vld [vmem:[%s11077] ss:$2 sm:$0xff]
    %11079 = vst.sshfl [vmem:[#allocation1 + $0x20] sm:$0xff pattern:$0x75316420] %v11043
    %11080 = vst.sshfl [vmem:[#allocation1 + $0x28] sm:$0xff pattern:$0x75316420] %v11044
    %11081 = vst.sshfl [vmem:[#allocation1 + $0x30] sm:$0xff pattern:$0x75316420] %v11045
    %11082 = vst.sshfl [vmem:[#allocation1 + $0x38] sm:$0xff pattern:$0x75316420] %v11046
    %s11083 = scalar_lea.vmem [#allocation1], 33
    %v11084 = vld [vmem:[%s11083] ss:$2 sm:$0xff]
    %s11085 = scalar_lea.vmem [#allocation1], 48
    %v11086 = vld [vmem:[%s11085] ss:$2 sm:$0xff]
    %11087 = vst.sshfl [vmem:[#allocation1] sm:$0xff pattern:$0x75316420] %v11047
    %11088 = vst.sshfl [vmem:[#allocation1 + $0x8] sm:$0xff pattern:$0x75316420] %v11048
    %11089 = vst.sshfl [vmem:[#allocation1 + $0x10] sm:$0xff pattern:$0x75316420] %v11049
    %11090 = vst.sshfl [vmem:[#allocation1 + $0x18] sm:$0xff pattern:$0x75316420] %v11050
    %v11091 = vld [vmem:[%s11075] ss:$2 sm:$0xff]
    %v11092 = vld [vmem:[%s11077] ss:$2 sm:$0xff]
    %11093 = vst.sshfl [vmem:[#allocation1 + $0x20] sm:$0xff pattern:$0x75316420] %v11051
    %11094 = vst.sshfl [vmem:[#allocation1 + $0x28] sm:$0xff pattern:$0x75316420] %v11052
    %11095 = vst.sshfl [vmem:[#allocation1 + $0x30] sm:$0xff pattern:$0x75316420] %v11053
    %11096 = vst.sshfl [vmem:[#allocation1 + $0x38] sm:$0xff pattern:$0x75316420] %v11054
    %v11097 = vld [vmem:[%s11083] ss:$2 sm:$0xff]
    %v11098 = vld [vmem:[%s11085] ss:$2 sm:$0xff]
    %v11099 = vrot.slane %v11076, 7
    %v11100 = vrot.slane %v11099, 4
    %v11101 = vrot.slane %v11078, 7
    %v11102 = vsel %vm5326, %v11100, %v11101
    %v11103 = vrot.slane %v11084, 7
    %v11104 = vrot.slane %v11103, 4
    %v11105 = vrot.slane %v11086, 7
    %v11106 = vsel %vm5326, %v11104, %v11105
    %v11107 = vrot.slane %v11091, 7
    %v11108 = vrot.slane %v11107, 4
    %v11109 = vrot.slane %v11092, 7
    %v11110 = vsel %vm5326, %v11108, %v11109
    %v11111 = vrot.slane %v11097, 7
    %v11112 = vrot.slane %v11111, 4
    %v11113 = vrot.slane %v11098, 7
    %v11114 = vsel %vm5326, %v11112, %v11113
    %11115 = vst [vmem:[#allocation1] ss:$2 sm:$0xff] %v11102
    %s11116 = scalar_lea.vmem [#allocation1], 1
    %11117 = vst [vmem:[%s11116] ss:$2 sm:$0xff] %v11106
    %s11118 = scalar_lea.vmem [#allocation1], 16
    %11119 = vst [vmem:[%s11118] ss:$2 sm:$0xff] %v11110
    %s11120 = scalar_lea.vmem [#allocation1], 17
    %11121 = vst [vmem:[%s11120] ss:$2 sm:$0xff] %v11114
    %v11122 = vld.sshfl [vmem:[#allocation1] sm:$0xff pattern:$0x75316420]
    %v11123 = vld.sshfl [vmem:[#allocation1 + $0x8] sm:$0xff pattern:$0x75316420]
    %v11124 = vld.sshfl [vmem:[#allocation1 + $0x10] sm:$0xff pattern:$0x75316420]
    %v11125 = vld.sshfl [vmem:[#allocation1 + $0x18] sm:$0xff pattern:$0x75316420]
    %11130 = vst [vmem:[#allocation15] sm:$0xff] %v11122
    %11131 = vst [vmem:[#allocation15 + $0x8] sm:$0xff] %v11123
    %11132 = vst [vmem:[#allocation15 + $0x10] sm:$0xff] %v11124
    %11133 = vst [vmem:[#allocation15 + $0x18] sm:$0xff] %v11125
    %v11134 = vmul.f32 %v10667, %v10990
    %v11135 = vmul.f32 %v10668, %v10991
    %v11136 = vmul.f32 %v10669, %v10990
    %v11137 = vmul.f32 %v10670, %v10991
    %v11138 = vmul.f32 %v10671, %v10990
    %v11139 = vmul.f32 %v10672, %v10991
    %v11140 = vmul.f32 %v10673, %v10990
    %v11141 = vmul.f32 %v10674, %v10991
    %v11142 = vmul.f32 %v10675, %v10990
    %v11143 = vmul.f32 %v10676, %v10991
    %v11144 = vmul.f32 %v10677, %v10990
    %v11145 = vmul.f32 %v10678, %v10991
    %v11146 = vmul.f32 %v10679, %v10990
    %v11147 = vmul.f32 %v10680, %v10991
    %v11148 = vmul.f32 %v10681, %v10990
    %v11149 = vmul.f32 %v10682, %v10991
    %v11150 = vadd.f32 %v11134, %v11019
    %v11151 = vadd.f32 %v11135, %v11020
    %v11152 = vadd.f32 %v11136, %v11019
    %v11153 = vadd.f32 %v11137, %v11020
    %v11154 = vadd.f32 %v11138, %v11019
    %v11155 = vadd.f32 %v11139, %v11020
    %v11156 = vadd.f32 %v11140, %v11019
    %v11157 = vadd.f32 %v11141, %v11020
    %v11158 = vadd.f32 %v11142, %v11019
    %v11159 = vadd.f32 %v11143, %v11020
    %v11160 = vadd.f32 %v11144, %v11019
    %v11161 = vadd.f32 %v11145, %v11020
    %v11162 = vadd.f32 %v11146, %v11019
    %v11163 = vadd.f32 %v11147, %v11020
    %v11164 = vadd.f32 %v11148, %v11019
    %v11165 = vadd.f32 %v11149, %v11020
    %v11166 = vmax.f32 %v11150, 0.0
    %v11167 = vmax.f32 %v11151, 0.0
    %v11168 = vmax.f32 %v11152, 0.0
    %v11169 = vmax.f32 %v11153, 0.0
    %v11170 = vmax.f32 %v11154, 0.0
    %v11171 = vmax.f32 %v11155, 0.0
    %v11172 = vmax.f32 %v11156, 0.0
    %v11173 = vmax.f32 %v11157, 0.0
    %v11174 = vmax.f32 %v11158, 0.0
    %v11175 = vmax.f32 %v11159, 0.0
    %v11176 = vmax.f32 %v11160, 0.0
    %v11177 = vmax.f32 %v11161, 0.0
    %v11178 = vmax.f32 %v11162, 0.0
    %v11179 = vmax.f32 %v11163, 0.0
    %v11180 = vmax.f32 %v11164, 0.0
    %v11181 = vmax.f32 %v11165, 0.0
    %11198 = vst.sshfl [vmem:[#allocation1] sm:$0xff pattern:$0x75316420] %v11166
    %11199 = vst.sshfl [vmem:[#allocation1 + $0x8] sm:$0xff pattern:$0x75316420] %v11167
    %11200 = vst.sshfl [vmem:[#allocation1 + $0x10] sm:$0xff pattern:$0x75316420] %v11168
    %11201 = vst.sshfl [vmem:[#allocation1 + $0x18] sm:$0xff pattern:$0x75316420] %v11169
    %s11202 = scalar_lea.vmem [#allocation1], 1
    %v11203 = vld [vmem:[%s11202] ss:$2 sm:$0xff]
    %s11204 = scalar_lea.vmem [#allocation1], 16
    %v11205 = vld [vmem:[%s11204] ss:$2 sm:$0xff]
    %11206 = vst.sshfl [vmem:[#allocation1 + $0x20] sm:$0xff pattern:$0x75316420] %v11170
    %11207 = vst.sshfl [vmem:[#allocation1 + $0x28] sm:$0xff pattern:$0x75316420] %v11171
    %11208 = vst.sshfl [vmem:[#allocation1 + $0x30] sm:$0xff pattern:$0x75316420] %v11172
    %11209 = vst.sshfl [vmem:[#allocation1 + $0x38] sm:$0xff pattern:$0x75316420] %v11173
    %s11210 = scalar_lea.vmem [#allocation1], 33
    %v11211 = vld [vmem:[%s11210] ss:$2 sm:$0xff]
    %s11212 = scalar_lea.vmem [#allocation1], 48
    %v11213 = vld [vmem:[%s11212] ss:$2 sm:$0xff]
    %11214 = vst.sshfl [vmem:[#allocation1] sm:$0xff pattern:$0x75316420] %v11174
    %11215 = vst.sshfl [vmem:[#allocation1 + $0x8] sm:$0xff pattern:$0x75316420] %v11175
    %11216 = vst.sshfl [vmem:[#allocation1 + $0x10] sm:$0xff pattern:$0x75316420] %v11176
    %11217 = vst.sshfl [vmem:[#allocation1 + $0x18] sm:$0xff pattern:$0x75316420] %v11177
    %v11218 = vld [vmem:[%s11202] ss:$2 sm:$0xff]
    %v11219 = vld [vmem:[%s11204] ss:$2 sm:$0xff]
    %11220 = vst.sshfl [vmem:[#allocation1 + $0x20] sm:$0xff pattern:$0x75316420] %v11178
    %11221 = vst.sshfl [vmem:[#allocation1 + $0x28] sm:$0xff pattern:$0x75316420] %v11179
    %11222 = vst.sshfl [vmem:[#allocation1 + $0x30] sm:$0xff pattern:$0x75316420] %v11180
    %11223 = vst.sshfl [vmem:[#allocation1 + $0x38] sm:$0xff pattern:$0x75316420] %v11181
    %v11224 = vld [vmem:[%s11210] ss:$2 sm:$0xff]
    %v11225 = vld [vmem:[%s11212] ss:$2 sm:$0xff]
    %v11226 = vrot.slane %v11203, 7
    %v11227 = vrot.slane %v11226, 4
    %v11228 = vrot.slane %v11205, 7
    %v11229 = vsel %vm5326, %v11227, %v11228
    %v11230 = vrot.slane %v11211, 7
    %v11231 = vrot.slane %v11230, 4
    %v11232 = vrot.slane %v11213, 7
    %v11233 = vsel %vm5326, %v11231, %v11232
    %v11234 = vrot.slane %v11218, 7
    %v11235 = vrot.slane %v11234, 4
    %v11236 = vrot.slane %v11219, 7
    %v11237 = vsel %vm5326, %v11235, %v11236
    %v11238 = vrot.slane %v11224, 7
    %v11239 = vrot.slane %v11238, 4
    %v11240 = vrot.slane %v11225, 7
    %v11241 = vsel %vm5326, %v11239, %v11240
    %11242 = vst [vmem:[#allocation1] ss:$2 sm:$0xff] %v11229
    %s11243 = scalar_lea.vmem [#allocation1], 1
    %11244 = vst [vmem:[%s11243] ss:$2 sm:$0xff] %v11233
    %s11245 = scalar_lea.vmem [#allocation1], 16
    %11246 = vst [vmem:[%s11245] ss:$2 sm:$0xff] %v11237
    %s11247 = scalar_lea.vmem [#allocation1], 17
    %11248 = vst [vmem:[%s11247] ss:$2 sm:$0xff] %v11241
    %v11249 = vld.sshfl [vmem:[#allocation1] sm:$0xff pattern:$0x75316420]
    %v11250 = vld.sshfl [vmem:[#allocation1 + $0x8] sm:$0xff pattern:$0x75316420]
    %v11251 = vld.sshfl [vmem:[#allocation1 + $0x10] sm:$0xff pattern:$0x75316420]
    %v11252 = vld.sshfl [vmem:[#allocation1 + $0x18] sm:$0xff pattern:$0x75316420]
    %s11257 = scalar_lea.vmem [#allocation15], 32
    %11258 = vst [vmem:[%s11257] sm:$0xff] %v11249
    %11259 = vst [vmem:[%s11257 + $0x8] sm:$0xff] %v11250
    %11260 = vst [vmem:[%s11257 + $0x10] sm:$0xff] %v11251
    %11261 = vst [vmem:[%s11257 + $0x18] sm:$0xff] %v11252
    // Predicated region
    $region62: #{tpu_custom_call.1} parent=1 // pred_check
      _
    $region63: #{tpu_custom_call.1} parent=1 // pred_check_branch
      %11263 = sbr.rel (0) target = $region65
    $region64: #{tpu_custom_call.1} parent=1 // pred_region
      %11265 = vsyncadd [#allocation5], 0
      %s11266 = sshll.u32 [#allocation15], 4
      %s11267 = int_to_ptr.vmem [resolvable:$true] %s11266
      %s11268 = sshll.u32 %s8, 4
      %s11269 = int_to_ptr.hbm [resolvable:$true] %s11268
      %11274 = dma.vmem_to_hbm [thread:$0]  %s11267, 1024, %s11269, [#allocation5], 256, 256, 16
    $region65: #{tpu_custom_call.1} parent=1 // pred_fallthru
      _
    // Predicated region
    $region66: #{tpu_custom_call.1} parent=1 // pred_check
      _
    $region67: #{tpu_custom_call.1} parent=1 // pred_check_branch
      %11276 = sbr.rel (0) target = $region69
    $region68: #{tpu_custom_call.1} parent=1 // pred_region
      %11278 = dma.done [#allocation5], 1024
    $region69: #{tpu_custom_call.1} parent=1 // pred_fallthru
      _
    %11279 = vsyncpa [#allocation4], 1
    %11280 = vsyncpa [#allocation7], 1
    %11281 = vsyncpa [#allocation10], 1
    %11282 = vsyncpa [#allocation13], 1
    %11283 = vsyncpa [#allocation5], 1

</llo_original>
